<compile_context>
chip_gen: v6e
topology: v6e:2x2x1
jax: 0.10.0
libtpu: 0.0.40
codegen_flags: <defaults>
</compile_context>

<pallas_src>
import jax
import jax.numpy as jnp
from jax.experimental import pallas as pl
from jax.experimental.pallas import tpu as pltpu

# ---------------- module constants (from the PyTorch source) ----------------
N_EMBED = 384
N_HEAD = 6
HEAD_SIZE = N_EMBED // N_HEAD     # 64
BLOCK_SIZE = 256                  # max sequence length (T <= BLOCK_SIZE)
FF_HIDDEN = 4 * N_EMBED           # 1536
LN_EPS = 1e-5                     # torch.nn.LayerNorm default

# small demo shapes (consistent with the module; T <= block_size)
BATCH = 2
SEQ_LEN = 64


# ---------------- Pallas kernel: one batch element per grid step ----------------
def _layernorm(x, gamma, beta):
    m = jnp.mean(x, axis=-1, keepdims=True)
    v = jnp.mean(jnp.square(x - m), axis=-1, keepdims=True)
    return (x - m) * jax.lax.rsqrt(v + LN_EPS) * gamma + beta


def block_kernel(x_ref, ln1g_ref, ln1b_ref, wqkv_ref, wproj_ref, bproj_ref,
                 ln2g_ref, ln2b_ref, w1_ref, b1_ref, w2_ref, b2_ref,
                 out_ref, attn_ref):
    T = x_ref.shape[1]
    C = x_ref.shape[2]

    x = x_ref[...].reshape(T, C)                                       # (T, C) f32

    # ---- LayerNorm 1 (f32) ----
    xn = _layernorm(x, ln1g_ref[...], ln1b_ref[...])

    # ---- fused q/k/v projection: one bf16 MXU matmul, f32 accumulation ----
    # (the C**-0.5 scale is already folded into the q columns of wqkv)
    qkv = jnp.dot(xn.astype(jnp.bfloat16), wqkv_ref[...],
                  preferred_element_type=jnp.float32)                  # (T, 3C)
    q = qkv[:, 0 * C:1 * C]          # 128-aligned lane slices
    k = qkv[:, 1 * C:2 * C]
    v = qkv[:, 2 * C:3 * C]

    # ---- additive causal mask, built once (0 on/below diagonal, -inf above) ----
    row = jax.lax.broadcasted_iota(jnp.int32, (T, T), 0)
    col = jax.lax.broadcasted_iota(jnp.int32, (T, T), 1)
    neg_mask = jnp.where(row >= col, 0.0, -jnp.inf).astype(jnp.float32)

    # ---- multi-head causal attention (static unroll over heads) ----
    # TODO(synk): the 64-wide per-head lane slices still force relayouts; a
    # head-batched dot_general (batch dims (B,H)) would remove them if Mosaic
    # lowers multi-batch-dim dot_general reliably.
    for h in range(N_HEAD):
        lo = h * HEAD_SIZE
        qh = q[:, lo:lo + HEAD_SIZE].astype(jnp.bfloat16)              # (T, D)
        kh = k[:, lo:lo + HEAD_SIZE].astype(jnp.bfloat16)
        vh = v[:, lo:lo + HEAD_SIZE].astype(jnp.bfloat16)

        # scores without an explicit transpose: contract the shared last dim
        s = jnp.einsum('td,sd->ts', qh, kh,
                       preferred_element_type=jnp.float32)             # (T, T) f32
        s = s + neg_mask
        s = s - jnp.max(s, axis=-1, keepdims=True)
        p = jnp.exp(s)
        p = p * pl.reciprocal(jnp.sum(p, axis=-1, keepdims=True), approx=True)
        # dropout on attention weights: identity in eval mode

        oh = jnp.dot(p.astype(jnp.bfloat16), vh,
                     preferred_element_type=jnp.float32)               # (T, D) f32
        # assemble head outputs in VMEM scratch at lane offset h*64
        attn_ref[:, lo:lo + HEAD_SIZE] = oh

    # ---- single K=384 output projection over the assembled head outputs ----
    sa = jnp.dot(attn_ref[...].astype(jnp.bfloat16), wproj_ref[...],
                 preferred_element_type=jnp.float32) + bproj_ref[...]
    # dropout: identity in eval mode
    x1 = x + sa

    # ---- LayerNorm 2 + FeedForward (ReLU after BOTH linears, per reference) ----
    x2n = _layernorm(x1, ln2g_ref[...], ln2b_ref[...])
    h1 = jnp.maximum(
        jnp.dot(x2n.astype(jnp.bfloat16), w1_ref[...],
                preferred_element_type=jnp.float32) + b1_ref[...], 0.0)
    h2 = jnp.maximum(
        jnp.dot(h1.astype(jnp.bfloat16), w2_ref[...],
                preferred_element_type=jnp.float32) + b2_ref[...], 0.0)
    # dropout: identity in eval mode

    out_ref[...] = (x1 + h2).reshape(1, T, C)                          # lane-dense (C=384)


# ---------------- wrapper: single pallas_call, grid over batch ----------------
@jax.jit
def block_forward(x, params):
    B, T, C = x.shape
    scale = C ** (-0.5)   # reference scales by n_embed**-0.5 (input C), not head_size

    # fuse q/k/v weights (scale folded into q) and cast all matmul weights to bf16
    wqkv = jnp.concatenate(
        [params["wq"] * scale, params["wk"], params["wv"]], axis=1
    ).astype(jnp.bfloat16)                                             # (C, 3C)
    wproj = params["wproj"].astype(jnp.bfloat16)
    w1 = params["w1"].astype(jnp.bfloat16)
    w2 = params["w2"].astype(jnp.bfloat16)

    def resident(shape):   # weights/biases: same block for every grid step
        return pl.BlockSpec(shape, lambda b: (0,) * len(shape))

    grid_spec = pltpu.PrefetchScalarGridSpec(
        num_scalar_prefetch=0,
        grid=(B,),
        in_specs=[
            pl.BlockSpec((1, T, C), lambda b: (b, 0, 0)),   # x: one batch per step
            resident((1, C)),                               # ln1 gamma
            resident((1, C)),                               # ln1 beta
            resident((C, 3 * C)),                           # wqkv (bf16)
            resident((C, C)),                               # wproj (bf16)
            resident((1, C)),                               # bproj
            resident((1, C)),                               # ln2 gamma
            resident((1, C)),                               # ln2 beta
            resident((C, FF_HIDDEN)),                       # w1 (bf16)
            resident((1, FF_HIDDEN)),                       # b1
            resident((FF_HIDDEN, C)),                       # w2 (bf16)
            resident((1, C)),                               # b2
        ],
        out_specs=pl.BlockSpec((1, T, C), lambda b: (b, 0, 0)),
        scratch_shapes=[pltpu.VMEM((T, C), jnp.float32)],   # head-output assembly
    )

    # TODO(synk): on v5e the ~1.8 MB of bf16 weight DMA is still exposed before
    # the first grid step; a cross-call weight prefetch (P10) would hide it when
    # this block is stacked per layer.
    return pl.pallas_call(
        block_kernel,
        out_shape=jax.ShapeDtypeStruct((B, T, C), jnp.float32),
        grid_spec=grid_spec,
        compiler_params=pltpu.CompilerParams(
            dimension_semantics=("parallel",),              # batch -> 2 TCs on v7x
            vmem_limit_bytes=32 * 1024 * 1024),
    )(x, params["ln1_g"], params["ln1_b"], wqkv, wproj, params["bproj"],
      params["ln2_g"], params["ln2_b"], w1, params["b1"], w2, params["b2"])


# ---------------- parameter init (deterministic, synthetic) ----------------
def init_params(key):
    def nrm(k, shape, scale=0.02):
        return (scale * jax.random.normal(k, shape)).astype(jnp.float32)

    ks = jax.random.split(key, 6)
    return {
        "ln1_g": jnp.ones((1, N_EMBED), jnp.float32),
        "ln1_b": jnp.zeros((1, N_EMBED), jnp.float32),
        "wq": nrm(ks[0], (N_EMBED, N_EMBED)),       # per-head K/Q/V packed on output axis
        "wk": nrm(ks[1], (N_EMBED, N_EMBED)),
        "wv": nrm(ks[2], (N_EMBED, N_EMBED)),
        "wproj": nrm(ks[3], (N_EMBED, N_EMBED)),
        "bproj": jnp.zeros((1, N_EMBED), jnp.float32),
        "ln2_g": jnp.ones((1, N_EMBED), jnp.float32),
        "ln2_b": jnp.zeros((1, N_EMBED), jnp.float32),
        "w1": nrm(ks[4], (N_EMBED, FF_HIDDEN)),
        "b1": jnp.zeros((1, FF_HIDDEN), jnp.float32),
        "w2": nrm(ks[5], (FF_HIDDEN, N_EMBED)),
        "b2": jnp.zeros((1, N_EMBED), jnp.float32),
    }


# ---------------- pure-JAX reference (mirrors the PyTorch Block, full f32) ----------------
def _ln_ref(x, g, b):
    m = x.mean(-1, keepdims=True)
    v = ((x - m) ** 2).mean(-1, keepdims=True)
    return (x - m) / jnp.sqrt(v + LN_EPS) * g + b


def block_forward_ref(x, params):
    B, T, C = x.shape
    mask = jnp.tril(jnp.ones((T, T), bool))
    xn = _ln_ref(x, params["ln1_g"][0], params["ln1_b"][0])
    q = xn @ params["wq"]; k = xn @ params["wk"]; v = xn @ params["wv"]
    outs = []
    for h in range(N_HEAD):
        lo, hi = h * HEAD_SIZE, (h + 1) * HEAD_SIZE
        w = (q[..., lo:hi] @ jnp.swapaxes(k[..., lo:hi], -1, -2)) * (C ** -0.5)
        w = jnp.where(mask, w, -jnp.inf)
        w = jax.nn.softmax(w, axis=-1)
        outs.append(w @ v[..., lo:hi])
    sa = jnp.concatenate(outs, -1) @ params["wproj"] + params["bproj"][0]
    x = x + sa
    xn = _ln_ref(x, params["ln2_g"][0], params["ln2_b"][0])
    h1 = jnp.maximum(xn @ params["w1"] + params["b1"][0], 0.0)
    h2 = jnp.maximum(h1 @ params["w2"] + params["b2"][0], 0.0)
    return x + h2


if __name__ == "__main__":
    key = jax.random.PRNGKey(0)
    pkey, xkey = jax.random.split(key)
    params = init_params(pkey)

    x = jax.random.normal(xkey, (BATCH, SEQ_LEN, N_EMBED), dtype=jnp.float32)

    out = block_forward(x, params)
    jax.block_until_ready(out)

    ref = block_forward_ref(x, params)
    assert out.shape == (BATCH, SEQ_LEN, N_EMBED)
    # tolerance covers bf16 matmul operands (f32 accumulation) and the
    # approximate (EUP) reciprocal in the softmax denominator
    assert jnp.allclose(out, ref, atol=2e-2, rtol=2e-2), "mismatch vs reference"
    # TODO(synk): training-mode dropout (p=0.2) is not implemented (eval-mode identity).
    print("KERNEL_OK")
</pallas_src>

<mosaic_0001>
module attributes {stable_mosaic.version = 11 : i64} {
  func.func @block_kernel(%arg0: i32, %arg1: memref<1x64x384xf32, #tpu.memory_space<vmem>>, %arg2: memref<1x384xf32, #tpu.memory_space<vmem>>, %arg3: memref<1x384xf32, #tpu.memory_space<vmem>>, %arg4: memref<384x1152xbf16, #tpu.memory_space<vmem>>, %arg5: memref<384x384xbf16, #tpu.memory_space<vmem>>, %arg6: memref<1x384xf32, #tpu.memory_space<vmem>>, %arg7: memref<1x384xf32, #tpu.memory_space<vmem>>, %arg8: memref<1x384xf32, #tpu.memory_space<vmem>>, %arg9: memref<384x1536xbf16, #tpu.memory_space<vmem>>, %arg10: memref<1x1536xf32, #tpu.memory_space<vmem>>, %arg11: memref<1536x384xbf16, #tpu.memory_space<vmem>>, %arg12: memref<1x384xf32, #tpu.memory_space<vmem>>, %arg13: memref<1x64x384xf32, #tpu.memory_space<vmem>>, %arg14: memref<64x384xf32, #tpu.memory_space<vmem>>) attributes {dimension_semantics = [#tpu.dimension_semantics<parallel>], iteration_bounds = array<i64: 2>, scalar_prefetch = 0 : i64, scratch_operands = 1 : i64, tpu.core_type = #tpu.core_type<tc>, window_params = [{transform_indices = @transform_0, window_bounds = array<i64: 1, 64, 384>}, {pipeline_mode = #tpu.pipeline_mode<synchronous>, transform_indices = @transform_1, window_bounds = array<i64: 1, 384>}, {pipeline_mode = #tpu.pipeline_mode<synchronous>, transform_indices = @transform_2, window_bounds = array<i64: 1, 384>}, {pipeline_mode = #tpu.pipeline_mode<synchronous>, transform_indices = @transform_3, window_bounds = array<i64: 384, 1152>}, {pipeline_mode = #tpu.pipeline_mode<synchronous>, transform_indices = @transform_4, window_bounds = array<i64: 384, 384>}, {pipeline_mode = #tpu.pipeline_mode<synchronous>, transform_indices = @transform_5, window_bounds = array<i64: 1, 384>}, {pipeline_mode = #tpu.pipeline_mode<synchronous>, transform_indices = @transform_6, window_bounds = array<i64: 1, 384>}, {pipeline_mode = #tpu.pipeline_mode<synchronous>, transform_indices = @transform_7, window_bounds = array<i64: 1, 384>}, {pipeline_mode = #tpu.pipeline_mode<synchronous>, transform_indices = @transform_8, window_bounds = array<i64: 384, 1536>}, {pipeline_mode = #tpu.pipeline_mode<synchronous>, transform_indices = @transform_9, window_bounds = array<i64: 1, 1536>}, {pipeline_mode = #tpu.pipeline_mode<synchronous>, transform_indices = @transform_10, window_bounds = array<i64: 1536, 384>}, {pipeline_mode = #tpu.pipeline_mode<synchronous>, transform_indices = @transform_11, window_bounds = array<i64: 1, 384>}, {transform_indices = @transform_12, window_bounds = array<i64: 1, 64, 384>}]} {
    %c0 = arith.constant 0 : index
    %c0_0 = arith.constant 0 : index
    %c0_1 = arith.constant 0 : index
    %0 = vector.load %arg1[%c0, %c0_0, %c0_1] : memref<1x64x384xf32, #tpu.memory_space<vmem>>, vector<1x64x384xf32>
    %1 = vector.shape_cast %0 : vector<1x64x384xf32> to vector<64x384xf32>
    %c0_2 = arith.constant 0 : index
    %c0_3 = arith.constant 0 : index
    %2 = vector.load %arg2[%c0_2, %c0_3] : memref<1x384xf32, #tpu.memory_space<vmem>>, vector<1x384xf32>
    %c0_4 = arith.constant 0 : index
    %c0_5 = arith.constant 0 : index
    %3 = vector.load %arg3[%c0_4, %c0_5] : memref<1x384xf32, #tpu.memory_space<vmem>>, vector<1x384xf32>
    %cst = arith.constant dense<0.000000e+00> : vector<64xf32>
    %4 = vector.multi_reduction <add>, %1, %cst [1] : vector<64x384xf32> to vector<64xf32>
    %5 = vector.shape_cast %4 : vector<64xf32> to vector<64x1xf32>
    %cst_6 = arith.constant 3.840000e+02 : f32
    %6 = vector.broadcast %cst_6 : f32 to vector<64x1xf32>
    %7 = arith.divf %5, %6 : vector<64x1xf32>
    %8 = vector.broadcast %7 : vector<64x1xf32> to vector<64x384xf32>
    %9 = arith.subf %1, %8 : vector<64x384xf32>
    %10 = arith.mulf %9, %9 : vector<64x384xf32>
    %cst_7 = arith.constant dense<0.000000e+00> : vector<64xf32>
    %11 = vector.multi_reduction <add>, %10, %cst_7 [1] : vector<64x384xf32> to vector<64xf32>
    %12 = vector.shape_cast %11 : vector<64xf32> to vector<64x1xf32>
    %cst_8 = arith.constant 3.840000e+02 : f32
    %13 = vector.broadcast %cst_8 : f32 to vector<64x1xf32>
    %14 = arith.divf %12, %13 : vector<64x1xf32>
    %15 = vector.broadcast %7 : vector<64x1xf32> to vector<64x384xf32>
    %16 = arith.subf %1, %15 : vector<64x384xf32>
    %cst_9 = arith.constant 9.99999974E-6 : f32
    %17 = vector.broadcast %cst_9 : f32 to vector<64x1xf32>
    %18 = arith.addf %14, %17 : vector<64x1xf32>
    %19 = math.rsqrt %18 : vector<64x1xf32>
    %20 = vector.broadcast %19 : vector<64x1xf32> to vector<64x384xf32>
    %21 = arith.mulf %16, %20 : vector<64x384xf32>
    %22 = vector.broadcast %2 : vector<1x384xf32> to vector<64x384xf32>
    %23 = arith.mulf %21, %22 : vector<64x384xf32>
    %24 = vector.broadcast %3 : vector<1x384xf32> to vector<64x384xf32>
    %25 = arith.addf %23, %24 : vector<64x384xf32>
    %26 = arith.truncf %25 : vector<64x384xf32> to vector<64x384xbf16>
    %c0_10 = arith.constant 0 : index
    %c0_11 = arith.constant 0 : index
    %27 = vector.load %arg4[%c0_10, %c0_11] : memref<384x1152xbf16, #tpu.memory_space<vmem>>, vector<384x1152xbf16>
    %cst_12 = arith.constant dense<0.000000e+00> : vector<64x1152xf32>
    %28 = tpu.matmul %26, %27, %cst_12 {dimension_numbers = #tpu.dot_dimension_numbers<[1], [0], [0], [1], [0, 0, 1, 1], [], []>} : vector<64x384xbf16>, vector<384x1152xbf16>, vector<64x1152xf32> -> vector<64x1152xf32>
    %29 = vector.extract_strided_slice %28 {offsets = [0, 0], sizes = [64, 384], strides = [1, 1]} : vector<64x1152xf32> to vector<64x384xf32>
    %30 = vector.extract_strided_slice %28 {offsets = [0, 384], sizes = [64, 384], strides = [1, 1]} : vector<64x1152xf32> to vector<64x384xf32>
    %31 = vector.extract_strided_slice %28 {offsets = [0, 768], sizes = [64, 384], strides = [1, 1]} : vector<64x1152xf32> to vector<64x384xf32>
    %32 = tpu.iota {dimensions = array<i32: 0>} : vector<64x64xi32>
    %33 = tpu.iota {dimensions = array<i32: 1>} : vector<64x64xi32>
    %34 = arith.cmpi sge, %32, %33 : vector<64x64xi32>
    %cst_13 = arith.constant 0.000000e+00 : f32
    %cst_14 = arith.constant 0xFF800000 : f32
    %35 = vector.broadcast %cst_13 : f32 to vector<64x64xf32>
    %36 = vector.broadcast %cst_14 : f32 to vector<64x64xf32>
    %37 = arith.select %34, %35, %36 : vector<64x64xi1>, vector<64x64xf32>
    %38 = vector.extract_strided_slice %29 {offsets = [0, 0], sizes = [64, 64], strides = [1, 1]} : vector<64x384xf32> to vector<64x64xf32>
    %39 = arith.truncf %38 : vector<64x64xf32> to vector<64x64xbf16>
    %40 = vector.extract_strided_slice %30 {offsets = [0, 0], sizes = [64, 64], strides = [1, 1]} : vector<64x384xf32> to vector<64x64xf32>
    %41 = arith.truncf %40 : vector<64x64xf32> to vector<64x64xbf16>
    %42 = vector.extract_strided_slice %31 {offsets = [0, 0], sizes = [64, 64], strides = [1, 1]} : vector<64x384xf32> to vector<64x64xf32>
    %43 = arith.truncf %42 : vector<64x64xf32> to vector<64x64xbf16>
    "tpu.trace_start"() <{level = 10 : i32, message = "td,sd->ts"}> : () -> ()
    %cst_15 = arith.constant dense<0.000000e+00> : vector<64x64xf32>
    %44 = tpu.matmul %39, %41, %cst_15 {dimension_numbers = #tpu.dot_dimension_numbers<[1], [1], [0], [0], [0, 0, 1, 0], [], []>} : vector<64x64xbf16>, vector<64x64xbf16>, vector<64x64xf32> -> vector<64x64xf32>
    "tpu.trace_stop"() : () -> ()
    %45 = arith.addf %44, %37 : vector<64x64xf32>
    %cst_16 = arith.constant dense<0xFF800000> : vector<64xf32>
    %46 = vector.multi_reduction <maximumf>, %45, %cst_16 [1] : vector<64x64xf32> to vector<64xf32>
    %47 = vector.shape_cast %46 : vector<64xf32> to vector<64x1xf32>
    %48 = vector.broadcast %47 : vector<64x1xf32> to vector<64x64xf32>
    %49 = arith.subf %45, %48 : vector<64x64xf32>
    %50 = math.exp %49 : vector<64x64xf32>
    %cst_17 = arith.constant dense<0.000000e+00> : vector<64xf32>
    %51 = vector.multi_reduction <add>, %50, %cst_17 [1] : vector<64x64xf32> to vector<64xf32>
    %52 = vector.shape_cast %51 : vector<64xf32> to vector<64x1xf32>
    %53 = tpu.reciprocal %52 {approx = true} : vector<64x1xf32> -> vector<64x1xf32>
    %54 = vector.broadcast %53 : vector<64x1xf32> to vector<64x64xf32>
    %55 = arith.mulf %50, %54 : vector<64x64xf32>
    %56 = arith.truncf %55 : vector<64x64xf32> to vector<64x64xbf16>
    %cst_18 = arith.constant dense<0.000000e+00> : vector<64x64xf32>
    %57 = tpu.matmul %56, %43, %cst_18 {dimension_numbers = #tpu.dot_dimension_numbers<[1], [0], [0], [1], [0, 0, 1, 1], [], []>} : vector<64x64xbf16>, vector<64x64xbf16>, vector<64x64xf32> -> vector<64x64xf32>
    %c0_19 = arith.constant 0 : index
    %c0_20 = arith.constant 0 : index
    %58 = vector.load %arg14[%c0_19, %c0_20] : memref<64x384xf32, #tpu.memory_space<vmem>>, vector<64x64xf32>
    tpu.vector_store %arg14[%c0_19, %c0_20], %57 {strides = array<i32>} : memref<64x384xf32, #tpu.memory_space<vmem>>, vector<64x64xf32>,
    %59 = vector.extract_strided_slice %29 {offsets = [0, 64], sizes = [64, 64], strides = [1, 1]} : vector<64x384xf32> to vector<64x64xf32>
    %60 = arith.truncf %59 : vector<64x64xf32> to vector<64x64xbf16>
    %61 = vector.extract_strided_slice %30 {offsets = [0, 64], sizes = [64, 64], strides = [1, 1]} : vector<64x384xf32> to vector<64x64xf32>
    %62 = arith.truncf %61 : vector<64x64xf32> to vector<64x64xbf16>
    %63 = vector.extract_strided_slice %31 {offsets = [0, 64], sizes = [64, 64], strides = [1, 1]} : vector<64x384xf32> to vector<64x64xf32>
    %64 = arith.truncf %63 : vector<64x64xf32> to vector<64x64xbf16>
    "tpu.trace_start"() <{level = 10 : i32, message = "td,sd->ts"}> : () -> ()
    %cst_21 = arith.constant dense<0.000000e+00> : vector<64x64xf32>
    %65 = tpu.matmul %60, %62, %cst_21 {dimension_numbers = #tpu.dot_dimension_numbers<[1], [1], [0], [0], [0, 0, 1, 0], [], []>} : vector<64x64xbf16>, vector<64x64xbf16>, vector<64x64xf32> -> vector<64x64xf32>
    "tpu.trace_stop"() : () -> ()
    %66 = arith.addf %65, %37 : vector<64x64xf32>
    %cst_22 = arith.constant dense<0xFF800000> : vector<64xf32>
    %67 = vector.multi_reduction <maximumf>, %66, %cst_22 [1] : vector<64x64xf32> to vector<64xf32>
    %68 = vector.shape_cast %67 : vector<64xf32> to vector<64x1xf32>
    %69 = vector.broadcast %68 : vector<64x1xf32> to vector<64x64xf32>
    %70 = arith.subf %66, %69 : vector<64x64xf32>
    %71 = math.exp %70 : vector<64x64xf32>
    %cst_23 = arith.constant dense<0.000000e+00> : vector<64xf32>
    %72 = vector.multi_reduction <add>, %71, %cst_23 [1] : vector<64x64xf32> to vector<64xf32>
    %73 = vector.shape_cast %72 : vector<64xf32> to vector<64x1xf32>
    %74 = tpu.reciprocal %73 {approx = true} : vector<64x1xf32> -> vector<64x1xf32>
    %75 = vector.broadcast %74 : vector<64x1xf32> to vector<64x64xf32>
    %76 = arith.mulf %71, %75 : vector<64x64xf32>
    %77 = arith.truncf %76 : vector<64x64xf32> to vector<64x64xbf16>
    %cst_24 = arith.constant dense<0.000000e+00> : vector<64x64xf32>
    %78 = tpu.matmul %77, %64, %cst_24 {dimension_numbers = #tpu.dot_dimension_numbers<[1], [0], [0], [1], [0, 0, 1, 1], [], []>} : vector<64x64xbf16>, vector<64x64xbf16>, vector<64x64xf32> -> vector<64x64xf32>
    %c0_25 = arith.constant 0 : index
    %c64 = arith.constant 64 : index
    %79 = vector.load %arg14[%c0_25, %c64] : memref<64x384xf32, #tpu.memory_space<vmem>>, vector<64x64xf32>
    tpu.vector_store %arg14[%c0_25, %c64], %78 {strides = array<i32>} : memref<64x384xf32, #tpu.memory_space<vmem>>, vector<64x64xf32>,
    %80 = vector.extract_strided_slice %29 {offsets = [0, 128], sizes = [64, 64], strides = [1, 1]} : vector<64x384xf32> to vector<64x64xf32>
    %81 = arith.truncf %80 : vector<64x64xf32> to vector<64x64xbf16>
    %82 = vector.extract_strided_slice %30 {offsets = [0, 128], sizes = [64, 64], strides = [1, 1]} : vector<64x384xf32> to vector<64x64xf32>
    %83 = arith.truncf %82 : vector<64x64xf32> to vector<64x64xbf16>
    %84 = vector.extract_strided_slice %31 {offsets = [0, 128], sizes = [64, 64], strides = [1, 1]} : vector<64x384xf32> to vector<64x64xf32>
    %85 = arith.truncf %84 : vector<64x64xf32> to vector<64x64xbf16>
    "tpu.trace_start"() <{level = 10 : i32, message = "td,sd->ts"}> : () -> ()
    %cst_26 = arith.constant dense<0.000000e+00> : vector<64x64xf32>
    %86 = tpu.matmul %81, %83, %cst_26 {dimension_numbers = #tpu.dot_dimension_numbers<[1], [1], [0], [0], [0, 0, 1, 0], [], []>} : vector<64x64xbf16>, vector<64x64xbf16>, vector<64x64xf32> -> vector<64x64xf32>
    "tpu.trace_stop"() : () -> ()
    %87 = arith.addf %86, %37 : vector<64x64xf32>
    %cst_27 = arith.constant dense<0xFF800000> : vector<64xf32>
    %88 = vector.multi_reduction <maximumf>, %87, %cst_27 [1] : vector<64x64xf32> to vector<64xf32>
    %89 = vector.shape_cast %88 : vector<64xf32> to vector<64x1xf32>
    %90 = vector.broadcast %89 : vector<64x1xf32> to vector<64x64xf32>
    %91 = arith.subf %87, %90 : vector<64x64xf32>
    %92 = math.exp %91 : vector<64x64xf32>
    %cst_28 = arith.constant dense<0.000000e+00> : vector<64xf32>
    %93 = vector.multi_reduction <add>, %92, %cst_28 [1] : vector<64x64xf32> to vector<64xf32>
    %94 = vector.shape_cast %93 : vector<64xf32> to vector<64x1xf32>
    %95 = tpu.reciprocal %94 {approx = true} : vector<64x1xf32> -> vector<64x1xf32>
    %96 = vector.broadcast %95 : vector<64x1xf32> to vector<64x64xf32>
    %97 = arith.mulf %92, %96 : vector<64x64xf32>
    %98 = arith.truncf %97 : vector<64x64xf32> to vector<64x64xbf16>
    %cst_29 = arith.constant dense<0.000000e+00> : vector<64x64xf32>
    %99 = tpu.matmul %98, %85, %cst_29 {dimension_numbers = #tpu.dot_dimension_numbers<[1], [0], [0], [1], [0, 0, 1, 1], [], []>} : vector<64x64xbf16>, vector<64x64xbf16>, vector<64x64xf32> -> vector<64x64xf32>
    %c0_30 = arith.constant 0 : index
    %c128 = arith.constant 128 : index
    %100 = vector.load %arg14[%c0_30, %c128] : memref<64x384xf32, #tpu.memory_space<vmem>>, vector<64x64xf32>
    tpu.vector_store %arg14[%c0_30, %c128], %99 {strides = array<i32>} : memref<64x384xf32, #tpu.memory_space<vmem>>, vector<64x64xf32>,
    %101 = vector.extract_strided_slice %29 {offsets = [0, 192], sizes = [64, 64], strides = [1, 1]} : vector<64x384xf32> to vector<64x64xf32>
    %102 = arith.truncf %101 : vector<64x64xf32> to vector<64x64xbf16>
    %103 = vector.extract_strided_slice %30 {offsets = [0, 192], sizes = [64, 64], strides = [1, 1]} : vector<64x384xf32> to vector<64x64xf32>
    %104 = arith.truncf %103 : vector<64x64xf32> to vector<64x64xbf16>
    %105 = vector.extract_strided_slice %31 {offsets = [0, 192], sizes = [64, 64], strides = [1, 1]} : vector<64x384xf32> to vector<64x64xf32>
    %106 = arith.truncf %105 : vector<64x64xf32> to vector<64x64xbf16>
    "tpu.trace_start"() <{level = 10 : i32, message = "td,sd->ts"}> : () -> ()
    %cst_31 = arith.constant dense<0.000000e+00> : vector<64x64xf32>
    %107 = tpu.matmul %102, %104, %cst_31 {dimension_numbers = #tpu.dot_dimension_numbers<[1], [1], [0], [0], [0, 0, 1, 0], [], []>} : vector<64x64xbf16>, vector<64x64xbf16>, vector<64x64xf32> -> vector<64x64xf32>
    "tpu.trace_stop"() : () -> ()
    %108 = arith.addf %107, %37 : vector<64x64xf32>
    %cst_32 = arith.constant dense<0xFF800000> : vector<64xf32>
    %109 = vector.multi_reduction <maximumf>, %108, %cst_32 [1] : vector<64x64xf32> to vector<64xf32>
    %110 = vector.shape_cast %109 : vector<64xf32> to vector<64x1xf32>
    %111 = vector.broadcast %110 : vector<64x1xf32> to vector<64x64xf32>
    %112 = arith.subf %108, %111 : vector<64x64xf32>
    %113 = math.exp %112 : vector<64x64xf32>
    %cst_33 = arith.constant dense<0.000000e+00> : vector<64xf32>
    %114 = vector.multi_reduction <add>, %113, %cst_33 [1] : vector<64x64xf32> to vector<64xf32>
    %115 = vector.shape_cast %114 : vector<64xf32> to vector<64x1xf32>
    %116 = tpu.reciprocal %115 {approx = true} : vector<64x1xf32> -> vector<64x1xf32>
    %117 = vector.broadcast %116 : vector<64x1xf32> to vector<64x64xf32>
    %118 = arith.mulf %113, %117 : vector<64x64xf32>
    %119 = arith.truncf %118 : vector<64x64xf32> to vector<64x64xbf16>
    %cst_34 = arith.constant dense<0.000000e+00> : vector<64x64xf32>
    %120 = tpu.matmul %119, %106, %cst_34 {dimension_numbers = #tpu.dot_dimension_numbers<[1], [0], [0], [1], [0, 0, 1, 1], [], []>} : vector<64x64xbf16>, vector<64x64xbf16>, vector<64x64xf32> -> vector<64x64xf32>
    %c0_35 = arith.constant 0 : index
    %c192 = arith.constant 192 : index
    %121 = vector.load %arg14[%c0_35, %c192] : memref<64x384xf32, #tpu.memory_space<vmem>>, vector<64x64xf32>
    tpu.vector_store %arg14[%c0_35, %c192], %120 {strides = array<i32>} : memref<64x384xf32, #tpu.memory_space<vmem>>, vector<64x64xf32>,
    %122 = vector.extract_strided_slice %29 {offsets = [0, 256], sizes = [64, 64], strides = [1, 1]} : vector<64x384xf32> to vector<64x64xf32>
    %123 = arith.truncf %122 : vector<64x64xf32> to vector<64x64xbf16>
    %124 = vector.extract_strided_slice %30 {offsets = [0, 256], sizes = [64, 64], strides = [1, 1]} : vector<64x384xf32> to vector<64x64xf32>
    %125 = arith.truncf %124 : vector<64x64xf32> to vector<64x64xbf16>
    %126 = vector.extract_strided_slice %31 {offsets = [0, 256], sizes = [64, 64], strides = [1, 1]} : vector<64x384xf32> to vector<64x64xf32>
    %127 = arith.truncf %126 : vector<64x64xf32> to vector<64x64xbf16>
    "tpu.trace_start"() <{level = 10 : i32, message = "td,sd->ts"}> : () -> ()
    %cst_36 = arith.constant dense<0.000000e+00> : vector<64x64xf32>
    %128 = tpu.matmul %123, %125, %cst_36 {dimension_numbers = #tpu.dot_dimension_numbers<[1], [1], [0], [0], [0, 0, 1, 0], [], []>} : vector<64x64xbf16>, vector<64x64xbf16>, vector<64x64xf32> -> vector<64x64xf32>
    "tpu.trace_stop"() : () -> ()
    %129 = arith.addf %128, %37 : vector<64x64xf32>
    %cst_37 = arith.constant dense<0xFF800000> : vector<64xf32>
    %130 = vector.multi_reduction <maximumf>, %129, %cst_37 [1] : vector<64x64xf32> to vector<64xf32>
    %131 = vector.shape_cast %130 : vector<64xf32> to vector<64x1xf32>
    %132 = vector.broadcast %131 : vector<64x1xf32> to vector<64x64xf32>
    %133 = arith.subf %129, %132 : vector<64x64xf32>
    %134 = math.exp %133 : vector<64x64xf32>
    %cst_38 = arith.constant dense<0.000000e+00> : vector<64xf32>
    %135 = vector.multi_reduction <add>, %134, %cst_38 [1] : vector<64x64xf32> to vector<64xf32>
    %136 = vector.shape_cast %135 : vector<64xf32> to vector<64x1xf32>
    %137 = tpu.reciprocal %136 {approx = true} : vector<64x1xf32> -> vector<64x1xf32>
    %138 = vector.broadcast %137 : vector<64x1xf32> to vector<64x64xf32>
    %139 = arith.mulf %134, %138 : vector<64x64xf32>
    %140 = arith.truncf %139 : vector<64x64xf32> to vector<64x64xbf16>
    %cst_39 = arith.constant dense<0.000000e+00> : vector<64x64xf32>
    %141 = tpu.matmul %140, %127, %cst_39 {dimension_numbers = #tpu.dot_dimension_numbers<[1], [0], [0], [1], [0, 0, 1, 1], [], []>} : vector<64x64xbf16>, vector<64x64xbf16>, vector<64x64xf32> -> vector<64x64xf32>
    %c0_40 = arith.constant 0 : index
    %c256 = arith.constant 256 : index
    %142 = vector.load %arg14[%c0_40, %c256] : memref<64x384xf32, #tpu.memory_space<vmem>>, vector<64x64xf32>
    tpu.vector_store %arg14[%c0_40, %c256], %141 {strides = array<i32>} : memref<64x384xf32, #tpu.memory_space<vmem>>, vector<64x64xf32>,
    %143 = vector.extract_strided_slice %29 {offsets = [0, 320], sizes = [64, 64], strides = [1, 1]} : vector<64x384xf32> to vector<64x64xf32>
    %144 = arith.truncf %143 : vector<64x64xf32> to vector<64x64xbf16>
    %145 = vector.extract_strided_slice %30 {offsets = [0, 320], sizes = [64, 64], strides = [1, 1]} : vector<64x384xf32> to vector<64x64xf32>
    %146 = arith.truncf %145 : vector<64x64xf32> to vector<64x64xbf16>
    %147 = vector.extract_strided_slice %31 {offsets = [0, 320], sizes = [64, 64], strides = [1, 1]} : vector<64x384xf32> to vector<64x64xf32>
    %148 = arith.truncf %147 : vector<64x64xf32> to vector<64x64xbf16>
    "tpu.trace_start"() <{level = 10 : i32, message = "td,sd->ts"}> : () -> ()
    %cst_41 = arith.constant dense<0.000000e+00> : vector<64x64xf32>
    %149 = tpu.matmul %144, %146, %cst_41 {dimension_numbers = #tpu.dot_dimension_numbers<[1], [1], [0], [0], [0, 0, 1, 0], [], []>} : vector<64x64xbf16>, vector<64x64xbf16>, vector<64x64xf32> -> vector<64x64xf32>
    "tpu.trace_stop"() : () -> ()
    %150 = arith.addf %149, %37 : vector<64x64xf32>
    %cst_42 = arith.constant dense<0xFF800000> : vector<64xf32>
    %151 = vector.multi_reduction <maximumf>, %150, %cst_42 [1] : vector<64x64xf32> to vector<64xf32>
    %152 = vector.shape_cast %151 : vector<64xf32> to vector<64x1xf32>
    %153 = vector.broadcast %152 : vector<64x1xf32> to vector<64x64xf32>
    %154 = arith.subf %150, %153 : vector<64x64xf32>
    %155 = math.exp %154 : vector<64x64xf32>
    %cst_43 = arith.constant dense<0.000000e+00> : vector<64xf32>
    %156 = vector.multi_reduction <add>, %155, %cst_43 [1] : vector<64x64xf32> to vector<64xf32>
    %157 = vector.shape_cast %156 : vector<64xf32> to vector<64x1xf32>
    %158 = tpu.reciprocal %157 {approx = true} : vector<64x1xf32> -> vector<64x1xf32>
    %159 = vector.broadcast %158 : vector<64x1xf32> to vector<64x64xf32>
    %160 = arith.mulf %155, %159 : vector<64x64xf32>
    %161 = arith.truncf %160 : vector<64x64xf32> to vector<64x64xbf16>
    %cst_44 = arith.constant dense<0.000000e+00> : vector<64x64xf32>
    %162 = tpu.matmul %161, %148, %cst_44 {dimension_numbers = #tpu.dot_dimension_numbers<[1], [0], [0], [1], [0, 0, 1, 1], [], []>} : vector<64x64xbf16>, vector<64x64xbf16>, vector<64x64xf32> -> vector<64x64xf32>
    %c0_45 = arith.constant 0 : index
    %c320 = arith.constant 320 : index
    %163 = vector.load %arg14[%c0_45, %c320] : memref<64x384xf32, #tpu.memory_space<vmem>>, vector<64x64xf32>
    tpu.vector_store %arg14[%c0_45, %c320], %162 {strides = array<i32>} : memref<64x384xf32, #tpu.memory_space<vmem>>, vector<64x64xf32>,
    %c0_46 = arith.constant 0 : index
    %c0_47 = arith.constant 0 : index
    %164 = vector.load %arg14[%c0_46, %c0_47] : memref<64x384xf32, #tpu.memory_space<vmem>>, vector<64x384xf32>
    %165 = arith.truncf %164 : vector<64x384xf32> to vector<64x384xbf16>
    %c0_48 = arith.constant 0 : index
    %c0_49 = arith.constant 0 : index
    %166 = vector.load %arg5[%c0_48, %c0_49] : memref<384x384xbf16, #tpu.memory_space<vmem>>, vector<384x384xbf16>
    %cst_50 = arith.constant dense<0.000000e+00> : vector<64x384xf32>
    %167 = tpu.matmul %165, %166, %cst_50 {dimension_numbers = #tpu.dot_dimension_numbers<[1], [0], [0], [1], [0, 0, 1, 1], [], []>} : vector<64x384xbf16>, vector<384x384xbf16>, vector<64x384xf32> -> vector<64x384xf32>
    %c0_51 = arith.constant 0 : index
    %c0_52 = arith.constant 0 : index
    %168 = vector.load %arg6[%c0_51, %c0_52] : memref<1x384xf32, #tpu.memory_space<vmem>>, vector<1x384xf32>
    %169 = vector.broadcast %168 : vector<1x384xf32> to vector<64x384xf32>
    %170 = arith.addf %167, %169 : vector<64x384xf32>
    %171 = arith.addf %1, %170 : vector<64x384xf32>
    %c0_53 = arith.constant 0 : index
    %c0_54 = arith.constant 0 : index
    %172 = vector.load %arg7[%c0_53, %c0_54] : memref<1x384xf32, #tpu.memory_space<vmem>>, vector<1x384xf32>
    %c0_55 = arith.constant 0 : index
    %c0_56 = arith.constant 0 : index
    %173 = vector.load %arg8[%c0_55, %c0_56] : memref<1x384xf32, #tpu.memory_space<vmem>>, vector<1x384xf32>
    %cst_57 = arith.constant dense<0.000000e+00> : vector<64xf32>
    %174 = vector.multi_reduction <add>, %171, %cst_57 [1] : vector<64x384xf32> to vector<64xf32>
    %175 = vector.shape_cast %174 : vector<64xf32> to vector<64x1xf32>
    %cst_58 = arith.constant 3.840000e+02 : f32
    %176 = vector.broadcast %cst_58 : f32 to vector<64x1xf32>
    %177 = arith.divf %175, %176 : vector<64x1xf32>
    %178 = vector.broadcast %177 : vector<64x1xf32> to vector<64x384xf32>
    %179 = arith.subf %171, %178 : vector<64x384xf32>
    %180 = arith.mulf %179, %179 : vector<64x384xf32>
    %cst_59 = arith.constant dense<0.000000e+00> : vector<64xf32>
    %181 = vector.multi_reduction <add>, %180, %cst_59 [1] : vector<64x384xf32> to vector<64xf32>
    %182 = vector.shape_cast %181 : vector<64xf32> to vector<64x1xf32>
    %cst_60 = arith.constant 3.840000e+02 : f32
    %183 = vector.broadcast %cst_60 : f32 to vector<64x1xf32>
    %184 = arith.divf %182, %183 : vector<64x1xf32>
    %185 = vector.broadcast %177 : vector<64x1xf32> to vector<64x384xf32>
    %186 = arith.subf %171, %185 : vector<64x384xf32>
    %cst_61 = arith.constant 9.99999974E-6 : f32
    %187 = vector.broadcast %cst_61 : f32 to vector<64x1xf32>
    %188 = arith.addf %184, %187 : vector<64x1xf32>
    %189 = math.rsqrt %188 : vector<64x1xf32>
    %190 = vector.broadcast %189 : vector<64x1xf32> to vector<64x384xf32>
    %191 = arith.mulf %186, %190 : vector<64x384xf32>
    %192 = vector.broadcast %172 : vector<1x384xf32> to vector<64x384xf32>
    %193 = arith.mulf %191, %192 : vector<64x384xf32>
    %194 = vector.broadcast %173 : vector<1x384xf32> to vector<64x384xf32>
    %195 = arith.addf %193, %194 : vector<64x384xf32>
    %196 = arith.truncf %195 : vector<64x384xf32> to vector<64x384xbf16>
    %c0_62 = arith.constant 0 : index
    %c0_63 = arith.constant 0 : index
    %197 = vector.load %arg9[%c0_62, %c0_63] : memref<384x1536xbf16, #tpu.memory_space<vmem>>, vector<384x1536xbf16>
    %cst_64 = arith.constant dense<0.000000e+00> : vector<64x1536xf32>
    %198 = tpu.matmul %196, %197, %cst_64 {dimension_numbers = #tpu.dot_dimension_numbers<[1], [0], [0], [1], [0, 0, 1, 1], [], []>} : vector<64x384xbf16>, vector<384x1536xbf16>, vector<64x1536xf32> -> vector<64x1536xf32>
    %c0_65 = arith.constant 0 : index
    %c0_66 = arith.constant 0 : index
    %199 = vector.load %arg10[%c0_65, %c0_66] : memref<1x1536xf32, #tpu.memory_space<vmem>>, vector<1x1536xf32>
    %200 = vector.broadcast %199 : vector<1x1536xf32> to vector<64x1536xf32>
    %201 = arith.addf %198, %200 : vector<64x1536xf32>
    %cst_67 = arith.constant 0.000000e+00 : f32
    %202 = vector.broadcast %cst_67 : f32 to vector<64x1536xf32>
    %203 = arith.maximumf %201, %202 : vector<64x1536xf32>
    %204 = arith.truncf %203 : vector<64x1536xf32> to vector<64x1536xbf16>
    %c0_68 = arith.constant 0 : index
    %c0_69 = arith.constant 0 : index
    %205 = vector.load %arg11[%c0_68, %c0_69] : memref<1536x384xbf16, #tpu.memory_space<vmem>>, vector<1536x384xbf16>
    %cst_70 = arith.constant dense<0.000000e+00> : vector<64x384xf32>
    %206 = tpu.matmul %204, %205, %cst_70 {dimension_numbers = #tpu.dot_dimension_numbers<[1], [0], [0], [1], [0, 0, 1, 1], [], []>} : vector<64x1536xbf16>, vector<1536x384xbf16>, vector<64x384xf32> -> vector<64x384xf32>
    %c0_71 = arith.constant 0 : index
    %c0_72 = arith.constant 0 : index
    %207 = vector.load %arg12[%c0_71, %c0_72] : memref<1x384xf32, #tpu.memory_space<vmem>>, vector<1x384xf32>
    %208 = vector.broadcast %207 : vector<1x384xf32> to vector<64x384xf32>
    %209 = arith.addf %206, %208 : vector<64x384xf32>
    %cst_73 = arith.constant 0.000000e+00 : f32
    %210 = vector.broadcast %cst_73 : f32 to vector<64x384xf32>
    %211 = arith.maximumf %209, %210 : vector<64x384xf32>
    %212 = arith.addf %171, %211 : vector<64x384xf32>
    %213 = vector.shape_cast %212 : vector<64x384xf32> to vector<1x64x384xf32>
    %c0_74 = arith.constant 0 : index
    %c0_75 = arith.constant 0 : index
    %c0_76 = arith.constant 0 : index
    %214 = vector.load %arg13[%c0_74, %c0_75, %c0_76] : memref<1x64x384xf32, #tpu.memory_space<vmem>>, vector<1x64x384xf32>
    tpu.vector_store %arg13[%c0_74, %c0_75, %c0_76], %213 {strides = array<i32>} : memref<1x64x384xf32, #tpu.memory_space<vmem>>, vector<1x64x384xf32>,
    return
  }
  func.func @transform_0(%arg0: i32) -> (i32, i32, i32) {
    %c0_i32 = arith.constant 0 : i32
    %c0_i32_0 = arith.constant 0 : i32
    %c0_i32_1 = arith.constant 0 : i32
    return %arg0, %c0_i32, %c0_i32_0 : i32, i32, i32
  }
  func.func @transform_1(%arg0: i32) -> (i32, i32) {
    %c0_i32 = arith.constant 0 : i32
    %c0_i32_0 = arith.constant 0 : i32
    %c0_i32_1 = arith.constant 0 : i32
    return %c0_i32, %c0_i32_0 : i32, i32
  }
  func.func @transform_2(%arg0: i32) -> (i32, i32) {
    %c0_i32 = arith.constant 0 : i32
    %c0_i32_0 = arith.constant 0 : i32
    %c0_i32_1 = arith.constant 0 : i32
    return %c0_i32, %c0_i32_0 : i32, i32
  }
  func.func @transform_3(%arg0: i32) -> (i32, i32) {
    %c0_i32 = arith.constant 0 : i32
    %c0_i32_0 = arith.constant 0 : i32
    %c0_i32_1 = arith.constant 0 : i32
    return %c0_i32, %c0_i32_0 : i32, i32
  }
  func.func @transform_4(%arg0: i32) -> (i32, i32) {
    %c0_i32 = arith.constant 0 : i32
    %c0_i32_0 = arith.constant 0 : i32
    %c0_i32_1 = arith.constant 0 : i32
    return %c0_i32, %c0_i32_0 : i32, i32
  }
  func.func @transform_5(%arg0: i32) -> (i32, i32) {
    %c0_i32 = arith.constant 0 : i32
    %c0_i32_0 = arith.constant 0 : i32
    %c0_i32_1 = arith.constant 0 : i32
    return %c0_i32, %c0_i32_0 : i32, i32
  }
  func.func @transform_6(%arg0: i32) -> (i32, i32) {
    %c0_i32 = arith.constant 0 : i32
    %c0_i32_0 = arith.constant 0 : i32
    %c0_i32_1 = arith.constant 0 : i32
    return %c0_i32, %c0_i32_0 : i32, i32
  }
  func.func @transform_7(%arg0: i32) -> (i32, i32) {
    %c0_i32 = arith.constant 0 : i32
    %c0_i32_0 = arith.constant 0 : i32
    %c0_i32_1 = arith.constant 0 : i32
    return %c0_i32, %c0_i32_0 : i32, i32
  }
  func.func @transform_8(%arg0: i32) -> (i32, i32) {
    %c0_i32 = arith.constant 0 : i32
    %c0_i32_0 = arith.constant 0 : i32
    %c0_i32_1 = arith.constant 0 : i32
    return %c0_i32, %c0_i32_0 : i32, i32
  }
  func.func @transform_9(%arg0: i32) -> (i32, i32) {
    %c0_i32 = arith.constant 0 : i32
    %c0_i32_0 = arith.constant 0 : i32
    %c0_i32_1 = arith.constant 0 : i32
    return %c0_i32, %c0_i32_0 : i32, i32
  }
  func.func @transform_10(%arg0: i32) -> (i32, i32) {
    %c0_i32 = arith.constant 0 : i32
    %c0_i32_0 = arith.constant 0 : i32
    %c0_i32_1 = arith.constant 0 : i32
    return %c0_i32, %c0_i32_0 : i32, i32
  }
  func.func @transform_11(%arg0: i32) -> (i32, i32) {
    %c0_i32 = arith.constant 0 : i32
    %c0_i32_0 = arith.constant 0 : i32
    %c0_i32_1 = arith.constant 0 : i32
    return %c0_i32, %c0_i32_0 : i32, i32
  }
  func.func @transform_12(%arg0: i32) -> (i32, i32, i32) {
    %c0_i32 = arith.constant 0 : i32
    %c0_i32_0 = arith.constant 0 : i32
    %c0_i32_1 = arith.constant 0 : i32
    return %arg0, %c0_i32, %c0_i32_0 : i32, i32, i32
  }
}

</mosaic_0001>

<llo_original>
// kernel: block_forward.1
$region0: #{block_forward.1}
  #allocation0 [shape = 'u32[]', space=smem, size = 0x4, offset = 0x4, fixed_abs, tag = 'smem constant byte address 0x4 - core index']
  #allocation1 [shape = 'u32[144,128]{1,0:T(1,128)}', space=vmem, size = 0x12000, scoped, tag = 'internal scratch']
  #allocation2 [shape = 'f32[64,384]{1,0:T(8,128)}', space=vmem, size = 0x18000, scoped, tag = 'scratch operand']
  %s0 = inlined_call_operand.vmem [shape: f32[2,64,384], index: 0, kind: input, shape index: {}]
  %s1 = inlined_call_operand.vmem [shape: f32[1,384], index: 1, kind: input, shape index: {}]
  %s2 = inlined_call_operand.vmem [shape: f32[1,384], index: 2, kind: input, shape index: {}]
  %s3 = inlined_call_operand.vmem [shape: bf16[384,1152], index: 3, kind: input, shape index: {}]
  %s4 = inlined_call_operand.vmem [shape: bf16[384,384], index: 4, kind: input, shape index: {}]
  %s5 = inlined_call_operand.vmem [shape: f32[1,384], index: 5, kind: input, shape index: {}]
  %s6 = inlined_call_operand.vmem [shape: f32[1,384], index: 6, kind: input, shape index: {}]
  %s7 = inlined_call_operand.vmem [shape: f32[1,384], index: 7, kind: input, shape index: {}]
  %s8 = inlined_call_operand.vmem [shape: bf16[384,1536], index: 8, kind: input, shape index: {}]
  %s9 = inlined_call_operand.vmem [shape: f32[1,1536], index: 9, kind: input, shape index: {}]
  %s10 = inlined_call_operand.vmem [shape: bf16[1536,384], index: 10, kind: input, shape index: {}]
  %s11 = inlined_call_operand.vmem [shape: f32[1,384], index: 11, kind: input, shape index: {}]
  %s12 = inlined_call_operand.hbm [shape: f32[2,64,384], index: 12, kind: output, shape index: {}]
  %s13 = sld [smem:[#allocation0]]
  $region81: #{block_forward.1} parent=0
    _
  %s15 = ssub.s32 1, %s13
  %s16 = scalar_select 0, %s15, %s13
  $region1: #{block_forward.1} parent=0
    #allocation3 [shape = 'u8[196608]{0}', space=vmem, size = 0x30000, scoped, tag = 'output window, operand 0']
    #allocation4 [shape = 's32[2]{0}', space=sflag, size = 0x8, scoped, tag = 'scoped memory for block_forward.1']
    %17 = vsyncpa [#allocation4], 0
    %s18 = scalar_lea.sflag [#allocation4], 1
    %19 = vsyncpa %s18, 0
    loop: start=0, step=1, limit=4
    $region2: #{block_forward.1} parent=1 // loop_pre_header
      _
    $region3: #{block_forward.1} parent=1 // loop_header
      %s21 = sphi 0, %s25
      %p22 = scmp.ge.s32.totalorder %s21, 4
      %s31 = sphi 0, %s33
      %s34 = sphi 0, %s31
      %s35 = sphi 0, %s34
      %s51 = sphi 0, %s35
      %s55 = sphi 0, %s55
      %s57 = sphi 0, %s55
      %s58 = sphi 0, %s57
      %s72 = sphi 0, %s58
      %s76 = sphi 0, %s76
      %s78 = sphi 0, %s76
      %s79 = sphi 0, %s78
      %s93 = sphi 0, %s79
      %s97 = sphi 0, %s97
      %s99 = sphi 0, %s97
      %s100 = sphi 0, %s99
      %s114 = sphi 0, %s100
      %s118 = sphi 0, %s118
      %s120 = sphi 0, %s118
      %s121 = sphi 0, %s120
      %s135 = sphi 0, %s121
      %s139 = sphi 0, %s139
      %s141 = sphi 0, %s139
      %s142 = sphi 0, %s141
      %s156 = sphi 0, %s142
      %s160 = sphi 0, %s160
      %s162 = sphi 0, %s160
      %s163 = sphi 0, %s162
      %s177 = sphi 0, %s163
      %s181 = sphi 0, %s181
      %s183 = sphi 0, %s181
      %s184 = sphi 0, %s183
      %s198 = sphi 0, %s184
      %s202 = sphi 0, %s202
      %s204 = sphi 0, %s202
      %s205 = sphi 0, %s204
      %s219 = sphi 0, %s205
      %s223 = sphi 0, %s223
      %s225 = sphi 0, %s223
      %s226 = sphi 0, %s225
      %s240 = sphi 0, %s226
      %s244 = sphi 0, %s244
      %s246 = sphi 0, %s244
      %s247 = sphi 0, %s246
      %s261 = sphi 0, %s247
      %s265 = sphi 0, %s265
      %s267 = sphi 0, %s265
      %s268 = sphi 0, %s267
      %s282 = sphi 0, %s268
      %s288 = sphi 0, %s290
      %s291 = sphi 0, %s288
      %s292 = sphi 0, %s291
      %s308 = sphi 0, %s292
    $region4: #{block_forward.1} parent=1 // loop_header_branch
      %24 = sbr.rel (%p22) target = $region8
    $region5: #{block_forward.1} parent=1 // loop_body
      %s26 = ssub.s32 %s21, 1
      %s27 = ssub.s32 %s21, 2
      %s28 = sadd.s32 %s21, 1
      %s29 = ssub.s32 %s21, %s28
      %p30 = scmp.eq.s32.totalorder %s29, 0
      %s32 = sadd.s32 %s31, 1
      %s33 = scalar_select %p30, %s31, %s32
      %p36 = pneg %p30
      %p37 = scmp.eq.s32.totalorder %s21, 1
      %p38 = por %p36, %p37
      %p39 = scmp.ne.s32.totalorder %s31, %s34
      %p40 = scmp.eq.s32.totalorder %s21, 0
      %p41 = por %p39, %p40
      %p42 = scmp.ne.s32.totalorder %s31, %s34
      %p43 = scmp.eq.s32.totalorder %s26, 1
      %p44 = por %p42, %p43
      %p45 = scmp.ne.s32.totalorder %s34, %s35
      %p46 = scmp.eq.s32.totalorder %s26, 0
      %p47 = por %p45, %p46
      %p48 = scmp.ne.s32.totalorder %s34, %s35
      %p49 = scmp.eq.s32.totalorder %s27, 1
      %p50 = por %p48, %p49
      %p52 = scmp.ne.s32.totalorder %s35, %s51
      %p53 = scmp.eq.s32.totalorder %s27, 0
      %p54 = por %p52, %p53
      %s56 = sadd.s32 %s55, 1
      %p59 = scmp.eq.s32.totalorder %s21, 1
      %p60 = scmp.ne.s32.totalorder %s55, %s57
      %p61 = scmp.eq.s32.totalorder %s21, 0
      %p62 = por %p60, %p61
      %p63 = scmp.ne.s32.totalorder %s55, %s57
      %p64 = scmp.eq.s32.totalorder %s26, 1
      %p65 = por %p63, %p64
      %p66 = scmp.ne.s32.totalorder %s57, %s58
      %p67 = scmp.eq.s32.totalorder %s26, 0
      %p68 = por %p66, %p67
      %p69 = scmp.ne.s32.totalorder %s57, %s58
      %p70 = scmp.eq.s32.totalorder %s27, 1
      %p71 = por %p69, %p70
      %p73 = scmp.ne.s32.totalorder %s58, %s72
      %p74 = scmp.eq.s32.totalorder %s27, 0
      %p75 = por %p73, %p74
      %s77 = sadd.s32 %s76, 1
      %p80 = scmp.eq.s32.totalorder %s21, 1
      %p81 = scmp.ne.s32.totalorder %s76, %s78
      %p82 = scmp.eq.s32.totalorder %s21, 0
      %p83 = por %p81, %p82
      %p84 = scmp.ne.s32.totalorder %s76, %s78
      %p85 = scmp.eq.s32.totalorder %s26, 1
      %p86 = por %p84, %p85
      %p87 = scmp.ne.s32.totalorder %s78, %s79
      %p88 = scmp.eq.s32.totalorder %s26, 0
      %p89 = por %p87, %p88
      %p90 = scmp.ne.s32.totalorder %s78, %s79
      %p91 = scmp.eq.s32.totalorder %s27, 1
      %p92 = por %p90, %p91
      %p94 = scmp.ne.s32.totalorder %s79, %s93
      %p95 = scmp.eq.s32.totalorder %s27, 0
      %p96 = por %p94, %p95
      %s98 = sadd.s32 %s97, 1
      %p101 = scmp.eq.s32.totalorder %s21, 1
      %p102 = scmp.ne.s32.totalorder %s97, %s99
      %p103 = scmp.eq.s32.totalorder %s21, 0
      %p104 = por %p102, %p103
      %p105 = scmp.ne.s32.totalorder %s97, %s99
      %p106 = scmp.eq.s32.totalorder %s26, 1
      %p107 = por %p105, %p106
      %p108 = scmp.ne.s32.totalorder %s99, %s100
      %p109 = scmp.eq.s32.totalorder %s26, 0
      %p110 = por %p108, %p109
      %p111 = scmp.ne.s32.totalorder %s99, %s100
      %p112 = scmp.eq.s32.totalorder %s27, 1
      %p113 = por %p111, %p112
      %p115 = scmp.ne.s32.totalorder %s100, %s114
      %p116 = scmp.eq.s32.totalorder %s27, 0
      %p117 = por %p115, %p116
      %s119 = sadd.s32 %s118, 1
      %p122 = scmp.eq.s32.totalorder %s21, 1
      %p123 = scmp.ne.s32.totalorder %s118, %s120
      %p124 = scmp.eq.s32.totalorder %s21, 0
      %p125 = por %p123, %p124
      %p126 = scmp.ne.s32.totalorder %s118, %s120
      %p127 = scmp.eq.s32.totalorder %s26, 1
      %p128 = por %p126, %p127
      %p129 = scmp.ne.s32.totalorder %s120, %s121
      %p130 = scmp.eq.s32.totalorder %s26, 0
      %p131 = por %p129, %p130
      %p132 = scmp.ne.s32.totalorder %s120, %s121
      %p133 = scmp.eq.s32.totalorder %s27, 1
      %p134 = por %p132, %p133
      %p136 = scmp.ne.s32.totalorder %s121, %s135
      %p137 = scmp.eq.s32.totalorder %s27, 0
      %p138 = por %p136, %p137
      %s140 = sadd.s32 %s139, 1
      %p143 = scmp.eq.s32.totalorder %s21, 1
      %p144 = scmp.ne.s32.totalorder %s139, %s141
      %p145 = scmp.eq.s32.totalorder %s21, 0
      %p146 = por %p144, %p145
      %p147 = scmp.ne.s32.totalorder %s139, %s141
      %p148 = scmp.eq.s32.totalorder %s26, 1
      %p149 = por %p147, %p148
      %p150 = scmp.ne.s32.totalorder %s141, %s142
      %p151 = scmp.eq.s32.totalorder %s26, 0
      %p152 = por %p150, %p151
      %p153 = scmp.ne.s32.totalorder %s141, %s142
      %p154 = scmp.eq.s32.totalorder %s27, 1
      %p155 = por %p153, %p154
      %p157 = scmp.ne.s32.totalorder %s142, %s156
      %p158 = scmp.eq.s32.totalorder %s27, 0
      %p159 = por %p157, %p158
      %s161 = sadd.s32 %s160, 1
      %p164 = scmp.eq.s32.totalorder %s21, 1
      %p165 = scmp.ne.s32.totalorder %s160, %s162
      %p166 = scmp.eq.s32.totalorder %s21, 0
      %p167 = por %p165, %p166
      %p168 = scmp.ne.s32.totalorder %s160, %s162
      %p169 = scmp.eq.s32.totalorder %s26, 1
      %p170 = por %p168, %p169
      %p171 = scmp.ne.s32.totalorder %s162, %s163
      %p172 = scmp.eq.s32.totalorder %s26, 0
      %p173 = por %p171, %p172
      %p174 = scmp.ne.s32.totalorder %s162, %s163
      %p175 = scmp.eq.s32.totalorder %s27, 1
      %p176 = por %p174, %p175
      %p178 = scmp.ne.s32.totalorder %s163, %s177
      %p179 = scmp.eq.s32.totalorder %s27, 0
      %p180 = por %p178, %p179
      %s182 = sadd.s32 %s181, 1
      %p185 = scmp.eq.s32.totalorder %s21, 1
      %p186 = scmp.ne.s32.totalorder %s181, %s183
      %p187 = scmp.eq.s32.totalorder %s21, 0
      %p188 = por %p186, %p187
      %p189 = scmp.ne.s32.totalorder %s181, %s183
      %p190 = scmp.eq.s32.totalorder %s26, 1
      %p191 = por %p189, %p190
      %p192 = scmp.ne.s32.totalorder %s183, %s184
      %p193 = scmp.eq.s32.totalorder %s26, 0
      %p194 = por %p192, %p193
      %p195 = scmp.ne.s32.totalorder %s183, %s184
      %p196 = scmp.eq.s32.totalorder %s27, 1
      %p197 = por %p195, %p196
      %p199 = scmp.ne.s32.totalorder %s184, %s198
      %p200 = scmp.eq.s32.totalorder %s27, 0
      %p201 = por %p199, %p200
      %s203 = sadd.s32 %s202, 1
      %p206 = scmp.eq.s32.totalorder %s21, 1
      %p207 = scmp.ne.s32.totalorder %s202, %s204
      %p208 = scmp.eq.s32.totalorder %s21, 0
      %p209 = por %p207, %p208
      %p210 = scmp.ne.s32.totalorder %s202, %s204
      %p211 = scmp.eq.s32.totalorder %s26, 1
      %p212 = por %p210, %p211
      %p213 = scmp.ne.s32.totalorder %s204, %s205
      %p214 = scmp.eq.s32.totalorder %s26, 0
      %p215 = por %p213, %p214
      %p216 = scmp.ne.s32.totalorder %s204, %s205
      %p217 = scmp.eq.s32.totalorder %s27, 1
      %p218 = por %p216, %p217
      %p220 = scmp.ne.s32.totalorder %s205, %s219
      %p221 = scmp.eq.s32.totalorder %s27, 0
      %p222 = por %p220, %p221
      %s224 = sadd.s32 %s223, 1
      %p227 = scmp.eq.s32.totalorder %s21, 1
      %p228 = scmp.ne.s32.totalorder %s223, %s225
      %p229 = scmp.eq.s32.totalorder %s21, 0
      %p230 = por %p228, %p229
      %p231 = scmp.ne.s32.totalorder %s223, %s225
      %p232 = scmp.eq.s32.totalorder %s26, 1
      %p233 = por %p231, %p232
      %p234 = scmp.ne.s32.totalorder %s225, %s226
      %p235 = scmp.eq.s32.totalorder %s26, 0
      %p236 = por %p234, %p235
      %p237 = scmp.ne.s32.totalorder %s225, %s226
      %p238 = scmp.eq.s32.totalorder %s27, 1
      %p239 = por %p237, %p238
      %p241 = scmp.ne.s32.totalorder %s226, %s240
      %p242 = scmp.eq.s32.totalorder %s27, 0
      %p243 = por %p241, %p242
      %s245 = sadd.s32 %s244, 1
      %p248 = scmp.eq.s32.totalorder %s21, 1
      %p249 = scmp.ne.s32.totalorder %s244, %s246
      %p250 = scmp.eq.s32.totalorder %s21, 0
      %p251 = por %p249, %p250
      %p252 = scmp.ne.s32.totalorder %s244, %s246
      %p253 = scmp.eq.s32.totalorder %s26, 1
      %p254 = por %p252, %p253
      %p255 = scmp.ne.s32.totalorder %s246, %s247
      %p256 = scmp.eq.s32.totalorder %s26, 0
      %p257 = por %p255, %p256
      %p258 = scmp.ne.s32.totalorder %s246, %s247
      %p259 = scmp.eq.s32.totalorder %s27, 1
      %p260 = por %p258, %p259
      %p262 = scmp.ne.s32.totalorder %s247, %s261
      %p263 = scmp.eq.s32.totalorder %s27, 0
      %p264 = por %p262, %p263
      %s266 = sadd.s32 %s265, 1
      %p269 = scmp.eq.s32.totalorder %s21, 1
      %p270 = scmp.ne.s32.totalorder %s265, %s267
      %p271 = scmp.eq.s32.totalorder %s21, 0
      %p272 = por %p270, %p271
      %p273 = scmp.ne.s32.totalorder %s265, %s267
      %p274 = scmp.eq.s32.totalorder %s26, 1
      %p275 = por %p273, %p274
      %p276 = scmp.ne.s32.totalorder %s267, %s268
      %p277 = scmp.eq.s32.totalorder %s26, 0
      %p278 = por %p276, %p277
      %p279 = scmp.ne.s32.totalorder %s267, %s268
      %p280 = scmp.eq.s32.totalorder %s27, 1
      %p281 = por %p279, %p280
      %p283 = scmp.ne.s32.totalorder %s268, %s282
      %p284 = scmp.eq.s32.totalorder %s27, 0
      %p285 = por %p283, %p284
      %s286 = ssub.s32 %s21, %s28
      %p287 = scmp.eq.s32.totalorder %s286, 0
      %s289 = sadd.s32 %s288, 1
      %s290 = scalar_select %p287, %s288, %s289
      %p293 = pneg %p287
      %p294 = scmp.eq.s32.totalorder %s21, 1
      %p295 = por %p293, %p294
      %p296 = scmp.ne.s32.totalorder %s288, %s291
      %p297 = scmp.eq.s32.totalorder %s21, 0
      %p298 = por %p296, %p297
      %p299 = scmp.ne.s32.totalorder %s288, %s291
      %p300 = scmp.eq.s32.totalorder %s26, 1
      %p301 = por %p299, %p300
      %p302 = scmp.ne.s32.totalorder %s291, %s292
      %p303 = scmp.eq.s32.totalorder %s26, 0
      %p304 = por %p302, %p303
      %p305 = scmp.ne.s32.totalorder %s291, %s292
      %p306 = scmp.eq.s32.totalorder %s27, 1
      %p307 = por %p305, %p306
      %p309 = scmp.ne.s32.totalorder %s292, %s308
      %p310 = scmp.eq.s32.totalorder %s27, 0
      %p311 = por %p309, %p310
      %p312 = scmp.le.s32.totalorder 1, %s21
      %p313 = scmp.lt.s32.totalorder %s21, 3
      %p314 = pnand %p312, %p313
      %p315 = pneg %p314
      // Predicated region
      $region9: #{block_forward.1} parent=5 // pred_check
        _
      $region10: #{block_forward.1} parent=5 // pred_check_branch
        %317 = sbr.rel (%p314) target = $region12
      $region11: #{block_forward.1} parent=5 // pred_region
        %s318 = ssub.s32 %s21, 1
        // Predicated region
        $region13: #{block_forward.1} parent=11 // pred_check
          %p319 = pneg %p68
        $region14: #{block_forward.1} parent=11 // pred_check_branch
          %321 = sbr.rel (%p319) target = $region16
        $region15: #{block_forward.1} parent=11 // pred_region
          _
        $region16: #{block_forward.1} parent=11 // pred_fallthru
          _
        // Predicated region
        $region17: #{block_forward.1} parent=11 // pred_check
          %p322 = pneg %p89
        $region18: #{block_forward.1} parent=11 // pred_check_branch
          %324 = sbr.rel (%p322) target = $region20
        $region19: #{block_forward.1} parent=11 // pred_region
          _
        $region20: #{block_forward.1} parent=11 // pred_fallthru
          _
        // Predicated region
        $region21: #{block_forward.1} parent=11 // pred_check
          %p325 = pneg %p110
        $region22: #{block_forward.1} parent=11 // pred_check_branch
          %327 = sbr.rel (%p325) target = $region24
        $region23: #{block_forward.1} parent=11 // pred_region
          _
        $region24: #{block_forward.1} parent=11 // pred_fallthru
          _
        // Predicated region
        $region25: #{block_forward.1} parent=11 // pred_check
          %p328 = pneg %p131
        $region26: #{block_forward.1} parent=11 // pred_check_branch
          %330 = sbr.rel (%p328) target = $region28
        $region27: #{block_forward.1} parent=11 // pred_region
          _
        $region28: #{block_forward.1} parent=11 // pred_fallthru
          _
        // Predicated region
        $region29: #{block_forward.1} parent=11 // pred_check
          %p331 = pneg %p152
        $region30: #{block_forward.1} parent=11 // pred_check_branch
          %333 = sbr.rel (%p331) target = $region32
        $region31: #{block_forward.1} parent=11 // pred_region
          _
        $region32: #{block_forward.1} parent=11 // pred_fallthru
          _
        // Predicated region
        $region33: #{block_forward.1} parent=11 // pred_check
          %p334 = pneg %p173
        $region34: #{block_forward.1} parent=11 // pred_check_branch
          %336 = sbr.rel (%p334) target = $region36
        $region35: #{block_forward.1} parent=11 // pred_region
          _
        $region36: #{block_forward.1} parent=11 // pred_fallthru
          _
        // Predicated region
        $region37: #{block_forward.1} parent=11 // pred_check
          %p337 = pneg %p194
        $region38: #{block_forward.1} parent=11 // pred_check_branch
          %339 = sbr.rel (%p337) target = $region40
        $region39: #{block_forward.1} parent=11 // pred_region
          _
        $region40: #{block_forward.1} parent=11 // pred_fallthru
          _
        // Predicated region
        $region41: #{block_forward.1} parent=11 // pred_check
          %p340 = pneg %p215
        $region42: #{block_forward.1} parent=11 // pred_check_branch
          %342 = sbr.rel (%p340) target = $region44
        $region43: #{block_forward.1} parent=11 // pred_region
          _
        $region44: #{block_forward.1} parent=11 // pred_fallthru
          _
        // Predicated region
        $region45: #{block_forward.1} parent=11 // pred_check
          %p343 = pneg %p236
        $region46: #{block_forward.1} parent=11 // pred_check_branch
          %345 = sbr.rel (%p343) target = $region48
        $region47: #{block_forward.1} parent=11 // pred_region
          _
        $region48: #{block_forward.1} parent=11 // pred_fallthru
          _
        // Predicated region
        $region49: #{block_forward.1} parent=11 // pred_check
          %p346 = pneg %p257
        $region50: #{block_forward.1} parent=11 // pred_check_branch
          %348 = sbr.rel (%p346) target = $region52
        $region51: #{block_forward.1} parent=11 // pred_region
          _
        $region52: #{block_forward.1} parent=11 // pred_fallthru
          _
        // Predicated region
        $region53: #{block_forward.1} parent=11 // pred_check
          %p349 = pneg %p278
        $region54: #{block_forward.1} parent=11 // pred_check_branch
          %351 = sbr.rel (%p349) target = $region56
        $region55: #{block_forward.1} parent=11 // pred_region
          _
        $region56: #{block_forward.1} parent=11 // pred_fallthru
          _
      $region12: #{block_forward.1} parent=5 // pred_fallthru
        _
      %p352 = scmp.lt.s32.totalorder %s21, 2
      // Predicated region
      $region57: #{block_forward.1} parent=5 // pred_check
        %p353 = pneg %p352
      $region58: #{block_forward.1} parent=5 // pred_check_branch
        %355 = sbr.rel (%p353) target = $region60
      $region59: #{block_forward.1} parent=5 // pred_region
        // Predicated region
        $region61: #{block_forward.1} parent=59 // pred_check
          %p356 = pneg %p41
        $region62: #{block_forward.1} parent=59 // pred_check_branch
          %358 = sbr.rel (%p356) target = $region64
        $region63: #{block_forward.1} parent=59 // pred_region
          %p359 = scmp.lt.s32.totalorder %s21, 1
          %s360 = scalar_select %p359, %s21, 1
          %s361 = smul.addr %s360, 24
          %s362 = smul.addr %s361, 8
          %s363 = scalar_lea.vmem %s0, %s362
        $region64: #{block_forward.1} parent=59 // pred_fallthru
          _
      $region60: #{block_forward.1} parent=5 // pred_fallthru
        _
      %p364 = scmp.le.s32.totalorder 1, %s21
      %p365 = scmp.lt.s32.totalorder %s21, 3
      %p366 = pnand %p364, %p365
      %p367 = pneg %p366
      // Predicated region
      $region65: #{block_forward.1} parent=5 // pred_check
        _
      $region66: #{block_forward.1} parent=5 // pred_check_branch
        %369 = sbr.rel (%p366) target = $region68
      $region67: #{block_forward.1} parent=5 // pred_region
        %s370 = ssub.s32 %s21, 1
        %p371 = scmp.lt.s32.totalorder %s26, 1
        %s372 = scalar_select %p371, %s26, 1
        %s373 = smul.addr %s372, 24
        %s374 = smul.addr %s373, 8
        %s375 = scalar_lea.vmem %s0, %s374
        %p376 = pneg %p47
        %p377 = pneg %p44
        %p378 = pneg %p68
        %p379 = pneg %p65
        %p380 = pneg %p89
        %p381 = pneg %p86
        %p382 = pneg %p110
        %p383 = pneg %p107
        %p384 = pneg %p131
        %p385 = pneg %p128
        %p386 = pneg %p152
        %p387 = pneg %p149
        %p388 = pneg %p173
        %p389 = pneg %p170
        %p390 = pneg %p194
        %p391 = pneg %p191
        %p392 = pneg %p215
        %p393 = pneg %p212
        %p394 = pneg %p236
        %p395 = pneg %p233
        %p396 = pneg %p257
        %p397 = pneg %p254
        %p398 = pneg %p278
        %p399 = pneg %p275
        %p400 = pneg %p304
        %p401 = pneg %p301
        %s402 = sand.u32 %s291, 1
        %s403 = scalar_lea.sflag [#allocation4], %s402
        %s404 = sand.u32 %s291, 1
        %s405 = smul.addr %s404, 192
        %s406 = scalar_lea.vmem [#allocation3], %s405
        %p407 = scmp.lt.s32.totalorder %s26, 1
        %s408 = scalar_select %p407, %s26, 1
        %s409 = smul.addr %s408, 24
        %s410 = smul.addr %s409, 8
        %s411 = scalar_lea.vmem %s0, %s410
        %v413 = vld [vmem:[%s411] sm:$0xff]
        %v414 = vld [vmem:[%s411 + $0x8] sm:$0xff]
        %v415 = vld [vmem:[%s411 + $0x10] sm:$0xff]
        %v416 = vld [vmem:[%s411 + $0x18] sm:$0xff]
        %v417 = vld [vmem:[%s411 + $0x20] sm:$0xff]
        %v418 = vld [vmem:[%s411 + $0x28] sm:$0xff]
        %v419 = vld [vmem:[%s411 + $0x30] sm:$0xff]
        %v420 = vld [vmem:[%s411 + $0x38] sm:$0xff]
        %v421 = vld [vmem:[%s411 + $0x40] sm:$0xff]
        %v422 = vld [vmem:[%s411 + $0x48] sm:$0xff]
        %v423 = vld [vmem:[%s411 + $0x50] sm:$0xff]
        %v424 = vld [vmem:[%s411 + $0x58] sm:$0xff]
        %v425 = vld [vmem:[%s411 + $0x60] sm:$0xff]
        %v426 = vld [vmem:[%s411 + $0x68] sm:$0xff]
        %v427 = vld [vmem:[%s411 + $0x70] sm:$0xff]
        %v428 = vld [vmem:[%s411 + $0x78] sm:$0xff]
        %v429 = vld [vmem:[%s411 + $0x80] sm:$0xff]
        %v430 = vld [vmem:[%s411 + $0x88] sm:$0xff]
        %v431 = vld [vmem:[%s411 + $0x90] sm:$0xff]
        %v432 = vld [vmem:[%s411 + $0x98] sm:$0xff]
        %v433 = vld [vmem:[%s411 + $0xa0] sm:$0xff]
        %v434 = vld [vmem:[%s411 + $0xa8] sm:$0xff]
        %v435 = vld [vmem:[%s411 + $0xb0] sm:$0xff]
        %v436 = vld [vmem:[%s411 + $0xb8] sm:$0xff]
        %v437 = vld [vmem:[%s1] sm:$0x7]
        %v438 = vld [vmem:[%s2] sm:$0x7]
        %v439 = vadd.f32 %v413, %v414
        %v440 = vadd.f32 %v439, %v415
        %441 = vadd.xlane.f32.xlu0 %v440
        %v442 = vpop.xlane.xlu0 %441
        %v443 = vadd.f32 %v416, %v417
        %v444 = vadd.f32 %v443, %v418
        %445 = vadd.xlane.f32.xlu0 %v444
        %v446 = vpop.xlane.xlu0 %445
        %v447 = vadd.f32 %v419, %v420
        %v448 = vadd.f32 %v447, %v421
        %449 = vadd.xlane.f32.xlu0 %v448
        %v450 = vpop.xlane.xlu0 %449
        %v451 = vadd.f32 %v422, %v423
        %v452 = vadd.f32 %v451, %v424
        %453 = vadd.xlane.f32.xlu0 %v452
        %v454 = vpop.xlane.xlu0 %453
        %v455 = vadd.f32 %v425, %v426
        %v456 = vadd.f32 %v455, %v427
        %457 = vadd.xlane.f32.xlu0 %v456
        %v458 = vpop.xlane.xlu0 %457
        %v459 = vadd.f32 %v428, %v429
        %v460 = vadd.f32 %v459, %v430
        %461 = vadd.xlane.f32.xlu0 %v460
        %v462 = vpop.xlane.xlu0 %461
        %v463 = vadd.f32 %v431, %v432
        %v464 = vadd.f32 %v463, %v433
        %465 = vadd.xlane.f32.xlu0 %v464
        %v466 = vpop.xlane.xlu0 %465
        %v467 = vadd.f32 %v434, %v435
        %v468 = vadd.f32 %v467, %v436
        %469 = vadd.xlane.f32.xlu0 %v468
        %v470 = vpop.xlane.xlu0 %469
        %v471 = vrcp.pop 384.0
        %v472 = vmul.f32 %v442, %v471
        %v473 = vmul.f32 %v446, %v471
        %v474 = vmul.f32 %v450, %v471
        %v475 = vmul.f32 %v454, %v471
        %v476 = vmul.f32 %v458, %v471
        %v477 = vmul.f32 %v462, %v471
        %v478 = vmul.f32 %v466, %v471
        %v479 = vmul.f32 %v470, %v471
        %v480 = vsub.f32 %v413, %v472
        %v481 = vsub.f32 %v414, %v472
        %v482 = vsub.f32 %v415, %v472
        %v483 = vsub.f32 %v416, %v473
        %v484 = vsub.f32 %v417, %v473
        %v485 = vsub.f32 %v418, %v473
        %v486 = vsub.f32 %v419, %v474
        %v487 = vsub.f32 %v420, %v474
        %v488 = vsub.f32 %v421, %v474
        %v489 = vsub.f32 %v422, %v475
        %v490 = vsub.f32 %v423, %v475
        %v491 = vsub.f32 %v424, %v475
        %v492 = vsub.f32 %v425, %v476
        %v493 = vsub.f32 %v426, %v476
        %v494 = vsub.f32 %v427, %v476
        %v495 = vsub.f32 %v428, %v477
        %v496 = vsub.f32 %v429, %v477
        %v497 = vsub.f32 %v430, %v477
        %v498 = vsub.f32 %v431, %v478
        %v499 = vsub.f32 %v432, %v478
        %v500 = vsub.f32 %v433, %v478
        %v501 = vsub.f32 %v434, %v479
        %v502 = vsub.f32 %v435, %v479
        %v503 = vsub.f32 %v436, %v479
        %v504 = vmul.f32 %v480, %v480
        %v505 = vmul.f32 %v481, %v481
        %v506 = vmul.f32 %v482, %v482
        %v507 = vmul.f32 %v483, %v483
        %v508 = vmul.f32 %v484, %v484
        %v509 = vmul.f32 %v485, %v485
        %v510 = vmul.f32 %v486, %v486
        %v511 = vmul.f32 %v487, %v487
        %v512 = vmul.f32 %v488, %v488
        %v513 = vmul.f32 %v489, %v489
        %v514 = vmul.f32 %v490, %v490
        %v515 = vmul.f32 %v491, %v491
        %v516 = vmul.f32 %v492, %v492
        %v517 = vmul.f32 %v493, %v493
        %v518 = vmul.f32 %v494, %v494
        %v519 = vmul.f32 %v495, %v495
        %v520 = vmul.f32 %v496, %v496
        %v521 = vmul.f32 %v497, %v497
        %v522 = vmul.f32 %v498, %v498
        %v523 = vmul.f32 %v499, %v499
        %v524 = vmul.f32 %v500, %v500
        %v525 = vmul.f32 %v501, %v501
        %v526 = vmul.f32 %v502, %v502
        %v527 = vmul.f32 %v503, %v503
        %v528 = vadd.f32 %v504, %v505
        %v529 = vadd.f32 %v528, %v506
        %530 = vadd.xlane.f32.xlu0 %v529
        %v531 = vpop.xlane.xlu0 %530
        %v532 = vadd.f32 %v507, %v508
        %v533 = vadd.f32 %v532, %v509
        %534 = vadd.xlane.f32.xlu0 %v533
        %v535 = vpop.xlane.xlu0 %534
        %v536 = vadd.f32 %v510, %v511
        %v537 = vadd.f32 %v536, %v512
        %538 = vadd.xlane.f32.xlu0 %v537
        %v539 = vpop.xlane.xlu0 %538
        %v540 = vadd.f32 %v513, %v514
        %v541 = vadd.f32 %v540, %v515
        %542 = vadd.xlane.f32.xlu0 %v541
        %v543 = vpop.xlane.xlu0 %542
        %v544 = vadd.f32 %v516, %v517
        %v545 = vadd.f32 %v544, %v518
        %546 = vadd.xlane.f32.xlu0 %v545
        %v547 = vpop.xlane.xlu0 %546
        %v548 = vadd.f32 %v519, %v520
        %v549 = vadd.f32 %v548, %v521
        %550 = vadd.xlane.f32.xlu0 %v549
        %v551 = vpop.xlane.xlu0 %550
        %v552 = vadd.f32 %v522, %v523
        %v553 = vadd.f32 %v552, %v524
        %554 = vadd.xlane.f32.xlu0 %v553
        %v555 = vpop.xlane.xlu0 %554
        %v556 = vadd.f32 %v525, %v526
        %v557 = vadd.f32 %v556, %v527
        %558 = vadd.xlane.f32.xlu0 %v557
        %v559 = vpop.xlane.xlu0 %558
        %v560 = vmul.f32 %v531, %v471
        %v561 = vmul.f32 %v535, %v471
        %v562 = vmul.f32 %v539, %v471
        %v563 = vmul.f32 %v543, %v471
        %v564 = vmul.f32 %v547, %v471
        %v565 = vmul.f32 %v551, %v471
        %v566 = vmul.f32 %v555, %v471
        %v567 = vmul.f32 %v559, %v471
        %v568 = vadd.f32 %v560, 1e-05
        %v569 = vadd.f32 %v561, 1e-05
        %v570 = vadd.f32 %v562, 1e-05
        %v571 = vadd.f32 %v563, 1e-05
        %v572 = vadd.f32 %v564, 1e-05
        %v573 = vadd.f32 %v565, 1e-05
        %v574 = vadd.f32 %v566, 1e-05
        %v575 = vadd.f32 %v567, 1e-05
        %v576 = vrsqrt.pop %v568
        %v577 = vrsqrt.pop %v569
        %v578 = vrsqrt.pop %v570
        %v579 = vrsqrt.pop %v571
        %v580 = vrsqrt.pop %v572
        %v581 = vrsqrt.pop %v573
        %v582 = vrsqrt.pop %v574
        %v583 = vrsqrt.pop %v575
        %v584 = vmul.f32 %v480, %v576
        %v585 = vmul.f32 %v481, %v576
        %v586 = vmul.f32 %v482, %v576
        %v587 = vmul.f32 %v483, %v577
        %v588 = vmul.f32 %v484, %v577
        %v589 = vmul.f32 %v485, %v577
        %v590 = vmul.f32 %v486, %v578
        %v591 = vmul.f32 %v487, %v578
        %v592 = vmul.f32 %v488, %v578
        %v593 = vmul.f32 %v489, %v579
        %v594 = vmul.f32 %v490, %v579
        %v595 = vmul.f32 %v491, %v579
        %v596 = vmul.f32 %v492, %v580
        %v597 = vmul.f32 %v493, %v580
        %v598 = vmul.f32 %v494, %v580
        %v599 = vmul.f32 %v495, %v581
        %v600 = vmul.f32 %v496, %v581
        %v601 = vmul.f32 %v497, %v581
        %v602 = vmul.f32 %v498, %v582
        %v603 = vmul.f32 %v499, %v582
        %v604 = vmul.f32 %v500, %v582
        %v605 = vmul.f32 %v501, %v583
        %v606 = vmul.f32 %v502, %v583
        %v607 = vmul.f32 %v503, %v583
        %v609 = vlaneseq
        %v610 = vshrl.u32 %v609, 7
        %v611 = vsub.s32 0, %v610
        %v612 = vrot.slane %v437, %v611
        %v613 = vlaneseq
        %v614 = vshrl.u32 %v613, 7
        %v615 = vsub.s32 1, %v614
        %v616 = vrot.slane %v437, %v615
        %v617 = vlaneseq
        %v618 = vshrl.u32 %v617, 7
        %v619 = vsub.s32 2, %v618
        %v620 = vrot.slane %v437, %v619
        %v624 = vmul.f32 %v584, %v612
        %v625 = vmul.f32 %v585, %v616
        %v626 = vmul.f32 %v586, %v620
        %v627 = vmul.f32 %v587, %v612
        %v628 = vmul.f32 %v588, %v616
        %v629 = vmul.f32 %v589, %v620
        %v630 = vmul.f32 %v590, %v612
        %v631 = vmul.f32 %v591, %v616
        %v632 = vmul.f32 %v592, %v620
        %v633 = vmul.f32 %v593, %v612
        %v634 = vmul.f32 %v594, %v616
        %v635 = vmul.f32 %v595, %v620
        %v636 = vmul.f32 %v596, %v612
        %v637 = vmul.f32 %v597, %v616
        %v638 = vmul.f32 %v598, %v620
        %v639 = vmul.f32 %v599, %v612
        %v640 = vmul.f32 %v600, %v616
        %v641 = vmul.f32 %v601, %v620
        %v642 = vmul.f32 %v602, %v612
        %v643 = vmul.f32 %v603, %v616
        %v644 = vmul.f32 %v604, %v620
        %v645 = vmul.f32 %v605, %v612
        %v646 = vmul.f32 %v606, %v616
        %v647 = vmul.f32 %v607, %v620
        %v649 = vlaneseq
        %v650 = vshrl.u32 %v649, 7
        %v651 = vsub.s32 0, %v650
        %v652 = vrot.slane %v438, %v651
        %v653 = vlaneseq
        %v654 = vshrl.u32 %v653, 7
        %v655 = vsub.s32 1, %v654
        %v656 = vrot.slane %v438, %v655
        %v657 = vlaneseq
        %v658 = vshrl.u32 %v657, 7
        %v659 = vsub.s32 2, %v658
        %v660 = vrot.slane %v438, %v659
        %v664 = vadd.f32 %v624, %v652
        %v665 = vadd.f32 %v625, %v656
        %v666 = vadd.f32 %v626, %v660
        %v667 = vadd.f32 %v627, %v652
        %v668 = vadd.f32 %v628, %v656
        %v669 = vadd.f32 %v629, %v660
        %v670 = vadd.f32 %v630, %v652
        %v671 = vadd.f32 %v631, %v656
        %v672 = vadd.f32 %v632, %v660
        %v673 = vadd.f32 %v633, %v652
        %v674 = vadd.f32 %v634, %v656
        %v675 = vadd.f32 %v635, %v660
        %v676 = vadd.f32 %v636, %v652
        %v677 = vadd.f32 %v637, %v656
        %v678 = vadd.f32 %v638, %v660
        %v679 = vadd.f32 %v639, %v652
        %v680 = vadd.f32 %v640, %v656
        %v681 = vadd.f32 %v641, %v660
        %v682 = vadd.f32 %v642, %v652
        %v683 = vadd.f32 %v643, %v656
        %v684 = vadd.f32 %v644, %v660
        %v685 = vadd.f32 %v645, %v652
        %v686 = vadd.f32 %v646, %v656
        %v687 = vadd.f32 %v647, %v660
        %v688 = vpack.c.bf16 %v667, %v664
        %v689 = vpack.c.bf16 %v668, %v665
        %v690 = vpack.c.bf16 %v669, %v666
        %v691 = vpack.c.bf16 %v673, %v670
        %v692 = vpack.c.bf16 %v674, %v671
        %v693 = vpack.c.bf16 %v675, %v672
        %v694 = vpack.c.bf16 %v679, %v676
        %v695 = vpack.c.bf16 %v680, %v677
        %v696 = vpack.c.bf16 %v681, %v678
        %v697 = vpack.c.bf16 %v685, %v682
        %v698 = vpack.c.bf16 %v686, %v683
        %v699 = vpack.c.bf16 %v687, %v684
        %v700 = vld [vmem:[%s3] sm:$0xff]
        %v701 = vld [vmem:[%s3 + $0x8] sm:$0xff]
        %v702 = vld [vmem:[%s3 + $0x10] sm:$0xff]
        %v703 = vld [vmem:[%s3 + $0x18] sm:$0xff]
        %v704 = vld [vmem:[%s3 + $0x20] sm:$0xf]
        %v705 = vld [vmem:[%s3 + $0x24] sm:$0xff]
        %v706 = vld [vmem:[%s3 + $0x2c] sm:$0xff]
        %v707 = vld [vmem:[%s3 + $0x34] sm:$0xff]
        %v708 = vld [vmem:[%s3 + $0x3c] sm:$0xff]
        %v709 = vld [vmem:[%s3 + $0x44] sm:$0xf]
        %v710 = vld [vmem:[%s3 + $0x48] sm:$0xff]
        %v711 = vld [vmem:[%s3 + $0x50] sm:$0xff]
        %v712 = vld [vmem:[%s3 + $0x58] sm:$0xff]
        %v713 = vld [vmem:[%s3 + $0x60] sm:$0xff]
        %v714 = vld [vmem:[%s3 + $0x68] sm:$0xf]
        %v715 = vld [vmem:[%s3 + $0x6c] sm:$0xff]
        %v716 = vld [vmem:[%s3 + $0x74] sm:$0xff]
        %v717 = vld [vmem:[%s3 + $0x7c] sm:$0xff]
        %v718 = vld [vmem:[%s3 + $0x84] sm:$0xff]
        %v719 = vld [vmem:[%s3 + $0x8c] sm:$0xf]
        %v720 = vld [vmem:[%s3 + $0x90] sm:$0xff]
        %v721 = vld [vmem:[%s3 + $0x98] sm:$0xff]
        %v722 = vld [vmem:[%s3 + $0xa0] sm:$0xff]
        %v723 = vld [vmem:[%s3 + $0xa8] sm:$0xff]
        %v724 = vld [vmem:[%s3 + $0xb0] sm:$0xf]
        %v725 = vld [vmem:[%s3 + $0xb4] sm:$0xff]
        %v726 = vld [vmem:[%s3 + $0xbc] sm:$0xff]
        %v727 = vld [vmem:[%s3 + $0xc4] sm:$0xff]
        %v728 = vld [vmem:[%s3 + $0xcc] sm:$0xff]
        %v729 = vld [vmem:[%s3 + $0xd4] sm:$0xf]
        %v730 = vld [vmem:[%s3 + $0xd8] sm:$0xff]
        %v731 = vld [vmem:[%s3 + $0xe0] sm:$0xff]
        %v732 = vld [vmem:[%s3 + $0xe8] sm:$0xff]
        %v733 = vld [vmem:[%s3 + $0xf0] sm:$0xff]
        %v734 = vld [vmem:[%s3 + $0xf8] sm:$0xf]
        %v735 = vld [vmem:[%s3 + $0xfc] sm:$0xff]
        %v736 = vld [vmem:[%s3 + $0x104] sm:$0xff]
        %v737 = vld [vmem:[%s3 + $0x10c] sm:$0xff]
        %v738 = vld [vmem:[%s3 + $0x114] sm:$0xff]
        %v739 = vld [vmem:[%s3 + $0x11c] sm:$0xf]
        %v740 = vld [vmem:[%s3 + $0x120] sm:$0xff]
        %v741 = vld [vmem:[%s3 + $0x128] sm:$0xff]
        %v742 = vld [vmem:[%s3 + $0x130] sm:$0xff]
        %v743 = vld [vmem:[%s3 + $0x138] sm:$0xff]
        %v744 = vld [vmem:[%s3 + $0x140] sm:$0xf]
        %v745 = vld [vmem:[%s3 + $0x144] sm:$0xff]
        %v746 = vld [vmem:[%s3 + $0x14c] sm:$0xff]
        %v747 = vld [vmem:[%s3 + $0x154] sm:$0xff]
        %v748 = vld [vmem:[%s3 + $0x15c] sm:$0xff]
        %v749 = vld [vmem:[%s3 + $0x164] sm:$0xf]
        %v750 = vld [vmem:[%s3 + $0x168] sm:$0xff]
        %v751 = vld [vmem:[%s3 + $0x170] sm:$0xff]
        %v752 = vld [vmem:[%s3 + $0x178] sm:$0xff]
        %v753 = vld [vmem:[%s3 + $0x180] sm:$0xff]
        %v754 = vld [vmem:[%s3 + $0x188] sm:$0xf]
        %v755 = vld [vmem:[%s3 + $0x18c] sm:$0xff]
        %v756 = vld [vmem:[%s3 + $0x194] sm:$0xff]
        %v757 = vld [vmem:[%s3 + $0x19c] sm:$0xff]
        %v758 = vld [vmem:[%s3 + $0x1a4] sm:$0xff]
        %v759 = vld [vmem:[%s3 + $0x1ac] sm:$0xf]
        %v760 = vld [vmem:[%s3 + $0x1b0] sm:$0xff]
        %v761 = vld [vmem:[%s3 + $0x1b8] sm:$0xff]
        %v762 = vld [vmem:[%s3 + $0x1c0] sm:$0xff]
        %v763 = vld [vmem:[%s3 + $0x1c8] sm:$0xff]
        %v764 = vld [vmem:[%s3 + $0x1d0] sm:$0xf]
        %v765 = vld [vmem:[%s3 + $0x1d4] sm:$0xff]
        %v766 = vld [vmem:[%s3 + $0x1dc] sm:$0xff]
        %v767 = vld [vmem:[%s3 + $0x1e4] sm:$0xff]
        %v768 = vld [vmem:[%s3 + $0x1ec] sm:$0xff]
        %v769 = vld [vmem:[%s3 + $0x1f4] sm:$0xf]
        %v770 = vld [vmem:[%s3 + $0x1f8] sm:$0xff]
        %v771 = vld [vmem:[%s3 + $0x200] sm:$0xff]
        %v772 = vld [vmem:[%s3 + $0x208] sm:$0xff]
        %v773 = vld [vmem:[%s3 + $0x210] sm:$0xff]
        %v774 = vld [vmem:[%s3 + $0x218] sm:$0xf]
        %v775 = vld [vmem:[%s3 + $0x21c] sm:$0xff]
        %v776 = vld [vmem:[%s3 + $0x224] sm:$0xff]
        %v777 = vld [vmem:[%s3 + $0x22c] sm:$0xff]
        %v778 = vld [vmem:[%s3 + $0x234] sm:$0xff]
        %v779 = vld [vmem:[%s3 + $0x23c] sm:$0xf]
        %v780 = vld [vmem:[%s3 + $0x240] sm:$0xff]
        %v781 = vld [vmem:[%s3 + $0x248] sm:$0xff]
        %v782 = vld [vmem:[%s3 + $0x250] sm:$0xff]
        %v783 = vld [vmem:[%s3 + $0x258] sm:$0xff]
        %v784 = vld [vmem:[%s3 + $0x260] sm:$0xf]
        %v785 = vld [vmem:[%s3 + $0x264] sm:$0xff]
        %v786 = vld [vmem:[%s3 + $0x26c] sm:$0xff]
        %v787 = vld [vmem:[%s3 + $0x274] sm:$0xff]
        %v788 = vld [vmem:[%s3 + $0x27c] sm:$0xff]
        %v789 = vld [vmem:[%s3 + $0x284] sm:$0xf]
        %v790 = vld [vmem:[%s3 + $0x288] sm:$0xff]
        %v791 = vld [vmem:[%s3 + $0x290] sm:$0xff]
        %v792 = vld [vmem:[%s3 + $0x298] sm:$0xff]
        %v793 = vld [vmem:[%s3 + $0x2a0] sm:$0xff]
        %v794 = vld [vmem:[%s3 + $0x2a8] sm:$0xf]
        %v795 = vld [vmem:[%s3 + $0x2ac] sm:$0xff]
        %v796 = vld [vmem:[%s3 + $0x2b4] sm:$0xff]
        %v797 = vld [vmem:[%s3 + $0x2bc] sm:$0xff]
        %v798 = vld [vmem:[%s3 + $0x2c4] sm:$0xff]
        %v799 = vld [vmem:[%s3 + $0x2cc] sm:$0xf]
        %v800 = vld [vmem:[%s3 + $0x2d0] sm:$0xff]
        %v801 = vld [vmem:[%s3 + $0x2d8] sm:$0xff]
        %v802 = vld [vmem:[%s3 + $0x2e0] sm:$0xff]
        %v803 = vld [vmem:[%s3 + $0x2e8] sm:$0xff]
        %v804 = vld [vmem:[%s3 + $0x2f0] sm:$0xf]
        %v805 = vld [vmem:[%s3 + $0x2f4] sm:$0xff]
        %v806 = vld [vmem:[%s3 + $0x2fc] sm:$0xff]
        %v807 = vld [vmem:[%s3 + $0x304] sm:$0xff]
        %v808 = vld [vmem:[%s3 + $0x30c] sm:$0xff]
        %v809 = vld [vmem:[%s3 + $0x314] sm:$0xf]
        %v810 = vld [vmem:[%s3 + $0x318] sm:$0xff]
        %v811 = vld [vmem:[%s3 + $0x320] sm:$0xff]
        %v812 = vld [vmem:[%s3 + $0x328] sm:$0xff]
        %v813 = vld [vmem:[%s3 + $0x330] sm:$0xff]
        %v814 = vld [vmem:[%s3 + $0x338] sm:$0xf]
        %v815 = vld [vmem:[%s3 + $0x33c] sm:$0xff]
        %v816 = vld [vmem:[%s3 + $0x344] sm:$0xff]
        %v817 = vld [vmem:[%s3 + $0x34c] sm:$0xff]
        %v818 = vld [vmem:[%s3 + $0x354] sm:$0xff]
        %v819 = vld [vmem:[%s3 + $0x35c] sm:$0xf]
        %v820 = vld [vmem:[%s3 + $0x360] sm:$0xff]
        %v821 = vld [vmem:[%s3 + $0x368] sm:$0xff]
        %v822 = vld [vmem:[%s3 + $0x370] sm:$0xff]
        %v823 = vld [vmem:[%s3 + $0x378] sm:$0xff]
        %v824 = vld [vmem:[%s3 + $0x380] sm:$0xf]
        %v825 = vld [vmem:[%s3 + $0x384] sm:$0xff]
        %v826 = vld [vmem:[%s3 + $0x38c] sm:$0xff]
        %v827 = vld [vmem:[%s3 + $0x394] sm:$0xff]
        %v828 = vld [vmem:[%s3 + $0x39c] sm:$0xff]
        %v829 = vld [vmem:[%s3 + $0x3a4] sm:$0xf]
        %v830 = vld [vmem:[%s3 + $0x3a8] sm:$0xff]
        %v831 = vld [vmem:[%s3 + $0x3b0] sm:$0xff]
        %v832 = vld [vmem:[%s3 + $0x3b8] sm:$0xff]
        %v833 = vld [vmem:[%s3 + $0x3c0] sm:$0xff]
        %v834 = vld [vmem:[%s3 + $0x3c8] sm:$0xf]
        %v835 = vld [vmem:[%s3 + $0x3cc] sm:$0xff]
        %v836 = vld [vmem:[%s3 + $0x3d4] sm:$0xff]
        %v837 = vld [vmem:[%s3 + $0x3dc] sm:$0xff]
        %v838 = vld [vmem:[%s3 + $0x3e4] sm:$0xff]
        %v839 = vld [vmem:[%s3 + $0x3ec] sm:$0xf]
        %v840 = vld [vmem:[%s3 + $0x3f0] sm:$0xff]
        %v841 = vld [vmem:[%s3 + $0x3f8] sm:$0xff]
        %v842 = vld [vmem:[%s3 + $0x400] sm:$0xff]
        %v843 = vld [vmem:[%s3 + $0x408] sm:$0xff]
        %v844 = vld [vmem:[%s3 + $0x410] sm:$0xf]
        %v845 = vld [vmem:[%s3 + $0x414] sm:$0xff]
        %v846 = vld [vmem:[%s3 + $0x41c] sm:$0xff]
        %v847 = vld [vmem:[%s3 + $0x424] sm:$0xff]
        %v848 = vld [vmem:[%s3 + $0x42c] sm:$0xff]
        %v849 = vld [vmem:[%s3 + $0x434] sm:$0xf]
        %v850 = vld [vmem:[%s3 + $0x438] sm:$0xff]
        %v851 = vld [vmem:[%s3 + $0x440] sm:$0xff]
        %v852 = vld [vmem:[%s3 + $0x448] sm:$0xff]
        %v853 = vld [vmem:[%s3 + $0x450] sm:$0xff]
        %v854 = vld [vmem:[%s3 + $0x458] sm:$0xf]
        %v855 = vld [vmem:[%s3 + $0x45c] sm:$0xff]
        %v856 = vld [vmem:[%s3 + $0x464] sm:$0xff]
        %v857 = vld [vmem:[%s3 + $0x46c] sm:$0xff]
        %v858 = vld [vmem:[%s3 + $0x474] sm:$0xff]
        %v859 = vld [vmem:[%s3 + $0x47c] sm:$0xf]
        %v860 = vld [vmem:[%s3 + $0x480] sm:$0xff]
        %v861 = vld [vmem:[%s3 + $0x488] sm:$0xff]
        %v862 = vld [vmem:[%s3 + $0x490] sm:$0xff]
        %v863 = vld [vmem:[%s3 + $0x498] sm:$0xff]
        %v864 = vld [vmem:[%s3 + $0x4a0] sm:$0xf]
        %v865 = vld [vmem:[%s3 + $0x4a4] sm:$0xff]
        %v866 = vld [vmem:[%s3 + $0x4ac] sm:$0xff]
        %v867 = vld [vmem:[%s3 + $0x4b4] sm:$0xff]
        %v868 = vld [vmem:[%s3 + $0x4bc] sm:$0xff]
        %v869 = vld [vmem:[%s3 + $0x4c4] sm:$0xf]
        %v870 = vld [vmem:[%s3 + $0x4c8] sm:$0xff]
        %v871 = vld [vmem:[%s3 + $0x4d0] sm:$0xff]
        %v872 = vld [vmem:[%s3 + $0x4d8] sm:$0xff]
        %v873 = vld [vmem:[%s3 + $0x4e0] sm:$0xff]
        %v874 = vld [vmem:[%s3 + $0x4e8] sm:$0xf]
        %v875 = vld [vmem:[%s3 + $0x4ec] sm:$0xff]
        %v876 = vld [vmem:[%s3 + $0x4f4] sm:$0xff]
        %v877 = vld [vmem:[%s3 + $0x4fc] sm:$0xff]
        %v878 = vld [vmem:[%s3 + $0x504] sm:$0xff]
        %v879 = vld [vmem:[%s3 + $0x50c] sm:$0xf]
        %v880 = vld [vmem:[%s3 + $0x510] sm:$0xff]
        %v881 = vld [vmem:[%s3 + $0x518] sm:$0xff]
        %v882 = vld [vmem:[%s3 + $0x520] sm:$0xff]
        %v883 = vld [vmem:[%s3 + $0x528] sm:$0xff]
        %v884 = vld [vmem:[%s3 + $0x530] sm:$0xf]
        %v885 = vld [vmem:[%s3 + $0x534] sm:$0xff]
        %v886 = vld [vmem:[%s3 + $0x53c] sm:$0xff]
        %v887 = vld [vmem:[%s3 + $0x544] sm:$0xff]
        %v888 = vld [vmem:[%s3 + $0x54c] sm:$0xff]
        %v889 = vld [vmem:[%s3 + $0x554] sm:$0xf]
        %v890 = vld [vmem:[%s3 + $0x558] sm:$0xff]
        %v891 = vld [vmem:[%s3 + $0x560] sm:$0xff]
        %v892 = vld [vmem:[%s3 + $0x568] sm:$0xff]
        %v893 = vld [vmem:[%s3 + $0x570] sm:$0xff]
        %v894 = vld [vmem:[%s3 + $0x578] sm:$0xf]
        %v895 = vld [vmem:[%s3 + $0x57c] sm:$0xff]
        %v896 = vld [vmem:[%s3 + $0x584] sm:$0xff]
        %v897 = vld [vmem:[%s3 + $0x58c] sm:$0xff]
        %v898 = vld [vmem:[%s3 + $0x594] sm:$0xff]
        %v899 = vld [vmem:[%s3 + $0x59c] sm:$0xf]
        %v900 = vld [vmem:[%s3 + $0x5a0] sm:$0xff]
        %v901 = vld [vmem:[%s3 + $0x5a8] sm:$0xff]
        %v902 = vld [vmem:[%s3 + $0x5b0] sm:$0xff]
        %v903 = vld [vmem:[%s3 + $0x5b8] sm:$0xff]
        %v904 = vld [vmem:[%s3 + $0x5c0] sm:$0xf]
        %v905 = vld [vmem:[%s3 + $0x5c4] sm:$0xff]
        %v906 = vld [vmem:[%s3 + $0x5cc] sm:$0xff]
        %v907 = vld [vmem:[%s3 + $0x5d4] sm:$0xff]
        %v908 = vld [vmem:[%s3 + $0x5dc] sm:$0xff]
        %v909 = vld [vmem:[%s3 + $0x5e4] sm:$0xf]
        %v910 = vld [vmem:[%s3 + $0x5e8] sm:$0xff]
        %v911 = vld [vmem:[%s3 + $0x5f0] sm:$0xff]
        %v912 = vld [vmem:[%s3 + $0x5f8] sm:$0xff]
        %v913 = vld [vmem:[%s3 + $0x600] sm:$0xff]
        %v914 = vld [vmem:[%s3 + $0x608] sm:$0xf]
        %v915 = vld [vmem:[%s3 + $0x60c] sm:$0xff]
        %v916 = vld [vmem:[%s3 + $0x614] sm:$0xff]
        %v917 = vld [vmem:[%s3 + $0x61c] sm:$0xff]
        %v918 = vld [vmem:[%s3 + $0x624] sm:$0xff]
        %v919 = vld [vmem:[%s3 + $0x62c] sm:$0xf]
        %v920 = vld [vmem:[%s3 + $0x630] sm:$0xff]
        %v921 = vld [vmem:[%s3 + $0x638] sm:$0xff]
        %v922 = vld [vmem:[%s3 + $0x640] sm:$0xff]
        %v923 = vld [vmem:[%s3 + $0x648] sm:$0xff]
        %v924 = vld [vmem:[%s3 + $0x650] sm:$0xf]
        %v925 = vld [vmem:[%s3 + $0x654] sm:$0xff]
        %v926 = vld [vmem:[%s3 + $0x65c] sm:$0xff]
        %v927 = vld [vmem:[%s3 + $0x664] sm:$0xff]
        %v928 = vld [vmem:[%s3 + $0x66c] sm:$0xff]
        %v929 = vld [vmem:[%s3 + $0x674] sm:$0xf]
        %v930 = vld [vmem:[%s3 + $0x678] sm:$0xff]
        %v931 = vld [vmem:[%s3 + $0x680] sm:$0xff]
        %v932 = vld [vmem:[%s3 + $0x688] sm:$0xff]
        %v933 = vld [vmem:[%s3 + $0x690] sm:$0xff]
        %v934 = vld [vmem:[%s3 + $0x698] sm:$0xf]
        %v935 = vld [vmem:[%s3 + $0x69c] sm:$0xff]
        %v936 = vld [vmem:[%s3 + $0x6a4] sm:$0xff]
        %v937 = vld [vmem:[%s3 + $0x6ac] sm:$0xff]
        %v938 = vld [vmem:[%s3 + $0x6b4] sm:$0xff]
        %v939 = vld [vmem:[%s3 + $0x6bc] sm:$0xf]
        %v1180 = vunpack.c.l.b16 %v700
        %v1181 = vunpack.c.h.b16 %v700
        %v1182 = vunpack.c.l.b16 %v701
        %v1183 = vunpack.c.h.b16 %v701
        %v1184 = vunpack.c.l.b16 %v702
        %v1185 = vunpack.c.h.b16 %v702
        %v1186 = vunpack.c.l.b16 %v703
        %v1187 = vunpack.c.h.b16 %v703
        %v1188 = vunpack.c.l.b16 %v704
        %v1189 = vunpack.c.l.b16 %v705
        %v1190 = vunpack.c.h.b16 %v705
        %v1191 = vunpack.c.l.b16 %v706
        %v1192 = vunpack.c.h.b16 %v706
        %v1193 = vunpack.c.l.b16 %v707
        %v1194 = vunpack.c.h.b16 %v707
        %v1195 = vunpack.c.l.b16 %v708
        %v1196 = vunpack.c.h.b16 %v708
        %v1197 = vunpack.c.l.b16 %v709
        %v1198 = vunpack.c.l.b16 %v710
        %v1199 = vunpack.c.h.b16 %v710
        %v1200 = vunpack.c.l.b16 %v711
        %v1201 = vunpack.c.h.b16 %v711
        %v1202 = vunpack.c.l.b16 %v712
        %v1203 = vunpack.c.h.b16 %v712
        %v1204 = vunpack.c.l.b16 %v713
        %v1205 = vunpack.c.h.b16 %v713
        %v1206 = vunpack.c.l.b16 %v714
        %v1207 = vunpack.c.l.b16 %v715
        %v1208 = vunpack.c.h.b16 %v715
        %v1209 = vunpack.c.l.b16 %v716
        %v1210 = vunpack.c.h.b16 %v716
        %v1211 = vunpack.c.l.b16 %v717
        %v1212 = vunpack.c.h.b16 %v717
        %v1213 = vunpack.c.l.b16 %v718
        %v1214 = vunpack.c.h.b16 %v718
        %v1215 = vunpack.c.l.b16 %v719
        %v1216 = vunpack.c.l.b16 %v720
        %v1217 = vunpack.c.h.b16 %v720
        %v1218 = vunpack.c.l.b16 %v721
        %v1219 = vunpack.c.h.b16 %v721
        %v1220 = vunpack.c.l.b16 %v722
        %v1221 = vunpack.c.h.b16 %v722
        %v1222 = vunpack.c.l.b16 %v723
        %v1223 = vunpack.c.h.b16 %v723
        %v1224 = vunpack.c.l.b16 %v724
        %v1225 = vunpack.c.l.b16 %v725
        %v1226 = vunpack.c.h.b16 %v725
        %v1227 = vunpack.c.l.b16 %v726
        %v1228 = vunpack.c.h.b16 %v726
        %v1229 = vunpack.c.l.b16 %v727
        %v1230 = vunpack.c.h.b16 %v727
        %v1231 = vunpack.c.l.b16 %v728
        %v1232 = vunpack.c.h.b16 %v728
        %v1233 = vunpack.c.l.b16 %v729
        %v1234 = vunpack.c.l.b16 %v730
        %v1235 = vunpack.c.h.b16 %v730
        %v1236 = vunpack.c.l.b16 %v731
        %v1237 = vunpack.c.h.b16 %v731
        %v1238 = vunpack.c.l.b16 %v732
        %v1239 = vunpack.c.h.b16 %v732
        %v1240 = vunpack.c.l.b16 %v733
        %v1241 = vunpack.c.h.b16 %v733
        %v1242 = vunpack.c.l.b16 %v734
        %v1243 = vunpack.c.l.b16 %v735
        %v1244 = vunpack.c.h.b16 %v735
        %v1245 = vunpack.c.l.b16 %v736
        %v1246 = vunpack.c.h.b16 %v736
        %v1247 = vunpack.c.l.b16 %v737
        %v1248 = vunpack.c.h.b16 %v737
        %v1249 = vunpack.c.l.b16 %v738
        %v1250 = vunpack.c.h.b16 %v738
        %v1251 = vunpack.c.l.b16 %v739
        %v1252 = vunpack.c.l.b16 %v740
        %v1253 = vunpack.c.h.b16 %v740
        %v1254 = vunpack.c.l.b16 %v741
        %v1255 = vunpack.c.h.b16 %v741
        %v1256 = vunpack.c.l.b16 %v742
        %v1257 = vunpack.c.h.b16 %v742
        %v1258 = vunpack.c.l.b16 %v743
        %v1259 = vunpack.c.h.b16 %v743
        %v1260 = vunpack.c.l.b16 %v744
        %v1261 = vunpack.c.l.b16 %v745
        %v1262 = vunpack.c.h.b16 %v745
        %v1263 = vunpack.c.l.b16 %v746
        %v1264 = vunpack.c.h.b16 %v746
        %v1265 = vunpack.c.l.b16 %v747
        %v1266 = vunpack.c.h.b16 %v747
        %v1267 = vunpack.c.l.b16 %v748
        %v1268 = vunpack.c.h.b16 %v748
        %v1269 = vunpack.c.l.b16 %v749
        %v1270 = vunpack.c.l.b16 %v750
        %v1271 = vunpack.c.h.b16 %v750
        %v1272 = vunpack.c.l.b16 %v751
        %v1273 = vunpack.c.h.b16 %v751
        %v1274 = vunpack.c.l.b16 %v752
        %v1275 = vunpack.c.h.b16 %v752
        %v1276 = vunpack.c.l.b16 %v753
        %v1277 = vunpack.c.h.b16 %v753
        %v1278 = vunpack.c.l.b16 %v754
        %v1279 = vunpack.c.l.b16 %v755
        %v1280 = vunpack.c.h.b16 %v755
        %v1281 = vunpack.c.l.b16 %v756
        %v1282 = vunpack.c.h.b16 %v756
        %v1283 = vunpack.c.l.b16 %v757
        %v1284 = vunpack.c.h.b16 %v757
        %v1285 = vunpack.c.l.b16 %v758
        %v1286 = vunpack.c.h.b16 %v758
        %v1287 = vunpack.c.l.b16 %v759
        %v1288 = vunpack.c.l.b16 %v760
        %v1289 = vunpack.c.h.b16 %v760
        %v1290 = vunpack.c.l.b16 %v761
        %v1291 = vunpack.c.h.b16 %v761
        %v1292 = vunpack.c.l.b16 %v762
        %v1293 = vunpack.c.h.b16 %v762
        %v1294 = vunpack.c.l.b16 %v763
        %v1295 = vunpack.c.h.b16 %v763
        %v1296 = vunpack.c.l.b16 %v764
        %v1297 = vunpack.c.l.b16 %v765
        %v1298 = vunpack.c.h.b16 %v765
        %v1299 = vunpack.c.l.b16 %v766
        %v1300 = vunpack.c.h.b16 %v766
        %v1301 = vunpack.c.l.b16 %v767
        %v1302 = vunpack.c.h.b16 %v767
        %v1303 = vunpack.c.l.b16 %v768
        %v1304 = vunpack.c.h.b16 %v768
        %v1305 = vunpack.c.l.b16 %v769
        %v1306 = vunpack.c.l.b16 %v770
        %v1307 = vunpack.c.h.b16 %v770
        %v1308 = vunpack.c.l.b16 %v771
        %v1309 = vunpack.c.h.b16 %v771
        %v1310 = vunpack.c.l.b16 %v772
        %v1311 = vunpack.c.h.b16 %v772
        %v1312 = vunpack.c.l.b16 %v773
        %v1313 = vunpack.c.h.b16 %v773
        %v1314 = vunpack.c.l.b16 %v774
        %v1315 = vunpack.c.l.b16 %v775
        %v1316 = vunpack.c.h.b16 %v775
        %v1317 = vunpack.c.l.b16 %v776
        %v1318 = vunpack.c.h.b16 %v776
        %v1319 = vunpack.c.l.b16 %v777
        %v1320 = vunpack.c.h.b16 %v777
        %v1321 = vunpack.c.l.b16 %v778
        %v1322 = vunpack.c.h.b16 %v778
        %v1323 = vunpack.c.l.b16 %v779
        %v1324 = vunpack.c.l.b16 %v780
        %v1325 = vunpack.c.h.b16 %v780
        %v1326 = vunpack.c.l.b16 %v781
        %v1327 = vunpack.c.h.b16 %v781
        %v1328 = vunpack.c.l.b16 %v782
        %v1329 = vunpack.c.h.b16 %v782
        %v1330 = vunpack.c.l.b16 %v783
        %v1331 = vunpack.c.h.b16 %v783
        %v1332 = vunpack.c.l.b16 %v784
        %v1333 = vunpack.c.l.b16 %v785
        %v1334 = vunpack.c.h.b16 %v785
        %v1335 = vunpack.c.l.b16 %v786
        %v1336 = vunpack.c.h.b16 %v786
        %v1337 = vunpack.c.l.b16 %v787
        %v1338 = vunpack.c.h.b16 %v787
        %v1339 = vunpack.c.l.b16 %v788
        %v1340 = vunpack.c.h.b16 %v788
        %v1341 = vunpack.c.l.b16 %v789
        %v1342 = vunpack.c.l.b16 %v790
        %v1343 = vunpack.c.h.b16 %v790
        %v1344 = vunpack.c.l.b16 %v791
        %v1345 = vunpack.c.h.b16 %v791
        %v1346 = vunpack.c.l.b16 %v792
        %v1347 = vunpack.c.h.b16 %v792
        %v1348 = vunpack.c.l.b16 %v793
        %v1349 = vunpack.c.h.b16 %v793
        %v1350 = vunpack.c.l.b16 %v794
        %v1351 = vunpack.c.l.b16 %v795
        %v1352 = vunpack.c.h.b16 %v795
        %v1353 = vunpack.c.l.b16 %v796
        %v1354 = vunpack.c.h.b16 %v796
        %v1355 = vunpack.c.l.b16 %v797
        %v1356 = vunpack.c.h.b16 %v797
        %v1357 = vunpack.c.l.b16 %v798
        %v1358 = vunpack.c.h.b16 %v798
        %v1359 = vunpack.c.l.b16 %v799
        %v1360 = vunpack.c.l.b16 %v800
        %v1361 = vunpack.c.h.b16 %v800
        %v1362 = vunpack.c.l.b16 %v801
        %v1363 = vunpack.c.h.b16 %v801
        %v1364 = vunpack.c.l.b16 %v802
        %v1365 = vunpack.c.h.b16 %v802
        %v1366 = vunpack.c.l.b16 %v803
        %v1367 = vunpack.c.h.b16 %v803
        %v1368 = vunpack.c.l.b16 %v804
        %v1369 = vunpack.c.l.b16 %v805
        %v1370 = vunpack.c.h.b16 %v805
        %v1371 = vunpack.c.l.b16 %v806
        %v1372 = vunpack.c.h.b16 %v806
        %v1373 = vunpack.c.l.b16 %v807
        %v1374 = vunpack.c.h.b16 %v807
        %v1375 = vunpack.c.l.b16 %v808
        %v1376 = vunpack.c.h.b16 %v808
        %v1377 = vunpack.c.l.b16 %v809
        %v1378 = vunpack.c.l.b16 %v810
        %v1379 = vunpack.c.h.b16 %v810
        %v1380 = vunpack.c.l.b16 %v811
        %v1381 = vunpack.c.h.b16 %v811
        %v1382 = vunpack.c.l.b16 %v812
        %v1383 = vunpack.c.h.b16 %v812
        %v1384 = vunpack.c.l.b16 %v813
        %v1385 = vunpack.c.h.b16 %v813
        %v1386 = vunpack.c.l.b16 %v814
        %v1387 = vunpack.c.l.b16 %v815
        %v1388 = vunpack.c.h.b16 %v815
        %v1389 = vunpack.c.l.b16 %v816
        %v1390 = vunpack.c.h.b16 %v816
        %v1391 = vunpack.c.l.b16 %v817
        %v1392 = vunpack.c.h.b16 %v817
        %v1393 = vunpack.c.l.b16 %v818
        %v1394 = vunpack.c.h.b16 %v818
        %v1395 = vunpack.c.l.b16 %v819
        %v1396 = vunpack.c.l.b16 %v820
        %v1397 = vunpack.c.h.b16 %v820
        %v1398 = vunpack.c.l.b16 %v821
        %v1399 = vunpack.c.h.b16 %v821
        %v1400 = vunpack.c.l.b16 %v822
        %v1401 = vunpack.c.h.b16 %v822
        %v1402 = vunpack.c.l.b16 %v823
        %v1403 = vunpack.c.h.b16 %v823
        %v1404 = vunpack.c.l.b16 %v824
        %v1405 = vunpack.c.l.b16 %v825
        %v1406 = vunpack.c.h.b16 %v825
        %v1407 = vunpack.c.l.b16 %v826
        %v1408 = vunpack.c.h.b16 %v826
        %v1409 = vunpack.c.l.b16 %v827
        %v1410 = vunpack.c.h.b16 %v827
        %v1411 = vunpack.c.l.b16 %v828
        %v1412 = vunpack.c.h.b16 %v828
        %v1413 = vunpack.c.l.b16 %v829
        %v1414 = vunpack.c.l.b16 %v830
        %v1415 = vunpack.c.h.b16 %v830
        %v1416 = vunpack.c.l.b16 %v831
        %v1417 = vunpack.c.h.b16 %v831
        %v1418 = vunpack.c.l.b16 %v832
        %v1419 = vunpack.c.h.b16 %v832
        %v1420 = vunpack.c.l.b16 %v833
        %v1421 = vunpack.c.h.b16 %v833
        %v1422 = vunpack.c.l.b16 %v834
        %v1423 = vunpack.c.l.b16 %v835
        %v1424 = vunpack.c.h.b16 %v835
        %v1425 = vunpack.c.l.b16 %v836
        %v1426 = vunpack.c.h.b16 %v836
        %v1427 = vunpack.c.l.b16 %v837
        %v1428 = vunpack.c.h.b16 %v837
        %v1429 = vunpack.c.l.b16 %v838
        %v1430 = vunpack.c.h.b16 %v838
        %v1431 = vunpack.c.l.b16 %v839
        %v1432 = vunpack.c.l.b16 %v840
        %v1433 = vunpack.c.h.b16 %v840
        %v1434 = vunpack.c.l.b16 %v841
        %v1435 = vunpack.c.h.b16 %v841
        %v1436 = vunpack.c.l.b16 %v842
        %v1437 = vunpack.c.h.b16 %v842
        %v1438 = vunpack.c.l.b16 %v843
        %v1439 = vunpack.c.h.b16 %v843
        %v1440 = vunpack.c.l.b16 %v844
        %v1441 = vunpack.c.l.b16 %v845
        %v1442 = vunpack.c.h.b16 %v845
        %v1443 = vunpack.c.l.b16 %v846
        %v1444 = vunpack.c.h.b16 %v846
        %v1445 = vunpack.c.l.b16 %v847
        %v1446 = vunpack.c.h.b16 %v847
        %v1447 = vunpack.c.l.b16 %v848
        %v1448 = vunpack.c.h.b16 %v848
        %v1449 = vunpack.c.l.b16 %v849
        %v1450 = vunpack.c.l.b16 %v850
        %v1451 = vunpack.c.h.b16 %v850
        %v1452 = vunpack.c.l.b16 %v851
        %v1453 = vunpack.c.h.b16 %v851
        %v1454 = vunpack.c.l.b16 %v852
        %v1455 = vunpack.c.h.b16 %v852
        %v1456 = vunpack.c.l.b16 %v853
        %v1457 = vunpack.c.h.b16 %v853
        %v1458 = vunpack.c.l.b16 %v854
        %v1459 = vunpack.c.l.b16 %v855
        %v1460 = vunpack.c.h.b16 %v855
        %v1461 = vunpack.c.l.b16 %v856
        %v1462 = vunpack.c.h.b16 %v856
        %v1463 = vunpack.c.l.b16 %v857
        %v1464 = vunpack.c.h.b16 %v857
        %v1465 = vunpack.c.l.b16 %v858
        %v1466 = vunpack.c.h.b16 %v858
        %v1467 = vunpack.c.l.b16 %v859
        %v1468 = vunpack.c.l.b16 %v860
        %v1469 = vunpack.c.h.b16 %v860
        %v1470 = vunpack.c.l.b16 %v861
        %v1471 = vunpack.c.h.b16 %v861
        %v1472 = vunpack.c.l.b16 %v862
        %v1473 = vunpack.c.h.b16 %v862
        %v1474 = vunpack.c.l.b16 %v863
        %v1475 = vunpack.c.h.b16 %v863
        %v1476 = vunpack.c.l.b16 %v864
        %v1477 = vunpack.c.l.b16 %v865
        %v1478 = vunpack.c.h.b16 %v865
        %v1479 = vunpack.c.l.b16 %v866
        %v1480 = vunpack.c.h.b16 %v866
        %v1481 = vunpack.c.l.b16 %v867
        %v1482 = vunpack.c.h.b16 %v867
        %v1483 = vunpack.c.l.b16 %v868
        %v1484 = vunpack.c.h.b16 %v868
        %v1485 = vunpack.c.l.b16 %v869
        %v1486 = vunpack.c.l.b16 %v870
        %v1487 = vunpack.c.h.b16 %v870
        %v1488 = vunpack.c.l.b16 %v871
        %v1489 = vunpack.c.h.b16 %v871
        %v1490 = vunpack.c.l.b16 %v872
        %v1491 = vunpack.c.h.b16 %v872
        %v1492 = vunpack.c.l.b16 %v873
        %v1493 = vunpack.c.h.b16 %v873
        %v1494 = vunpack.c.l.b16 %v874
        %v1495 = vunpack.c.l.b16 %v875
        %v1496 = vunpack.c.h.b16 %v875
        %v1497 = vunpack.c.l.b16 %v876
        %v1498 = vunpack.c.h.b16 %v876
        %v1499 = vunpack.c.l.b16 %v877
        %v1500 = vunpack.c.h.b16 %v877
        %v1501 = vunpack.c.l.b16 %v878
        %v1502 = vunpack.c.h.b16 %v878
        %v1503 = vunpack.c.l.b16 %v879
        %v1504 = vunpack.c.l.b16 %v880
        %v1505 = vunpack.c.h.b16 %v880
        %v1506 = vunpack.c.l.b16 %v881
        %v1507 = vunpack.c.h.b16 %v881
        %v1508 = vunpack.c.l.b16 %v882
        %v1509 = vunpack.c.h.b16 %v882
        %v1510 = vunpack.c.l.b16 %v883
        %v1511 = vunpack.c.h.b16 %v883
        %v1512 = vunpack.c.l.b16 %v884
        %v1513 = vunpack.c.l.b16 %v885
        %v1514 = vunpack.c.h.b16 %v885
        %v1515 = vunpack.c.l.b16 %v886
        %v1516 = vunpack.c.h.b16 %v886
        %v1517 = vunpack.c.l.b16 %v887
        %v1518 = vunpack.c.h.b16 %v887
        %v1519 = vunpack.c.l.b16 %v888
        %v1520 = vunpack.c.h.b16 %v888
        %v1521 = vunpack.c.l.b16 %v889
        %v1522 = vunpack.c.l.b16 %v890
        %v1523 = vunpack.c.h.b16 %v890
        %v1524 = vunpack.c.l.b16 %v891
        %v1525 = vunpack.c.h.b16 %v891
        %v1526 = vunpack.c.l.b16 %v892
        %v1527 = vunpack.c.h.b16 %v892
        %v1528 = vunpack.c.l.b16 %v893
        %v1529 = vunpack.c.h.b16 %v893
        %v1530 = vunpack.c.l.b16 %v894
        %v1531 = vunpack.c.l.b16 %v895
        %v1532 = vunpack.c.h.b16 %v895
        %v1533 = vunpack.c.l.b16 %v896
        %v1534 = vunpack.c.h.b16 %v896
        %v1535 = vunpack.c.l.b16 %v897
        %v1536 = vunpack.c.h.b16 %v897
        %v1537 = vunpack.c.l.b16 %v898
        %v1538 = vunpack.c.h.b16 %v898
        %v1539 = vunpack.c.l.b16 %v899
        %v1540 = vunpack.c.l.b16 %v900
        %v1541 = vunpack.c.h.b16 %v900
        %v1542 = vunpack.c.l.b16 %v901
        %v1543 = vunpack.c.h.b16 %v901
        %v1544 = vunpack.c.l.b16 %v902
        %v1545 = vunpack.c.h.b16 %v902
        %v1546 = vunpack.c.l.b16 %v903
        %v1547 = vunpack.c.h.b16 %v903
        %v1548 = vunpack.c.l.b16 %v904
        %v1549 = vunpack.c.l.b16 %v905
        %v1550 = vunpack.c.h.b16 %v905
        %v1551 = vunpack.c.l.b16 %v906
        %v1552 = vunpack.c.h.b16 %v906
        %v1553 = vunpack.c.l.b16 %v907
        %v1554 = vunpack.c.h.b16 %v907
        %v1555 = vunpack.c.l.b16 %v908
        %v1556 = vunpack.c.h.b16 %v908
        %v1557 = vunpack.c.l.b16 %v909
        %v1558 = vunpack.c.l.b16 %v910
        %v1559 = vunpack.c.h.b16 %v910
        %v1560 = vunpack.c.l.b16 %v911
        %v1561 = vunpack.c.h.b16 %v911
        %v1562 = vunpack.c.l.b16 %v912
        %v1563 = vunpack.c.h.b16 %v912
        %v1564 = vunpack.c.l.b16 %v913
        %v1565 = vunpack.c.h.b16 %v913
        %v1566 = vunpack.c.l.b16 %v914
        %v1567 = vunpack.c.l.b16 %v915
        %v1568 = vunpack.c.h.b16 %v915
        %v1569 = vunpack.c.l.b16 %v916
        %v1570 = vunpack.c.h.b16 %v916
        %v1571 = vunpack.c.l.b16 %v917
        %v1572 = vunpack.c.h.b16 %v917
        %v1573 = vunpack.c.l.b16 %v918
        %v1574 = vunpack.c.h.b16 %v918
        %v1575 = vunpack.c.l.b16 %v919
        %v1576 = vunpack.c.l.b16 %v920
        %v1577 = vunpack.c.h.b16 %v920
        %v1578 = vunpack.c.l.b16 %v921
        %v1579 = vunpack.c.h.b16 %v921
        %v1580 = vunpack.c.l.b16 %v922
        %v1581 = vunpack.c.h.b16 %v922
        %v1582 = vunpack.c.l.b16 %v923
        %v1583 = vunpack.c.h.b16 %v923
        %v1584 = vunpack.c.l.b16 %v924
        %v1585 = vunpack.c.l.b16 %v925
        %v1586 = vunpack.c.h.b16 %v925
        %v1587 = vunpack.c.l.b16 %v926
        %v1588 = vunpack.c.h.b16 %v926
        %v1589 = vunpack.c.l.b16 %v927
        %v1590 = vunpack.c.h.b16 %v927
        %v1591 = vunpack.c.l.b16 %v928
        %v1592 = vunpack.c.h.b16 %v928
        %v1593 = vunpack.c.l.b16 %v929
        %v1594 = vunpack.c.l.b16 %v930
        %v1595 = vunpack.c.h.b16 %v930
        %v1596 = vunpack.c.l.b16 %v931
        %v1597 = vunpack.c.h.b16 %v931
        %v1598 = vunpack.c.l.b16 %v932
        %v1599 = vunpack.c.h.b16 %v932
        %v1600 = vunpack.c.l.b16 %v933
        %v1601 = vunpack.c.h.b16 %v933
        %v1602 = vunpack.c.l.b16 %v934
        %v1603 = vunpack.c.l.b16 %v935
        %v1604 = vunpack.c.h.b16 %v935
        %v1605 = vunpack.c.l.b16 %v936
        %v1606 = vunpack.c.h.b16 %v936
        %v1607 = vunpack.c.l.b16 %v937
        %v1608 = vunpack.c.h.b16 %v937
        %v1609 = vunpack.c.l.b16 %v938
        %v1610 = vunpack.c.h.b16 %v938
        %v1611 = vunpack.c.l.b16 %v939
        %v1612 = vpack.c.b16 %v1189, %v1180
        %v1613 = vpack.c.b16 %v1190, %v1181
        %v1614 = vpack.c.b16 %v1191, %v1182
        %v1615 = vpack.c.b16 %v1192, %v1183
        %v1616 = vpack.c.b16 %v1193, %v1184
        %v1617 = vpack.c.b16 %v1194, %v1185
        %v1618 = vpack.c.b16 %v1195, %v1186
        %v1619 = vpack.c.b16 %v1196, %v1187
        %v1620 = vpack.c.b16 %v1197, %v1188
        %v1621 = vpack.c.b16 %v1207, %v1198
        %v1622 = vpack.c.b16 %v1208, %v1199
        %v1623 = vpack.c.b16 %v1209, %v1200
        %v1624 = vpack.c.b16 %v1210, %v1201
        %v1625 = vpack.c.b16 %v1211, %v1202
        %v1626 = vpack.c.b16 %v1212, %v1203
        %v1627 = vpack.c.b16 %v1213, %v1204
        %v1628 = vpack.c.b16 %v1214, %v1205
        %v1629 = vpack.c.b16 %v1215, %v1206
        %v1630 = vpack.c.b16 %v1225, %v1216
        %v1631 = vpack.c.b16 %v1226, %v1217
        %v1632 = vpack.c.b16 %v1227, %v1218
        %v1633 = vpack.c.b16 %v1228, %v1219
        %v1634 = vpack.c.b16 %v1229, %v1220
        %v1635 = vpack.c.b16 %v1230, %v1221
        %v1636 = vpack.c.b16 %v1231, %v1222
        %v1637 = vpack.c.b16 %v1232, %v1223
        %v1638 = vpack.c.b16 %v1233, %v1224
        %v1639 = vpack.c.b16 %v1243, %v1234
        %v1640 = vpack.c.b16 %v1244, %v1235
        %v1641 = vpack.c.b16 %v1245, %v1236
        %v1642 = vpack.c.b16 %v1246, %v1237
        %v1643 = vpack.c.b16 %v1247, %v1238
        %v1644 = vpack.c.b16 %v1248, %v1239
        %v1645 = vpack.c.b16 %v1249, %v1240
        %v1646 = vpack.c.b16 %v1250, %v1241
        %v1647 = vpack.c.b16 %v1251, %v1242
        %v1648 = vpack.c.b16 %v1261, %v1252
        %v1649 = vpack.c.b16 %v1262, %v1253
        %v1650 = vpack.c.b16 %v1263, %v1254
        %v1651 = vpack.c.b16 %v1264, %v1255
        %v1652 = vpack.c.b16 %v1265, %v1256
        %v1653 = vpack.c.b16 %v1266, %v1257
        %v1654 = vpack.c.b16 %v1267, %v1258
        %v1655 = vpack.c.b16 %v1268, %v1259
        %v1656 = vpack.c.b16 %v1269, %v1260
        %v1657 = vpack.c.b16 %v1279, %v1270
        %v1658 = vpack.c.b16 %v1280, %v1271
        %v1659 = vpack.c.b16 %v1281, %v1272
        %v1660 = vpack.c.b16 %v1282, %v1273
        %v1661 = vpack.c.b16 %v1283, %v1274
        %v1662 = vpack.c.b16 %v1284, %v1275
        %v1663 = vpack.c.b16 %v1285, %v1276
        %v1664 = vpack.c.b16 %v1286, %v1277
        %v1665 = vpack.c.b16 %v1287, %v1278
        %v1666 = vpack.c.b16 %v1297, %v1288
        %v1667 = vpack.c.b16 %v1298, %v1289
        %v1668 = vpack.c.b16 %v1299, %v1290
        %v1669 = vpack.c.b16 %v1300, %v1291
        %v1670 = vpack.c.b16 %v1301, %v1292
        %v1671 = vpack.c.b16 %v1302, %v1293
        %v1672 = vpack.c.b16 %v1303, %v1294
        %v1673 = vpack.c.b16 %v1304, %v1295
        %v1674 = vpack.c.b16 %v1305, %v1296
        %v1675 = vpack.c.b16 %v1315, %v1306
        %v1676 = vpack.c.b16 %v1316, %v1307
        %v1677 = vpack.c.b16 %v1317, %v1308
        %v1678 = vpack.c.b16 %v1318, %v1309
        %v1679 = vpack.c.b16 %v1319, %v1310
        %v1680 = vpack.c.b16 %v1320, %v1311
        %v1681 = vpack.c.b16 %v1321, %v1312
        %v1682 = vpack.c.b16 %v1322, %v1313
        %v1683 = vpack.c.b16 %v1323, %v1314
        %v1684 = vpack.c.b16 %v1333, %v1324
        %v1685 = vpack.c.b16 %v1334, %v1325
        %v1686 = vpack.c.b16 %v1335, %v1326
        %v1687 = vpack.c.b16 %v1336, %v1327
        %v1688 = vpack.c.b16 %v1337, %v1328
        %v1689 = vpack.c.b16 %v1338, %v1329
        %v1690 = vpack.c.b16 %v1339, %v1330
        %v1691 = vpack.c.b16 %v1340, %v1331
        %v1692 = vpack.c.b16 %v1341, %v1332
        %v1693 = vpack.c.b16 %v1351, %v1342
        %v1694 = vpack.c.b16 %v1352, %v1343
        %v1695 = vpack.c.b16 %v1353, %v1344
        %v1696 = vpack.c.b16 %v1354, %v1345
        %v1697 = vpack.c.b16 %v1355, %v1346
        %v1698 = vpack.c.b16 %v1356, %v1347
        %v1699 = vpack.c.b16 %v1357, %v1348
        %v1700 = vpack.c.b16 %v1358, %v1349
        %v1701 = vpack.c.b16 %v1359, %v1350
        %v1702 = vpack.c.b16 %v1369, %v1360
        %v1703 = vpack.c.b16 %v1370, %v1361
        %v1704 = vpack.c.b16 %v1371, %v1362
        %v1705 = vpack.c.b16 %v1372, %v1363
        %v1706 = vpack.c.b16 %v1373, %v1364
        %v1707 = vpack.c.b16 %v1374, %v1365
        %v1708 = vpack.c.b16 %v1375, %v1366
        %v1709 = vpack.c.b16 %v1376, %v1367
        %v1710 = vpack.c.b16 %v1377, %v1368
        %v1711 = vpack.c.b16 %v1387, %v1378
        %v1712 = vpack.c.b16 %v1388, %v1379
        %v1713 = vpack.c.b16 %v1389, %v1380
        %v1714 = vpack.c.b16 %v1390, %v1381
        %v1715 = vpack.c.b16 %v1391, %v1382
        %v1716 = vpack.c.b16 %v1392, %v1383
        %v1717 = vpack.c.b16 %v1393, %v1384
        %v1718 = vpack.c.b16 %v1394, %v1385
        %v1719 = vpack.c.b16 %v1395, %v1386
        %v1720 = vpack.c.b16 %v1405, %v1396
        %v1721 = vpack.c.b16 %v1406, %v1397
        %v1722 = vpack.c.b16 %v1407, %v1398
        %v1723 = vpack.c.b16 %v1408, %v1399
        %v1724 = vpack.c.b16 %v1409, %v1400
        %v1725 = vpack.c.b16 %v1410, %v1401
        %v1726 = vpack.c.b16 %v1411, %v1402
        %v1727 = vpack.c.b16 %v1412, %v1403
        %v1728 = vpack.c.b16 %v1413, %v1404
        %v1729 = vpack.c.b16 %v1423, %v1414
        %v1730 = vpack.c.b16 %v1424, %v1415
        %v1731 = vpack.c.b16 %v1425, %v1416
        %v1732 = vpack.c.b16 %v1426, %v1417
        %v1733 = vpack.c.b16 %v1427, %v1418
        %v1734 = vpack.c.b16 %v1428, %v1419
        %v1735 = vpack.c.b16 %v1429, %v1420
        %v1736 = vpack.c.b16 %v1430, %v1421
        %v1737 = vpack.c.b16 %v1431, %v1422
        %v1738 = vpack.c.b16 %v1441, %v1432
        %v1739 = vpack.c.b16 %v1442, %v1433
        %v1740 = vpack.c.b16 %v1443, %v1434
        %v1741 = vpack.c.b16 %v1444, %v1435
        %v1742 = vpack.c.b16 %v1445, %v1436
        %v1743 = vpack.c.b16 %v1446, %v1437
        %v1744 = vpack.c.b16 %v1447, %v1438
        %v1745 = vpack.c.b16 %v1448, %v1439
        %v1746 = vpack.c.b16 %v1449, %v1440
        %v1747 = vpack.c.b16 %v1459, %v1450
        %v1748 = vpack.c.b16 %v1460, %v1451
        %v1749 = vpack.c.b16 %v1461, %v1452
        %v1750 = vpack.c.b16 %v1462, %v1453
        %v1751 = vpack.c.b16 %v1463, %v1454
        %v1752 = vpack.c.b16 %v1464, %v1455
        %v1753 = vpack.c.b16 %v1465, %v1456
        %v1754 = vpack.c.b16 %v1466, %v1457
        %v1755 = vpack.c.b16 %v1467, %v1458
        %v1756 = vpack.c.b16 %v1477, %v1468
        %v1757 = vpack.c.b16 %v1478, %v1469
        %v1758 = vpack.c.b16 %v1479, %v1470
        %v1759 = vpack.c.b16 %v1480, %v1471
        %v1760 = vpack.c.b16 %v1481, %v1472
        %v1761 = vpack.c.b16 %v1482, %v1473
        %v1762 = vpack.c.b16 %v1483, %v1474
        %v1763 = vpack.c.b16 %v1484, %v1475
        %v1764 = vpack.c.b16 %v1485, %v1476
        %v1765 = vpack.c.b16 %v1495, %v1486
        %v1766 = vpack.c.b16 %v1496, %v1487
        %v1767 = vpack.c.b16 %v1497, %v1488
        %v1768 = vpack.c.b16 %v1498, %v1489
        %v1769 = vpack.c.b16 %v1499, %v1490
        %v1770 = vpack.c.b16 %v1500, %v1491
        %v1771 = vpack.c.b16 %v1501, %v1492
        %v1772 = vpack.c.b16 %v1502, %v1493
        %v1773 = vpack.c.b16 %v1503, %v1494
        %v1774 = vpack.c.b16 %v1513, %v1504
        %v1775 = vpack.c.b16 %v1514, %v1505
        %v1776 = vpack.c.b16 %v1515, %v1506
        %v1777 = vpack.c.b16 %v1516, %v1507
        %v1778 = vpack.c.b16 %v1517, %v1508
        %v1779 = vpack.c.b16 %v1518, %v1509
        %v1780 = vpack.c.b16 %v1519, %v1510
        %v1781 = vpack.c.b16 %v1520, %v1511
        %v1782 = vpack.c.b16 %v1521, %v1512
        %v1783 = vpack.c.b16 %v1531, %v1522
        %v1784 = vpack.c.b16 %v1532, %v1523
        %v1785 = vpack.c.b16 %v1533, %v1524
        %v1786 = vpack.c.b16 %v1534, %v1525
        %v1787 = vpack.c.b16 %v1535, %v1526
        %v1788 = vpack.c.b16 %v1536, %v1527
        %v1789 = vpack.c.b16 %v1537, %v1528
        %v1790 = vpack.c.b16 %v1538, %v1529
        %v1791 = vpack.c.b16 %v1539, %v1530
        %v1792 = vpack.c.b16 %v1549, %v1540
        %v1793 = vpack.c.b16 %v1550, %v1541
        %v1794 = vpack.c.b16 %v1551, %v1542
        %v1795 = vpack.c.b16 %v1552, %v1543
        %v1796 = vpack.c.b16 %v1553, %v1544
        %v1797 = vpack.c.b16 %v1554, %v1545
        %v1798 = vpack.c.b16 %v1555, %v1546
        %v1799 = vpack.c.b16 %v1556, %v1547
        %v1800 = vpack.c.b16 %v1557, %v1548
        %v1801 = vpack.c.b16 %v1567, %v1558
        %v1802 = vpack.c.b16 %v1568, %v1559
        %v1803 = vpack.c.b16 %v1569, %v1560
        %v1804 = vpack.c.b16 %v1570, %v1561
        %v1805 = vpack.c.b16 %v1571, %v1562
        %v1806 = vpack.c.b16 %v1572, %v1563
        %v1807 = vpack.c.b16 %v1573, %v1564
        %v1808 = vpack.c.b16 %v1574, %v1565
        %v1809 = vpack.c.b16 %v1575, %v1566
        %v1810 = vpack.c.b16 %v1585, %v1576
        %v1811 = vpack.c.b16 %v1586, %v1577
        %v1812 = vpack.c.b16 %v1587, %v1578
        %v1813 = vpack.c.b16 %v1588, %v1579
        %v1814 = vpack.c.b16 %v1589, %v1580
        %v1815 = vpack.c.b16 %v1590, %v1581
        %v1816 = vpack.c.b16 %v1591, %v1582
        %v1817 = vpack.c.b16 %v1592, %v1583
        %v1818 = vpack.c.b16 %v1593, %v1584
        %v1819 = vpack.c.b16 %v1603, %v1594
        %v1820 = vpack.c.b16 %v1604, %v1595
        %v1821 = vpack.c.b16 %v1605, %v1596
        %v1822 = vpack.c.b16 %v1606, %v1597
        %v1823 = vpack.c.b16 %v1607, %v1598
        %v1824 = vpack.c.b16 %v1608, %v1599
        %v1825 = vpack.c.b16 %v1609, %v1600
        %v1826 = vpack.c.b16 %v1610, %v1601
        %v1827 = vpack.c.b16 %v1611, %v1602
        %2044 = vmatprep.subr.bf16.mxu0 %v1676
        %2045 = vmatpush1.bf16.msra.mxu0 %v1675
        %2046 = vmatprep.subr.bf16.mxu0 %v1667
        %2047 = vmatpush1.bf16.msra.mxu0 %v1666
        %2048 = vmatprep.subr.bf16.mxu0 %v1658
        %2049 = vmatpush1.bf16.msra.mxu0 %v1657
        %2050 = vmatprep.subr.bf16.mxu0 %v1649
        %2051 = vmatpush1.bf16.msra.mxu0 %v1648
        %2052 = vmatprep.subr.bf16.mxu0 %v1640
        %2053 = vmatpush1.bf16.msra.mxu0 %v1639
        %2054 = vmatprep.subr.bf16.mxu0 %v1631
        %2055 = vmatpush1.bf16.msra.mxu0 %v1630
        %2056 = vmatprep.subr.bf16.mxu0 %v1622
        %2057 = vmatpush1.bf16.msra.mxu0 %v1621
        %2058 = vmatprep.subr.bf16.mxu0 %v1613
        %2059 = vmatpush1.bf16.msra.mxu0 %v1612
        %2060 = vmatprep.subr.bf16.mxu0 %v1748
        %2061 = vmatpush2.bf16.msra.mxu0 %v1747
        %2062 = vmatprep.subr.bf16.mxu0 %v1739
        %2063 = vmatpush2.bf16.msra.mxu0 %v1738
        %2064 = vmatprep.subr.bf16.mxu0 %v1730
        %2065 = vmatpush2.bf16.msra.mxu0 %v1729
        %2066 = vmatprep.subr.bf16.mxu0 %v1721
        %2067 = vmatpush2.bf16.msra.mxu0 %v1720
        %2068 = vmatprep.subr.bf16.mxu0 %v1712
        %2069 = vmatpush2.bf16.msra.mxu0 %v1711
        %2070 = vmatprep.subr.bf16.mxu0 %v1703
        %2071 = vmatpush2.bf16.msra.mxu0 %v1702
        %2072 = vmatprep.subr.bf16.mxu0 %v1694
        %2073 = vmatpush2.bf16.msra.mxu0 %v1693
        %2074 = vmatprep.subr.bf16.mxu0 %v1685
        %2075 = vmatpush2.bf16.msra.mxu0 %v1684
        %2076 = vmatprep.mubr.bf16.mxu0 %v689
        %2077 = vmatmul.mubr.bf16.gmra.mxu0 %v688
        %v2078 = vpop.f32.mrf.mxu0
        %v2079 = vadd.f32 0.0, %v2078
        %v2080 = vpop.f32.mrf.mxu0
        %v2081 = vadd.f32 0.0, %v2080
        %v2082 = vpop.f32.mrf.mxu0
        %v2083 = vadd.f32 0.0, %v2082
        %v2084 = vpop.f32.mrf.mxu0
        %v2085 = vadd.f32 0.0, %v2084
        %2086 = vmatprep.mubr.bf16.mxu0 %v692
        %2087 = vmatmul.mubr.bf16.gmra.mxu0 %v691
        %v2088 = vpop.f32.mrf.mxu0
        %v2089 = vadd.f32 0.0, %v2088
        %v2090 = vpop.f32.mrf.mxu0
        %v2091 = vadd.f32 0.0, %v2090
        %v2092 = vpop.f32.mrf.mxu0
        %v2093 = vadd.f32 0.0, %v2092
        %v2094 = vpop.f32.mrf.mxu0
        %v2095 = vadd.f32 0.0, %v2094
        %2096 = vmatprep.mubr.bf16.mxu0 %v695
        %2097 = vmatmul.mubr.bf16.gmra.mxu0 %v694
        %v2098 = vpop.f32.mrf.mxu0
        %v2099 = vadd.f32 0.0, %v2098
        %v2100 = vpop.f32.mrf.mxu0
        %v2101 = vadd.f32 0.0, %v2100
        %v2102 = vpop.f32.mrf.mxu0
        %v2103 = vadd.f32 0.0, %v2102
        %v2104 = vpop.f32.mrf.mxu0
        %v2105 = vadd.f32 0.0, %v2104
        %2106 = vmatprep.mubr.bf16.mxu0 %v698
        %2107 = vmatmul.mubr.bf16.gmra.mxu0 %v697
        %v2108 = vpop.f32.mrf.mxu0
        %v2109 = vadd.f32 0.0, %v2108
        %v2110 = vpop.f32.mrf.mxu0
        %v2111 = vadd.f32 0.0, %v2110
        %v2112 = vpop.f32.mrf.mxu0
        %v2113 = vadd.f32 0.0, %v2112
        %v2114 = vpop.f32.mrf.mxu0
        %v2115 = vadd.f32 0.0, %v2114
        %2116 = vdwg.mxu0
        %2117 = vmatprep.subr.bf16.mxu0 %v1820
        %2118 = vmatpush1.bf16.msra.mxu0 %v1819
        %2119 = vmatprep.subr.bf16.mxu0 %v1811
        %2120 = vmatpush1.bf16.msra.mxu0 %v1810
        %2121 = vmatprep.subr.bf16.mxu0 %v1802
        %2122 = vmatpush1.bf16.msra.mxu0 %v1801
        %2123 = vmatprep.subr.bf16.mxu0 %v1793
        %2124 = vmatpush1.bf16.msra.mxu0 %v1792
        %2125 = vmatprep.subr.bf16.mxu0 %v1784
        %2126 = vmatpush1.bf16.msra.mxu0 %v1783
        %2127 = vmatprep.subr.bf16.mxu0 %v1775
        %2128 = vmatpush1.bf16.msra.mxu0 %v1774
        %2129 = vmatprep.subr.bf16.mxu0 %v1766
        %2130 = vmatpush1.bf16.msra.mxu0 %v1765
        %2131 = vmatprep.subr.bf16.mxu0 %v1757
        %2132 = vmatpush1.bf16.msra.mxu0 %v1756
        %2133 = vmatprep.subr.bf16.mxu0 0
        %2134 = vmatpush2.bf16.msra.mxu0 0
        %2135 = vmatprep.subr.bf16.mxu0 0
        %2136 = vmatpush2.bf16.msra.mxu0 0
        %2137 = vmatprep.subr.bf16.mxu0 0
        %2138 = vmatpush2.bf16.msra.mxu0 0
        %2139 = vmatprep.subr.bf16.mxu0 0
        %2140 = vmatpush2.bf16.msra.mxu0 0
        %2141 = vmatprep.subr.bf16.mxu0 0
        %2142 = vmatpush2.bf16.msra.mxu0 0
        %2143 = vmatprep.subr.bf16.mxu0 0
        %2144 = vmatpush2.bf16.msra.mxu0 0
        %2145 = vmatprep.subr.bf16.mxu0 0
        %2146 = vmatpush2.bf16.msra.mxu0 0
        %2147 = vmatprep.subr.bf16.mxu0 0
        %2148 = vmatpush2.bf16.msra.mxu0 0
        %2149 = vmatprep.mubr.bf16.mxu0 0
        %2150 = vmatmul.mubr.bf16.gmra.mxu0 %v690
        %v2151 = vpop.f32.mrf.mxu0
        %v2152 = vadd.f32 %v2079, %v2151
        %v2153 = vpop.f32.mrf.mxu0
        %v2154 = vadd.f32 %v2081, %v2153
        %v2155 = vpop.f32.mrf.mxu0
        %v2156 = vadd.f32 %v2083, %v2155
        %v2157 = vpop.f32.mrf.mxu0
        %v2158 = vadd.f32 %v2085, %v2157
        %2159 = vmatprep.mubr.bf16.mxu0 0
        %2160 = vmatmul.mubr.bf16.gmra.mxu0 %v693
        %v2161 = vpop.f32.mrf.mxu0
        %v2162 = vadd.f32 %v2089, %v2161
        %v2163 = vpop.f32.mrf.mxu0
        %v2164 = vadd.f32 %v2091, %v2163
        %v2165 = vpop.f32.mrf.mxu0
        %v2166 = vadd.f32 %v2093, %v2165
        %v2167 = vpop.f32.mrf.mxu0
        %v2168 = vadd.f32 %v2095, %v2167
        %2169 = vmatprep.mubr.bf16.mxu0 0
        %2170 = vmatmul.mubr.bf16.gmra.mxu0 %v696
        %v2171 = vpop.f32.mrf.mxu0
        %v2172 = vadd.f32 %v2099, %v2171
        %v2173 = vpop.f32.mrf.mxu0
        %v2174 = vadd.f32 %v2101, %v2173
        %v2175 = vpop.f32.mrf.mxu0
        %v2176 = vadd.f32 %v2103, %v2175
        %v2177 = vpop.f32.mrf.mxu0
        %v2178 = vadd.f32 %v2105, %v2177
        %2179 = vmatprep.mubr.bf16.mxu0 0
        %2180 = vmatmul.mubr.bf16.gmra.mxu0 %v699
        %v2181 = vpop.f32.mrf.mxu0
        %v2182 = vadd.f32 %v2109, %v2181
        %v2183 = vpop.f32.mrf.mxu0
        %v2184 = vadd.f32 %v2111, %v2183
        %v2185 = vpop.f32.mrf.mxu0
        %v2186 = vadd.f32 %v2113, %v2185
        %v2187 = vpop.f32.mrf.mxu0
        %v2188 = vadd.f32 %v2115, %v2187
        %2189 = vdwg.mxu0
        %2190 = vmatprep.subr.bf16.mxu0 %v1678
        %2191 = vmatpush1.bf16.msra.mxu0 %v1677
        %2192 = vmatprep.subr.bf16.mxu0 %v1669
        %2193 = vmatpush1.bf16.msra.mxu0 %v1668
        %2194 = vmatprep.subr.bf16.mxu0 %v1660
        %2195 = vmatpush1.bf16.msra.mxu0 %v1659
        %2196 = vmatprep.subr.bf16.mxu0 %v1651
        %2197 = vmatpush1.bf16.msra.mxu0 %v1650
        %2198 = vmatprep.subr.bf16.mxu0 %v1642
        %2199 = vmatpush1.bf16.msra.mxu0 %v1641
        %2200 = vmatprep.subr.bf16.mxu0 %v1633
        %2201 = vmatpush1.bf16.msra.mxu0 %v1632
        %2202 = vmatprep.subr.bf16.mxu0 %v1624
        %2203 = vmatpush1.bf16.msra.mxu0 %v1623
        %2204 = vmatprep.subr.bf16.mxu0 %v1615
        %2205 = vmatpush1.bf16.msra.mxu0 %v1614
        %2206 = vmatprep.subr.bf16.mxu0 %v1750
        %2207 = vmatpush2.bf16.msra.mxu0 %v1749
        %2208 = vmatprep.subr.bf16.mxu0 %v1741
        %2209 = vmatpush2.bf16.msra.mxu0 %v1740
        %2210 = vmatprep.subr.bf16.mxu0 %v1732
        %2211 = vmatpush2.bf16.msra.mxu0 %v1731
        %2212 = vmatprep.subr.bf16.mxu0 %v1723
        %2213 = vmatpush2.bf16.msra.mxu0 %v1722
        %2214 = vmatprep.subr.bf16.mxu0 %v1714
        %2215 = vmatpush2.bf16.msra.mxu0 %v1713
        %2216 = vmatprep.subr.bf16.mxu0 %v1705
        %2217 = vmatpush2.bf16.msra.mxu0 %v1704
        %2218 = vmatprep.subr.bf16.mxu0 %v1696
        %2219 = vmatpush2.bf16.msra.mxu0 %v1695
        %2220 = vmatprep.subr.bf16.mxu0 %v1687
        %2221 = vmatpush2.bf16.msra.mxu0 %v1686
        %2222 = vmatprep.mubr.bf16.mxu0 %v689
        %2223 = vmatmul.mubr.bf16.gmra.mxu0 %v688
        %v2224 = vpop.f32.mrf.mxu0
        %v2225 = vadd.f32 0.0, %v2224
        %v2226 = vpop.f32.mrf.mxu0
        %v2227 = vadd.f32 0.0, %v2226
        %v2228 = vpop.f32.mrf.mxu0
        %v2229 = vadd.f32 0.0, %v2228
        %v2230 = vpop.f32.mrf.mxu0
        %v2231 = vadd.f32 0.0, %v2230
        %2232 = vmatprep.mubr.bf16.mxu0 %v692
        %2233 = vmatmul.mubr.bf16.gmra.mxu0 %v691
        %v2234 = vpop.f32.mrf.mxu0
        %v2235 = vadd.f32 0.0, %v2234
        %v2236 = vpop.f32.mrf.mxu0
        %v2237 = vadd.f32 0.0, %v2236
        %v2238 = vpop.f32.mrf.mxu0
        %v2239 = vadd.f32 0.0, %v2238
        %v2240 = vpop.f32.mrf.mxu0
        %v2241 = vadd.f32 0.0, %v2240
        %2242 = vmatprep.mubr.bf16.mxu0 %v695
        %2243 = vmatmul.mubr.bf16.gmra.mxu0 %v694
        %v2244 = vpop.f32.mrf.mxu0
        %v2245 = vadd.f32 0.0, %v2244
        %v2246 = vpop.f32.mrf.mxu0
        %v2247 = vadd.f32 0.0, %v2246
        %v2248 = vpop.f32.mrf.mxu0
        %v2249 = vadd.f32 0.0, %v2248
        %v2250 = vpop.f32.mrf.mxu0
        %v2251 = vadd.f32 0.0, %v2250
        %2252 = vmatprep.mubr.bf16.mxu0 %v698
        %2253 = vmatmul.mubr.bf16.gmra.mxu0 %v697
        %v2254 = vpop.f32.mrf.mxu0
        %v2255 = vadd.f32 0.0, %v2254
        %v2256 = vpop.f32.mrf.mxu0
        %v2257 = vadd.f32 0.0, %v2256
        %v2258 = vpop.f32.mrf.mxu0
        %v2259 = vadd.f32 0.0, %v2258
        %v2260 = vpop.f32.mrf.mxu0
        %v2261 = vadd.f32 0.0, %v2260
        %2262 = vdwg.mxu0
        %2263 = vmatprep.subr.bf16.mxu0 %v1822
        %2264 = vmatpush1.bf16.msra.mxu0 %v1821
        %2265 = vmatprep.subr.bf16.mxu0 %v1813
        %2266 = vmatpush1.bf16.msra.mxu0 %v1812
        %2267 = vmatprep.subr.bf16.mxu0 %v1804
        %2268 = vmatpush1.bf16.msra.mxu0 %v1803
        %2269 = vmatprep.subr.bf16.mxu0 %v1795
        %2270 = vmatpush1.bf16.msra.mxu0 %v1794
        %2271 = vmatprep.subr.bf16.mxu0 %v1786
        %2272 = vmatpush1.bf16.msra.mxu0 %v1785
        %2273 = vmatprep.subr.bf16.mxu0 %v1777
        %2274 = vmatpush1.bf16.msra.mxu0 %v1776
        %2275 = vmatprep.subr.bf16.mxu0 %v1768
        %2276 = vmatpush1.bf16.msra.mxu0 %v1767
        %2277 = vmatprep.subr.bf16.mxu0 %v1759
        %2278 = vmatpush1.bf16.msra.mxu0 %v1758
        %2279 = vmatprep.subr.bf16.mxu0 0
        %2280 = vmatpush2.bf16.msra.mxu0 0
        %2281 = vmatprep.subr.bf16.mxu0 0
        %2282 = vmatpush2.bf16.msra.mxu0 0
        %2283 = vmatprep.subr.bf16.mxu0 0
        %2284 = vmatpush2.bf16.msra.mxu0 0
        %2285 = vmatprep.subr.bf16.mxu0 0
        %2286 = vmatpush2.bf16.msra.mxu0 0
        %2287 = vmatprep.subr.bf16.mxu0 0
        %2288 = vmatpush2.bf16.msra.mxu0 0
        %2289 = vmatprep.subr.bf16.mxu0 0
        %2290 = vmatpush2.bf16.msra.mxu0 0
        %2291 = vmatprep.subr.bf16.mxu0 0
        %2292 = vmatpush2.bf16.msra.mxu0 0
        %2293 = vmatprep.subr.bf16.mxu0 0
        %2294 = vmatpush2.bf16.msra.mxu0 0
        %2295 = vmatprep.mubr.bf16.mxu0 0
        %2296 = vmatmul.mubr.bf16.gmra.mxu0 %v690
        %v2297 = vpop.f32.mrf.mxu0
        %v2298 = vadd.f32 %v2225, %v2297
        %v2299 = vpop.f32.mrf.mxu0
        %v2300 = vadd.f32 %v2227, %v2299
        %v2301 = vpop.f32.mrf.mxu0
        %v2302 = vadd.f32 %v2229, %v2301
        %v2303 = vpop.f32.mrf.mxu0
        %v2304 = vadd.f32 %v2231, %v2303
        %2305 = vmatprep.mubr.bf16.mxu0 0
        %2306 = vmatmul.mubr.bf16.gmra.mxu0 %v693
        %v2307 = vpop.f32.mrf.mxu0
        %v2308 = vadd.f32 %v2235, %v2307
        %v2309 = vpop.f32.mrf.mxu0
        %v2310 = vadd.f32 %v2237, %v2309
        %v2311 = vpop.f32.mrf.mxu0
        %v2312 = vadd.f32 %v2239, %v2311
        %v2313 = vpop.f32.mrf.mxu0
        %v2314 = vadd.f32 %v2241, %v2313
        %2315 = vmatprep.mubr.bf16.mxu0 0
        %2316 = vmatmul.mubr.bf16.gmra.mxu0 %v696
        %v2317 = vpop.f32.mrf.mxu0
        %v2318 = vadd.f32 %v2245, %v2317
        %v2319 = vpop.f32.mrf.mxu0
        %v2320 = vadd.f32 %v2247, %v2319
        %v2321 = vpop.f32.mrf.mxu0
        %v2322 = vadd.f32 %v2249, %v2321
        %v2323 = vpop.f32.mrf.mxu0
        %v2324 = vadd.f32 %v2251, %v2323
        %2325 = vmatprep.mubr.bf16.mxu0 0
        %2326 = vmatmul.mubr.bf16.gmra.mxu0 %v699
        %v2327 = vpop.f32.mrf.mxu0
        %v2328 = vadd.f32 %v2255, %v2327
        %v2329 = vpop.f32.mrf.mxu0
        %v2330 = vadd.f32 %v2257, %v2329
        %v2331 = vpop.f32.mrf.mxu0
        %v2332 = vadd.f32 %v2259, %v2331
        %v2333 = vpop.f32.mrf.mxu0
        %v2334 = vadd.f32 %v2261, %v2333
        %2335 = vdwg.mxu0
        %2336 = vmatprep.subr.bf16.mxu0 %v1680
        %2337 = vmatpush1.bf16.msra.mxu0 %v1679
        %2338 = vmatprep.subr.bf16.mxu0 %v1671
        %2339 = vmatpush1.bf16.msra.mxu0 %v1670
        %2340 = vmatprep.subr.bf16.mxu0 %v1662
        %2341 = vmatpush1.bf16.msra.mxu0 %v1661
        %2342 = vmatprep.subr.bf16.mxu0 %v1653
        %2343 = vmatpush1.bf16.msra.mxu0 %v1652
        %2344 = vmatprep.subr.bf16.mxu0 %v1644
        %2345 = vmatpush1.bf16.msra.mxu0 %v1643
        %2346 = vmatprep.subr.bf16.mxu0 %v1635
        %2347 = vmatpush1.bf16.msra.mxu0 %v1634
        %2348 = vmatprep.subr.bf16.mxu0 %v1626
        %2349 = vmatpush1.bf16.msra.mxu0 %v1625
        %2350 = vmatprep.subr.bf16.mxu0 %v1617
        %2351 = vmatpush1.bf16.msra.mxu0 %v1616
        %2352 = vmatprep.subr.bf16.mxu0 %v1752
        %2353 = vmatpush2.bf16.msra.mxu0 %v1751
        %2354 = vmatprep.subr.bf16.mxu0 %v1743
        %2355 = vmatpush2.bf16.msra.mxu0 %v1742
        %2356 = vmatprep.subr.bf16.mxu0 %v1734
        %2357 = vmatpush2.bf16.msra.mxu0 %v1733
        %2358 = vmatprep.subr.bf16.mxu0 %v1725
        %2359 = vmatpush2.bf16.msra.mxu0 %v1724
        %2360 = vmatprep.subr.bf16.mxu0 %v1716
        %2361 = vmatpush2.bf16.msra.mxu0 %v1715
        %2362 = vmatprep.subr.bf16.mxu0 %v1707
        %2363 = vmatpush2.bf16.msra.mxu0 %v1706
        %2364 = vmatprep.subr.bf16.mxu0 %v1698
        %2365 = vmatpush2.bf16.msra.mxu0 %v1697
        %2366 = vmatprep.subr.bf16.mxu0 %v1689
        %2367 = vmatpush2.bf16.msra.mxu0 %v1688
        %2368 = vmatprep.mubr.bf16.mxu0 %v689
        %2369 = vmatmul.mubr.bf16.gmra.mxu0 %v688
        %v2370 = vpop.f32.mrf.mxu0
        %v2371 = vadd.f32 0.0, %v2370
        %v2372 = vpop.f32.mrf.mxu0
        %v2373 = vadd.f32 0.0, %v2372
        %v2374 = vpop.f32.mrf.mxu0
        %v2375 = vadd.f32 0.0, %v2374
        %v2376 = vpop.f32.mrf.mxu0
        %v2377 = vadd.f32 0.0, %v2376
        %2378 = vmatprep.mubr.bf16.mxu0 %v692
        %2379 = vmatmul.mubr.bf16.gmra.mxu0 %v691
        %v2380 = vpop.f32.mrf.mxu0
        %v2381 = vadd.f32 0.0, %v2380
        %v2382 = vpop.f32.mrf.mxu0
        %v2383 = vadd.f32 0.0, %v2382
        %v2384 = vpop.f32.mrf.mxu0
        %v2385 = vadd.f32 0.0, %v2384
        %v2386 = vpop.f32.mrf.mxu0
        %v2387 = vadd.f32 0.0, %v2386
        %2388 = vmatprep.mubr.bf16.mxu0 %v695
        %2389 = vmatmul.mubr.bf16.gmra.mxu0 %v694
        %v2390 = vpop.f32.mrf.mxu0
        %v2391 = vadd.f32 0.0, %v2390
        %v2392 = vpop.f32.mrf.mxu0
        %v2393 = vadd.f32 0.0, %v2392
        %v2394 = vpop.f32.mrf.mxu0
        %v2395 = vadd.f32 0.0, %v2394
        %v2396 = vpop.f32.mrf.mxu0
        %v2397 = vadd.f32 0.0, %v2396
        %2398 = vmatprep.mubr.bf16.mxu0 %v698
        %2399 = vmatmul.mubr.bf16.gmra.mxu0 %v697
        %v2400 = vpop.f32.mrf.mxu0
        %v2401 = vadd.f32 0.0, %v2400
        %v2402 = vpop.f32.mrf.mxu0
        %v2403 = vadd.f32 0.0, %v2402
        %v2404 = vpop.f32.mrf.mxu0
        %v2405 = vadd.f32 0.0, %v2404
        %v2406 = vpop.f32.mrf.mxu0
        %v2407 = vadd.f32 0.0, %v2406
        %2408 = vdwg.mxu0
        %2409 = vmatprep.subr.bf16.mxu0 %v1824
        %2410 = vmatpush1.bf16.msra.mxu0 %v1823
        %2411 = vmatprep.subr.bf16.mxu0 %v1815
        %2412 = vmatpush1.bf16.msra.mxu0 %v1814
        %2413 = vmatprep.subr.bf16.mxu0 %v1806
        %2414 = vmatpush1.bf16.msra.mxu0 %v1805
        %2415 = vmatprep.subr.bf16.mxu0 %v1797
        %2416 = vmatpush1.bf16.msra.mxu0 %v1796
        %2417 = vmatprep.subr.bf16.mxu0 %v1788
        %2418 = vmatpush1.bf16.msra.mxu0 %v1787
        %2419 = vmatprep.subr.bf16.mxu0 %v1779
        %2420 = vmatpush1.bf16.msra.mxu0 %v1778
        %2421 = vmatprep.subr.bf16.mxu0 %v1770
        %2422 = vmatpush1.bf16.msra.mxu0 %v1769
        %2423 = vmatprep.subr.bf16.mxu0 %v1761
        %2424 = vmatpush1.bf16.msra.mxu0 %v1760
        %2425 = vmatprep.subr.bf16.mxu0 0
        %2426 = vmatpush2.bf16.msra.mxu0 0
        %2427 = vmatprep.subr.bf16.mxu0 0
        %2428 = vmatpush2.bf16.msra.mxu0 0
        %2429 = vmatprep.subr.bf16.mxu0 0
        %2430 = vmatpush2.bf16.msra.mxu0 0
        %2431 = vmatprep.subr.bf16.mxu0 0
        %2432 = vmatpush2.bf16.msra.mxu0 0
        %2433 = vmatprep.subr.bf16.mxu0 0
        %2434 = vmatpush2.bf16.msra.mxu0 0
        %2435 = vmatprep.subr.bf16.mxu0 0
        %2436 = vmatpush2.bf16.msra.mxu0 0
        %2437 = vmatprep.subr.bf16.mxu0 0
        %2438 = vmatpush2.bf16.msra.mxu0 0
        %2439 = vmatprep.subr.bf16.mxu0 0
        %2440 = vmatpush2.bf16.msra.mxu0 0
        %2441 = vmatprep.mubr.bf16.mxu0 0
        %2442 = vmatmul.mubr.bf16.gmra.mxu0 %v690
        %v2443 = vpop.f32.mrf.mxu0
        %v2444 = vadd.f32 %v2371, %v2443
        %v2445 = vpop.f32.mrf.mxu0
        %v2446 = vadd.f32 %v2373, %v2445
        %v2447 = vpop.f32.mrf.mxu0
        %v2448 = vadd.f32 %v2375, %v2447
        %v2449 = vpop.f32.mrf.mxu0
        %v2450 = vadd.f32 %v2377, %v2449
        %2451 = vmatprep.mubr.bf16.mxu0 0
        %2452 = vmatmul.mubr.bf16.gmra.mxu0 %v693
        %v2453 = vpop.f32.mrf.mxu0
        %v2454 = vadd.f32 %v2381, %v2453
        %v2455 = vpop.f32.mrf.mxu0
        %v2456 = vadd.f32 %v2383, %v2455
        %v2457 = vpop.f32.mrf.mxu0
        %v2458 = vadd.f32 %v2385, %v2457
        %v2459 = vpop.f32.mrf.mxu0
        %v2460 = vadd.f32 %v2387, %v2459
        %2461 = vmatprep.mubr.bf16.mxu0 0
        %2462 = vmatmul.mubr.bf16.gmra.mxu0 %v696
        %v2463 = vpop.f32.mrf.mxu0
        %v2464 = vadd.f32 %v2391, %v2463
        %v2465 = vpop.f32.mrf.mxu0
        %v2466 = vadd.f32 %v2393, %v2465
        %v2467 = vpop.f32.mrf.mxu0
        %v2468 = vadd.f32 %v2395, %v2467
        %v2469 = vpop.f32.mrf.mxu0
        %v2470 = vadd.f32 %v2397, %v2469
        %2471 = vmatprep.mubr.bf16.mxu0 0
        %2472 = vmatmul.mubr.bf16.gmra.mxu0 %v699
        %v2473 = vpop.f32.mrf.mxu0
        %v2474 = vadd.f32 %v2401, %v2473
        %v2475 = vpop.f32.mrf.mxu0
        %v2476 = vadd.f32 %v2403, %v2475
        %v2477 = vpop.f32.mrf.mxu0
        %v2478 = vadd.f32 %v2405, %v2477
        %v2479 = vpop.f32.mrf.mxu0
        %v2480 = vadd.f32 %v2407, %v2479
        %2481 = vdwg.mxu0
        %2482 = vmatprep.subr.bf16.mxu0 %v1682
        %2483 = vmatpush1.bf16.msra.mxu0 %v1681
        %2484 = vmatprep.subr.bf16.mxu0 %v1673
        %2485 = vmatpush1.bf16.msra.mxu0 %v1672
        %2486 = vmatprep.subr.bf16.mxu0 %v1664
        %2487 = vmatpush1.bf16.msra.mxu0 %v1663
        %2488 = vmatprep.subr.bf16.mxu0 %v1655
        %2489 = vmatpush1.bf16.msra.mxu0 %v1654
        %2490 = vmatprep.subr.bf16.mxu0 %v1646
        %2491 = vmatpush1.bf16.msra.mxu0 %v1645
        %2492 = vmatprep.subr.bf16.mxu0 %v1637
        %2493 = vmatpush1.bf16.msra.mxu0 %v1636
        %2494 = vmatprep.subr.bf16.mxu0 %v1628
        %2495 = vmatpush1.bf16.msra.mxu0 %v1627
        %2496 = vmatprep.subr.bf16.mxu0 %v1619
        %2497 = vmatpush1.bf16.msra.mxu0 %v1618
        %2498 = vmatprep.subr.bf16.mxu0 %v1754
        %2499 = vmatpush2.bf16.msra.mxu0 %v1753
        %2500 = vmatprep.subr.bf16.mxu0 %v1745
        %2501 = vmatpush2.bf16.msra.mxu0 %v1744
        %2502 = vmatprep.subr.bf16.mxu0 %v1736
        %2503 = vmatpush2.bf16.msra.mxu0 %v1735
        %2504 = vmatprep.subr.bf16.mxu0 %v1727
        %2505 = vmatpush2.bf16.msra.mxu0 %v1726
        %2506 = vmatprep.subr.bf16.mxu0 %v1718
        %2507 = vmatpush2.bf16.msra.mxu0 %v1717
        %2508 = vmatprep.subr.bf16.mxu0 %v1709
        %2509 = vmatpush2.bf16.msra.mxu0 %v1708
        %2510 = vmatprep.subr.bf16.mxu0 %v1700
        %2511 = vmatpush2.bf16.msra.mxu0 %v1699
        %2512 = vmatprep.subr.bf16.mxu0 %v1691
        %2513 = vmatpush2.bf16.msra.mxu0 %v1690
        %2514 = vmatprep.mubr.bf16.mxu0 %v689
        %2515 = vmatmul.mubr.bf16.gmra.mxu0 %v688
        %v2516 = vpop.f32.mrf.mxu0
        %v2517 = vadd.f32 0.0, %v2516
        %v2518 = vpop.f32.mrf.mxu0
        %v2519 = vadd.f32 0.0, %v2518
        %v2520 = vpop.f32.mrf.mxu0
        %v2521 = vadd.f32 0.0, %v2520
        %v2522 = vpop.f32.mrf.mxu0
        %v2523 = vadd.f32 0.0, %v2522
        %2524 = vmatprep.mubr.bf16.mxu0 %v692
        %2525 = vmatmul.mubr.bf16.gmra.mxu0 %v691
        %v2526 = vpop.f32.mrf.mxu0
        %v2527 = vadd.f32 0.0, %v2526
        %v2528 = vpop.f32.mrf.mxu0
        %v2529 = vadd.f32 0.0, %v2528
        %v2530 = vpop.f32.mrf.mxu0
        %v2531 = vadd.f32 0.0, %v2530
        %v2532 = vpop.f32.mrf.mxu0
        %v2533 = vadd.f32 0.0, %v2532
        %2534 = vmatprep.mubr.bf16.mxu0 %v695
        %2535 = vmatmul.mubr.bf16.gmra.mxu0 %v694
        %v2536 = vpop.f32.mrf.mxu0
        %v2537 = vadd.f32 0.0, %v2536
        %v2538 = vpop.f32.mrf.mxu0
        %v2539 = vadd.f32 0.0, %v2538
        %v2540 = vpop.f32.mrf.mxu0
        %v2541 = vadd.f32 0.0, %v2540
        %v2542 = vpop.f32.mrf.mxu0
        %v2543 = vadd.f32 0.0, %v2542
        %2544 = vmatprep.mubr.bf16.mxu0 %v698
        %2545 = vmatmul.mubr.bf16.gmra.mxu0 %v697
        %v2546 = vpop.f32.mrf.mxu0
        %v2547 = vadd.f32 0.0, %v2546
        %v2548 = vpop.f32.mrf.mxu0
        %v2549 = vadd.f32 0.0, %v2548
        %v2550 = vpop.f32.mrf.mxu0
        %v2551 = vadd.f32 0.0, %v2550
        %v2552 = vpop.f32.mrf.mxu0
        %v2553 = vadd.f32 0.0, %v2552
        %2554 = vdwg.mxu0
        %2555 = vmatprep.subr.bf16.mxu0 %v1826
        %2556 = vmatpush1.bf16.msra.mxu0 %v1825
        %2557 = vmatprep.subr.bf16.mxu0 %v1817
        %2558 = vmatpush1.bf16.msra.mxu0 %v1816
        %2559 = vmatprep.subr.bf16.mxu0 %v1808
        %2560 = vmatpush1.bf16.msra.mxu0 %v1807
        %2561 = vmatprep.subr.bf16.mxu0 %v1799
        %2562 = vmatpush1.bf16.msra.mxu0 %v1798
        %2563 = vmatprep.subr.bf16.mxu0 %v1790
        %2564 = vmatpush1.bf16.msra.mxu0 %v1789
        %2565 = vmatprep.subr.bf16.mxu0 %v1781
        %2566 = vmatpush1.bf16.msra.mxu0 %v1780
        %2567 = vmatprep.subr.bf16.mxu0 %v1772
        %2568 = vmatpush1.bf16.msra.mxu0 %v1771
        %2569 = vmatprep.subr.bf16.mxu0 %v1763
        %2570 = vmatpush1.bf16.msra.mxu0 %v1762
        %2571 = vmatprep.subr.bf16.mxu0 0
        %2572 = vmatpush2.bf16.msra.mxu0 0
        %2573 = vmatprep.subr.bf16.mxu0 0
        %2574 = vmatpush2.bf16.msra.mxu0 0
        %2575 = vmatprep.subr.bf16.mxu0 0
        %2576 = vmatpush2.bf16.msra.mxu0 0
        %2577 = vmatprep.subr.bf16.mxu0 0
        %2578 = vmatpush2.bf16.msra.mxu0 0
        %2579 = vmatprep.subr.bf16.mxu0 0
        %2580 = vmatpush2.bf16.msra.mxu0 0
        %2581 = vmatprep.subr.bf16.mxu0 0
        %2582 = vmatpush2.bf16.msra.mxu0 0
        %2583 = vmatprep.subr.bf16.mxu0 0
        %2584 = vmatpush2.bf16.msra.mxu0 0
        %2585 = vmatprep.subr.bf16.mxu0 0
        %2586 = vmatpush2.bf16.msra.mxu0 0
        %2587 = vmatprep.mubr.bf16.mxu0 0
        %2588 = vmatmul.mubr.bf16.gmra.mxu0 %v690
        %v2589 = vpop.f32.mrf.mxu0
        %v2590 = vadd.f32 %v2517, %v2589
        %v2591 = vpop.f32.mrf.mxu0
        %v2592 = vadd.f32 %v2519, %v2591
        %v2593 = vpop.f32.mrf.mxu0
        %v2594 = vadd.f32 %v2521, %v2593
        %v2595 = vpop.f32.mrf.mxu0
        %v2596 = vadd.f32 %v2523, %v2595
        %2597 = vmatprep.mubr.bf16.mxu0 0
        %2598 = vmatmul.mubr.bf16.gmra.mxu0 %v693
        %v2599 = vpop.f32.mrf.mxu0
        %v2600 = vadd.f32 %v2527, %v2599
        %v2601 = vpop.f32.mrf.mxu0
        %v2602 = vadd.f32 %v2529, %v2601
        %v2603 = vpop.f32.mrf.mxu0
        %v2604 = vadd.f32 %v2531, %v2603
        %v2605 = vpop.f32.mrf.mxu0
        %v2606 = vadd.f32 %v2533, %v2605
        %2607 = vmatprep.mubr.bf16.mxu0 0
        %2608 = vmatmul.mubr.bf16.gmra.mxu0 %v696
        %v2609 = vpop.f32.mrf.mxu0
        %v2610 = vadd.f32 %v2537, %v2609
        %v2611 = vpop.f32.mrf.mxu0
        %v2612 = vadd.f32 %v2539, %v2611
        %v2613 = vpop.f32.mrf.mxu0
        %v2614 = vadd.f32 %v2541, %v2613
        %v2615 = vpop.f32.mrf.mxu0
        %v2616 = vadd.f32 %v2543, %v2615
        %2617 = vmatprep.mubr.bf16.mxu0 0
        %2618 = vmatmul.mubr.bf16.gmra.mxu0 %v699
        %v2619 = vpop.f32.mrf.mxu0
        %v2620 = vadd.f32 %v2547, %v2619
        %v2621 = vpop.f32.mrf.mxu0
        %v2622 = vadd.f32 %v2549, %v2621
        %v2623 = vpop.f32.mrf.mxu0
        %v2624 = vadd.f32 %v2551, %v2623
        %v2625 = vpop.f32.mrf.mxu0
        %v2626 = vadd.f32 %v2553, %v2625
        %2627 = vdwg.mxu0
        %2628 = vmatprep.subr.bf16.mxu0 0
        %2629 = vmatpush1.bf16.msra.mxu0 %v1683
        %2630 = vmatprep.subr.bf16.mxu0 0
        %2631 = vmatpush1.bf16.msra.mxu0 %v1674
        %2632 = vmatprep.subr.bf16.mxu0 0
        %2633 = vmatpush1.bf16.msra.mxu0 %v1665
        %2634 = vmatprep.subr.bf16.mxu0 0
        %2635 = vmatpush1.bf16.msra.mxu0 %v1656
        %2636 = vmatprep.subr.bf16.mxu0 0
        %2637 = vmatpush1.bf16.msra.mxu0 %v1647
        %2638 = vmatprep.subr.bf16.mxu0 0
        %2639 = vmatpush1.bf16.msra.mxu0 %v1638
        %2640 = vmatprep.subr.bf16.mxu0 0
        %2641 = vmatpush1.bf16.msra.mxu0 %v1629
        %2642 = vmatprep.subr.bf16.mxu0 0
        %2643 = vmatpush1.bf16.msra.mxu0 %v1620
        %2644 = vmatprep.subr.bf16.mxu0 0
        %2645 = vmatpush2.bf16.msra.mxu0 %v1755
        %2646 = vmatprep.subr.bf16.mxu0 0
        %2647 = vmatpush2.bf16.msra.mxu0 %v1746
        %2648 = vmatprep.subr.bf16.mxu0 0
        %2649 = vmatpush2.bf16.msra.mxu0 %v1737
        %2650 = vmatprep.subr.bf16.mxu0 0
        %2651 = vmatpush2.bf16.msra.mxu0 %v1728
        %2652 = vmatprep.subr.bf16.mxu0 0
        %2653 = vmatpush2.bf16.msra.mxu0 %v1719
        %2654 = vmatprep.subr.bf16.mxu0 0
        %2655 = vmatpush2.bf16.msra.mxu0 %v1710
        %2656 = vmatprep.subr.bf16.mxu0 0
        %2657 = vmatpush2.bf16.msra.mxu0 %v1701
        %2658 = vmatprep.subr.bf16.mxu0 0
        %2659 = vmatpush2.bf16.msra.mxu0 %v1692
        %2660 = vmatprep.mubr.bf16.mxu0 %v689
        %2661 = vmatmul.mubr.bf16.gmra.mxu0 %v688
        %v2662 = vpop.f32.mrf.mxu0
        %v2663 = vadd.f32 0.0, %v2662
        %v2664 = vpop.f32.mrf.mxu0
        %v2665 = vpop.f32.mrf.mxu0
        %v2666 = vadd.f32 0.0, %v2665
        %v2667 = vpop.f32.mrf.mxu0
        %2668 = vmatprep.mubr.bf16.mxu0 %v692
        %2669 = vmatmul.mubr.bf16.gmra.mxu0 %v691
        %v2670 = vpop.f32.mrf.mxu0
        %v2671 = vadd.f32 0.0, %v2670
        %v2672 = vpop.f32.mrf.mxu0
        %v2673 = vpop.f32.mrf.mxu0
        %v2674 = vadd.f32 0.0, %v2673
        %v2675 = vpop.f32.mrf.mxu0
        %2676 = vmatprep.mubr.bf16.mxu0 %v695
        %2677 = vmatmul.mubr.bf16.gmra.mxu0 %v694
        %v2678 = vpop.f32.mrf.mxu0
        %v2679 = vadd.f32 0.0, %v2678
        %v2680 = vpop.f32.mrf.mxu0
        %v2681 = vpop.f32.mrf.mxu0
        %v2682 = vadd.f32 0.0, %v2681
        %v2683 = vpop.f32.mrf.mxu0
        %2684 = vmatprep.mubr.bf16.mxu0 %v698
        %2685 = vmatmul.mubr.bf16.gmra.mxu0 %v697
        %v2686 = vpop.f32.mrf.mxu0
        %v2687 = vadd.f32 0.0, %v2686
        %v2688 = vpop.f32.mrf.mxu0
        %v2689 = vpop.f32.mrf.mxu0
        %v2690 = vadd.f32 0.0, %v2689
        %v2691 = vpop.f32.mrf.mxu0
        %2692 = vdwg.mxu0
        %2693 = vmatprep.subr.bf16.mxu0 0
        %2694 = vmatpush1.bf16.msra.mxu0 %v1827
        %2695 = vmatprep.subr.bf16.mxu0 0
        %2696 = vmatpush1.bf16.msra.mxu0 %v1818
        %2697 = vmatprep.subr.bf16.mxu0 0
        %2698 = vmatpush1.bf16.msra.mxu0 %v1809
        %2699 = vmatprep.subr.bf16.mxu0 0
        %2700 = vmatpush1.bf16.msra.mxu0 %v1800
        %2701 = vmatprep.subr.bf16.mxu0 0
        %2702 = vmatpush1.bf16.msra.mxu0 %v1791
        %2703 = vmatprep.subr.bf16.mxu0 0
        %2704 = vmatpush1.bf16.msra.mxu0 %v1782
        %2705 = vmatprep.subr.bf16.mxu0 0
        %2706 = vmatpush1.bf16.msra.mxu0 %v1773
        %2707 = vmatprep.subr.bf16.mxu0 0
        %2708 = vmatpush1.bf16.msra.mxu0 %v1764
        %2709 = vmatprep.subr.bf16.mxu0 0
        %2710 = vmatpush2.bf16.msra.mxu0 0
        %2711 = vmatprep.subr.bf16.mxu0 0
        %2712 = vmatpush2.bf16.msra.mxu0 0
        %2713 = vmatprep.subr.bf16.mxu0 0
        %2714 = vmatpush2.bf16.msra.mxu0 0
        %2715 = vmatprep.subr.bf16.mxu0 0
        %2716 = vmatpush2.bf16.msra.mxu0 0
        %2717 = vmatprep.subr.bf16.mxu0 0
        %2718 = vmatpush2.bf16.msra.mxu0 0
        %2719 = vmatprep.subr.bf16.mxu0 0
        %2720 = vmatpush2.bf16.msra.mxu0 0
        %2721 = vmatprep.subr.bf16.mxu0 0
        %2722 = vmatpush2.bf16.msra.mxu0 0
        %2723 = vmatprep.subr.bf16.mxu0 0
        %2724 = vmatpush2.bf16.msra.mxu0 0
        %2725 = vmatprep.mubr.bf16.mxu0 0
        %2726 = vmatmul.mubr.bf16.gmra.mxu0 %v690
        %v2727 = vpop.f32.mrf.mxu0
        %v2728 = vadd.f32 %v2663, %v2727
        %v2729 = vpop.f32.mrf.mxu0
        %v2730 = vpop.f32.mrf.mxu0
        %v2731 = vadd.f32 %v2666, %v2730
        %v2732 = vpop.f32.mrf.mxu0
        %2733 = vmatprep.mubr.bf16.mxu0 0
        %2734 = vmatmul.mubr.bf16.gmra.mxu0 %v693
        %v2735 = vpop.f32.mrf.mxu0
        %v2736 = vadd.f32 %v2671, %v2735
        %v2737 = vpop.f32.mrf.mxu0
        %v2738 = vpop.f32.mrf.mxu0
        %v2739 = vadd.f32 %v2674, %v2738
        %v2740 = vpop.f32.mrf.mxu0
        %2741 = vmatprep.mubr.bf16.mxu0 0
        %2742 = vmatmul.mubr.bf16.gmra.mxu0 %v696
        %v2743 = vpop.f32.mrf.mxu0
        %v2744 = vadd.f32 %v2679, %v2743
        %v2745 = vpop.f32.mrf.mxu0
        %v2746 = vpop.f32.mrf.mxu0
        %v2747 = vadd.f32 %v2682, %v2746
        %v2748 = vpop.f32.mrf.mxu0
        %2749 = vmatprep.mubr.bf16.mxu0 0
        %2750 = vmatmul.mubr.bf16.gmra.mxu0 %v699
        %v2751 = vpop.f32.mrf.mxu0
        %v2752 = vadd.f32 %v2687, %v2751
        %v2753 = vpop.f32.mrf.mxu0
        %v2754 = vpop.f32.mrf.mxu0
        %v2755 = vadd.f32 %v2690, %v2754
        %v2756 = vpop.f32.mrf.mxu0
        %2757 = vdwg.mxu0
        %v2758 = vlaneseq
        %v2759 = vshrl.u32 %v2758, 7
        %v2760 = vadd.s32 %v2759, 8
        %v2761 = vadd.s32 %v2759, 16
        %v2762 = vadd.s32 %v2759, 24
        %v2763 = vadd.s32 %v2759, 32
        %v2764 = vadd.s32 %v2759, 40
        %v2765 = vadd.s32 %v2759, 48
        %v2766 = vadd.s32 %v2759, 56
        %v2767 = vlaneseq
        %v2768 = vand.u32 %v2767, 127
        %vm2769 = vcmp.ge.s32.totalorder %v2759, %v2768
        %vm2770 = vcmp.ge.s32.totalorder %v2760, %v2768
        %vm2771 = vcmp.ge.s32.totalorder %v2761, %v2768
        %vm2772 = vcmp.ge.s32.totalorder %v2762, %v2768
        %vm2773 = vcmp.ge.s32.totalorder %v2763, %v2768
        %vm2774 = vcmp.ge.s32.totalorder %v2764, %v2768
        %vm2775 = vcmp.ge.s32.totalorder %v2765, %v2768
        %vm2776 = vcmp.ge.s32.totalorder %v2766, %v2768
        %v2777 = vsel %vm2769, 0.0, -inf
        %v2778 = vsel %vm2770, 0.0, -inf
        %v2779 = vsel %vm2771, 0.0, -inf
        %v2780 = vsel %vm2772, 0.0, -inf
        %v2781 = vsel %vm2773, 0.0, -inf
        %v2782 = vsel %vm2774, 0.0, -inf
        %v2783 = vsel %vm2775, 0.0, -inf
        %v2784 = vsel %vm2776, 0.0, -inf
        %v2785 = vpack.c.bf16 %v2156, %v2152
        %v2786 = vpack.c.bf16 %v2166, %v2162
        %v2787 = vpack.c.bf16 %v2176, %v2172
        %v2788 = vpack.c.bf16 %v2186, %v2182
        %v2789 = vpack.c.bf16 %v2304, %v2300
        %v2790 = vpack.c.bf16 %v2314, %v2310
        %v2791 = vpack.c.bf16 %v2324, %v2320
        %v2792 = vpack.c.bf16 %v2334, %v2330
        %v2793 = vpack.c.bf16 %v2594, %v2590
        %v2794 = vpack.c.bf16 %v2604, %v2600
        %v2795 = vpack.c.bf16 %v2614, %v2610
        %v2796 = vpack.c.bf16 %v2624, %v2620
        %vm2797 = vcmask 523264
        %v2799 = vsel %vm2797, %v2785, 0
        %v2802 = vsel %vm2797, %v2786, 0
        %v2805 = vsel %vm2797, %v2787, 0
        %v2808 = vsel %vm2797, %v2788, 0
        %v2811 = vsel %vm2797, %v2789, 0
        %v2814 = vsel %vm2797, %v2790, 0
        %v2817 = vsel %vm2797, %v2791, 0
        %v2820 = vsel %vm2797, %v2792, 0
        %2822 = vmatprep.subr.bf16.mxu0 0
        %2823 = vmatpush1.bf16.xpose.msra.mxu0 0
        %2824 = vmatprep.subr.bf16.mxu0 0
        %2825 = vmatpush1.bf16.xpose.msra.mxu0 0
        %2826 = vmatprep.subr.bf16.mxu0 0
        %2827 = vmatpush1.bf16.xpose.msra.mxu0 0
        %2828 = vmatprep.subr.bf16.mxu0 0
        %2829 = vmatpush1.bf16.xpose.msra.mxu0 0
        %2830 = vmatprep.subr.bf16.mxu0 0
        %2831 = vmatpush1.bf16.xpose.msra.mxu0 %v2820
        %2832 = vmatprep.subr.bf16.mxu0 0
        %2833 = vmatpush1.bf16.xpose.msra.mxu0 %v2817
        %2834 = vmatprep.subr.bf16.mxu0 0
        %2835 = vmatpush1.bf16.xpose.msra.mxu0 %v2814
        %2836 = vmatprep.subr.bf16.mxu0 0
        %2837 = vmatpush1.bf16.xpose.msra.mxu0 %v2811
        %2838 = vmatprep.subr.bf16.mxu0 0
        %2839 = vmatpush2.bf16.xpose.msra.mxu0 0
        %2840 = vmatprep.subr.bf16.mxu0 0
        %2841 = vmatpush2.bf16.xpose.msra.mxu0 0
        %2842 = vmatprep.subr.bf16.mxu0 0
        %2843 = vmatpush2.bf16.xpose.msra.mxu0 0
        %2844 = vmatprep.subr.bf16.mxu0 0
        %2845 = vmatpush2.bf16.xpose.msra.mxu0 0
        %2846 = vmatprep.subr.bf16.mxu0 0
        %2847 = vmatpush2.bf16.xpose.msra.mxu0 0
        %2848 = vmatprep.subr.bf16.mxu0 0
        %2849 = vmatpush2.bf16.xpose.msra.mxu0 0
        %2850 = vmatprep.subr.bf16.mxu0 0
        %2851 = vmatpush2.bf16.xpose.msra.mxu0 0
        %2852 = vmatprep.subr.bf16.mxu0 0
        %2853 = vmatpush2.bf16.xpose.msra.mxu0 0
        %2854 = vmatprep.mubr.bf16.mxu0 0
        %2855 = vmatmul.mubr.bf16.gmra.mxu0 %v2799
        %v2856 = vpop.f32.mrf.mxu0
        %v2857 = vadd.f32 %v2777, %v2856
        %v2858 = vpop.f32.mrf.mxu0
        %v2859 = vpop.f32.mrf.mxu0
        %v2860 = vadd.f32 %v2778, %v2859
        %v2861 = vpop.f32.mrf.mxu0
        %2862 = vmatprep.mubr.bf16.mxu0 0
        %2863 = vmatmul.mubr.bf16.gmra.mxu0 %v2802
        %v2864 = vpop.f32.mrf.mxu0
        %v2865 = vadd.f32 %v2779, %v2864
        %v2866 = vpop.f32.mrf.mxu0
        %v2867 = vpop.f32.mrf.mxu0
        %v2868 = vadd.f32 %v2780, %v2867
        %v2869 = vpop.f32.mrf.mxu0
        %2870 = vmatprep.mubr.bf16.mxu0 0
        %2871 = vmatmul.mubr.bf16.gmra.mxu0 %v2805
        %v2872 = vpop.f32.mrf.mxu0
        %v2873 = vadd.f32 %v2781, %v2872
        %v2874 = vpop.f32.mrf.mxu0
        %v2875 = vpop.f32.mrf.mxu0
        %v2876 = vadd.f32 %v2782, %v2875
        %v2877 = vpop.f32.mrf.mxu0
        %2878 = vmatprep.mubr.bf16.mxu0 0
        %2879 = vmatmul.mubr.bf16.gmra.mxu0 %v2808
        %v2880 = vpop.f32.mrf.mxu0
        %v2881 = vadd.f32 %v2783, %v2880
        %v2882 = vpop.f32.mrf.mxu0
        %v2883 = vpop.f32.mrf.mxu0
        %v2884 = vadd.f32 %v2784, %v2883
        %v2885 = vpop.f32.mrf.mxu0
        %2886 = vdwg.mxu0
        %v2887 = vsel %vm2797, %v2857, -inf
        %2888 = vmax.xlane.f32.xlu0 %v2887
        %v2889 = vpop.xlane.xlu0 %2888
        %v2890 = vsel %vm2797, %v2860, -inf
        %2891 = vmax.xlane.f32.xlu0 %v2890
        %v2892 = vpop.xlane.xlu0 %2891
        %v2893 = vsel %vm2797, %v2865, -inf
        %2894 = vmax.xlane.f32.xlu0 %v2893
        %v2895 = vpop.xlane.xlu0 %2894
        %v2896 = vsel %vm2797, %v2868, -inf
        %2897 = vmax.xlane.f32.xlu0 %v2896
        %v2898 = vpop.xlane.xlu0 %2897
        %v2899 = vsel %vm2797, %v2873, -inf
        %2900 = vmax.xlane.f32.xlu0 %v2899
        %v2901 = vpop.xlane.xlu0 %2900
        %v2902 = vsel %vm2797, %v2876, -inf
        %2903 = vmax.xlane.f32.xlu0 %v2902
        %v2904 = vpop.xlane.xlu0 %2903
        %v2905 = vsel %vm2797, %v2881, -inf
        %2906 = vmax.xlane.f32.xlu0 %v2905
        %v2907 = vpop.xlane.xlu0 %2906
        %v2908 = vsel %vm2797, %v2884, -inf
        %2909 = vmax.xlane.f32.xlu0 %v2908
        %v2910 = vpop.xlane.xlu0 %2909
        %v2911 = vsub.f32 %v2857, %v2889
        %v2912 = vsub.f32 %v2860, %v2892
        %v2913 = vsub.f32 %v2865, %v2895
        %v2914 = vsub.f32 %v2868, %v2898
        %v2915 = vsub.f32 %v2873, %v2901
        %v2916 = vsub.f32 %v2876, %v2904
        %v2917 = vsub.f32 %v2881, %v2907
        %v2918 = vsub.f32 %v2884, %v2910
        %v2919 = vmul.f32 %v2911, 1.442695
        %v2920 = vpow.pop %v2919
        %v2921 = vmul.f32 %v2912, 1.442695
        %v2922 = vpow.pop %v2921
        %v2923 = vmul.f32 %v2913, 1.442695
        %v2924 = vpow.pop %v2923
        %v2925 = vmul.f32 %v2914, 1.442695
        %v2926 = vpow.pop %v2925
        %v2927 = vmul.f32 %v2915, 1.442695
        %v2928 = vpow.pop %v2927
        %v2929 = vmul.f32 %v2916, 1.442695
        %v2930 = vpow.pop %v2929
        %v2931 = vmul.f32 %v2917, 1.442695
        %v2932 = vpow.pop %v2931
        %v2933 = vmul.f32 %v2918, 1.442695
        %v2934 = vpow.pop %v2933
        %v2935 = vsel %vm2797, %v2920, 0.0
        %2936 = vadd.xlane.f32.xlu0 %v2935
        %v2937 = vpop.xlane.xlu0 %2936
        %v2938 = vsel %vm2797, %v2922, 0.0
        %2939 = vadd.xlane.f32.xlu0 %v2938
        %v2940 = vpop.xlane.xlu0 %2939
        %v2941 = vsel %vm2797, %v2924, 0.0
        %2942 = vadd.xlane.f32.xlu0 %v2941
        %v2943 = vpop.xlane.xlu0 %2942
        %v2944 = vsel %vm2797, %v2926, 0.0
        %2945 = vadd.xlane.f32.xlu0 %v2944
        %v2946 = vpop.xlane.xlu0 %2945
        %v2947 = vsel %vm2797, %v2928, 0.0
        %2948 = vadd.xlane.f32.xlu0 %v2947
        %v2949 = vpop.xlane.xlu0 %2948
        %v2950 = vsel %vm2797, %v2930, 0.0
        %2951 = vadd.xlane.f32.xlu0 %v2950
        %v2952 = vpop.xlane.xlu0 %2951
        %v2953 = vsel %vm2797, %v2932, 0.0
        %2954 = vadd.xlane.f32.xlu0 %v2953
        %v2955 = vpop.xlane.xlu0 %2954
        %v2956 = vsel %vm2797, %v2934, 0.0
        %2957 = vadd.xlane.f32.xlu0 %v2956
        %v2958 = vpop.xlane.xlu0 %2957
        %v2959 = vrcp.pop %v2937
        %v2960 = vrcp.pop %v2940
        %v2961 = vrcp.pop %v2943
        %v2962 = vrcp.pop %v2946
        %v2963 = vrcp.pop %v2949
        %v2964 = vrcp.pop %v2952
        %v2965 = vrcp.pop %v2955
        %v2966 = vrcp.pop %v2958
        %v2967 = vmul.f32 %v2920, %v2959
        %v2968 = vmul.f32 %v2922, %v2960
        %v2969 = vmul.f32 %v2924, %v2961
        %v2970 = vmul.f32 %v2926, %v2962
        %v2971 = vmul.f32 %v2928, %v2963
        %v2972 = vmul.f32 %v2930, %v2964
        %v2973 = vmul.f32 %v2932, %v2965
        %v2974 = vmul.f32 %v2934, %v2966
        %v2975 = vpack.c.bf16 %v2968, %v2967
        %v2976 = vpack.c.bf16 %v2970, %v2969
        %v2977 = vpack.c.bf16 %v2972, %v2971
        %v2978 = vpack.c.bf16 %v2974, %v2973
        %v2980 = vsel %vm2797, %v2975, 0
        %v2983 = vsel %vm2797, %v2976, 0
        %v2986 = vsel %vm2797, %v2977, 0
        %v2989 = vsel %vm2797, %v2978, 0
        %2991 = vmatprep.subr.bf16.mxu0 0
        %2992 = vmatpush1.bf16.msra.mxu0 0
        %2993 = vmatprep.subr.bf16.mxu0 0
        %2994 = vmatpush1.bf16.msra.mxu0 0
        %2995 = vmatprep.subr.bf16.mxu0 0
        %2996 = vmatpush1.bf16.msra.mxu0 0
        %2997 = vmatprep.subr.bf16.mxu0 0
        %2998 = vmatpush1.bf16.msra.mxu0 0
        %2999 = vmatprep.subr.bf16.mxu0 0
        %3000 = vmatpush1.bf16.msra.mxu0 %v2796
        %3001 = vmatprep.subr.bf16.mxu0 0
        %3002 = vmatpush1.bf16.msra.mxu0 %v2795
        %3003 = vmatprep.subr.bf16.mxu0 0
        %3004 = vmatpush1.bf16.msra.mxu0 %v2794
        %3005 = vmatprep.subr.bf16.mxu0 0
        %3006 = vmatpush1.bf16.msra.mxu0 %v2793
        %3007 = vmatprep.subr.bf16.mxu0 0
        %3008 = vmatpush2.bf16.msra.mxu0 0
        %3009 = vmatprep.subr.bf16.mxu0 0
        %3010 = vmatpush2.bf16.msra.mxu0 0
        %3011 = vmatprep.subr.bf16.mxu0 0
        %3012 = vmatpush2.bf16.msra.mxu0 0
        %3013 = vmatprep.subr.bf16.mxu0 0
        %3014 = vmatpush2.bf16.msra.mxu0 0
        %3015 = vmatprep.subr.bf16.mxu0 0
        %3016 = vmatpush2.bf16.msra.mxu0 0
        %3017 = vmatprep.subr.bf16.mxu0 0
        %3018 = vmatpush2.bf16.msra.mxu0 0
        %3019 = vmatprep.subr.bf16.mxu0 0
        %3020 = vmatpush2.bf16.msra.mxu0 0
        %3021 = vmatprep.subr.bf16.mxu0 0
        %3022 = vmatpush2.bf16.msra.mxu0 0
        %3023 = vmatprep.mubr.bf16.mxu0 0
        %3024 = vmatmul.mubr.bf16.gmra.mxu0 %v2980
        %v3025 = vpop.f32.mrf.mxu0
        %v3026 = vadd.f32 0.0, %v3025
        %v3027 = vpop.f32.mrf.mxu0
        %v3028 = vpop.f32.mrf.mxu0
        %v3029 = vadd.f32 0.0, %v3028
        %v3030 = vpop.f32.mrf.mxu0
        %3031 = vmatprep.mubr.bf16.mxu0 0
        %3032 = vmatmul.mubr.bf16.gmra.mxu0 %v2983
        %v3033 = vpop.f32.mrf.mxu0
        %v3034 = vadd.f32 0.0, %v3033
        %v3035 = vpop.f32.mrf.mxu0
        %v3036 = vpop.f32.mrf.mxu0
        %v3037 = vadd.f32 0.0, %v3036
        %v3038 = vpop.f32.mrf.mxu0
        %3039 = vmatprep.mubr.bf16.mxu0 0
        %3040 = vmatmul.mubr.bf16.gmra.mxu0 %v2986
        %v3041 = vpop.f32.mrf.mxu0
        %v3042 = vadd.f32 0.0, %v3041
        %v3043 = vpop.f32.mrf.mxu0
        %v3044 = vpop.f32.mrf.mxu0
        %v3045 = vadd.f32 0.0, %v3044
        %v3046 = vpop.f32.mrf.mxu0
        %3047 = vmatprep.mubr.bf16.mxu0 0
        %3048 = vmatmul.mubr.bf16.gmra.mxu0 %v2989
        %v3049 = vpop.f32.mrf.mxu0
        %v3050 = vadd.f32 0.0, %v3049
        %v3051 = vpop.f32.mrf.mxu0
        %v3052 = vpop.f32.mrf.mxu0
        %v3053 = vadd.f32 0.0, %v3052
        %v3054 = vpop.f32.mrf.mxu0
        %3055 = vdwg.mxu0
        %3056 = vst.msk [vmem:[#allocation2] sm:$0xff] %vm2797, %v3026
        %3057 = vst.msk [vmem:[#allocation2 + $0x18] sm:$0xff] %vm2797, %v3029
        %3058 = vst.msk [vmem:[#allocation2 + $0x30] sm:$0xff] %vm2797, %v3034
        %3059 = vst.msk [vmem:[#allocation2 + $0x48] sm:$0xff] %vm2797, %v3037
        %3060 = vst.msk [vmem:[#allocation2 + $0x60] sm:$0xff] %vm2797, %v3042
        %3061 = vst.msk [vmem:[#allocation2 + $0x78] sm:$0xff] %vm2797, %v3045
        %3062 = vst.msk [vmem:[#allocation2 + $0x90] sm:$0xff] %vm2797, %v3050
        %3063 = vst.msk [vmem:[#allocation2 + $0xa8] sm:$0xff] %vm2797, %v3053
        %3068 = vrot.lane.b32.xlu0 %v2785, 64
        %v3069 = vpop.permute.xlu0 %3068
        %3070 = vrot.lane.b32.xlu0 %v2786, 64
        %v3071 = vpop.permute.xlu0 %3070
        %3072 = vrot.lane.b32.xlu0 %v2787, 64
        %v3073 = vpop.permute.xlu0 %3072
        %3074 = vrot.lane.b32.xlu0 %v2788, 64
        %v3075 = vpop.permute.xlu0 %3074
        %3080 = vrot.lane.b32.xlu0 %v2789, 64
        %v3081 = vpop.permute.xlu0 %3080
        %3082 = vrot.lane.b32.xlu0 %v2790, 64
        %v3083 = vpop.permute.xlu0 %3082
        %3084 = vrot.lane.b32.xlu0 %v2791, 64
        %v3085 = vpop.permute.xlu0 %3084
        %3086 = vrot.lane.b32.xlu0 %v2792, 64
        %v3087 = vpop.permute.xlu0 %3086
        %v3089 = vsel %vm2797, %v3069, 0
        %v3092 = vsel %vm2797, %v3071, 0
        %v3095 = vsel %vm2797, %v3073, 0
        %v3098 = vsel %vm2797, %v3075, 0
        %v3101 = vsel %vm2797, %v3081, 0
        %v3104 = vsel %vm2797, %v3083, 0
        %v3107 = vsel %vm2797, %v3085, 0
        %v3110 = vsel %vm2797, %v3087, 0
        %3112 = vmatprep.subr.bf16.mxu0 0
        %3113 = vmatpush1.bf16.xpose.msra.mxu0 0
        %3114 = vmatprep.subr.bf16.mxu0 0
        %3115 = vmatpush1.bf16.xpose.msra.mxu0 0
        %3116 = vmatprep.subr.bf16.mxu0 0
        %3117 = vmatpush1.bf16.xpose.msra.mxu0 0
        %3118 = vmatprep.subr.bf16.mxu0 0
        %3119 = vmatpush1.bf16.xpose.msra.mxu0 0
        %3120 = vmatprep.subr.bf16.mxu0 0
        %3121 = vmatpush1.bf16.xpose.msra.mxu0 %v3110
        %3122 = vmatprep.subr.bf16.mxu0 0
        %3123 = vmatpush1.bf16.xpose.msra.mxu0 %v3107
        %3124 = vmatprep.subr.bf16.mxu0 0
        %3125 = vmatpush1.bf16.xpose.msra.mxu0 %v3104
        %3126 = vmatprep.subr.bf16.mxu0 0
        %3127 = vmatpush1.bf16.xpose.msra.mxu0 %v3101
        %3128 = vmatprep.subr.bf16.mxu0 0
        %3129 = vmatpush2.bf16.xpose.msra.mxu0 0
        %3130 = vmatprep.subr.bf16.mxu0 0
        %3131 = vmatpush2.bf16.xpose.msra.mxu0 0
        %3132 = vmatprep.subr.bf16.mxu0 0
        %3133 = vmatpush2.bf16.xpose.msra.mxu0 0
        %3134 = vmatprep.subr.bf16.mxu0 0
        %3135 = vmatpush2.bf16.xpose.msra.mxu0 0
        %3136 = vmatprep.subr.bf16.mxu0 0
        %3137 = vmatpush2.bf16.xpose.msra.mxu0 0
        %3138 = vmatprep.subr.bf16.mxu0 0
        %3139 = vmatpush2.bf16.xpose.msra.mxu0 0
        %3140 = vmatprep.subr.bf16.mxu0 0
        %3141 = vmatpush2.bf16.xpose.msra.mxu0 0
        %3142 = vmatprep.subr.bf16.mxu0 0
        %3143 = vmatpush2.bf16.xpose.msra.mxu0 0
        %3144 = vmatprep.mubr.bf16.mxu0 0
        %3145 = vmatmul.mubr.bf16.gmra.mxu0 %v3089
        %v3146 = vpop.f32.mrf.mxu0
        %v3147 = vadd.f32 %v2777, %v3146
        %v3148 = vpop.f32.mrf.mxu0
        %v3149 = vpop.f32.mrf.mxu0
        %v3150 = vadd.f32 %v2778, %v3149
        %v3151 = vpop.f32.mrf.mxu0
        %3152 = vmatprep.mubr.bf16.mxu0 0
        %3153 = vmatmul.mubr.bf16.gmra.mxu0 %v3092
        %v3154 = vpop.f32.mrf.mxu0
        %v3155 = vadd.f32 %v2779, %v3154
        %v3156 = vpop.f32.mrf.mxu0
        %v3157 = vpop.f32.mrf.mxu0
        %v3158 = vadd.f32 %v2780, %v3157
        %v3159 = vpop.f32.mrf.mxu0
        %3160 = vmatprep.mubr.bf16.mxu0 0
        %3161 = vmatmul.mubr.bf16.gmra.mxu0 %v3095
        %v3162 = vpop.f32.mrf.mxu0
        %v3163 = vadd.f32 %v2781, %v3162
        %v3164 = vpop.f32.mrf.mxu0
        %v3165 = vpop.f32.mrf.mxu0
        %v3166 = vadd.f32 %v2782, %v3165
        %v3167 = vpop.f32.mrf.mxu0
        %3168 = vmatprep.mubr.bf16.mxu0 0
        %3169 = vmatmul.mubr.bf16.gmra.mxu0 %v3098
        %v3170 = vpop.f32.mrf.mxu0
        %v3171 = vadd.f32 %v2783, %v3170
        %v3172 = vpop.f32.mrf.mxu0
        %v3173 = vpop.f32.mrf.mxu0
        %v3174 = vadd.f32 %v2784, %v3173
        %v3175 = vpop.f32.mrf.mxu0
        %3176 = vdwg.mxu0
        %v3177 = vsel %vm2797, %v3147, -inf
        %3178 = vmax.xlane.f32.xlu0 %v3177
        %v3179 = vpop.xlane.xlu0 %3178
        %v3180 = vsel %vm2797, %v3150, -inf
        %3181 = vmax.xlane.f32.xlu0 %v3180
        %v3182 = vpop.xlane.xlu0 %3181
        %v3183 = vsel %vm2797, %v3155, -inf
        %3184 = vmax.xlane.f32.xlu0 %v3183
        %v3185 = vpop.xlane.xlu0 %3184
        %v3186 = vsel %vm2797, %v3158, -inf
        %3187 = vmax.xlane.f32.xlu0 %v3186
        %v3188 = vpop.xlane.xlu0 %3187
        %v3189 = vsel %vm2797, %v3163, -inf
        %3190 = vmax.xlane.f32.xlu0 %v3189
        %v3191 = vpop.xlane.xlu0 %3190
        %v3192 = vsel %vm2797, %v3166, -inf
        %3193 = vmax.xlane.f32.xlu0 %v3192
        %v3194 = vpop.xlane.xlu0 %3193
        %v3195 = vsel %vm2797, %v3171, -inf
        %3196 = vmax.xlane.f32.xlu0 %v3195
        %v3197 = vpop.xlane.xlu0 %3196
        %v3198 = vsel %vm2797, %v3174, -inf
        %3199 = vmax.xlane.f32.xlu0 %v3198
        %v3200 = vpop.xlane.xlu0 %3199
        %v3201 = vsub.f32 %v3147, %v3179
        %v3202 = vsub.f32 %v3150, %v3182
        %v3203 = vsub.f32 %v3155, %v3185
        %v3204 = vsub.f32 %v3158, %v3188
        %v3205 = vsub.f32 %v3163, %v3191
        %v3206 = vsub.f32 %v3166, %v3194
        %v3207 = vsub.f32 %v3171, %v3197
        %v3208 = vsub.f32 %v3174, %v3200
        %v3209 = vmul.f32 %v3201, 1.442695
        %v3210 = vpow.pop %v3209
        %v3211 = vmul.f32 %v3202, 1.442695
        %v3212 = vpow.pop %v3211
        %v3213 = vmul.f32 %v3203, 1.442695
        %v3214 = vpow.pop %v3213
        %v3215 = vmul.f32 %v3204, 1.442695
        %v3216 = vpow.pop %v3215
        %v3217 = vmul.f32 %v3205, 1.442695
        %v3218 = vpow.pop %v3217
        %v3219 = vmul.f32 %v3206, 1.442695
        %v3220 = vpow.pop %v3219
        %v3221 = vmul.f32 %v3207, 1.442695
        %v3222 = vpow.pop %v3221
        %v3223 = vmul.f32 %v3208, 1.442695
        %v3224 = vpow.pop %v3223
        %v3225 = vsel %vm2797, %v3210, 0.0
        %3226 = vadd.xlane.f32.xlu0 %v3225
        %v3227 = vpop.xlane.xlu0 %3226
        %v3228 = vsel %vm2797, %v3212, 0.0
        %3229 = vadd.xlane.f32.xlu0 %v3228
        %v3230 = vpop.xlane.xlu0 %3229
        %v3231 = vsel %vm2797, %v3214, 0.0
        %3232 = vadd.xlane.f32.xlu0 %v3231
        %v3233 = vpop.xlane.xlu0 %3232
        %v3234 = vsel %vm2797, %v3216, 0.0
        %3235 = vadd.xlane.f32.xlu0 %v3234
        %v3236 = vpop.xlane.xlu0 %3235
        %v3237 = vsel %vm2797, %v3218, 0.0
        %3238 = vadd.xlane.f32.xlu0 %v3237
        %v3239 = vpop.xlane.xlu0 %3238
        %v3240 = vsel %vm2797, %v3220, 0.0
        %3241 = vadd.xlane.f32.xlu0 %v3240
        %v3242 = vpop.xlane.xlu0 %3241
        %v3243 = vsel %vm2797, %v3222, 0.0
        %3244 = vadd.xlane.f32.xlu0 %v3243
        %v3245 = vpop.xlane.xlu0 %3244
        %v3246 = vsel %vm2797, %v3224, 0.0
        %3247 = vadd.xlane.f32.xlu0 %v3246
        %v3248 = vpop.xlane.xlu0 %3247
        %v3249 = vrcp.pop %v3227
        %v3250 = vrcp.pop %v3230
        %v3251 = vrcp.pop %v3233
        %v3252 = vrcp.pop %v3236
        %v3253 = vrcp.pop %v3239
        %v3254 = vrcp.pop %v3242
        %v3255 = vrcp.pop %v3245
        %v3256 = vrcp.pop %v3248
        %v3257 = vmul.f32 %v3210, %v3249
        %v3258 = vmul.f32 %v3212, %v3250
        %v3259 = vmul.f32 %v3214, %v3251
        %v3260 = vmul.f32 %v3216, %v3252
        %v3261 = vmul.f32 %v3218, %v3253
        %v3262 = vmul.f32 %v3220, %v3254
        %v3263 = vmul.f32 %v3222, %v3255
        %v3264 = vmul.f32 %v3224, %v3256
        %v3265 = vpack.c.bf16 %v3258, %v3257
        %v3266 = vpack.c.bf16 %v3260, %v3259
        %v3267 = vpack.c.bf16 %v3262, %v3261
        %v3268 = vpack.c.bf16 %v3264, %v3263
        %3273 = vrot.lane.b32.xlu0 %v2793, 64
        %v3274 = vpop.permute.xlu0 %3273
        %3275 = vrot.lane.b32.xlu0 %v2794, 64
        %v3276 = vpop.permute.xlu0 %3275
        %3277 = vrot.lane.b32.xlu0 %v2795, 64
        %v3278 = vpop.permute.xlu0 %3277
        %3279 = vrot.lane.b32.xlu0 %v2796, 64
        %v3280 = vpop.permute.xlu0 %3279
        %v3286 = vsel %vm2797, %v3265, 0
        %v3289 = vsel %vm2797, %v3266, 0
        %v3292 = vsel %vm2797, %v3267, 0
        %v3295 = vsel %vm2797, %v3268, 0
        %3297 = vmatprep.subr.bf16.mxu0 0
        %3298 = vmatpush1.bf16.msra.mxu0 0
        %3299 = vmatprep.subr.bf16.mxu0 0
        %3300 = vmatpush1.bf16.msra.mxu0 0
        %3301 = vmatprep.subr.bf16.mxu0 0
        %3302 = vmatpush1.bf16.msra.mxu0 0
        %3303 = vmatprep.subr.bf16.mxu0 0
        %3304 = vmatpush1.bf16.msra.mxu0 0
        %3305 = vmatprep.subr.bf16.mxu0 0
        %3306 = vmatpush1.bf16.msra.mxu0 %v3280
        %3307 = vmatprep.subr.bf16.mxu0 0
        %3308 = vmatpush1.bf16.msra.mxu0 %v3278
        %3309 = vmatprep.subr.bf16.mxu0 0
        %3310 = vmatpush1.bf16.msra.mxu0 %v3276
        %3311 = vmatprep.subr.bf16.mxu0 0
        %3312 = vmatpush1.bf16.msra.mxu0 %v3274
        %3313 = vmatprep.subr.bf16.mxu0 0
        %3314 = vmatpush2.bf16.msra.mxu0 0
        %3315 = vmatprep.subr.bf16.mxu0 0
        %3316 = vmatpush2.bf16.msra.mxu0 0
        %3317 = vmatprep.subr.bf16.mxu0 0
        %3318 = vmatpush2.bf16.msra.mxu0 0
        %3319 = vmatprep.subr.bf16.mxu0 0
        %3320 = vmatpush2.bf16.msra.mxu0 0
        %3321 = vmatprep.subr.bf16.mxu0 0
        %3322 = vmatpush2.bf16.msra.mxu0 0
        %3323 = vmatprep.subr.bf16.mxu0 0
        %3324 = vmatpush2.bf16.msra.mxu0 0
        %3325 = vmatprep.subr.bf16.mxu0 0
        %3326 = vmatpush2.bf16.msra.mxu0 0
        %3327 = vmatprep.subr.bf16.mxu0 0
        %3328 = vmatpush2.bf16.msra.mxu0 0
        %3329 = vmatprep.mubr.bf16.mxu0 0
        %3330 = vmatmul.mubr.bf16.gmra.mxu0 %v3286
        %v3331 = vpop.f32.mrf.mxu0
        %v3332 = vadd.f32 0.0, %v3331
        %v3333 = vpop.f32.mrf.mxu0
        %v3334 = vpop.f32.mrf.mxu0
        %v3335 = vadd.f32 0.0, %v3334
        %v3336 = vpop.f32.mrf.mxu0
        %3337 = vmatprep.mubr.bf16.mxu0 0
        %3338 = vmatmul.mubr.bf16.gmra.mxu0 %v3289
        %v3339 = vpop.f32.mrf.mxu0
        %v3340 = vadd.f32 0.0, %v3339
        %v3341 = vpop.f32.mrf.mxu0
        %v3342 = vpop.f32.mrf.mxu0
        %v3343 = vadd.f32 0.0, %v3342
        %v3344 = vpop.f32.mrf.mxu0
        %3345 = vmatprep.mubr.bf16.mxu0 0
        %3346 = vmatmul.mubr.bf16.gmra.mxu0 %v3292
        %v3347 = vpop.f32.mrf.mxu0
        %v3348 = vadd.f32 0.0, %v3347
        %v3349 = vpop.f32.mrf.mxu0
        %v3350 = vpop.f32.mrf.mxu0
        %v3351 = vadd.f32 0.0, %v3350
        %v3352 = vpop.f32.mrf.mxu0
        %3353 = vmatprep.mubr.bf16.mxu0 0
        %3354 = vmatmul.mubr.bf16.gmra.mxu0 %v3295
        %v3355 = vpop.f32.mrf.mxu0
        %v3356 = vadd.f32 0.0, %v3355
        %v3357 = vpop.f32.mrf.mxu0
        %v3358 = vpop.f32.mrf.mxu0
        %v3359 = vadd.f32 0.0, %v3358
        %v3360 = vpop.f32.mrf.mxu0
        %3361 = vdwg.mxu0
        %3370 = vrot.lane.b32.xlu0 %v3332, 64
        %v3371 = vpop.permute.xlu0 %3370
        %3372 = vrot.lane.b32.xlu0 %v3335, 64
        %v3373 = vpop.permute.xlu0 %3372
        %3374 = vrot.lane.b32.xlu0 %v3340, 64
        %v3375 = vpop.permute.xlu0 %3374
        %3376 = vrot.lane.b32.xlu0 %v3343, 64
        %v3377 = vpop.permute.xlu0 %3376
        %3378 = vrot.lane.b32.xlu0 %v3348, 64
        %v3379 = vpop.permute.xlu0 %3378
        %3380 = vrot.lane.b32.xlu0 %v3351, 64
        %v3381 = vpop.permute.xlu0 %3380
        %3382 = vrot.lane.b32.xlu0 %v3356, 64
        %v3383 = vpop.permute.xlu0 %3382
        %3384 = vrot.lane.b32.xlu0 %v3359, 64
        %v3385 = vpop.permute.xlu0 %3384
        %vm3394 = vcmask 1048064
        %3395 = vst.msk [vmem:[#allocation2] sm:$0xff] %vm3394, %v3371
        %3396 = vst.msk [vmem:[#allocation2 + $0x18] sm:$0xff] %vm3394, %v3373
        %3397 = vst.msk [vmem:[#allocation2 + $0x30] sm:$0xff] %vm3394, %v3375
        %3398 = vst.msk [vmem:[#allocation2 + $0x48] sm:$0xff] %vm3394, %v3377
        %3399 = vst.msk [vmem:[#allocation2 + $0x60] sm:$0xff] %vm3394, %v3379
        %3400 = vst.msk [vmem:[#allocation2 + $0x78] sm:$0xff] %vm3394, %v3381
        %3401 = vst.msk [vmem:[#allocation2 + $0x90] sm:$0xff] %vm3394, %v3383
        %3402 = vst.msk [vmem:[#allocation2 + $0xa8] sm:$0xff] %vm3394, %v3385
        %v3403 = vpack.c.bf16 %v2158, %v2154
        %v3404 = vpack.c.bf16 %v2168, %v2164
        %v3405 = vpack.c.bf16 %v2178, %v2174
        %v3406 = vpack.c.bf16 %v2188, %v2184
        %v3407 = vpack.c.bf16 %v2448, %v2444
        %v3408 = vpack.c.bf16 %v2458, %v2454
        %v3409 = vpack.c.bf16 %v2468, %v2464
        %v3410 = vpack.c.bf16 %v2478, %v2474
        %v3411 = vpack.c.bf16 %v2596, %v2592
        %v3412 = vpack.c.bf16 %v2606, %v2602
        %v3413 = vpack.c.bf16 %v2616, %v2612
        %v3414 = vpack.c.bf16 %v2626, %v2622
        %v3416 = vsel %vm2797, %v3403, 0
        %v3419 = vsel %vm2797, %v3404, 0
        %v3422 = vsel %vm2797, %v3405, 0
        %v3425 = vsel %vm2797, %v3406, 0
        %v3428 = vsel %vm2797, %v3407, 0
        %v3431 = vsel %vm2797, %v3408, 0
        %v3434 = vsel %vm2797, %v3409, 0
        %v3437 = vsel %vm2797, %v3410, 0
        %3439 = vmatprep.subr.bf16.mxu0 0
        %3440 = vmatpush1.bf16.xpose.msra.mxu0 0
        %3441 = vmatprep.subr.bf16.mxu0 0
        %3442 = vmatpush1.bf16.xpose.msra.mxu0 0
        %3443 = vmatprep.subr.bf16.mxu0 0
        %3444 = vmatpush1.bf16.xpose.msra.mxu0 0
        %3445 = vmatprep.subr.bf16.mxu0 0
        %3446 = vmatpush1.bf16.xpose.msra.mxu0 0
        %3447 = vmatprep.subr.bf16.mxu0 0
        %3448 = vmatpush1.bf16.xpose.msra.mxu0 %v3437
        %3449 = vmatprep.subr.bf16.mxu0 0
        %3450 = vmatpush1.bf16.xpose.msra.mxu0 %v3434
        %3451 = vmatprep.subr.bf16.mxu0 0
        %3452 = vmatpush1.bf16.xpose.msra.mxu0 %v3431
        %3453 = vmatprep.subr.bf16.mxu0 0
        %3454 = vmatpush1.bf16.xpose.msra.mxu0 %v3428
        %3455 = vmatprep.subr.bf16.mxu0 0
        %3456 = vmatpush2.bf16.xpose.msra.mxu0 0
        %3457 = vmatprep.subr.bf16.mxu0 0
        %3458 = vmatpush2.bf16.xpose.msra.mxu0 0
        %3459 = vmatprep.subr.bf16.mxu0 0
        %3460 = vmatpush2.bf16.xpose.msra.mxu0 0
        %3461 = vmatprep.subr.bf16.mxu0 0
        %3462 = vmatpush2.bf16.xpose.msra.mxu0 0
        %3463 = vmatprep.subr.bf16.mxu0 0
        %3464 = vmatpush2.bf16.xpose.msra.mxu0 0
        %3465 = vmatprep.subr.bf16.mxu0 0
        %3466 = vmatpush2.bf16.xpose.msra.mxu0 0
        %3467 = vmatprep.subr.bf16.mxu0 0
        %3468 = vmatpush2.bf16.xpose.msra.mxu0 0
        %3469 = vmatprep.subr.bf16.mxu0 0
        %3470 = vmatpush2.bf16.xpose.msra.mxu0 0
        %3471 = vmatprep.mubr.bf16.mxu0 0
        %3472 = vmatmul.mubr.bf16.gmra.mxu0 %v3416
        %v3473 = vpop.f32.mrf.mxu0
        %v3474 = vadd.f32 %v2777, %v3473
        %v3475 = vpop.f32.mrf.mxu0
        %v3476 = vpop.f32.mrf.mxu0
        %v3477 = vadd.f32 %v2778, %v3476
        %v3478 = vpop.f32.mrf.mxu0
        %3479 = vmatprep.mubr.bf16.mxu0 0
        %3480 = vmatmul.mubr.bf16.gmra.mxu0 %v3419
        %v3481 = vpop.f32.mrf.mxu0
        %v3482 = vadd.f32 %v2779, %v3481
        %v3483 = vpop.f32.mrf.mxu0
        %v3484 = vpop.f32.mrf.mxu0
        %v3485 = vadd.f32 %v2780, %v3484
        %v3486 = vpop.f32.mrf.mxu0
        %3487 = vmatprep.mubr.bf16.mxu0 0
        %3488 = vmatmul.mubr.bf16.gmra.mxu0 %v3422
        %v3489 = vpop.f32.mrf.mxu0
        %v3490 = vadd.f32 %v2781, %v3489
        %v3491 = vpop.f32.mrf.mxu0
        %v3492 = vpop.f32.mrf.mxu0
        %v3493 = vadd.f32 %v2782, %v3492
        %v3494 = vpop.f32.mrf.mxu0
        %3495 = vmatprep.mubr.bf16.mxu0 0
        %3496 = vmatmul.mubr.bf16.gmra.mxu0 %v3425
        %v3497 = vpop.f32.mrf.mxu0
        %v3498 = vadd.f32 %v2783, %v3497
        %v3499 = vpop.f32.mrf.mxu0
        %v3500 = vpop.f32.mrf.mxu0
        %v3501 = vadd.f32 %v2784, %v3500
        %v3502 = vpop.f32.mrf.mxu0
        %3503 = vdwg.mxu0
        %v3504 = vsel %vm2797, %v3474, -inf
        %3505 = vmax.xlane.f32.xlu0 %v3504
        %v3506 = vpop.xlane.xlu0 %3505
        %v3507 = vsel %vm2797, %v3477, -inf
        %3508 = vmax.xlane.f32.xlu0 %v3507
        %v3509 = vpop.xlane.xlu0 %3508
        %v3510 = vsel %vm2797, %v3482, -inf
        %3511 = vmax.xlane.f32.xlu0 %v3510
        %v3512 = vpop.xlane.xlu0 %3511
        %v3513 = vsel %vm2797, %v3485, -inf
        %3514 = vmax.xlane.f32.xlu0 %v3513
        %v3515 = vpop.xlane.xlu0 %3514
        %v3516 = vsel %vm2797, %v3490, -inf
        %3517 = vmax.xlane.f32.xlu0 %v3516
        %v3518 = vpop.xlane.xlu0 %3517
        %v3519 = vsel %vm2797, %v3493, -inf
        %3520 = vmax.xlane.f32.xlu0 %v3519
        %v3521 = vpop.xlane.xlu0 %3520
        %v3522 = vsel %vm2797, %v3498, -inf
        %3523 = vmax.xlane.f32.xlu0 %v3522
        %v3524 = vpop.xlane.xlu0 %3523
        %v3525 = vsel %vm2797, %v3501, -inf
        %3526 = vmax.xlane.f32.xlu0 %v3525
        %v3527 = vpop.xlane.xlu0 %3526
        %v3528 = vsub.f32 %v3474, %v3506
        %v3529 = vsub.f32 %v3477, %v3509
        %v3530 = vsub.f32 %v3482, %v3512
        %v3531 = vsub.f32 %v3485, %v3515
        %v3532 = vsub.f32 %v3490, %v3518
        %v3533 = vsub.f32 %v3493, %v3521
        %v3534 = vsub.f32 %v3498, %v3524
        %v3535 = vsub.f32 %v3501, %v3527
        %v3536 = vmul.f32 %v3528, 1.442695
        %v3537 = vpow.pop %v3536
        %v3538 = vmul.f32 %v3529, 1.442695
        %v3539 = vpow.pop %v3538
        %v3540 = vmul.f32 %v3530, 1.442695
        %v3541 = vpow.pop %v3540
        %v3542 = vmul.f32 %v3531, 1.442695
        %v3543 = vpow.pop %v3542
        %v3544 = vmul.f32 %v3532, 1.442695
        %v3545 = vpow.pop %v3544
        %v3546 = vmul.f32 %v3533, 1.442695
        %v3547 = vpow.pop %v3546
        %v3548 = vmul.f32 %v3534, 1.442695
        %v3549 = vpow.pop %v3548
        %v3550 = vmul.f32 %v3535, 1.442695
        %v3551 = vpow.pop %v3550
        %v3552 = vsel %vm2797, %v3537, 0.0
        %3553 = vadd.xlane.f32.xlu0 %v3552
        %v3554 = vpop.xlane.xlu0 %3553
        %v3555 = vsel %vm2797, %v3539, 0.0
        %3556 = vadd.xlane.f32.xlu0 %v3555
        %v3557 = vpop.xlane.xlu0 %3556
        %v3558 = vsel %vm2797, %v3541, 0.0
        %3559 = vadd.xlane.f32.xlu0 %v3558
        %v3560 = vpop.xlane.xlu0 %3559
        %v3561 = vsel %vm2797, %v3543, 0.0
        %3562 = vadd.xlane.f32.xlu0 %v3561
        %v3563 = vpop.xlane.xlu0 %3562
        %v3564 = vsel %vm2797, %v3545, 0.0
        %3565 = vadd.xlane.f32.xlu0 %v3564
        %v3566 = vpop.xlane.xlu0 %3565
        %v3567 = vsel %vm2797, %v3547, 0.0
        %3568 = vadd.xlane.f32.xlu0 %v3567
        %v3569 = vpop.xlane.xlu0 %3568
        %v3570 = vsel %vm2797, %v3549, 0.0
        %3571 = vadd.xlane.f32.xlu0 %v3570
        %v3572 = vpop.xlane.xlu0 %3571
        %v3573 = vsel %vm2797, %v3551, 0.0
        %3574 = vadd.xlane.f32.xlu0 %v3573
        %v3575 = vpop.xlane.xlu0 %3574
        %v3576 = vrcp.pop %v3554
        %v3577 = vrcp.pop %v3557
        %v3578 = vrcp.pop %v3560
        %v3579 = vrcp.pop %v3563
        %v3580 = vrcp.pop %v3566
        %v3581 = vrcp.pop %v3569
        %v3582 = vrcp.pop %v3572
        %v3583 = vrcp.pop %v3575
        %v3584 = vmul.f32 %v3537, %v3576
        %v3585 = vmul.f32 %v3539, %v3577
        %v3586 = vmul.f32 %v3541, %v3578
        %v3587 = vmul.f32 %v3543, %v3579
        %v3588 = vmul.f32 %v3545, %v3580
        %v3589 = vmul.f32 %v3547, %v3581
        %v3590 = vmul.f32 %v3549, %v3582
        %v3591 = vmul.f32 %v3551, %v3583
        %v3592 = vpack.c.bf16 %v3585, %v3584
        %v3593 = vpack.c.bf16 %v3587, %v3586
        %v3594 = vpack.c.bf16 %v3589, %v3588
        %v3595 = vpack.c.bf16 %v3591, %v3590
        %v3597 = vsel %vm2797, %v3592, 0
        %v3600 = vsel %vm2797, %v3593, 0
        %v3603 = vsel %vm2797, %v3594, 0
        %v3606 = vsel %vm2797, %v3595, 0
        %3608 = vmatprep.subr.bf16.mxu0 0
        %3609 = vmatpush1.bf16.msra.mxu0 0
        %3610 = vmatprep.subr.bf16.mxu0 0
        %3611 = vmatpush1.bf16.msra.mxu0 0
        %3612 = vmatprep.subr.bf16.mxu0 0
        %3613 = vmatpush1.bf16.msra.mxu0 0
        %3614 = vmatprep.subr.bf16.mxu0 0
        %3615 = vmatpush1.bf16.msra.mxu0 0
        %3616 = vmatprep.subr.bf16.mxu0 0
        %3617 = vmatpush1.bf16.msra.mxu0 %v3414
        %3618 = vmatprep.subr.bf16.mxu0 0
        %3619 = vmatpush1.bf16.msra.mxu0 %v3413
        %3620 = vmatprep.subr.bf16.mxu0 0
        %3621 = vmatpush1.bf16.msra.mxu0 %v3412
        %3622 = vmatprep.subr.bf16.mxu0 0
        %3623 = vmatpush1.bf16.msra.mxu0 %v3411
        %3624 = vmatprep.subr.bf16.mxu0 0
        %3625 = vmatpush2.bf16.msra.mxu0 0
        %3626 = vmatprep.subr.bf16.mxu0 0
        %3627 = vmatpush2.bf16.msra.mxu0 0
        %3628 = vmatprep.subr.bf16.mxu0 0
        %3629 = vmatpush2.bf16.msra.mxu0 0
        %3630 = vmatprep.subr.bf16.mxu0 0
        %3631 = vmatpush2.bf16.msra.mxu0 0
        %3632 = vmatprep.subr.bf16.mxu0 0
        %3633 = vmatpush2.bf16.msra.mxu0 0
        %3634 = vmatprep.subr.bf16.mxu0 0
        %3635 = vmatpush2.bf16.msra.mxu0 0
        %3636 = vmatprep.subr.bf16.mxu0 0
        %3637 = vmatpush2.bf16.msra.mxu0 0
        %3638 = vmatprep.subr.bf16.mxu0 0
        %3639 = vmatpush2.bf16.msra.mxu0 0
        %3640 = vmatprep.mubr.bf16.mxu0 0
        %3641 = vmatmul.mubr.bf16.gmra.mxu0 %v3597
        %v3642 = vpop.f32.mrf.mxu0
        %v3643 = vadd.f32 0.0, %v3642
        %v3644 = vpop.f32.mrf.mxu0
        %v3645 = vpop.f32.mrf.mxu0
        %v3646 = vadd.f32 0.0, %v3645
        %v3647 = vpop.f32.mrf.mxu0
        %3648 = vmatprep.mubr.bf16.mxu0 0
        %3649 = vmatmul.mubr.bf16.gmra.mxu0 %v3600
        %v3650 = vpop.f32.mrf.mxu0
        %v3651 = vadd.f32 0.0, %v3650
        %v3652 = vpop.f32.mrf.mxu0
        %v3653 = vpop.f32.mrf.mxu0
        %v3654 = vadd.f32 0.0, %v3653
        %v3655 = vpop.f32.mrf.mxu0
        %3656 = vmatprep.mubr.bf16.mxu0 0
        %3657 = vmatmul.mubr.bf16.gmra.mxu0 %v3603
        %v3658 = vpop.f32.mrf.mxu0
        %v3659 = vadd.f32 0.0, %v3658
        %v3660 = vpop.f32.mrf.mxu0
        %v3661 = vpop.f32.mrf.mxu0
        %v3662 = vadd.f32 0.0, %v3661
        %v3663 = vpop.f32.mrf.mxu0
        %3664 = vmatprep.mubr.bf16.mxu0 0
        %3665 = vmatmul.mubr.bf16.gmra.mxu0 %v3606
        %v3666 = vpop.f32.mrf.mxu0
        %v3667 = vadd.f32 0.0, %v3666
        %v3668 = vpop.f32.mrf.mxu0
        %v3669 = vpop.f32.mrf.mxu0
        %v3670 = vadd.f32 0.0, %v3669
        %v3671 = vpop.f32.mrf.mxu0
        %3672 = vdwg.mxu0
        %3673 = vst.msk [vmem:[#allocation2 + $0x8] sm:$0xff] %vm2797, %v3643
        %3674 = vst.msk [vmem:[#allocation2 + $0x20] sm:$0xff] %vm2797, %v3646
        %3675 = vst.msk [vmem:[#allocation2 + $0x38] sm:$0xff] %vm2797, %v3651
        %3676 = vst.msk [vmem:[#allocation2 + $0x50] sm:$0xff] %vm2797, %v3654
        %3677 = vst.msk [vmem:[#allocation2 + $0x68] sm:$0xff] %vm2797, %v3659
        %3678 = vst.msk [vmem:[#allocation2 + $0x80] sm:$0xff] %vm2797, %v3662
        %3679 = vst.msk [vmem:[#allocation2 + $0x98] sm:$0xff] %vm2797, %v3667
        %3680 = vst.msk [vmem:[#allocation2 + $0xb0] sm:$0xff] %vm2797, %v3670
        %3685 = vrot.lane.b32.xlu0 %v3403, 64
        %v3686 = vpop.permute.xlu0 %3685
        %3687 = vrot.lane.b32.xlu0 %v3404, 64
        %v3688 = vpop.permute.xlu0 %3687
        %3689 = vrot.lane.b32.xlu0 %v3405, 64
        %v3690 = vpop.permute.xlu0 %3689
        %3691 = vrot.lane.b32.xlu0 %v3406, 64
        %v3692 = vpop.permute.xlu0 %3691
        %3697 = vrot.lane.b32.xlu0 %v3407, 64
        %v3698 = vpop.permute.xlu0 %3697
        %3699 = vrot.lane.b32.xlu0 %v3408, 64
        %v3700 = vpop.permute.xlu0 %3699
        %3701 = vrot.lane.b32.xlu0 %v3409, 64
        %v3702 = vpop.permute.xlu0 %3701
        %3703 = vrot.lane.b32.xlu0 %v3410, 64
        %v3704 = vpop.permute.xlu0 %3703
        %v3706 = vsel %vm2797, %v3686, 0
        %v3709 = vsel %vm2797, %v3688, 0
        %v3712 = vsel %vm2797, %v3690, 0
        %v3715 = vsel %vm2797, %v3692, 0
        %v3718 = vsel %vm2797, %v3698, 0
        %v3721 = vsel %vm2797, %v3700, 0
        %v3724 = vsel %vm2797, %v3702, 0
        %v3727 = vsel %vm2797, %v3704, 0
        %3729 = vmatprep.subr.bf16.mxu0 0
        %3730 = vmatpush1.bf16.xpose.msra.mxu0 0
        %3731 = vmatprep.subr.bf16.mxu0 0
        %3732 = vmatpush1.bf16.xpose.msra.mxu0 0
        %3733 = vmatprep.subr.bf16.mxu0 0
        %3734 = vmatpush1.bf16.xpose.msra.mxu0 0
        %3735 = vmatprep.subr.bf16.mxu0 0
        %3736 = vmatpush1.bf16.xpose.msra.mxu0 0
        %3737 = vmatprep.subr.bf16.mxu0 0
        %3738 = vmatpush1.bf16.xpose.msra.mxu0 %v3727
        %3739 = vmatprep.subr.bf16.mxu0 0
        %3740 = vmatpush1.bf16.xpose.msra.mxu0 %v3724
        %3741 = vmatprep.subr.bf16.mxu0 0
        %3742 = vmatpush1.bf16.xpose.msra.mxu0 %v3721
        %3743 = vmatprep.subr.bf16.mxu0 0
        %3744 = vmatpush1.bf16.xpose.msra.mxu0 %v3718
        %3745 = vmatprep.subr.bf16.mxu0 0
        %3746 = vmatpush2.bf16.xpose.msra.mxu0 0
        %3747 = vmatprep.subr.bf16.mxu0 0
        %3748 = vmatpush2.bf16.xpose.msra.mxu0 0
        %3749 = vmatprep.subr.bf16.mxu0 0
        %3750 = vmatpush2.bf16.xpose.msra.mxu0 0
        %3751 = vmatprep.subr.bf16.mxu0 0
        %3752 = vmatpush2.bf16.xpose.msra.mxu0 0
        %3753 = vmatprep.subr.bf16.mxu0 0
        %3754 = vmatpush2.bf16.xpose.msra.mxu0 0
        %3755 = vmatprep.subr.bf16.mxu0 0
        %3756 = vmatpush2.bf16.xpose.msra.mxu0 0
        %3757 = vmatprep.subr.bf16.mxu0 0
        %3758 = vmatpush2.bf16.xpose.msra.mxu0 0
        %3759 = vmatprep.subr.bf16.mxu0 0
        %3760 = vmatpush2.bf16.xpose.msra.mxu0 0
        %3761 = vmatprep.mubr.bf16.mxu0 0
        %3762 = vmatmul.mubr.bf16.gmra.mxu0 %v3706
        %v3763 = vpop.f32.mrf.mxu0
        %v3764 = vadd.f32 %v2777, %v3763
        %v3765 = vpop.f32.mrf.mxu0
        %v3766 = vpop.f32.mrf.mxu0
        %v3767 = vadd.f32 %v2778, %v3766
        %v3768 = vpop.f32.mrf.mxu0
        %3769 = vmatprep.mubr.bf16.mxu0 0
        %3770 = vmatmul.mubr.bf16.gmra.mxu0 %v3709
        %v3771 = vpop.f32.mrf.mxu0
        %v3772 = vadd.f32 %v2779, %v3771
        %v3773 = vpop.f32.mrf.mxu0
        %v3774 = vpop.f32.mrf.mxu0
        %v3775 = vadd.f32 %v2780, %v3774
        %v3776 = vpop.f32.mrf.mxu0
        %3777 = vmatprep.mubr.bf16.mxu0 0
        %3778 = vmatmul.mubr.bf16.gmra.mxu0 %v3712
        %v3779 = vpop.f32.mrf.mxu0
        %v3780 = vadd.f32 %v2781, %v3779
        %v3781 = vpop.f32.mrf.mxu0
        %v3782 = vpop.f32.mrf.mxu0
        %v3783 = vadd.f32 %v2782, %v3782
        %v3784 = vpop.f32.mrf.mxu0
        %3785 = vmatprep.mubr.bf16.mxu0 0
        %3786 = vmatmul.mubr.bf16.gmra.mxu0 %v3715
        %v3787 = vpop.f32.mrf.mxu0
        %v3788 = vadd.f32 %v2783, %v3787
        %v3789 = vpop.f32.mrf.mxu0
        %v3790 = vpop.f32.mrf.mxu0
        %v3791 = vadd.f32 %v2784, %v3790
        %v3792 = vpop.f32.mrf.mxu0
        %3793 = vdwg.mxu0
        %v3794 = vsel %vm2797, %v3764, -inf
        %3795 = vmax.xlane.f32.xlu0 %v3794
        %v3796 = vpop.xlane.xlu0 %3795
        %v3797 = vsel %vm2797, %v3767, -inf
        %3798 = vmax.xlane.f32.xlu0 %v3797
        %v3799 = vpop.xlane.xlu0 %3798
        %v3800 = vsel %vm2797, %v3772, -inf
        %3801 = vmax.xlane.f32.xlu0 %v3800
        %v3802 = vpop.xlane.xlu0 %3801
        %v3803 = vsel %vm2797, %v3775, -inf
        %3804 = vmax.xlane.f32.xlu0 %v3803
        %v3805 = vpop.xlane.xlu0 %3804
        %v3806 = vsel %vm2797, %v3780, -inf
        %3807 = vmax.xlane.f32.xlu0 %v3806
        %v3808 = vpop.xlane.xlu0 %3807
        %v3809 = vsel %vm2797, %v3783, -inf
        %3810 = vmax.xlane.f32.xlu0 %v3809
        %v3811 = vpop.xlane.xlu0 %3810
        %v3812 = vsel %vm2797, %v3788, -inf
        %3813 = vmax.xlane.f32.xlu0 %v3812
        %v3814 = vpop.xlane.xlu0 %3813
        %v3815 = vsel %vm2797, %v3791, -inf
        %3816 = vmax.xlane.f32.xlu0 %v3815
        %v3817 = vpop.xlane.xlu0 %3816
        %v3818 = vsub.f32 %v3764, %v3796
        %v3819 = vsub.f32 %v3767, %v3799
        %v3820 = vsub.f32 %v3772, %v3802
        %v3821 = vsub.f32 %v3775, %v3805
        %v3822 = vsub.f32 %v3780, %v3808
        %v3823 = vsub.f32 %v3783, %v3811
        %v3824 = vsub.f32 %v3788, %v3814
        %v3825 = vsub.f32 %v3791, %v3817
        %v3826 = vmul.f32 %v3818, 1.442695
        %v3827 = vpow.pop %v3826
        %v3828 = vmul.f32 %v3819, 1.442695
        %v3829 = vpow.pop %v3828
        %v3830 = vmul.f32 %v3820, 1.442695
        %v3831 = vpow.pop %v3830
        %v3832 = vmul.f32 %v3821, 1.442695
        %v3833 = vpow.pop %v3832
        %v3834 = vmul.f32 %v3822, 1.442695
        %v3835 = vpow.pop %v3834
        %v3836 = vmul.f32 %v3823, 1.442695
        %v3837 = vpow.pop %v3836
        %v3838 = vmul.f32 %v3824, 1.442695
        %v3839 = vpow.pop %v3838
        %v3840 = vmul.f32 %v3825, 1.442695
        %v3841 = vpow.pop %v3840
        %v3842 = vsel %vm2797, %v3827, 0.0
        %3843 = vadd.xlane.f32.xlu0 %v3842
        %v3844 = vpop.xlane.xlu0 %3843
        %v3845 = vsel %vm2797, %v3829, 0.0
        %3846 = vadd.xlane.f32.xlu0 %v3845
        %v3847 = vpop.xlane.xlu0 %3846
        %v3848 = vsel %vm2797, %v3831, 0.0
        %3849 = vadd.xlane.f32.xlu0 %v3848
        %v3850 = vpop.xlane.xlu0 %3849
        %v3851 = vsel %vm2797, %v3833, 0.0
        %3852 = vadd.xlane.f32.xlu0 %v3851
        %v3853 = vpop.xlane.xlu0 %3852
        %v3854 = vsel %vm2797, %v3835, 0.0
        %3855 = vadd.xlane.f32.xlu0 %v3854
        %v3856 = vpop.xlane.xlu0 %3855
        %v3857 = vsel %vm2797, %v3837, 0.0
        %3858 = vadd.xlane.f32.xlu0 %v3857
        %v3859 = vpop.xlane.xlu0 %3858
        %v3860 = vsel %vm2797, %v3839, 0.0
        %3861 = vadd.xlane.f32.xlu0 %v3860
        %v3862 = vpop.xlane.xlu0 %3861
        %v3863 = vsel %vm2797, %v3841, 0.0
        %3864 = vadd.xlane.f32.xlu0 %v3863
        %v3865 = vpop.xlane.xlu0 %3864
        %v3866 = vrcp.pop %v3844
        %v3867 = vrcp.pop %v3847
        %v3868 = vrcp.pop %v3850
        %v3869 = vrcp.pop %v3853
        %v3870 = vrcp.pop %v3856
        %v3871 = vrcp.pop %v3859
        %v3872 = vrcp.pop %v3862
        %v3873 = vrcp.pop %v3865
        %v3874 = vmul.f32 %v3827, %v3866
        %v3875 = vmul.f32 %v3829, %v3867
        %v3876 = vmul.f32 %v3831, %v3868
        %v3877 = vmul.f32 %v3833, %v3869
        %v3878 = vmul.f32 %v3835, %v3870
        %v3879 = vmul.f32 %v3837, %v3871
        %v3880 = vmul.f32 %v3839, %v3872
        %v3881 = vmul.f32 %v3841, %v3873
        %v3882 = vpack.c.bf16 %v3875, %v3874
        %v3883 = vpack.c.bf16 %v3877, %v3876
        %v3884 = vpack.c.bf16 %v3879, %v3878
        %v3885 = vpack.c.bf16 %v3881, %v3880
        %3890 = vrot.lane.b32.xlu0 %v3411, 64
        %v3891 = vpop.permute.xlu0 %3890
        %3892 = vrot.lane.b32.xlu0 %v3412, 64
        %v3893 = vpop.permute.xlu0 %3892
        %3894 = vrot.lane.b32.xlu0 %v3413, 64
        %v3895 = vpop.permute.xlu0 %3894
        %3896 = vrot.lane.b32.xlu0 %v3414, 64
        %v3897 = vpop.permute.xlu0 %3896
        %v3903 = vsel %vm2797, %v3882, 0
        %v3906 = vsel %vm2797, %v3883, 0
        %v3909 = vsel %vm2797, %v3884, 0
        %v3912 = vsel %vm2797, %v3885, 0
        %3914 = vmatprep.subr.bf16.mxu0 0
        %3915 = vmatpush1.bf16.msra.mxu0 0
        %3916 = vmatprep.subr.bf16.mxu0 0
        %3917 = vmatpush1.bf16.msra.mxu0 0
        %3918 = vmatprep.subr.bf16.mxu0 0
        %3919 = vmatpush1.bf16.msra.mxu0 0
        %3920 = vmatprep.subr.bf16.mxu0 0
        %3921 = vmatpush1.bf16.msra.mxu0 0
        %3922 = vmatprep.subr.bf16.mxu0 0
        %3923 = vmatpush1.bf16.msra.mxu0 %v3897
        %3924 = vmatprep.subr.bf16.mxu0 0
        %3925 = vmatpush1.bf16.msra.mxu0 %v3895
        %3926 = vmatprep.subr.bf16.mxu0 0
        %3927 = vmatpush1.bf16.msra.mxu0 %v3893
        %3928 = vmatprep.subr.bf16.mxu0 0
        %3929 = vmatpush1.bf16.msra.mxu0 %v3891
        %3930 = vmatprep.subr.bf16.mxu0 0
        %3931 = vmatpush2.bf16.msra.mxu0 0
        %3932 = vmatprep.subr.bf16.mxu0 0
        %3933 = vmatpush2.bf16.msra.mxu0 0
        %3934 = vmatprep.subr.bf16.mxu0 0
        %3935 = vmatpush2.bf16.msra.mxu0 0
        %3936 = vmatprep.subr.bf16.mxu0 0
        %3937 = vmatpush2.bf16.msra.mxu0 0
        %3938 = vmatprep.subr.bf16.mxu0 0
        %3939 = vmatpush2.bf16.msra.mxu0 0
        %3940 = vmatprep.subr.bf16.mxu0 0
        %3941 = vmatpush2.bf16.msra.mxu0 0
        %3942 = vmatprep.subr.bf16.mxu0 0
        %3943 = vmatpush2.bf16.msra.mxu0 0
        %3944 = vmatprep.subr.bf16.mxu0 0
        %3945 = vmatpush2.bf16.msra.mxu0 0
        %3946 = vmatprep.mubr.bf16.mxu0 0
        %3947 = vmatmul.mubr.bf16.gmra.mxu0 %v3903
        %v3948 = vpop.f32.mrf.mxu0
        %v3949 = vadd.f32 0.0, %v3948
        %v3950 = vpop.f32.mrf.mxu0
        %v3951 = vpop.f32.mrf.mxu0
        %v3952 = vadd.f32 0.0, %v3951
        %v3953 = vpop.f32.mrf.mxu0
        %3954 = vmatprep.mubr.bf16.mxu0 0
        %3955 = vmatmul.mubr.bf16.gmra.mxu0 %v3906
        %v3956 = vpop.f32.mrf.mxu0
        %v3957 = vadd.f32 0.0, %v3956
        %v3958 = vpop.f32.mrf.mxu0
        %v3959 = vpop.f32.mrf.mxu0
        %v3960 = vadd.f32 0.0, %v3959
        %v3961 = vpop.f32.mrf.mxu0
        %3962 = vmatprep.mubr.bf16.mxu0 0
        %3963 = vmatmul.mubr.bf16.gmra.mxu0 %v3909
        %v3964 = vpop.f32.mrf.mxu0
        %v3965 = vadd.f32 0.0, %v3964
        %v3966 = vpop.f32.mrf.mxu0
        %v3967 = vpop.f32.mrf.mxu0
        %v3968 = vadd.f32 0.0, %v3967
        %v3969 = vpop.f32.mrf.mxu0
        %3970 = vmatprep.mubr.bf16.mxu0 0
        %3971 = vmatmul.mubr.bf16.gmra.mxu0 %v3912
        %v3972 = vpop.f32.mrf.mxu0
        %v3973 = vadd.f32 0.0, %v3972
        %v3974 = vpop.f32.mrf.mxu0
        %v3975 = vpop.f32.mrf.mxu0
        %v3976 = vadd.f32 0.0, %v3975
        %v3977 = vpop.f32.mrf.mxu0
        %3978 = vdwg.mxu0
        %3987 = vrot.lane.b32.xlu0 %v3949, 64
        %v3988 = vpop.permute.xlu0 %3987
        %3989 = vrot.lane.b32.xlu0 %v3952, 64
        %v3990 = vpop.permute.xlu0 %3989
        %3991 = vrot.lane.b32.xlu0 %v3957, 64
        %v3992 = vpop.permute.xlu0 %3991
        %3993 = vrot.lane.b32.xlu0 %v3960, 64
        %v3994 = vpop.permute.xlu0 %3993
        %3995 = vrot.lane.b32.xlu0 %v3965, 64
        %v3996 = vpop.permute.xlu0 %3995
        %3997 = vrot.lane.b32.xlu0 %v3968, 64
        %v3998 = vpop.permute.xlu0 %3997
        %3999 = vrot.lane.b32.xlu0 %v3973, 64
        %v4000 = vpop.permute.xlu0 %3999
        %4001 = vrot.lane.b32.xlu0 %v3976, 64
        %v4002 = vpop.permute.xlu0 %4001
        %4011 = vst.msk [vmem:[#allocation2 + $0x8] sm:$0xff] %vm3394, %v3988
        %4012 = vst.msk [vmem:[#allocation2 + $0x20] sm:$0xff] %vm3394, %v3990
        %4013 = vst.msk [vmem:[#allocation2 + $0x38] sm:$0xff] %vm3394, %v3992
        %4014 = vst.msk [vmem:[#allocation2 + $0x50] sm:$0xff] %vm3394, %v3994
        %4015 = vst.msk [vmem:[#allocation2 + $0x68] sm:$0xff] %vm3394, %v3996
        %4016 = vst.msk [vmem:[#allocation2 + $0x80] sm:$0xff] %vm3394, %v3998
        %4017 = vst.msk [vmem:[#allocation2 + $0x98] sm:$0xff] %vm3394, %v4000
        %4018 = vst.msk [vmem:[#allocation2 + $0xb0] sm:$0xff] %vm3394, %v4002
        %v4019 = vpack.c.bf16 %v2302, %v2298
        %v4020 = vpack.c.bf16 %v2312, %v2308
        %v4021 = vpack.c.bf16 %v2322, %v2318
        %v4022 = vpack.c.bf16 %v2332, %v2328
        %v4023 = vpack.c.bf16 %v2450, %v2446
        %v4024 = vpack.c.bf16 %v2460, %v2456
        %v4025 = vpack.c.bf16 %v2470, %v2466
        %v4026 = vpack.c.bf16 %v2480, %v2476
        %v4027 = vpack.c.bf16 %v2731, %v2728
        %v4028 = vpack.c.bf16 %v2739, %v2736
        %v4029 = vpack.c.bf16 %v2747, %v2744
        %v4030 = vpack.c.bf16 %v2755, %v2752
        %v4032 = vsel %vm2797, %v4019, 0
        %v4035 = vsel %vm2797, %v4020, 0
        %v4038 = vsel %vm2797, %v4021, 0
        %v4041 = vsel %vm2797, %v4022, 0
        %v4044 = vsel %vm2797, %v4023, 0
        %v4047 = vsel %vm2797, %v4024, 0
        %v4050 = vsel %vm2797, %v4025, 0
        %v4053 = vsel %vm2797, %v4026, 0
        %4055 = vmatprep.subr.bf16.mxu0 0
        %4056 = vmatpush1.bf16.xpose.msra.mxu0 0
        %4057 = vmatprep.subr.bf16.mxu0 0
        %4058 = vmatpush1.bf16.xpose.msra.mxu0 0
        %4059 = vmatprep.subr.bf16.mxu0 0
        %4060 = vmatpush1.bf16.xpose.msra.mxu0 0
        %4061 = vmatprep.subr.bf16.mxu0 0
        %4062 = vmatpush1.bf16.xpose.msra.mxu0 0
        %4063 = vmatprep.subr.bf16.mxu0 0
        %4064 = vmatpush1.bf16.xpose.msra.mxu0 %v4053
        %4065 = vmatprep.subr.bf16.mxu0 0
        %4066 = vmatpush1.bf16.xpose.msra.mxu0 %v4050
        %4067 = vmatprep.subr.bf16.mxu0 0
        %4068 = vmatpush1.bf16.xpose.msra.mxu0 %v4047
        %4069 = vmatprep.subr.bf16.mxu0 0
        %4070 = vmatpush1.bf16.xpose.msra.mxu0 %v4044
        %4071 = vmatprep.subr.bf16.mxu0 0
        %4072 = vmatpush2.bf16.xpose.msra.mxu0 0
        %4073 = vmatprep.subr.bf16.mxu0 0
        %4074 = vmatpush2.bf16.xpose.msra.mxu0 0
        %4075 = vmatprep.subr.bf16.mxu0 0
        %4076 = vmatpush2.bf16.xpose.msra.mxu0 0
        %4077 = vmatprep.subr.bf16.mxu0 0
        %4078 = vmatpush2.bf16.xpose.msra.mxu0 0
        %4079 = vmatprep.subr.bf16.mxu0 0
        %4080 = vmatpush2.bf16.xpose.msra.mxu0 0
        %4081 = vmatprep.subr.bf16.mxu0 0
        %4082 = vmatpush2.bf16.xpose.msra.mxu0 0
        %4083 = vmatprep.subr.bf16.mxu0 0
        %4084 = vmatpush2.bf16.xpose.msra.mxu0 0
        %4085 = vmatprep.subr.bf16.mxu0 0
        %4086 = vmatpush2.bf16.xpose.msra.mxu0 0
        %4087 = vmatprep.mubr.bf16.mxu0 0
        %4088 = vmatmul.mubr.bf16.gmra.mxu0 %v4032
        %v4089 = vpop.f32.mrf.mxu0
        %v4090 = vadd.f32 %v2777, %v4089
        %v4091 = vpop.f32.mrf.mxu0
        %v4092 = vpop.f32.mrf.mxu0
        %v4093 = vadd.f32 %v2778, %v4092
        %v4094 = vpop.f32.mrf.mxu0
        %4095 = vmatprep.mubr.bf16.mxu0 0
        %4096 = vmatmul.mubr.bf16.gmra.mxu0 %v4035
        %v4097 = vpop.f32.mrf.mxu0
        %v4098 = vadd.f32 %v2779, %v4097
        %v4099 = vpop.f32.mrf.mxu0
        %v4100 = vpop.f32.mrf.mxu0
        %v4101 = vadd.f32 %v2780, %v4100
        %v4102 = vpop.f32.mrf.mxu0
        %4103 = vmatprep.mubr.bf16.mxu0 0
        %4104 = vmatmul.mubr.bf16.gmra.mxu0 %v4038
        %v4105 = vpop.f32.mrf.mxu0
        %v4106 = vadd.f32 %v2781, %v4105
        %v4107 = vpop.f32.mrf.mxu0
        %v4108 = vpop.f32.mrf.mxu0
        %v4109 = vadd.f32 %v2782, %v4108
        %v4110 = vpop.f32.mrf.mxu0
        %4111 = vmatprep.mubr.bf16.mxu0 0
        %4112 = vmatmul.mubr.bf16.gmra.mxu0 %v4041
        %v4113 = vpop.f32.mrf.mxu0
        %v4114 = vadd.f32 %v2783, %v4113
        %v4115 = vpop.f32.mrf.mxu0
        %v4116 = vpop.f32.mrf.mxu0
        %v4117 = vadd.f32 %v2784, %v4116
        %v4118 = vpop.f32.mrf.mxu0
        %4119 = vdwg.mxu0
        %v4120 = vsel %vm2797, %v4090, -inf
        %4121 = vmax.xlane.f32.xlu0 %v4120
        %v4122 = vpop.xlane.xlu0 %4121
        %v4123 = vsel %vm2797, %v4093, -inf
        %4124 = vmax.xlane.f32.xlu0 %v4123
        %v4125 = vpop.xlane.xlu0 %4124
        %v4126 = vsel %vm2797, %v4098, -inf
        %4127 = vmax.xlane.f32.xlu0 %v4126
        %v4128 = vpop.xlane.xlu0 %4127
        %v4129 = vsel %vm2797, %v4101, -inf
        %4130 = vmax.xlane.f32.xlu0 %v4129
        %v4131 = vpop.xlane.xlu0 %4130
        %v4132 = vsel %vm2797, %v4106, -inf
        %4133 = vmax.xlane.f32.xlu0 %v4132
        %v4134 = vpop.xlane.xlu0 %4133
        %v4135 = vsel %vm2797, %v4109, -inf
        %4136 = vmax.xlane.f32.xlu0 %v4135
        %v4137 = vpop.xlane.xlu0 %4136
        %v4138 = vsel %vm2797, %v4114, -inf
        %4139 = vmax.xlane.f32.xlu0 %v4138
        %v4140 = vpop.xlane.xlu0 %4139
        %v4141 = vsel %vm2797, %v4117, -inf
        %4142 = vmax.xlane.f32.xlu0 %v4141
        %v4143 = vpop.xlane.xlu0 %4142
        %v4144 = vsub.f32 %v4090, %v4122
        %v4145 = vsub.f32 %v4093, %v4125
        %v4146 = vsub.f32 %v4098, %v4128
        %v4147 = vsub.f32 %v4101, %v4131
        %v4148 = vsub.f32 %v4106, %v4134
        %v4149 = vsub.f32 %v4109, %v4137
        %v4150 = vsub.f32 %v4114, %v4140
        %v4151 = vsub.f32 %v4117, %v4143
        %v4152 = vmul.f32 %v4144, 1.442695
        %v4153 = vpow.pop %v4152
        %v4154 = vmul.f32 %v4145, 1.442695
        %v4155 = vpow.pop %v4154
        %v4156 = vmul.f32 %v4146, 1.442695
        %v4157 = vpow.pop %v4156
        %v4158 = vmul.f32 %v4147, 1.442695
        %v4159 = vpow.pop %v4158
        %v4160 = vmul.f32 %v4148, 1.442695
        %v4161 = vpow.pop %v4160
        %v4162 = vmul.f32 %v4149, 1.442695
        %v4163 = vpow.pop %v4162
        %v4164 = vmul.f32 %v4150, 1.442695
        %v4165 = vpow.pop %v4164
        %v4166 = vmul.f32 %v4151, 1.442695
        %v4167 = vpow.pop %v4166
        %v4168 = vsel %vm2797, %v4153, 0.0
        %4169 = vadd.xlane.f32.xlu0 %v4168
        %v4170 = vpop.xlane.xlu0 %4169
        %v4171 = vsel %vm2797, %v4155, 0.0
        %4172 = vadd.xlane.f32.xlu0 %v4171
        %v4173 = vpop.xlane.xlu0 %4172
        %v4174 = vsel %vm2797, %v4157, 0.0
        %4175 = vadd.xlane.f32.xlu0 %v4174
        %v4176 = vpop.xlane.xlu0 %4175
        %v4177 = vsel %vm2797, %v4159, 0.0
        %4178 = vadd.xlane.f32.xlu0 %v4177
        %v4179 = vpop.xlane.xlu0 %4178
        %v4180 = vsel %vm2797, %v4161, 0.0
        %4181 = vadd.xlane.f32.xlu0 %v4180
        %v4182 = vpop.xlane.xlu0 %4181
        %v4183 = vsel %vm2797, %v4163, 0.0
        %4184 = vadd.xlane.f32.xlu0 %v4183
        %v4185 = vpop.xlane.xlu0 %4184
        %v4186 = vsel %vm2797, %v4165, 0.0
        %4187 = vadd.xlane.f32.xlu0 %v4186
        %v4188 = vpop.xlane.xlu0 %4187
        %v4189 = vsel %vm2797, %v4167, 0.0
        %4190 = vadd.xlane.f32.xlu0 %v4189
        %v4191 = vpop.xlane.xlu0 %4190
        %v4192 = vrcp.pop %v4170
        %v4193 = vrcp.pop %v4173
        %v4194 = vrcp.pop %v4176
        %v4195 = vrcp.pop %v4179
        %v4196 = vrcp.pop %v4182
        %v4197 = vrcp.pop %v4185
        %v4198 = vrcp.pop %v4188
        %v4199 = vrcp.pop %v4191
        %v4200 = vmul.f32 %v4153, %v4192
        %v4201 = vmul.f32 %v4155, %v4193
        %v4202 = vmul.f32 %v4157, %v4194
        %v4203 = vmul.f32 %v4159, %v4195
        %v4204 = vmul.f32 %v4161, %v4196
        %v4205 = vmul.f32 %v4163, %v4197
        %v4206 = vmul.f32 %v4165, %v4198
        %v4207 = vmul.f32 %v4167, %v4199
        %v4208 = vpack.c.bf16 %v4201, %v4200
        %v4209 = vpack.c.bf16 %v4203, %v4202
        %v4210 = vpack.c.bf16 %v4205, %v4204
        %v4211 = vpack.c.bf16 %v4207, %v4206
        %v4213 = vsel %vm2797, %v4208, 0
        %v4216 = vsel %vm2797, %v4209, 0
        %v4219 = vsel %vm2797, %v4210, 0
        %v4222 = vsel %vm2797, %v4211, 0
        %4224 = vmatprep.subr.bf16.mxu0 0
        %4225 = vmatpush1.bf16.msra.mxu0 0
        %4226 = vmatprep.subr.bf16.mxu0 0
        %4227 = vmatpush1.bf16.msra.mxu0 0
        %4228 = vmatprep.subr.bf16.mxu0 0
        %4229 = vmatpush1.bf16.msra.mxu0 0
        %4230 = vmatprep.subr.bf16.mxu0 0
        %4231 = vmatpush1.bf16.msra.mxu0 0
        %4232 = vmatprep.subr.bf16.mxu0 0
        %4233 = vmatpush1.bf16.msra.mxu0 %v4030
        %4234 = vmatprep.subr.bf16.mxu0 0
        %4235 = vmatpush1.bf16.msra.mxu0 %v4029
        %4236 = vmatprep.subr.bf16.mxu0 0
        %4237 = vmatpush1.bf16.msra.mxu0 %v4028
        %4238 = vmatprep.subr.bf16.mxu0 0
        %4239 = vmatpush1.bf16.msra.mxu0 %v4027
        %4240 = vmatprep.subr.bf16.mxu0 0
        %4241 = vmatpush2.bf16.msra.mxu0 0
        %4242 = vmatprep.subr.bf16.mxu0 0
        %4243 = vmatpush2.bf16.msra.mxu0 0
        %4244 = vmatprep.subr.bf16.mxu0 0
        %4245 = vmatpush2.bf16.msra.mxu0 0
        %4246 = vmatprep.subr.bf16.mxu0 0
        %4247 = vmatpush2.bf16.msra.mxu0 0
        %4248 = vmatprep.subr.bf16.mxu0 0
        %4249 = vmatpush2.bf16.msra.mxu0 0
        %4250 = vmatprep.subr.bf16.mxu0 0
        %4251 = vmatpush2.bf16.msra.mxu0 0
        %4252 = vmatprep.subr.bf16.mxu0 0
        %4253 = vmatpush2.bf16.msra.mxu0 0
        %4254 = vmatprep.subr.bf16.mxu0 0
        %4255 = vmatpush2.bf16.msra.mxu0 0
        %4256 = vmatprep.mubr.bf16.mxu0 0
        %4257 = vmatmul.mubr.bf16.gmra.mxu0 %v4213
        %v4258 = vpop.f32.mrf.mxu0
        %v4259 = vadd.f32 0.0, %v4258
        %v4260 = vpop.f32.mrf.mxu0
        %v4261 = vpop.f32.mrf.mxu0
        %v4262 = vadd.f32 0.0, %v4261
        %v4263 = vpop.f32.mrf.mxu0
        %4264 = vmatprep.mubr.bf16.mxu0 0
        %4265 = vmatmul.mubr.bf16.gmra.mxu0 %v4216
        %v4266 = vpop.f32.mrf.mxu0
        %v4267 = vadd.f32 0.0, %v4266
        %v4268 = vpop.f32.mrf.mxu0
        %v4269 = vpop.f32.mrf.mxu0
        %v4270 = vadd.f32 0.0, %v4269
        %v4271 = vpop.f32.mrf.mxu0
        %4272 = vmatprep.mubr.bf16.mxu0 0
        %4273 = vmatmul.mubr.bf16.gmra.mxu0 %v4219
        %v4274 = vpop.f32.mrf.mxu0
        %v4275 = vadd.f32 0.0, %v4274
        %v4276 = vpop.f32.mrf.mxu0
        %v4277 = vpop.f32.mrf.mxu0
        %v4278 = vadd.f32 0.0, %v4277
        %v4279 = vpop.f32.mrf.mxu0
        %4280 = vmatprep.mubr.bf16.mxu0 0
        %4281 = vmatmul.mubr.bf16.gmra.mxu0 %v4222
        %v4282 = vpop.f32.mrf.mxu0
        %v4283 = vadd.f32 0.0, %v4282
        %v4284 = vpop.f32.mrf.mxu0
        %v4285 = vpop.f32.mrf.mxu0
        %v4286 = vadd.f32 0.0, %v4285
        %v4287 = vpop.f32.mrf.mxu0
        %4288 = vdwg.mxu0
        %4289 = vst.msk [vmem:[#allocation2 + $0x10] sm:$0xff] %vm2797, %v4259
        %4290 = vst.msk [vmem:[#allocation2 + $0x28] sm:$0xff] %vm2797, %v4262
        %4291 = vst.msk [vmem:[#allocation2 + $0x40] sm:$0xff] %vm2797, %v4267
        %4292 = vst.msk [vmem:[#allocation2 + $0x58] sm:$0xff] %vm2797, %v4270
        %4293 = vst.msk [vmem:[#allocation2 + $0x70] sm:$0xff] %vm2797, %v4275
        %4294 = vst.msk [vmem:[#allocation2 + $0x88] sm:$0xff] %vm2797, %v4278
        %4295 = vst.msk [vmem:[#allocation2 + $0xa0] sm:$0xff] %vm2797, %v4283
        %4296 = vst.msk [vmem:[#allocation2 + $0xb8] sm:$0xff] %vm2797, %v4286
        %4301 = vrot.lane.b32.xlu0 %v4019, 64
        %v4302 = vpop.permute.xlu0 %4301
        %4303 = vrot.lane.b32.xlu0 %v4020, 64
        %v4304 = vpop.permute.xlu0 %4303
        %4305 = vrot.lane.b32.xlu0 %v4021, 64
        %v4306 = vpop.permute.xlu0 %4305
        %4307 = vrot.lane.b32.xlu0 %v4022, 64
        %v4308 = vpop.permute.xlu0 %4307
        %4313 = vrot.lane.b32.xlu0 %v4023, 64
        %v4314 = vpop.permute.xlu0 %4313
        %4315 = vrot.lane.b32.xlu0 %v4024, 64
        %v4316 = vpop.permute.xlu0 %4315
        %4317 = vrot.lane.b32.xlu0 %v4025, 64
        %v4318 = vpop.permute.xlu0 %4317
        %4319 = vrot.lane.b32.xlu0 %v4026, 64
        %v4320 = vpop.permute.xlu0 %4319
        %v4322 = vsel %vm2797, %v4302, 0
        %v4325 = vsel %vm2797, %v4304, 0
        %v4328 = vsel %vm2797, %v4306, 0
        %v4331 = vsel %vm2797, %v4308, 0
        %v4334 = vsel %vm2797, %v4314, 0
        %v4337 = vsel %vm2797, %v4316, 0
        %v4340 = vsel %vm2797, %v4318, 0
        %v4343 = vsel %vm2797, %v4320, 0
        %4345 = vmatprep.subr.bf16.mxu0 0
        %4346 = vmatpush1.bf16.xpose.msra.mxu0 0
        %4347 = vmatprep.subr.bf16.mxu0 0
        %4348 = vmatpush1.bf16.xpose.msra.mxu0 0
        %4349 = vmatprep.subr.bf16.mxu0 0
        %4350 = vmatpush1.bf16.xpose.msra.mxu0 0
        %4351 = vmatprep.subr.bf16.mxu0 0
        %4352 = vmatpush1.bf16.xpose.msra.mxu0 0
        %4353 = vmatprep.subr.bf16.mxu0 0
        %4354 = vmatpush1.bf16.xpose.msra.mxu0 %v4343
        %4355 = vmatprep.subr.bf16.mxu0 0
        %4356 = vmatpush1.bf16.xpose.msra.mxu0 %v4340
        %4357 = vmatprep.subr.bf16.mxu0 0
        %4358 = vmatpush1.bf16.xpose.msra.mxu0 %v4337
        %4359 = vmatprep.subr.bf16.mxu0 0
        %4360 = vmatpush1.bf16.xpose.msra.mxu0 %v4334
        %4361 = vmatprep.subr.bf16.mxu0 0
        %4362 = vmatpush2.bf16.xpose.msra.mxu0 0
        %4363 = vmatprep.subr.bf16.mxu0 0
        %4364 = vmatpush2.bf16.xpose.msra.mxu0 0
        %4365 = vmatprep.subr.bf16.mxu0 0
        %4366 = vmatpush2.bf16.xpose.msra.mxu0 0
        %4367 = vmatprep.subr.bf16.mxu0 0
        %4368 = vmatpush2.bf16.xpose.msra.mxu0 0
        %4369 = vmatprep.subr.bf16.mxu0 0
        %4370 = vmatpush2.bf16.xpose.msra.mxu0 0
        %4371 = vmatprep.subr.bf16.mxu0 0
        %4372 = vmatpush2.bf16.xpose.msra.mxu0 0
        %4373 = vmatprep.subr.bf16.mxu0 0
        %4374 = vmatpush2.bf16.xpose.msra.mxu0 0
        %4375 = vmatprep.subr.bf16.mxu0 0
        %4376 = vmatpush2.bf16.xpose.msra.mxu0 0
        %4377 = vmatprep.mubr.bf16.mxu0 0
        %4378 = vmatmul.mubr.bf16.gmra.mxu0 %v4322
        %v4379 = vpop.f32.mrf.mxu0
        %v4380 = vadd.f32 %v2777, %v4379
        %v4381 = vpop.f32.mrf.mxu0
        %v4382 = vpop.f32.mrf.mxu0
        %v4383 = vadd.f32 %v2778, %v4382
        %v4384 = vpop.f32.mrf.mxu0
        %4385 = vmatprep.mubr.bf16.mxu0 0
        %4386 = vmatmul.mubr.bf16.gmra.mxu0 %v4325
        %v4387 = vpop.f32.mrf.mxu0
        %v4388 = vadd.f32 %v2779, %v4387
        %v4389 = vpop.f32.mrf.mxu0
        %v4390 = vpop.f32.mrf.mxu0
        %v4391 = vadd.f32 %v2780, %v4390
        %v4392 = vpop.f32.mrf.mxu0
        %4393 = vmatprep.mubr.bf16.mxu0 0
        %4394 = vmatmul.mubr.bf16.gmra.mxu0 %v4328
        %v4395 = vpop.f32.mrf.mxu0
        %v4396 = vadd.f32 %v2781, %v4395
        %v4397 = vpop.f32.mrf.mxu0
        %v4398 = vpop.f32.mrf.mxu0
        %v4399 = vadd.f32 %v2782, %v4398
        %v4400 = vpop.f32.mrf.mxu0
        %4401 = vmatprep.mubr.bf16.mxu0 0
        %4402 = vmatmul.mubr.bf16.gmra.mxu0 %v4331
        %v4403 = vpop.f32.mrf.mxu0
        %v4404 = vadd.f32 %v2783, %v4403
        %v4405 = vpop.f32.mrf.mxu0
        %v4406 = vpop.f32.mrf.mxu0
        %v4407 = vadd.f32 %v2784, %v4406
        %v4408 = vpop.f32.mrf.mxu0
        %4409 = vdwg.mxu0
        %v4410 = vsel %vm2797, %v4380, -inf
        %4411 = vmax.xlane.f32.xlu0 %v4410
        %v4412 = vpop.xlane.xlu0 %4411
        %v4413 = vsel %vm2797, %v4383, -inf
        %4414 = vmax.xlane.f32.xlu0 %v4413
        %v4415 = vpop.xlane.xlu0 %4414
        %v4416 = vsel %vm2797, %v4388, -inf
        %4417 = vmax.xlane.f32.xlu0 %v4416
        %v4418 = vpop.xlane.xlu0 %4417
        %v4419 = vsel %vm2797, %v4391, -inf
        %4420 = vmax.xlane.f32.xlu0 %v4419
        %v4421 = vpop.xlane.xlu0 %4420
        %v4422 = vsel %vm2797, %v4396, -inf
        %4423 = vmax.xlane.f32.xlu0 %v4422
        %v4424 = vpop.xlane.xlu0 %4423
        %v4425 = vsel %vm2797, %v4399, -inf
        %4426 = vmax.xlane.f32.xlu0 %v4425
        %v4427 = vpop.xlane.xlu0 %4426
        %v4428 = vsel %vm2797, %v4404, -inf
        %4429 = vmax.xlane.f32.xlu0 %v4428
        %v4430 = vpop.xlane.xlu0 %4429
        %v4431 = vsel %vm2797, %v4407, -inf
        %4432 = vmax.xlane.f32.xlu0 %v4431
        %v4433 = vpop.xlane.xlu0 %4432
        %v4434 = vsub.f32 %v4380, %v4412
        %v4435 = vsub.f32 %v4383, %v4415
        %v4436 = vsub.f32 %v4388, %v4418
        %v4437 = vsub.f32 %v4391, %v4421
        %v4438 = vsub.f32 %v4396, %v4424
        %v4439 = vsub.f32 %v4399, %v4427
        %v4440 = vsub.f32 %v4404, %v4430
        %v4441 = vsub.f32 %v4407, %v4433
        %v4442 = vmul.f32 %v4434, 1.442695
        %v4443 = vpow.pop %v4442
        %v4444 = vmul.f32 %v4435, 1.442695
        %v4445 = vpow.pop %v4444
        %v4446 = vmul.f32 %v4436, 1.442695
        %v4447 = vpow.pop %v4446
        %v4448 = vmul.f32 %v4437, 1.442695
        %v4449 = vpow.pop %v4448
        %v4450 = vmul.f32 %v4438, 1.442695
        %v4451 = vpow.pop %v4450
        %v4452 = vmul.f32 %v4439, 1.442695
        %v4453 = vpow.pop %v4452
        %v4454 = vmul.f32 %v4440, 1.442695
        %v4455 = vpow.pop %v4454
        %v4456 = vmul.f32 %v4441, 1.442695
        %v4457 = vpow.pop %v4456
        %v4458 = vsel %vm2797, %v4443, 0.0
        %4459 = vadd.xlane.f32.xlu0 %v4458
        %v4460 = vpop.xlane.xlu0 %4459
        %v4461 = vsel %vm2797, %v4445, 0.0
        %4462 = vadd.xlane.f32.xlu0 %v4461
        %v4463 = vpop.xlane.xlu0 %4462
        %v4464 = vsel %vm2797, %v4447, 0.0
        %4465 = vadd.xlane.f32.xlu0 %v4464
        %v4466 = vpop.xlane.xlu0 %4465
        %v4467 = vsel %vm2797, %v4449, 0.0
        %4468 = vadd.xlane.f32.xlu0 %v4467
        %v4469 = vpop.xlane.xlu0 %4468
        %v4470 = vsel %vm2797, %v4451, 0.0
        %4471 = vadd.xlane.f32.xlu0 %v4470
        %v4472 = vpop.xlane.xlu0 %4471
        %v4473 = vsel %vm2797, %v4453, 0.0
        %4474 = vadd.xlane.f32.xlu0 %v4473
        %v4475 = vpop.xlane.xlu0 %4474
        %v4476 = vsel %vm2797, %v4455, 0.0
        %4477 = vadd.xlane.f32.xlu0 %v4476
        %v4478 = vpop.xlane.xlu0 %4477
        %v4479 = vsel %vm2797, %v4457, 0.0
        %4480 = vadd.xlane.f32.xlu0 %v4479
        %v4481 = vpop.xlane.xlu0 %4480
        %v4482 = vrcp.pop %v4460
        %v4483 = vrcp.pop %v4463
        %v4484 = vrcp.pop %v4466
        %v4485 = vrcp.pop %v4469
        %v4486 = vrcp.pop %v4472
        %v4487 = vrcp.pop %v4475
        %v4488 = vrcp.pop %v4478
        %v4489 = vrcp.pop %v4481
        %v4490 = vmul.f32 %v4443, %v4482
        %v4491 = vmul.f32 %v4445, %v4483
        %v4492 = vmul.f32 %v4447, %v4484
        %v4493 = vmul.f32 %v4449, %v4485
        %v4494 = vmul.f32 %v4451, %v4486
        %v4495 = vmul.f32 %v4453, %v4487
        %v4496 = vmul.f32 %v4455, %v4488
        %v4497 = vmul.f32 %v4457, %v4489
        %v4498 = vpack.c.bf16 %v4491, %v4490
        %v4499 = vpack.c.bf16 %v4493, %v4492
        %v4500 = vpack.c.bf16 %v4495, %v4494
        %v4501 = vpack.c.bf16 %v4497, %v4496
        %4506 = vrot.lane.b32.xlu0 %v4027, 64
        %v4507 = vpop.permute.xlu0 %4506
        %4508 = vrot.lane.b32.xlu0 %v4028, 64
        %v4509 = vpop.permute.xlu0 %4508
        %4510 = vrot.lane.b32.xlu0 %v4029, 64
        %v4511 = vpop.permute.xlu0 %4510
        %4512 = vrot.lane.b32.xlu0 %v4030, 64
        %v4513 = vpop.permute.xlu0 %4512
        %v4519 = vsel %vm2797, %v4498, 0
        %v4522 = vsel %vm2797, %v4499, 0
        %v4525 = vsel %vm2797, %v4500, 0
        %v4528 = vsel %vm2797, %v4501, 0
        %4530 = vmatprep.subr.bf16.mxu0 0
        %4531 = vmatpush1.bf16.msra.mxu0 0
        %4532 = vmatprep.subr.bf16.mxu0 0
        %4533 = vmatpush1.bf16.msra.mxu0 0
        %4534 = vmatprep.subr.bf16.mxu0 0
        %4535 = vmatpush1.bf16.msra.mxu0 0
        %4536 = vmatprep.subr.bf16.mxu0 0
        %4537 = vmatpush1.bf16.msra.mxu0 0
        %4538 = vmatprep.subr.bf16.mxu0 0
        %4539 = vmatpush1.bf16.msra.mxu0 %v4513
        %4540 = vmatprep.subr.bf16.mxu0 0
        %4541 = vmatpush1.bf16.msra.mxu0 %v4511
        %4542 = vmatprep.subr.bf16.mxu0 0
        %4543 = vmatpush1.bf16.msra.mxu0 %v4509
        %4544 = vmatprep.subr.bf16.mxu0 0
        %4545 = vmatpush1.bf16.msra.mxu0 %v4507
        %4546 = vmatprep.subr.bf16.mxu0 0
        %4547 = vmatpush2.bf16.msra.mxu0 0
        %4548 = vmatprep.subr.bf16.mxu0 0
        %4549 = vmatpush2.bf16.msra.mxu0 0
        %4550 = vmatprep.subr.bf16.mxu0 0
        %4551 = vmatpush2.bf16.msra.mxu0 0
        %4552 = vmatprep.subr.bf16.mxu0 0
        %4553 = vmatpush2.bf16.msra.mxu0 0
        %4554 = vmatprep.subr.bf16.mxu0 0
        %4555 = vmatpush2.bf16.msra.mxu0 0
        %4556 = vmatprep.subr.bf16.mxu0 0
        %4557 = vmatpush2.bf16.msra.mxu0 0
        %4558 = vmatprep.subr.bf16.mxu0 0
        %4559 = vmatpush2.bf16.msra.mxu0 0
        %4560 = vmatprep.subr.bf16.mxu0 0
        %4561 = vmatpush2.bf16.msra.mxu0 0
        %4562 = vmatprep.mubr.bf16.mxu0 0
        %4563 = vmatmul.mubr.bf16.gmra.mxu0 %v4519
        %v4564 = vpop.f32.mrf.mxu0
        %v4565 = vadd.f32 0.0, %v4564
        %v4566 = vpop.f32.mrf.mxu0
        %v4567 = vpop.f32.mrf.mxu0
        %v4568 = vadd.f32 0.0, %v4567
        %v4569 = vpop.f32.mrf.mxu0
        %4570 = vmatprep.mubr.bf16.mxu0 0
        %4571 = vmatmul.mubr.bf16.gmra.mxu0 %v4522
        %v4572 = vpop.f32.mrf.mxu0
        %v4573 = vadd.f32 0.0, %v4572
        %v4574 = vpop.f32.mrf.mxu0
        %v4575 = vpop.f32.mrf.mxu0
        %v4576 = vadd.f32 0.0, %v4575
        %v4577 = vpop.f32.mrf.mxu0
        %4578 = vmatprep.mubr.bf16.mxu0 0
        %4579 = vmatmul.mubr.bf16.gmra.mxu0 %v4525
        %v4580 = vpop.f32.mrf.mxu0
        %v4581 = vadd.f32 0.0, %v4580
        %v4582 = vpop.f32.mrf.mxu0
        %v4583 = vpop.f32.mrf.mxu0
        %v4584 = vadd.f32 0.0, %v4583
        %v4585 = vpop.f32.mrf.mxu0
        %4586 = vmatprep.mubr.bf16.mxu0 0
        %4587 = vmatmul.mubr.bf16.gmra.mxu0 %v4528
        %v4588 = vpop.f32.mrf.mxu0
        %v4589 = vadd.f32 0.0, %v4588
        %v4590 = vpop.f32.mrf.mxu0
        %v4591 = vpop.f32.mrf.mxu0
        %v4592 = vadd.f32 0.0, %v4591
        %v4593 = vpop.f32.mrf.mxu0
        %4594 = vdwg.mxu0
        %4603 = vrot.lane.b32.xlu0 %v4565, 64
        %v4604 = vpop.permute.xlu0 %4603
        %4605 = vrot.lane.b32.xlu0 %v4568, 64
        %v4606 = vpop.permute.xlu0 %4605
        %4607 = vrot.lane.b32.xlu0 %v4573, 64
        %v4608 = vpop.permute.xlu0 %4607
        %4609 = vrot.lane.b32.xlu0 %v4576, 64
        %v4610 = vpop.permute.xlu0 %4609
        %4611 = vrot.lane.b32.xlu0 %v4581, 64
        %v4612 = vpop.permute.xlu0 %4611
        %4613 = vrot.lane.b32.xlu0 %v4584, 64
        %v4614 = vpop.permute.xlu0 %4613
        %4615 = vrot.lane.b32.xlu0 %v4589, 64
        %v4616 = vpop.permute.xlu0 %4615
        %4617 = vrot.lane.b32.xlu0 %v4592, 64
        %v4618 = vpop.permute.xlu0 %4617
        %4627 = vst.msk [vmem:[#allocation2 + $0x10] sm:$0xff] %vm3394, %v4604
        %4628 = vst.msk [vmem:[#allocation2 + $0x28] sm:$0xff] %vm3394, %v4606
        %4629 = vst.msk [vmem:[#allocation2 + $0x40] sm:$0xff] %vm3394, %v4608
        %4630 = vst.msk [vmem:[#allocation2 + $0x58] sm:$0xff] %vm3394, %v4610
        %4631 = vst.msk [vmem:[#allocation2 + $0x70] sm:$0xff] %vm3394, %v4612
        %4632 = vst.msk [vmem:[#allocation2 + $0x88] sm:$0xff] %vm3394, %v4614
        %4633 = vst.msk [vmem:[#allocation2 + $0xa0] sm:$0xff] %vm3394, %v4616
        %4634 = vst.msk [vmem:[#allocation2 + $0xb8] sm:$0xff] %vm3394, %v4618
        %v4635 = vld [vmem:[#allocation2] sm:$0xff]
        %v4636 = vld [vmem:[#allocation2 + $0x8] sm:$0xff]
        %v4637 = vld [vmem:[#allocation2 + $0x10] sm:$0xff]
        %v4638 = vld [vmem:[#allocation2 + $0x18] sm:$0xff]
        %v4639 = vld [vmem:[#allocation2 + $0x20] sm:$0xff]
        %v4640 = vld [vmem:[#allocation2 + $0x28] sm:$0xff]
        %v4641 = vld [vmem:[#allocation2 + $0x30] sm:$0xff]
        %v4642 = vld [vmem:[#allocation2 + $0x38] sm:$0xff]
        %v4643 = vld [vmem:[#allocation2 + $0x40] sm:$0xff]
        %v4644 = vld [vmem:[#allocation2 + $0x48] sm:$0xff]
        %v4645 = vld [vmem:[#allocation2 + $0x50] sm:$0xff]
        %v4646 = vld [vmem:[#allocation2 + $0x58] sm:$0xff]
        %v4647 = vld [vmem:[#allocation2 + $0x60] sm:$0xff]
        %v4648 = vld [vmem:[#allocation2 + $0x68] sm:$0xff]
        %v4649 = vld [vmem:[#allocation2 + $0x70] sm:$0xff]
        %v4650 = vld [vmem:[#allocation2 + $0x78] sm:$0xff]
        %v4651 = vld [vmem:[#allocation2 + $0x80] sm:$0xff]
        %v4652 = vld [vmem:[#allocation2 + $0x88] sm:$0xff]
        %v4653 = vld [vmem:[#allocation2 + $0x90] sm:$0xff]
        %v4654 = vld [vmem:[#allocation2 + $0x98] sm:$0xff]
        %v4655 = vld [vmem:[#allocation2 + $0xa0] sm:$0xff]
        %v4656 = vld [vmem:[#allocation2 + $0xa8] sm:$0xff]
        %v4657 = vld [vmem:[#allocation2 + $0xb0] sm:$0xff]
        %v4658 = vld [vmem:[#allocation2 + $0xb8] sm:$0xff]
        %v4659 = vpack.c.bf16 %v4638, %v4635
        %v4660 = vpack.c.bf16 %v4639, %v4636
        %v4661 = vpack.c.bf16 %v4640, %v4637
        %v4662 = vpack.c.bf16 %v4644, %v4641
        %v4663 = vpack.c.bf16 %v4645, %v4642
        %v4664 = vpack.c.bf16 %v4646, %v4643
        %v4665 = vpack.c.bf16 %v4650, %v4647
        %v4666 = vpack.c.bf16 %v4651, %v4648
        %v4667 = vpack.c.bf16 %v4652, %v4649
        %v4668 = vpack.c.bf16 %v4656, %v4653
        %v4669 = vpack.c.bf16 %v4657, %v4654
        %v4670 = vpack.c.bf16 %v4658, %v4655
        %v4671 = vld [vmem:[%s4] sm:$0xff]
        %v4672 = vld [vmem:[%s4 + $0x8] sm:$0xf]
        %v4673 = vld [vmem:[%s4 + $0xc] sm:$0xff]
        %v4674 = vld [vmem:[%s4 + $0x14] sm:$0xf]
        %v4675 = vld [vmem:[%s4 + $0x18] sm:$0xff]
        %v4676 = vld [vmem:[%s4 + $0x20] sm:$0xf]
        %v4677 = vld [vmem:[%s4 + $0x24] sm:$0xff]
        %v4678 = vld [vmem:[%s4 + $0x2c] sm:$0xf]
        %v4679 = vld [vmem:[%s4 + $0x30] sm:$0xff]
        %v4680 = vld [vmem:[%s4 + $0x38] sm:$0xf]
        %v4681 = vld [vmem:[%s4 + $0x3c] sm:$0xff]
        %v4682 = vld [vmem:[%s4 + $0x44] sm:$0xf]
        %v4683 = vld [vmem:[%s4 + $0x48] sm:$0xff]
        %v4684 = vld [vmem:[%s4 + $0x50] sm:$0xf]
        %v4685 = vld [vmem:[%s4 + $0x54] sm:$0xff]
        %v4686 = vld [vmem:[%s4 + $0x5c] sm:$0xf]
        %v4687 = vld [vmem:[%s4 + $0x60] sm:$0xff]
        %v4688 = vld [vmem:[%s4 + $0x68] sm:$0xf]
        %v4689 = vld [vmem:[%s4 + $0x6c] sm:$0xff]
        %v4690 = vld [vmem:[%s4 + $0x74] sm:$0xf]
        %v4691 = vld [vmem:[%s4 + $0x78] sm:$0xff]
        %v4692 = vld [vmem:[%s4 + $0x80] sm:$0xf]
        %v4693 = vld [vmem:[%s4 + $0x84] sm:$0xff]
        %v4694 = vld [vmem:[%s4 + $0x8c] sm:$0xf]
        %v4695 = vld [vmem:[%s4 + $0x90] sm:$0xff]
        %v4696 = vld [vmem:[%s4 + $0x98] sm:$0xf]
        %v4697 = vld [vmem:[%s4 + $0x9c] sm:$0xff]
        %v4698 = vld [vmem:[%s4 + $0xa4] sm:$0xf]
        %v4699 = vld [vmem:[%s4 + $0xa8] sm:$0xff]
        %v4700 = vld [vmem:[%s4 + $0xb0] sm:$0xf]
        %v4701 = vld [vmem:[%s4 + $0xb4] sm:$0xff]
        %v4702 = vld [vmem:[%s4 + $0xbc] sm:$0xf]
        %v4703 = vld [vmem:[%s4 + $0xc0] sm:$0xff]
        %v4704 = vld [vmem:[%s4 + $0xc8] sm:$0xf]
        %v4705 = vld [vmem:[%s4 + $0xcc] sm:$0xff]
        %v4706 = vld [vmem:[%s4 + $0xd4] sm:$0xf]
        %v4707 = vld [vmem:[%s4 + $0xd8] sm:$0xff]
        %v4708 = vld [vmem:[%s4 + $0xe0] sm:$0xf]
        %v4709 = vld [vmem:[%s4 + $0xe4] sm:$0xff]
        %v4710 = vld [vmem:[%s4 + $0xec] sm:$0xf]
        %v4711 = vld [vmem:[%s4 + $0xf0] sm:$0xff]
        %v4712 = vld [vmem:[%s4 + $0xf8] sm:$0xf]
        %v4713 = vld [vmem:[%s4 + $0xfc] sm:$0xff]
        %v4714 = vld [vmem:[%s4 + $0x104] sm:$0xf]
        %v4715 = vld [vmem:[%s4 + $0x108] sm:$0xff]
        %v4716 = vld [vmem:[%s4 + $0x110] sm:$0xf]
        %v4717 = vld [vmem:[%s4 + $0x114] sm:$0xff]
        %v4718 = vld [vmem:[%s4 + $0x11c] sm:$0xf]
        %v4719 = vld [vmem:[%s4 + $0x120] sm:$0xff]
        %v4720 = vld [vmem:[%s4 + $0x128] sm:$0xf]
        %v4721 = vld [vmem:[%s4 + $0x12c] sm:$0xff]
        %v4722 = vld [vmem:[%s4 + $0x134] sm:$0xf]
        %v4723 = vld [vmem:[%s4 + $0x138] sm:$0xff]
        %v4724 = vld [vmem:[%s4 + $0x140] sm:$0xf]
        %v4725 = vld [vmem:[%s4 + $0x144] sm:$0xff]
        %v4726 = vld [vmem:[%s4 + $0x14c] sm:$0xf]
        %v4727 = vld [vmem:[%s4 + $0x150] sm:$0xff]
        %v4728 = vld [vmem:[%s4 + $0x158] sm:$0xf]
        %v4729 = vld [vmem:[%s4 + $0x15c] sm:$0xff]
        %v4730 = vld [vmem:[%s4 + $0x164] sm:$0xf]
        %v4731 = vld [vmem:[%s4 + $0x168] sm:$0xff]
        %v4732 = vld [vmem:[%s4 + $0x170] sm:$0xf]
        %v4733 = vld [vmem:[%s4 + $0x174] sm:$0xff]
        %v4734 = vld [vmem:[%s4 + $0x17c] sm:$0xf]
        %v4735 = vld [vmem:[%s4 + $0x180] sm:$0xff]
        %v4736 = vld [vmem:[%s4 + $0x188] sm:$0xf]
        %v4737 = vld [vmem:[%s4 + $0x18c] sm:$0xff]
        %v4738 = vld [vmem:[%s4 + $0x194] sm:$0xf]
        %v4739 = vld [vmem:[%s4 + $0x198] sm:$0xff]
        %v4740 = vld [vmem:[%s4 + $0x1a0] sm:$0xf]
        %v4741 = vld [vmem:[%s4 + $0x1a4] sm:$0xff]
        %v4742 = vld [vmem:[%s4 + $0x1ac] sm:$0xf]
        %v4743 = vld [vmem:[%s4 + $0x1b0] sm:$0xff]
        %v4744 = vld [vmem:[%s4 + $0x1b8] sm:$0xf]
        %v4745 = vld [vmem:[%s4 + $0x1bc] sm:$0xff]
        %v4746 = vld [vmem:[%s4 + $0x1c4] sm:$0xf]
        %v4747 = vld [vmem:[%s4 + $0x1c8] sm:$0xff]
        %v4748 = vld [vmem:[%s4 + $0x1d0] sm:$0xf]
        %v4749 = vld [vmem:[%s4 + $0x1d4] sm:$0xff]
        %v4750 = vld [vmem:[%s4 + $0x1dc] sm:$0xf]
        %v4751 = vld [vmem:[%s4 + $0x1e0] sm:$0xff]
        %v4752 = vld [vmem:[%s4 + $0x1e8] sm:$0xf]
        %v4753 = vld [vmem:[%s4 + $0x1ec] sm:$0xff]
        %v4754 = vld [vmem:[%s4 + $0x1f4] sm:$0xf]
        %v4755 = vld [vmem:[%s4 + $0x1f8] sm:$0xff]
        %v4756 = vld [vmem:[%s4 + $0x200] sm:$0xf]
        %v4757 = vld [vmem:[%s4 + $0x204] sm:$0xff]
        %v4758 = vld [vmem:[%s4 + $0x20c] sm:$0xf]
        %v4759 = vld [vmem:[%s4 + $0x210] sm:$0xff]
        %v4760 = vld [vmem:[%s4 + $0x218] sm:$0xf]
        %v4761 = vld [vmem:[%s4 + $0x21c] sm:$0xff]
        %v4762 = vld [vmem:[%s4 + $0x224] sm:$0xf]
        %v4763 = vld [vmem:[%s4 + $0x228] sm:$0xff]
        %v4764 = vld [vmem:[%s4 + $0x230] sm:$0xf]
        %v4765 = vld [vmem:[%s4 + $0x234] sm:$0xff]
        %v4766 = vld [vmem:[%s4 + $0x23c] sm:$0xf]
        %v4767 = vld [vmem:[%s5] sm:$0x7]
        %v4769 = vlaneseq
        %v4770 = vshrl.u32 %v4769, 7
        %v4771 = vsub.s32 0, %v4770
        %v4772 = vrot.slane %v4767, %v4771
        %v4773 = vlaneseq
        %v4774 = vshrl.u32 %v4773, 7
        %v4775 = vsub.s32 1, %v4774
        %v4776 = vrot.slane %v4767, %v4775
        %v4777 = vlaneseq
        %v4778 = vshrl.u32 %v4777, 7
        %v4779 = vsub.s32 2, %v4778
        %v4780 = vrot.slane %v4767, %v4779
        %v4880 = vunpack.c.l.b16 %v4671
        %v4881 = vunpack.c.h.b16 %v4671
        %v4882 = vunpack.c.l.b16 %v4672
        %v4883 = vunpack.c.l.b16 %v4673
        %v4884 = vunpack.c.h.b16 %v4673
        %v4885 = vunpack.c.l.b16 %v4674
        %v4886 = vunpack.c.l.b16 %v4675
        %v4887 = vunpack.c.h.b16 %v4675
        %v4888 = vunpack.c.l.b16 %v4676
        %v4889 = vunpack.c.l.b16 %v4677
        %v4890 = vunpack.c.h.b16 %v4677
        %v4891 = vunpack.c.l.b16 %v4678
        %v4892 = vunpack.c.l.b16 %v4679
        %v4893 = vunpack.c.h.b16 %v4679
        %v4894 = vunpack.c.l.b16 %v4680
        %v4895 = vunpack.c.l.b16 %v4681
        %v4896 = vunpack.c.h.b16 %v4681
        %v4897 = vunpack.c.l.b16 %v4682
        %v4898 = vunpack.c.l.b16 %v4683
        %v4899 = vunpack.c.h.b16 %v4683
        %v4900 = vunpack.c.l.b16 %v4684
        %v4901 = vunpack.c.l.b16 %v4685
        %v4902 = vunpack.c.h.b16 %v4685
        %v4903 = vunpack.c.l.b16 %v4686
        %v4904 = vunpack.c.l.b16 %v4687
        %v4905 = vunpack.c.h.b16 %v4687
        %v4906 = vunpack.c.l.b16 %v4688
        %v4907 = vunpack.c.l.b16 %v4689
        %v4908 = vunpack.c.h.b16 %v4689
        %v4909 = vunpack.c.l.b16 %v4690
        %v4910 = vunpack.c.l.b16 %v4691
        %v4911 = vunpack.c.h.b16 %v4691
        %v4912 = vunpack.c.l.b16 %v4692
        %v4913 = vunpack.c.l.b16 %v4693
        %v4914 = vunpack.c.h.b16 %v4693
        %v4915 = vunpack.c.l.b16 %v4694
        %v4916 = vunpack.c.l.b16 %v4695
        %v4917 = vunpack.c.h.b16 %v4695
        %v4918 = vunpack.c.l.b16 %v4696
        %v4919 = vunpack.c.l.b16 %v4697
        %v4920 = vunpack.c.h.b16 %v4697
        %v4921 = vunpack.c.l.b16 %v4698
        %v4922 = vunpack.c.l.b16 %v4699
        %v4923 = vunpack.c.h.b16 %v4699
        %v4924 = vunpack.c.l.b16 %v4700
        %v4925 = vunpack.c.l.b16 %v4701
        %v4926 = vunpack.c.h.b16 %v4701
        %v4927 = vunpack.c.l.b16 %v4702
        %v4928 = vunpack.c.l.b16 %v4703
        %v4929 = vunpack.c.h.b16 %v4703
        %v4930 = vunpack.c.l.b16 %v4704
        %v4931 = vunpack.c.l.b16 %v4705
        %v4932 = vunpack.c.h.b16 %v4705
        %v4933 = vunpack.c.l.b16 %v4706
        %v4934 = vunpack.c.l.b16 %v4707
        %v4935 = vunpack.c.h.b16 %v4707
        %v4936 = vunpack.c.l.b16 %v4708
        %v4937 = vunpack.c.l.b16 %v4709
        %v4938 = vunpack.c.h.b16 %v4709
        %v4939 = vunpack.c.l.b16 %v4710
        %v4940 = vunpack.c.l.b16 %v4711
        %v4941 = vunpack.c.h.b16 %v4711
        %v4942 = vunpack.c.l.b16 %v4712
        %v4943 = vunpack.c.l.b16 %v4713
        %v4944 = vunpack.c.h.b16 %v4713
        %v4945 = vunpack.c.l.b16 %v4714
        %v4946 = vunpack.c.l.b16 %v4715
        %v4947 = vunpack.c.h.b16 %v4715
        %v4948 = vunpack.c.l.b16 %v4716
        %v4949 = vunpack.c.l.b16 %v4717
        %v4950 = vunpack.c.h.b16 %v4717
        %v4951 = vunpack.c.l.b16 %v4718
        %v4952 = vunpack.c.l.b16 %v4719
        %v4953 = vunpack.c.h.b16 %v4719
        %v4954 = vunpack.c.l.b16 %v4720
        %v4955 = vunpack.c.l.b16 %v4721
        %v4956 = vunpack.c.h.b16 %v4721
        %v4957 = vunpack.c.l.b16 %v4722
        %v4958 = vunpack.c.l.b16 %v4723
        %v4959 = vunpack.c.h.b16 %v4723
        %v4960 = vunpack.c.l.b16 %v4724
        %v4961 = vunpack.c.l.b16 %v4725
        %v4962 = vunpack.c.h.b16 %v4725
        %v4963 = vunpack.c.l.b16 %v4726
        %v4964 = vunpack.c.l.b16 %v4727
        %v4965 = vunpack.c.h.b16 %v4727
        %v4966 = vunpack.c.l.b16 %v4728
        %v4967 = vunpack.c.l.b16 %v4729
        %v4968 = vunpack.c.h.b16 %v4729
        %v4969 = vunpack.c.l.b16 %v4730
        %v4970 = vunpack.c.l.b16 %v4731
        %v4971 = vunpack.c.h.b16 %v4731
        %v4972 = vunpack.c.l.b16 %v4732
        %v4973 = vunpack.c.l.b16 %v4733
        %v4974 = vunpack.c.h.b16 %v4733
        %v4975 = vunpack.c.l.b16 %v4734
        %v4976 = vunpack.c.l.b16 %v4735
        %v4977 = vunpack.c.h.b16 %v4735
        %v4978 = vunpack.c.l.b16 %v4736
        %v4979 = vunpack.c.l.b16 %v4737
        %v4980 = vunpack.c.h.b16 %v4737
        %v4981 = vunpack.c.l.b16 %v4738
        %v4982 = vunpack.c.l.b16 %v4739
        %v4983 = vunpack.c.h.b16 %v4739
        %v4984 = vunpack.c.l.b16 %v4740
        %v4985 = vunpack.c.l.b16 %v4741
        %v4986 = vunpack.c.h.b16 %v4741
        %v4987 = vunpack.c.l.b16 %v4742
        %v4988 = vunpack.c.l.b16 %v4743
        %v4989 = vunpack.c.h.b16 %v4743
        %v4990 = vunpack.c.l.b16 %v4744
        %v4991 = vunpack.c.l.b16 %v4745
        %v4992 = vunpack.c.h.b16 %v4745
        %v4993 = vunpack.c.l.b16 %v4746
        %v4994 = vunpack.c.l.b16 %v4747
        %v4995 = vunpack.c.h.b16 %v4747
        %v4996 = vunpack.c.l.b16 %v4748
        %v4997 = vunpack.c.l.b16 %v4749
        %v4998 = vunpack.c.h.b16 %v4749
        %v4999 = vunpack.c.l.b16 %v4750
        %v5000 = vunpack.c.l.b16 %v4751
        %v5001 = vunpack.c.h.b16 %v4751
        %v5002 = vunpack.c.l.b16 %v4752
        %v5003 = vunpack.c.l.b16 %v4753
        %v5004 = vunpack.c.h.b16 %v4753
        %v5005 = vunpack.c.l.b16 %v4754
        %v5006 = vunpack.c.l.b16 %v4755
        %v5007 = vunpack.c.h.b16 %v4755
        %v5008 = vunpack.c.l.b16 %v4756
        %v5009 = vunpack.c.l.b16 %v4757
        %v5010 = vunpack.c.h.b16 %v4757
        %v5011 = vunpack.c.l.b16 %v4758
        %v5012 = vunpack.c.l.b16 %v4759
        %v5013 = vunpack.c.h.b16 %v4759
        %v5014 = vunpack.c.l.b16 %v4760
        %v5015 = vunpack.c.l.b16 %v4761
        %v5016 = vunpack.c.h.b16 %v4761
        %v5017 = vunpack.c.l.b16 %v4762
        %v5018 = vunpack.c.l.b16 %v4763
        %v5019 = vunpack.c.h.b16 %v4763
        %v5020 = vunpack.c.l.b16 %v4764
        %v5021 = vunpack.c.l.b16 %v4765
        %v5022 = vunpack.c.h.b16 %v4765
        %v5023 = vunpack.c.l.b16 %v4766
        %v5024 = vpack.c.b16 %v4883, %v4880
        %v5025 = vpack.c.b16 %v4884, %v4881
        %v5026 = vpack.c.b16 %v4885, %v4882
        %v5027 = vpack.c.b16 %v4889, %v4886
        %v5028 = vpack.c.b16 %v4890, %v4887
        %v5029 = vpack.c.b16 %v4891, %v4888
        %v5030 = vpack.c.b16 %v4895, %v4892
        %v5031 = vpack.c.b16 %v4896, %v4893
        %v5032 = vpack.c.b16 %v4897, %v4894
        %v5033 = vpack.c.b16 %v4901, %v4898
        %v5034 = vpack.c.b16 %v4902, %v4899
        %v5035 = vpack.c.b16 %v4903, %v4900
        %v5036 = vpack.c.b16 %v4907, %v4904
        %v5037 = vpack.c.b16 %v4908, %v4905
        %v5038 = vpack.c.b16 %v4909, %v4906
        %v5039 = vpack.c.b16 %v4913, %v4910
        %v5040 = vpack.c.b16 %v4914, %v4911
        %v5041 = vpack.c.b16 %v4915, %v4912
        %v5042 = vpack.c.b16 %v4919, %v4916
        %v5043 = vpack.c.b16 %v4920, %v4917
        %v5044 = vpack.c.b16 %v4921, %v4918
        %v5045 = vpack.c.b16 %v4925, %v4922
        %v5046 = vpack.c.b16 %v4926, %v4923
        %v5047 = vpack.c.b16 %v4927, %v4924
        %v5048 = vpack.c.b16 %v4931, %v4928
        %v5049 = vpack.c.b16 %v4932, %v4929
        %v5050 = vpack.c.b16 %v4933, %v4930
        %v5051 = vpack.c.b16 %v4937, %v4934
        %v5052 = vpack.c.b16 %v4938, %v4935
        %v5053 = vpack.c.b16 %v4939, %v4936
        %v5054 = vpack.c.b16 %v4943, %v4940
        %v5055 = vpack.c.b16 %v4944, %v4941
        %v5056 = vpack.c.b16 %v4945, %v4942
        %v5057 = vpack.c.b16 %v4949, %v4946
        %v5058 = vpack.c.b16 %v4950, %v4947
        %v5059 = vpack.c.b16 %v4951, %v4948
        %v5060 = vpack.c.b16 %v4955, %v4952
        %v5061 = vpack.c.b16 %v4956, %v4953
        %v5062 = vpack.c.b16 %v4957, %v4954
        %v5063 = vpack.c.b16 %v4961, %v4958
        %v5064 = vpack.c.b16 %v4962, %v4959
        %v5065 = vpack.c.b16 %v4963, %v4960
        %v5066 = vpack.c.b16 %v4967, %v4964
        %v5067 = vpack.c.b16 %v4968, %v4965
        %v5068 = vpack.c.b16 %v4969, %v4966
        %v5069 = vpack.c.b16 %v4973, %v4970
        %v5070 = vpack.c.b16 %v4974, %v4971
        %v5071 = vpack.c.b16 %v4975, %v4972
        %v5072 = vpack.c.b16 %v4979, %v4976
        %v5073 = vpack.c.b16 %v4980, %v4977
        %v5074 = vpack.c.b16 %v4981, %v4978
        %v5075 = vpack.c.b16 %v4985, %v4982
        %v5076 = vpack.c.b16 %v4986, %v4983
        %v5077 = vpack.c.b16 %v4987, %v4984
        %v5078 = vpack.c.b16 %v4991, %v4988
        %v5079 = vpack.c.b16 %v4992, %v4989
        %v5080 = vpack.c.b16 %v4993, %v4990
        %v5081 = vpack.c.b16 %v4997, %v4994
        %v5082 = vpack.c.b16 %v4998, %v4995
        %v5083 = vpack.c.b16 %v4999, %v4996
        %v5084 = vpack.c.b16 %v5003, %v5000
        %v5085 = vpack.c.b16 %v5004, %v5001
        %v5086 = vpack.c.b16 %v5005, %v5002
        %v5087 = vpack.c.b16 %v5009, %v5006
        %v5088 = vpack.c.b16 %v5010, %v5007
        %v5089 = vpack.c.b16 %v5011, %v5008
        %v5090 = vpack.c.b16 %v5015, %v5012
        %v5091 = vpack.c.b16 %v5016, %v5013
        %v5092 = vpack.c.b16 %v5017, %v5014
        %v5093 = vpack.c.b16 %v5021, %v5018
        %v5094 = vpack.c.b16 %v5022, %v5019
        %v5095 = vpack.c.b16 %v5023, %v5020
        %5168 = vmatprep.subr.bf16.mxu0 %v5046
        %5169 = vmatpush1.bf16.msra.mxu0 %v5045
        %5170 = vmatprep.subr.bf16.mxu0 %v5043
        %5171 = vmatpush1.bf16.msra.mxu0 %v5042
        %5172 = vmatprep.subr.bf16.mxu0 %v5040
        %5173 = vmatpush1.bf16.msra.mxu0 %v5039
        %5174 = vmatprep.subr.bf16.mxu0 %v5037
        %5175 = vmatpush1.bf16.msra.mxu0 %v5036
        %5176 = vmatprep.subr.bf16.mxu0 %v5034
        %5177 = vmatpush1.bf16.msra.mxu0 %v5033
        %5178 = vmatprep.subr.bf16.mxu0 %v5031
        %5179 = vmatpush1.bf16.msra.mxu0 %v5030
        %5180 = vmatprep.subr.bf16.mxu0 %v5028
        %5181 = vmatpush1.bf16.msra.mxu0 %v5027
        %5182 = vmatprep.subr.bf16.mxu0 %v5025
        %5183 = vmatpush1.bf16.msra.mxu0 %v5024
        %5184 = vmatprep.subr.bf16.mxu0 %v5070
        %5185 = vmatpush2.bf16.msra.mxu0 %v5069
        %5186 = vmatprep.subr.bf16.mxu0 %v5067
        %5187 = vmatpush2.bf16.msra.mxu0 %v5066
        %5188 = vmatprep.subr.bf16.mxu0 %v5064
        %5189 = vmatpush2.bf16.msra.mxu0 %v5063
        %5190 = vmatprep.subr.bf16.mxu0 %v5061
        %5191 = vmatpush2.bf16.msra.mxu0 %v5060
        %5192 = vmatprep.subr.bf16.mxu0 %v5058
        %5193 = vmatpush2.bf16.msra.mxu0 %v5057
        %5194 = vmatprep.subr.bf16.mxu0 %v5055
        %5195 = vmatpush2.bf16.msra.mxu0 %v5054
        %5196 = vmatprep.subr.bf16.mxu0 %v5052
        %5197 = vmatpush2.bf16.msra.mxu0 %v5051
        %5198 = vmatprep.subr.bf16.mxu0 %v5049
        %5199 = vmatpush2.bf16.msra.mxu0 %v5048
        %5200 = vmatprep.mubr.bf16.mxu0 %v4660
        %5201 = vmatmul.mubr.bf16.gmra.mxu0 %v4659
        %v5202 = vpop.f32.mrf.mxu0
        %v5203 = vadd.f32 %v4772, %v5202
        %v5204 = vpop.f32.mrf.mxu0
        %v5205 = vadd.f32 %v4776, %v5204
        %v5206 = vpop.f32.mrf.mxu0
        %v5207 = vadd.f32 %v4772, %v5206
        %v5208 = vpop.f32.mrf.mxu0
        %v5209 = vadd.f32 %v4776, %v5208
        %5210 = vmatprep.mubr.bf16.mxu0 %v4663
        %5211 = vmatmul.mubr.bf16.gmra.mxu0 %v4662
        %v5212 = vpop.f32.mrf.mxu0
        %v5213 = vadd.f32 %v4772, %v5212
        %v5214 = vpop.f32.mrf.mxu0
        %v5215 = vadd.f32 %v4776, %v5214
        %v5216 = vpop.f32.mrf.mxu0
        %v5217 = vadd.f32 %v4772, %v5216
        %v5218 = vpop.f32.mrf.mxu0
        %v5219 = vadd.f32 %v4776, %v5218
        %5220 = vmatprep.mubr.bf16.mxu0 %v4666
        %5221 = vmatmul.mubr.bf16.gmra.mxu0 %v4665
        %v5222 = vpop.f32.mrf.mxu0
        %v5223 = vadd.f32 %v4772, %v5222
        %v5224 = vpop.f32.mrf.mxu0
        %v5225 = vadd.f32 %v4776, %v5224
        %v5226 = vpop.f32.mrf.mxu0
        %v5227 = vadd.f32 %v4772, %v5226
        %v5228 = vpop.f32.mrf.mxu0
        %v5229 = vadd.f32 %v4776, %v5228
        %5230 = vmatprep.mubr.bf16.mxu0 %v4669
        %5231 = vmatmul.mubr.bf16.gmra.mxu0 %v4668
        %v5232 = vpop.f32.mrf.mxu0
        %v5233 = vadd.f32 %v4772, %v5232
        %v5234 = vpop.f32.mrf.mxu0
        %v5235 = vadd.f32 %v4776, %v5234
        %v5236 = vpop.f32.mrf.mxu0
        %v5237 = vadd.f32 %v4772, %v5236
        %v5238 = vpop.f32.mrf.mxu0
        %v5239 = vadd.f32 %v4776, %v5238
        %5240 = vdwg.mxu0
        %5241 = vmatprep.subr.bf16.mxu0 %v5094
        %5242 = vmatpush1.bf16.msra.mxu0 %v5093
        %5243 = vmatprep.subr.bf16.mxu0 %v5091
        %5244 = vmatpush1.bf16.msra.mxu0 %v5090
        %5245 = vmatprep.subr.bf16.mxu0 %v5088
        %5246 = vmatpush1.bf16.msra.mxu0 %v5087
        %5247 = vmatprep.subr.bf16.mxu0 %v5085
        %5248 = vmatpush1.bf16.msra.mxu0 %v5084
        %5249 = vmatprep.subr.bf16.mxu0 %v5082
        %5250 = vmatpush1.bf16.msra.mxu0 %v5081
        %5251 = vmatprep.subr.bf16.mxu0 %v5079
        %5252 = vmatpush1.bf16.msra.mxu0 %v5078
        %5253 = vmatprep.subr.bf16.mxu0 %v5076
        %5254 = vmatpush1.bf16.msra.mxu0 %v5075
        %5255 = vmatprep.subr.bf16.mxu0 %v5073
        %5256 = vmatpush1.bf16.msra.mxu0 %v5072
        %5257 = vmatprep.subr.bf16.mxu0 0
        %5258 = vmatpush2.bf16.msra.mxu0 0
        %5259 = vmatprep.subr.bf16.mxu0 0
        %5260 = vmatpush2.bf16.msra.mxu0 0
        %5261 = vmatprep.subr.bf16.mxu0 0
        %5262 = vmatpush2.bf16.msra.mxu0 0
        %5263 = vmatprep.subr.bf16.mxu0 0
        %5264 = vmatpush2.bf16.msra.mxu0 0
        %5265 = vmatprep.subr.bf16.mxu0 0
        %5266 = vmatpush2.bf16.msra.mxu0 0
        %5267 = vmatprep.subr.bf16.mxu0 0
        %5268 = vmatpush2.bf16.msra.mxu0 0
        %5269 = vmatprep.subr.bf16.mxu0 0
        %5270 = vmatpush2.bf16.msra.mxu0 0
        %5271 = vmatprep.subr.bf16.mxu0 0
        %5272 = vmatpush2.bf16.msra.mxu0 0
        %5273 = vmatprep.mubr.bf16.mxu0 0
        %5274 = vmatmul.mubr.bf16.gmra.mxu0 %v4661
        %v5275 = vpop.f32.mrf.mxu0
        %v5276 = vadd.f32 %v5203, %v5275
        %v5277 = vpop.f32.mrf.mxu0
        %v5278 = vadd.f32 %v5205, %v5277
        %v5279 = vpop.f32.mrf.mxu0
        %v5280 = vadd.f32 %v5207, %v5279
        %v5281 = vpop.f32.mrf.mxu0
        %v5282 = vadd.f32 %v5209, %v5281
        %5283 = vmatprep.mubr.bf16.mxu0 0
        %5284 = vmatmul.mubr.bf16.gmra.mxu0 %v4664
        %v5285 = vpop.f32.mrf.mxu0
        %v5286 = vadd.f32 %v5213, %v5285
        %v5287 = vpop.f32.mrf.mxu0
        %v5288 = vadd.f32 %v5215, %v5287
        %v5289 = vpop.f32.mrf.mxu0
        %v5290 = vadd.f32 %v5217, %v5289
        %v5291 = vpop.f32.mrf.mxu0
        %v5292 = vadd.f32 %v5219, %v5291
        %5293 = vmatprep.mubr.bf16.mxu0 0
        %5294 = vmatmul.mubr.bf16.gmra.mxu0 %v4667
        %v5295 = vpop.f32.mrf.mxu0
        %v5296 = vadd.f32 %v5223, %v5295
        %v5297 = vpop.f32.mrf.mxu0
        %v5298 = vadd.f32 %v5225, %v5297
        %v5299 = vpop.f32.mrf.mxu0
        %v5300 = vadd.f32 %v5227, %v5299
        %v5301 = vpop.f32.mrf.mxu0
        %v5302 = vadd.f32 %v5229, %v5301
        %5303 = vmatprep.mubr.bf16.mxu0 0
        %5304 = vmatmul.mubr.bf16.gmra.mxu0 %v4670
        %v5305 = vpop.f32.mrf.mxu0
        %v5306 = vadd.f32 %v5233, %v5305
        %v5307 = vpop.f32.mrf.mxu0
        %v5308 = vadd.f32 %v5235, %v5307
        %v5309 = vpop.f32.mrf.mxu0
        %v5310 = vadd.f32 %v5237, %v5309
        %v5311 = vpop.f32.mrf.mxu0
        %v5312 = vadd.f32 %v5239, %v5311
        %5313 = vdwg.mxu0
        %5314 = vmatprep.subr.bf16.mxu0 0
        %5315 = vmatpush1.bf16.msra.mxu0 %v5047
        %5316 = vmatprep.subr.bf16.mxu0 0
        %5317 = vmatpush1.bf16.msra.mxu0 %v5044
        %5318 = vmatprep.subr.bf16.mxu0 0
        %5319 = vmatpush1.bf16.msra.mxu0 %v5041
        %5320 = vmatprep.subr.bf16.mxu0 0
        %5321 = vmatpush1.bf16.msra.mxu0 %v5038
        %5322 = vmatprep.subr.bf16.mxu0 0
        %5323 = vmatpush1.bf16.msra.mxu0 %v5035
        %5324 = vmatprep.subr.bf16.mxu0 0
        %5325 = vmatpush1.bf16.msra.mxu0 %v5032
        %5326 = vmatprep.subr.bf16.mxu0 0
        %5327 = vmatpush1.bf16.msra.mxu0 %v5029
        %5328 = vmatprep.subr.bf16.mxu0 0
        %5329 = vmatpush1.bf16.msra.mxu0 %v5026
        %5330 = vmatprep.subr.bf16.mxu0 0
        %5331 = vmatpush2.bf16.msra.mxu0 %v5071
        %5332 = vmatprep.subr.bf16.mxu0 0
        %5333 = vmatpush2.bf16.msra.mxu0 %v5068
        %5334 = vmatprep.subr.bf16.mxu0 0
        %5335 = vmatpush2.bf16.msra.mxu0 %v5065
        %5336 = vmatprep.subr.bf16.mxu0 0
        %5337 = vmatpush2.bf16.msra.mxu0 %v5062
        %5338 = vmatprep.subr.bf16.mxu0 0
        %5339 = vmatpush2.bf16.msra.mxu0 %v5059
        %5340 = vmatprep.subr.bf16.mxu0 0
        %5341 = vmatpush2.bf16.msra.mxu0 %v5056
        %5342 = vmatprep.subr.bf16.mxu0 0
        %5343 = vmatpush2.bf16.msra.mxu0 %v5053
        %5344 = vmatprep.subr.bf16.mxu0 0
        %5345 = vmatpush2.bf16.msra.mxu0 %v5050
        %5346 = vmatprep.mubr.bf16.mxu0 %v4660
        %5347 = vmatmul.mubr.bf16.gmra.mxu0 %v4659
        %v5348 = vpop.f32.mrf.mxu0
        %v5349 = vadd.f32 %v4780, %v5348
        %v5350 = vpop.f32.mrf.mxu0
        %v5351 = vpop.f32.mrf.mxu0
        %v5352 = vadd.f32 %v4780, %v5351
        %v5353 = vpop.f32.mrf.mxu0
        %5354 = vmatprep.mubr.bf16.mxu0 %v4663
        %5355 = vmatmul.mubr.bf16.gmra.mxu0 %v4662
        %v5356 = vpop.f32.mrf.mxu0
        %v5357 = vadd.f32 %v4780, %v5356
        %v5358 = vpop.f32.mrf.mxu0
        %v5359 = vpop.f32.mrf.mxu0
        %v5360 = vadd.f32 %v4780, %v5359
        %v5361 = vpop.f32.mrf.mxu0
        %5362 = vmatprep.mubr.bf16.mxu0 %v4666
        %5363 = vmatmul.mubr.bf16.gmra.mxu0 %v4665
        %v5364 = vpop.f32.mrf.mxu0
        %v5365 = vadd.f32 %v4780, %v5364
        %v5366 = vpop.f32.mrf.mxu0
        %v5367 = vpop.f32.mrf.mxu0
        %v5368 = vadd.f32 %v4780, %v5367
        %v5369 = vpop.f32.mrf.mxu0
        %5370 = vmatprep.mubr.bf16.mxu0 %v4669
        %5371 = vmatmul.mubr.bf16.gmra.mxu0 %v4668
        %v5372 = vpop.f32.mrf.mxu0
        %v5373 = vadd.f32 %v4780, %v5372
        %v5374 = vpop.f32.mrf.mxu0
        %v5375 = vpop.f32.mrf.mxu0
        %v5376 = vadd.f32 %v4780, %v5375
        %v5377 = vpop.f32.mrf.mxu0
        %5378 = vdwg.mxu0
        %5379 = vmatprep.subr.bf16.mxu0 0
        %5380 = vmatpush1.bf16.msra.mxu0 %v5095
        %5381 = vmatprep.subr.bf16.mxu0 0
        %5382 = vmatpush1.bf16.msra.mxu0 %v5092
        %5383 = vmatprep.subr.bf16.mxu0 0
        %5384 = vmatpush1.bf16.msra.mxu0 %v5089
        %5385 = vmatprep.subr.bf16.mxu0 0
        %5386 = vmatpush1.bf16.msra.mxu0 %v5086
        %5387 = vmatprep.subr.bf16.mxu0 0
        %5388 = vmatpush1.bf16.msra.mxu0 %v5083
        %5389 = vmatprep.subr.bf16.mxu0 0
        %5390 = vmatpush1.bf16.msra.mxu0 %v5080
        %5391 = vmatprep.subr.bf16.mxu0 0
        %5392 = vmatpush1.bf16.msra.mxu0 %v5077
        %5393 = vmatprep.subr.bf16.mxu0 0
        %5394 = vmatpush1.bf16.msra.mxu0 %v5074
        %5395 = vmatprep.subr.bf16.mxu0 0
        %5396 = vmatpush2.bf16.msra.mxu0 0
        %5397 = vmatprep.subr.bf16.mxu0 0
        %5398 = vmatpush2.bf16.msra.mxu0 0
        %5399 = vmatprep.subr.bf16.mxu0 0
        %5400 = vmatpush2.bf16.msra.mxu0 0
        %5401 = vmatprep.subr.bf16.mxu0 0
        %5402 = vmatpush2.bf16.msra.mxu0 0
        %5403 = vmatprep.subr.bf16.mxu0 0
        %5404 = vmatpush2.bf16.msra.mxu0 0
        %5405 = vmatprep.subr.bf16.mxu0 0
        %5406 = vmatpush2.bf16.msra.mxu0 0
        %5407 = vmatprep.subr.bf16.mxu0 0
        %5408 = vmatpush2.bf16.msra.mxu0 0
        %5409 = vmatprep.subr.bf16.mxu0 0
        %5410 = vmatpush2.bf16.msra.mxu0 0
        %5411 = vmatprep.mubr.bf16.mxu0 0
        %5412 = vmatmul.mubr.bf16.gmra.mxu0 %v4661
        %v5413 = vpop.f32.mrf.mxu0
        %v5414 = vadd.f32 %v5349, %v5413
        %v5415 = vpop.f32.mrf.mxu0
        %v5416 = vpop.f32.mrf.mxu0
        %v5417 = vadd.f32 %v5352, %v5416
        %v5418 = vpop.f32.mrf.mxu0
        %5419 = vmatprep.mubr.bf16.mxu0 0
        %5420 = vmatmul.mubr.bf16.gmra.mxu0 %v4664
        %v5421 = vpop.f32.mrf.mxu0
        %v5422 = vadd.f32 %v5357, %v5421
        %v5423 = vpop.f32.mrf.mxu0
        %v5424 = vpop.f32.mrf.mxu0
        %v5425 = vadd.f32 %v5360, %v5424
        %v5426 = vpop.f32.mrf.mxu0
        %5427 = vmatprep.mubr.bf16.mxu0 0
        %5428 = vmatmul.mubr.bf16.gmra.mxu0 %v4667
        %v5429 = vpop.f32.mrf.mxu0
        %v5430 = vadd.f32 %v5365, %v5429
        %v5431 = vpop.f32.mrf.mxu0
        %v5432 = vpop.f32.mrf.mxu0
        %v5433 = vadd.f32 %v5368, %v5432
        %v5434 = vpop.f32.mrf.mxu0
        %5435 = vmatprep.mubr.bf16.mxu0 0
        %5436 = vmatmul.mubr.bf16.gmra.mxu0 %v4670
        %v5437 = vpop.f32.mrf.mxu0
        %v5438 = vadd.f32 %v5373, %v5437
        %v5439 = vpop.f32.mrf.mxu0
        %v5440 = vpop.f32.mrf.mxu0
        %v5441 = vadd.f32 %v5376, %v5440
        %v5442 = vpop.f32.mrf.mxu0
        %5443 = vdwg.mxu0
        %v5444 = vadd.f32 %v413, %v5276
        %v5445 = vadd.f32 %v414, %v5278
        %v5446 = vadd.f32 %v415, %v5414
        %v5447 = vadd.f32 %v416, %v5280
        %v5448 = vadd.f32 %v417, %v5282
        %v5449 = vadd.f32 %v418, %v5417
        %v5450 = vadd.f32 %v419, %v5286
        %v5451 = vadd.f32 %v420, %v5288
        %v5452 = vadd.f32 %v421, %v5422
        %v5453 = vadd.f32 %v422, %v5290
        %v5454 = vadd.f32 %v423, %v5292
        %v5455 = vadd.f32 %v424, %v5425
        %v5456 = vadd.f32 %v425, %v5296
        %v5457 = vadd.f32 %v426, %v5298
        %v5458 = vadd.f32 %v427, %v5430
        %v5459 = vadd.f32 %v428, %v5300
        %v5460 = vadd.f32 %v429, %v5302
        %v5461 = vadd.f32 %v430, %v5433
        %v5462 = vadd.f32 %v431, %v5306
        %v5463 = vadd.f32 %v432, %v5308
        %v5464 = vadd.f32 %v433, %v5438
        %v5465 = vadd.f32 %v434, %v5310
        %v5466 = vadd.f32 %v435, %v5312
        %v5467 = vadd.f32 %v436, %v5441
        %v5468 = vld [vmem:[%s6] sm:$0x7]
        %v5469 = vld [vmem:[%s7] sm:$0x7]
        %v5470 = vadd.f32 %v5444, %v5445
        %v5471 = vadd.f32 %v5470, %v5446
        %5472 = vadd.xlane.f32.xlu0 %v5471
        %v5473 = vpop.xlane.xlu0 %5472
        %v5474 = vadd.f32 %v5447, %v5448
        %v5475 = vadd.f32 %v5474, %v5449
        %5476 = vadd.xlane.f32.xlu0 %v5475
        %v5477 = vpop.xlane.xlu0 %5476
        %v5478 = vadd.f32 %v5450, %v5451
        %v5479 = vadd.f32 %v5478, %v5452
        %5480 = vadd.xlane.f32.xlu0 %v5479
        %v5481 = vpop.xlane.xlu0 %5480
        %v5482 = vadd.f32 %v5453, %v5454
        %v5483 = vadd.f32 %v5482, %v5455
        %5484 = vadd.xlane.f32.xlu0 %v5483
        %v5485 = vpop.xlane.xlu0 %5484
        %v5486 = vadd.f32 %v5456, %v5457
        %v5487 = vadd.f32 %v5486, %v5458
        %5488 = vadd.xlane.f32.xlu0 %v5487
        %v5489 = vpop.xlane.xlu0 %5488
        %v5490 = vadd.f32 %v5459, %v5460
        %v5491 = vadd.f32 %v5490, %v5461
        %5492 = vadd.xlane.f32.xlu0 %v5491
        %v5493 = vpop.xlane.xlu0 %5492
        %v5494 = vadd.f32 %v5462, %v5463
        %v5495 = vadd.f32 %v5494, %v5464
        %5496 = vadd.xlane.f32.xlu0 %v5495
        %v5497 = vpop.xlane.xlu0 %5496
        %v5498 = vadd.f32 %v5465, %v5466
        %v5499 = vadd.f32 %v5498, %v5467
        %5500 = vadd.xlane.f32.xlu0 %v5499
        %v5501 = vpop.xlane.xlu0 %5500
        %v5502 = vmul.f32 %v5473, %v471
        %v5503 = vmul.f32 %v5477, %v471
        %v5504 = vmul.f32 %v5481, %v471
        %v5505 = vmul.f32 %v5485, %v471
        %v5506 = vmul.f32 %v5489, %v471
        %v5507 = vmul.f32 %v5493, %v471
        %v5508 = vmul.f32 %v5497, %v471
        %v5509 = vmul.f32 %v5501, %v471
        %v5510 = vsub.f32 %v5444, %v5502
        %v5511 = vsub.f32 %v5445, %v5502
        %v5512 = vsub.f32 %v5446, %v5502
        %v5513 = vsub.f32 %v5447, %v5503
        %v5514 = vsub.f32 %v5448, %v5503
        %v5515 = vsub.f32 %v5449, %v5503
        %v5516 = vsub.f32 %v5450, %v5504
        %v5517 = vsub.f32 %v5451, %v5504
        %v5518 = vsub.f32 %v5452, %v5504
        %v5519 = vsub.f32 %v5453, %v5505
        %v5520 = vsub.f32 %v5454, %v5505
        %v5521 = vsub.f32 %v5455, %v5505
        %v5522 = vsub.f32 %v5456, %v5506
        %v5523 = vsub.f32 %v5457, %v5506
        %v5524 = vsub.f32 %v5458, %v5506
        %v5525 = vsub.f32 %v5459, %v5507
        %v5526 = vsub.f32 %v5460, %v5507
        %v5527 = vsub.f32 %v5461, %v5507
        %v5528 = vsub.f32 %v5462, %v5508
        %v5529 = vsub.f32 %v5463, %v5508
        %v5530 = vsub.f32 %v5464, %v5508
        %v5531 = vsub.f32 %v5465, %v5509
        %v5532 = vsub.f32 %v5466, %v5509
        %v5533 = vsub.f32 %v5467, %v5509
        %v5534 = vmul.f32 %v5510, %v5510
        %v5535 = vmul.f32 %v5511, %v5511
        %v5536 = vmul.f32 %v5512, %v5512
        %v5537 = vmul.f32 %v5513, %v5513
        %v5538 = vmul.f32 %v5514, %v5514
        %v5539 = vmul.f32 %v5515, %v5515
        %v5540 = vmul.f32 %v5516, %v5516
        %v5541 = vmul.f32 %v5517, %v5517
        %v5542 = vmul.f32 %v5518, %v5518
        %v5543 = vmul.f32 %v5519, %v5519
        %v5544 = vmul.f32 %v5520, %v5520
        %v5545 = vmul.f32 %v5521, %v5521
        %v5546 = vmul.f32 %v5522, %v5522
        %v5547 = vmul.f32 %v5523, %v5523
        %v5548 = vmul.f32 %v5524, %v5524
        %v5549 = vmul.f32 %v5525, %v5525
        %v5550 = vmul.f32 %v5526, %v5526
        %v5551 = vmul.f32 %v5527, %v5527
        %v5552 = vmul.f32 %v5528, %v5528
        %v5553 = vmul.f32 %v5529, %v5529
        %v5554 = vmul.f32 %v5530, %v5530
        %v5555 = vmul.f32 %v5531, %v5531
        %v5556 = vmul.f32 %v5532, %v5532
        %v5557 = vmul.f32 %v5533, %v5533
        %v5558 = vadd.f32 %v5534, %v5535
        %v5559 = vadd.f32 %v5558, %v5536
        %5560 = vadd.xlane.f32.xlu0 %v5559
        %v5561 = vpop.xlane.xlu0 %5560
        %v5562 = vadd.f32 %v5537, %v5538
        %v5563 = vadd.f32 %v5562, %v5539
        %5564 = vadd.xlane.f32.xlu0 %v5563
        %v5565 = vpop.xlane.xlu0 %5564
        %v5566 = vadd.f32 %v5540, %v5541
        %v5567 = vadd.f32 %v5566, %v5542
        %5568 = vadd.xlane.f32.xlu0 %v5567
        %v5569 = vpop.xlane.xlu0 %5568
        %v5570 = vadd.f32 %v5543, %v5544
        %v5571 = vadd.f32 %v5570, %v5545
        %5572 = vadd.xlane.f32.xlu0 %v5571
        %v5573 = vpop.xlane.xlu0 %5572
        %v5574 = vadd.f32 %v5546, %v5547
        %v5575 = vadd.f32 %v5574, %v5548
        %5576 = vadd.xlane.f32.xlu0 %v5575
        %v5577 = vpop.xlane.xlu0 %5576
        %v5578 = vadd.f32 %v5549, %v5550
        %v5579 = vadd.f32 %v5578, %v5551
        %5580 = vadd.xlane.f32.xlu0 %v5579
        %v5581 = vpop.xlane.xlu0 %5580
        %v5582 = vadd.f32 %v5552, %v5553
        %v5583 = vadd.f32 %v5582, %v5554
        %5584 = vadd.xlane.f32.xlu0 %v5583
        %v5585 = vpop.xlane.xlu0 %5584
        %v5586 = vadd.f32 %v5555, %v5556
        %v5587 = vadd.f32 %v5586, %v5557
        %5588 = vadd.xlane.f32.xlu0 %v5587
        %v5589 = vpop.xlane.xlu0 %5588
        %v5590 = vmul.f32 %v5561, %v471
        %v5591 = vmul.f32 %v5565, %v471
        %v5592 = vmul.f32 %v5569, %v471
        %v5593 = vmul.f32 %v5573, %v471
        %v5594 = vmul.f32 %v5577, %v471
        %v5595 = vmul.f32 %v5581, %v471
        %v5596 = vmul.f32 %v5585, %v471
        %v5597 = vmul.f32 %v5589, %v471
        %v5598 = vadd.f32 %v5590, 1e-05
        %v5599 = vadd.f32 %v5591, 1e-05
        %v5600 = vadd.f32 %v5592, 1e-05
        %v5601 = vadd.f32 %v5593, 1e-05
        %v5602 = vadd.f32 %v5594, 1e-05
        %v5603 = vadd.f32 %v5595, 1e-05
        %v5604 = vadd.f32 %v5596, 1e-05
        %v5605 = vadd.f32 %v5597, 1e-05
        %v5606 = vrsqrt.pop %v5598
        %v5607 = vrsqrt.pop %v5599
        %v5608 = vrsqrt.pop %v5600
        %v5609 = vrsqrt.pop %v5601
        %v5610 = vrsqrt.pop %v5602
        %v5611 = vrsqrt.pop %v5603
        %v5612 = vrsqrt.pop %v5604
        %v5613 = vrsqrt.pop %v5605
        %v5614 = vmul.f32 %v5510, %v5606
        %v5615 = vmul.f32 %v5511, %v5606
        %v5616 = vmul.f32 %v5512, %v5606
        %v5617 = vmul.f32 %v5513, %v5607
        %v5618 = vmul.f32 %v5514, %v5607
        %v5619 = vmul.f32 %v5515, %v5607
        %v5620 = vmul.f32 %v5516, %v5608
        %v5621 = vmul.f32 %v5517, %v5608
        %v5622 = vmul.f32 %v5518, %v5608
        %v5623 = vmul.f32 %v5519, %v5609
        %v5624 = vmul.f32 %v5520, %v5609
        %v5625 = vmul.f32 %v5521, %v5609
        %v5626 = vmul.f32 %v5522, %v5610
        %v5627 = vmul.f32 %v5523, %v5610
        %v5628 = vmul.f32 %v5524, %v5610
        %v5629 = vmul.f32 %v5525, %v5611
        %v5630 = vmul.f32 %v5526, %v5611
        %v5631 = vmul.f32 %v5527, %v5611
        %v5632 = vmul.f32 %v5528, %v5612
        %v5633 = vmul.f32 %v5529, %v5612
        %v5634 = vmul.f32 %v5530, %v5612
        %v5635 = vmul.f32 %v5531, %v5613
        %v5636 = vmul.f32 %v5532, %v5613
        %v5637 = vmul.f32 %v5533, %v5613
        %v5639 = vlaneseq
        %v5640 = vshrl.u32 %v5639, 7
        %v5641 = vsub.s32 0, %v5640
        %v5642 = vrot.slane %v5468, %v5641
        %v5643 = vlaneseq
        %v5644 = vshrl.u32 %v5643, 7
        %v5645 = vsub.s32 1, %v5644
        %v5646 = vrot.slane %v5468, %v5645
        %v5647 = vlaneseq
        %v5648 = vshrl.u32 %v5647, 7
        %v5649 = vsub.s32 2, %v5648
        %v5650 = vrot.slane %v5468, %v5649
        %v5654 = vmul.f32 %v5614, %v5642
        %v5655 = vmul.f32 %v5615, %v5646
        %v5656 = vmul.f32 %v5616, %v5650
        %v5657 = vmul.f32 %v5617, %v5642
        %v5658 = vmul.f32 %v5618, %v5646
        %v5659 = vmul.f32 %v5619, %v5650
        %v5660 = vmul.f32 %v5620, %v5642
        %v5661 = vmul.f32 %v5621, %v5646
        %v5662 = vmul.f32 %v5622, %v5650
        %v5663 = vmul.f32 %v5623, %v5642
        %v5664 = vmul.f32 %v5624, %v5646
        %v5665 = vmul.f32 %v5625, %v5650
        %v5666 = vmul.f32 %v5626, %v5642
        %v5667 = vmul.f32 %v5627, %v5646
        %v5668 = vmul.f32 %v5628, %v5650
        %v5669 = vmul.f32 %v5629, %v5642
        %v5670 = vmul.f32 %v5630, %v5646
        %v5671 = vmul.f32 %v5631, %v5650
        %v5672 = vmul.f32 %v5632, %v5642
        %v5673 = vmul.f32 %v5633, %v5646
        %v5674 = vmul.f32 %v5634, %v5650
        %v5675 = vmul.f32 %v5635, %v5642
        %v5676 = vmul.f32 %v5636, %v5646
        %v5677 = vmul.f32 %v5637, %v5650
        %v5679 = vlaneseq
        %v5680 = vshrl.u32 %v5679, 7
        %v5681 = vsub.s32 0, %v5680
        %v5682 = vrot.slane %v5469, %v5681
        %v5683 = vlaneseq
        %v5684 = vshrl.u32 %v5683, 7
        %v5685 = vsub.s32 1, %v5684
        %v5686 = vrot.slane %v5469, %v5685
        %v5687 = vlaneseq
        %v5688 = vshrl.u32 %v5687, 7
        %v5689 = vsub.s32 2, %v5688
        %v5690 = vrot.slane %v5469, %v5689
        %v5694 = vadd.f32 %v5654, %v5682
        %v5695 = vadd.f32 %v5655, %v5686
        %v5696 = vadd.f32 %v5656, %v5690
        %v5697 = vadd.f32 %v5657, %v5682
        %v5698 = vadd.f32 %v5658, %v5686
        %v5699 = vadd.f32 %v5659, %v5690
        %v5700 = vadd.f32 %v5660, %v5682
        %v5701 = vadd.f32 %v5661, %v5686
        %v5702 = vadd.f32 %v5662, %v5690
        %v5703 = vadd.f32 %v5663, %v5682
        %v5704 = vadd.f32 %v5664, %v5686
        %v5705 = vadd.f32 %v5665, %v5690
        %v5706 = vadd.f32 %v5666, %v5682
        %v5707 = vadd.f32 %v5667, %v5686
        %v5708 = vadd.f32 %v5668, %v5690
        %v5709 = vadd.f32 %v5669, %v5682
        %v5710 = vadd.f32 %v5670, %v5686
        %v5711 = vadd.f32 %v5671, %v5690
        %v5712 = vadd.f32 %v5672, %v5682
        %v5713 = vadd.f32 %v5673, %v5686
        %v5714 = vadd.f32 %v5674, %v5690
        %v5715 = vadd.f32 %v5675, %v5682
        %v5716 = vadd.f32 %v5676, %v5686
        %v5717 = vadd.f32 %v5677, %v5690
        %v5718 = vpack.c.bf16 %v5697, %v5694
        %v5719 = vpack.c.bf16 %v5698, %v5695
        %v5720 = vpack.c.bf16 %v5699, %v5696
        %v5721 = vpack.c.bf16 %v5703, %v5700
        %v5722 = vpack.c.bf16 %v5704, %v5701
        %v5723 = vpack.c.bf16 %v5705, %v5702
        %v5724 = vpack.c.bf16 %v5709, %v5706
        %v5725 = vpack.c.bf16 %v5710, %v5707
        %v5726 = vpack.c.bf16 %v5711, %v5708
        %v5727 = vpack.c.bf16 %v5715, %v5712
        %v5728 = vpack.c.bf16 %v5716, %v5713
        %v5729 = vpack.c.bf16 %v5717, %v5714
        %v5730 = vld [vmem:[%s8] sm:$0xff]
        %v5731 = vld [vmem:[%s8 + $0x8] sm:$0xff]
        %v5732 = vld [vmem:[%s8 + $0x10] sm:$0xff]
        %v5733 = vld [vmem:[%s8 + $0x18] sm:$0xff]
        %v5734 = vld [vmem:[%s8 + $0x20] sm:$0xff]
        %v5735 = vld [vmem:[%s8 + $0x28] sm:$0xff]
        %v5736 = vld [vmem:[%s8 + $0x30] sm:$0xff]
        %v5737 = vld [vmem:[%s8 + $0x38] sm:$0xff]
        %v5738 = vld [vmem:[%s8 + $0x40] sm:$0xff]
        %v5739 = vld [vmem:[%s8 + $0x48] sm:$0xff]
        %v5740 = vld [vmem:[%s8 + $0x50] sm:$0xff]
        %v5741 = vld [vmem:[%s8 + $0x58] sm:$0xff]
        %v5742 = vld [vmem:[%s8 + $0x60] sm:$0xff]
        %v5743 = vld [vmem:[%s8 + $0x68] sm:$0xff]
        %v5744 = vld [vmem:[%s8 + $0x70] sm:$0xff]
        %v5745 = vld [vmem:[%s8 + $0x78] sm:$0xff]
        %v5746 = vld [vmem:[%s8 + $0x80] sm:$0xff]
        %v5747 = vld [vmem:[%s8 + $0x88] sm:$0xff]
        %v5748 = vld [vmem:[%s8 + $0x90] sm:$0xff]
        %v5749 = vld [vmem:[%s8 + $0x98] sm:$0xff]
        %v5750 = vld [vmem:[%s8 + $0xa0] sm:$0xff]
        %v5751 = vld [vmem:[%s8 + $0xa8] sm:$0xff]
        %v5752 = vld [vmem:[%s8 + $0xb0] sm:$0xff]
        %v5753 = vld [vmem:[%s8 + $0xb8] sm:$0xff]
        %v5754 = vld [vmem:[%s8 + $0xc0] sm:$0xff]
        %v5755 = vld [vmem:[%s8 + $0xc8] sm:$0xff]
        %v5756 = vld [vmem:[%s8 + $0xd0] sm:$0xff]
        %v5757 = vld [vmem:[%s8 + $0xd8] sm:$0xff]
        %v5758 = vld [vmem:[%s8 + $0xe0] sm:$0xff]
        %v5759 = vld [vmem:[%s8 + $0xe8] sm:$0xff]
        %v5760 = vld [vmem:[%s8 + $0xf0] sm:$0xff]
        %v5761 = vld [vmem:[%s8 + $0xf8] sm:$0xff]
        %v5762 = vld [vmem:[%s8 + $0x100] sm:$0xff]
        %v5763 = vld [vmem:[%s8 + $0x108] sm:$0xff]
        %v5764 = vld [vmem:[%s8 + $0x110] sm:$0xff]
        %v5765 = vld [vmem:[%s8 + $0x118] sm:$0xff]
        %v5766 = vld [vmem:[%s8 + $0x120] sm:$0xff]
        %v5767 = vld [vmem:[%s8 + $0x128] sm:$0xff]
        %v5768 = vld [vmem:[%s8 + $0x130] sm:$0xff]
        %v5769 = vld [vmem:[%s8 + $0x138] sm:$0xff]
        %v5770 = vld [vmem:[%s8 + $0x140] sm:$0xff]
        %v5771 = vld [vmem:[%s8 + $0x148] sm:$0xff]
        %v5772 = vld [vmem:[%s8 + $0x150] sm:$0xff]
        %v5773 = vld [vmem:[%s8 + $0x158] sm:$0xff]
        %v5774 = vld [vmem:[%s8 + $0x160] sm:$0xff]
        %v5775 = vld [vmem:[%s8 + $0x168] sm:$0xff]
        %v5776 = vld [vmem:[%s8 + $0x170] sm:$0xff]
        %v5777 = vld [vmem:[%s8 + $0x178] sm:$0xff]
        %v5778 = vld [vmem:[%s8 + $0x180] sm:$0xff]
        %v5779 = vld [vmem:[%s8 + $0x188] sm:$0xff]
        %v5780 = vld [vmem:[%s8 + $0x190] sm:$0xff]
        %v5781 = vld [vmem:[%s8 + $0x198] sm:$0xff]
        %v5782 = vld [vmem:[%s8 + $0x1a0] sm:$0xff]
        %v5783 = vld [vmem:[%s8 + $0x1a8] sm:$0xff]
        %v5784 = vld [vmem:[%s8 + $0x1b0] sm:$0xff]
        %v5785 = vld [vmem:[%s8 + $0x1b8] sm:$0xff]
        %v5786 = vld [vmem:[%s8 + $0x1c0] sm:$0xff]
        %v5787 = vld [vmem:[%s8 + $0x1c8] sm:$0xff]
        %v5788 = vld [vmem:[%s8 + $0x1d0] sm:$0xff]
        %v5789 = vld [vmem:[%s8 + $0x1d8] sm:$0xff]
        %v5790 = vld [vmem:[%s8 + $0x1e0] sm:$0xff]
        %v5791 = vld [vmem:[%s8 + $0x1e8] sm:$0xff]
        %v5792 = vld [vmem:[%s8 + $0x1f0] sm:$0xff]
        %v5793 = vld [vmem:[%s8 + $0x1f8] sm:$0xff]
        %v5794 = vld [vmem:[%s8 + $0x200] sm:$0xff]
        %v5795 = vld [vmem:[%s8 + $0x208] sm:$0xff]
        %v5796 = vld [vmem:[%s8 + $0x210] sm:$0xff]
        %v5797 = vld [vmem:[%s8 + $0x218] sm:$0xff]
        %v5798 = vld [vmem:[%s8 + $0x220] sm:$0xff]
        %v5799 = vld [vmem:[%s8 + $0x228] sm:$0xff]
        %v5800 = vld [vmem:[%s8 + $0x230] sm:$0xff]
        %v5801 = vld [vmem:[%s8 + $0x238] sm:$0xff]
        %v5802 = vld [vmem:[%s8 + $0x240] sm:$0xff]
        %v5803 = vld [vmem:[%s8 + $0x248] sm:$0xff]
        %v5804 = vld [vmem:[%s8 + $0x250] sm:$0xff]
        %v5805 = vld [vmem:[%s8 + $0x258] sm:$0xff]
        %v5806 = vld [vmem:[%s8 + $0x260] sm:$0xff]
        %v5807 = vld [vmem:[%s8 + $0x268] sm:$0xff]
        %v5808 = vld [vmem:[%s8 + $0x270] sm:$0xff]
        %v5809 = vld [vmem:[%s8 + $0x278] sm:$0xff]
        %v5810 = vld [vmem:[%s8 + $0x280] sm:$0xff]
        %v5811 = vld [vmem:[%s8 + $0x288] sm:$0xff]
        %v5812 = vld [vmem:[%s8 + $0x290] sm:$0xff]
        %v5813 = vld [vmem:[%s8 + $0x298] sm:$0xff]
        %v5814 = vld [vmem:[%s8 + $0x2a0] sm:$0xff]
        %v5815 = vld [vmem:[%s8 + $0x2a8] sm:$0xff]
        %v5816 = vld [vmem:[%s8 + $0x2b0] sm:$0xff]
        %v5817 = vld [vmem:[%s8 + $0x2b8] sm:$0xff]
        %v5818 = vld [vmem:[%s8 + $0x2c0] sm:$0xff]
        %v5819 = vld [vmem:[%s8 + $0x2c8] sm:$0xff]
        %v5820 = vld [vmem:[%s8 + $0x2d0] sm:$0xff]
        %v5821 = vld [vmem:[%s8 + $0x2d8] sm:$0xff]
        %v5822 = vld [vmem:[%s8 + $0x2e0] sm:$0xff]
        %v5823 = vld [vmem:[%s8 + $0x2e8] sm:$0xff]
        %v5824 = vld [vmem:[%s8 + $0x2f0] sm:$0xff]
        %v5825 = vld [vmem:[%s8 + $0x2f8] sm:$0xff]
        %v5826 = vld [vmem:[%s8 + $0x300] sm:$0xff]
        %v5827 = vld [vmem:[%s8 + $0x308] sm:$0xff]
        %v5828 = vld [vmem:[%s8 + $0x310] sm:$0xff]
        %v5829 = vld [vmem:[%s8 + $0x318] sm:$0xff]
        %v5830 = vld [vmem:[%s8 + $0x320] sm:$0xff]
        %v5831 = vld [vmem:[%s8 + $0x328] sm:$0xff]
        %v5832 = vld [vmem:[%s8 + $0x330] sm:$0xff]
        %v5833 = vld [vmem:[%s8 + $0x338] sm:$0xff]
        %v5834 = vld [vmem:[%s8 + $0x340] sm:$0xff]
        %v5835 = vld [vmem:[%s8 + $0x348] sm:$0xff]
        %v5836 = vld [vmem:[%s8 + $0x350] sm:$0xff]
        %v5837 = vld [vmem:[%s8 + $0x358] sm:$0xff]
        %v5838 = vld [vmem:[%s8 + $0x360] sm:$0xff]
        %v5839 = vld [vmem:[%s8 + $0x368] sm:$0xff]
        %v5840 = vld [vmem:[%s8 + $0x370] sm:$0xff]
        %v5841 = vld [vmem:[%s8 + $0x378] sm:$0xff]
        %v5842 = vld [vmem:[%s8 + $0x380] sm:$0xff]
        %v5843 = vld [vmem:[%s8 + $0x388] sm:$0xff]
        %v5844 = vld [vmem:[%s8 + $0x390] sm:$0xff]
        %v5845 = vld [vmem:[%s8 + $0x398] sm:$0xff]
        %v5846 = vld [vmem:[%s8 + $0x3a0] sm:$0xff]
        %v5847 = vld [vmem:[%s8 + $0x3a8] sm:$0xff]
        %v5848 = vld [vmem:[%s8 + $0x3b0] sm:$0xff]
        %v5849 = vld [vmem:[%s8 + $0x3b8] sm:$0xff]
        %v5850 = vld [vmem:[%s8 + $0x3c0] sm:$0xff]
        %v5851 = vld [vmem:[%s8 + $0x3c8] sm:$0xff]
        %v5852 = vld [vmem:[%s8 + $0x3d0] sm:$0xff]
        %v5853 = vld [vmem:[%s8 + $0x3d8] sm:$0xff]
        %v5854 = vld [vmem:[%s8 + $0x3e0] sm:$0xff]
        %v5855 = vld [vmem:[%s8 + $0x3e8] sm:$0xff]
        %v5856 = vld [vmem:[%s8 + $0x3f0] sm:$0xff]
        %v5857 = vld [vmem:[%s8 + $0x3f8] sm:$0xff]
        %v5858 = vld [vmem:[%s8 + $0x400] sm:$0xff]
        %v5859 = vld [vmem:[%s8 + $0x408] sm:$0xff]
        %v5860 = vld [vmem:[%s8 + $0x410] sm:$0xff]
        %v5861 = vld [vmem:[%s8 + $0x418] sm:$0xff]
        %v5862 = vld [vmem:[%s8 + $0x420] sm:$0xff]
        %v5863 = vld [vmem:[%s8 + $0x428] sm:$0xff]
        %v5864 = vld [vmem:[%s8 + $0x430] sm:$0xff]
        %v5865 = vld [vmem:[%s8 + $0x438] sm:$0xff]
        %v5866 = vld [vmem:[%s8 + $0x440] sm:$0xff]
        %v5867 = vld [vmem:[%s8 + $0x448] sm:$0xff]
        %v5868 = vld [vmem:[%s8 + $0x450] sm:$0xff]
        %v5869 = vld [vmem:[%s8 + $0x458] sm:$0xff]
        %v5870 = vld [vmem:[%s8 + $0x460] sm:$0xff]
        %v5871 = vld [vmem:[%s8 + $0x468] sm:$0xff]
        %v5872 = vld [vmem:[%s8 + $0x470] sm:$0xff]
        %v5873 = vld [vmem:[%s8 + $0x478] sm:$0xff]
        %v5874 = vld [vmem:[%s8 + $0x480] sm:$0xff]
        %v5875 = vld [vmem:[%s8 + $0x488] sm:$0xff]
        %v5876 = vld [vmem:[%s8 + $0x490] sm:$0xff]
        %v5877 = vld [vmem:[%s8 + $0x498] sm:$0xff]
        %v5878 = vld [vmem:[%s8 + $0x4a0] sm:$0xff]
        %v5879 = vld [vmem:[%s8 + $0x4a8] sm:$0xff]
        %v5880 = vld [vmem:[%s8 + $0x4b0] sm:$0xff]
        %v5881 = vld [vmem:[%s8 + $0x4b8] sm:$0xff]
        %v5882 = vld [vmem:[%s8 + $0x4c0] sm:$0xff]
        %v5883 = vld [vmem:[%s8 + $0x4c8] sm:$0xff]
        %v5884 = vld [vmem:[%s8 + $0x4d0] sm:$0xff]
        %v5885 = vld [vmem:[%s8 + $0x4d8] sm:$0xff]
        %v5886 = vld [vmem:[%s8 + $0x4e0] sm:$0xff]
        %v5887 = vld [vmem:[%s8 + $0x4e8] sm:$0xff]
        %v5888 = vld [vmem:[%s8 + $0x4f0] sm:$0xff]
        %v5889 = vld [vmem:[%s8 + $0x4f8] sm:$0xff]
        %v5890 = vld [vmem:[%s8 + $0x500] sm:$0xff]
        %v5891 = vld [vmem:[%s8 + $0x508] sm:$0xff]
        %v5892 = vld [vmem:[%s8 + $0x510] sm:$0xff]
        %v5893 = vld [vmem:[%s8 + $0x518] sm:$0xff]
        %v5894 = vld [vmem:[%s8 + $0x520] sm:$0xff]
        %v5895 = vld [vmem:[%s8 + $0x528] sm:$0xff]
        %v5896 = vld [vmem:[%s8 + $0x530] sm:$0xff]
        %v5897 = vld [vmem:[%s8 + $0x538] sm:$0xff]
        %v5898 = vld [vmem:[%s8 + $0x540] sm:$0xff]
        %v5899 = vld [vmem:[%s8 + $0x548] sm:$0xff]
        %v5900 = vld [vmem:[%s8 + $0x550] sm:$0xff]
        %v5901 = vld [vmem:[%s8 + $0x558] sm:$0xff]
        %v5902 = vld [vmem:[%s8 + $0x560] sm:$0xff]
        %v5903 = vld [vmem:[%s8 + $0x568] sm:$0xff]
        %v5904 = vld [vmem:[%s8 + $0x570] sm:$0xff]
        %v5905 = vld [vmem:[%s8 + $0x578] sm:$0xff]
        %v5906 = vld [vmem:[%s8 + $0x580] sm:$0xff]
        %v5907 = vld [vmem:[%s8 + $0x588] sm:$0xff]
        %v5908 = vld [vmem:[%s8 + $0x590] sm:$0xff]
        %v5909 = vld [vmem:[%s8 + $0x598] sm:$0xff]
        %v5910 = vld [vmem:[%s8 + $0x5a0] sm:$0xff]
        %v5911 = vld [vmem:[%s8 + $0x5a8] sm:$0xff]
        %v5912 = vld [vmem:[%s8 + $0x5b0] sm:$0xff]
        %v5913 = vld [vmem:[%s8 + $0x5b8] sm:$0xff]
        %v5914 = vld [vmem:[%s8 + $0x5c0] sm:$0xff]
        %v5915 = vld [vmem:[%s8 + $0x5c8] sm:$0xff]
        %v5916 = vld [vmem:[%s8 + $0x5d0] sm:$0xff]
        %v5917 = vld [vmem:[%s8 + $0x5d8] sm:$0xff]
        %v5918 = vld [vmem:[%s8 + $0x5e0] sm:$0xff]
        %v5919 = vld [vmem:[%s8 + $0x5e8] sm:$0xff]
        %v5920 = vld [vmem:[%s8 + $0x5f0] sm:$0xff]
        %v5921 = vld [vmem:[%s8 + $0x5f8] sm:$0xff]
        %v5922 = vld [vmem:[%s8 + $0x600] sm:$0xff]
        %v5923 = vld [vmem:[%s8 + $0x608] sm:$0xff]
        %v5924 = vld [vmem:[%s8 + $0x610] sm:$0xff]
        %v5925 = vld [vmem:[%s8 + $0x618] sm:$0xff]
        %v5926 = vld [vmem:[%s8 + $0x620] sm:$0xff]
        %v5927 = vld [vmem:[%s8 + $0x628] sm:$0xff]
        %v5928 = vld [vmem:[%s8 + $0x630] sm:$0xff]
        %v5929 = vld [vmem:[%s8 + $0x638] sm:$0xff]
        %v5930 = vld [vmem:[%s8 + $0x640] sm:$0xff]
        %v5931 = vld [vmem:[%s8 + $0x648] sm:$0xff]
        %v5932 = vld [vmem:[%s8 + $0x650] sm:$0xff]
        %v5933 = vld [vmem:[%s8 + $0x658] sm:$0xff]
        %v5934 = vld [vmem:[%s8 + $0x660] sm:$0xff]
        %v5935 = vld [vmem:[%s8 + $0x668] sm:$0xff]
        %v5936 = vld [vmem:[%s8 + $0x670] sm:$0xff]
        %v5937 = vld [vmem:[%s8 + $0x678] sm:$0xff]
        %v5938 = vld [vmem:[%s8 + $0x680] sm:$0xff]
        %v5939 = vld [vmem:[%s8 + $0x688] sm:$0xff]
        %v5940 = vld [vmem:[%s8 + $0x690] sm:$0xff]
        %v5941 = vld [vmem:[%s8 + $0x698] sm:$0xff]
        %v5942 = vld [vmem:[%s8 + $0x6a0] sm:$0xff]
        %v5943 = vld [vmem:[%s8 + $0x6a8] sm:$0xff]
        %v5944 = vld [vmem:[%s8 + $0x6b0] sm:$0xff]
        %v5945 = vld [vmem:[%s8 + $0x6b8] sm:$0xff]
        %v5946 = vld [vmem:[%s8 + $0x6c0] sm:$0xff]
        %v5947 = vld [vmem:[%s8 + $0x6c8] sm:$0xff]
        %v5948 = vld [vmem:[%s8 + $0x6d0] sm:$0xff]
        %v5949 = vld [vmem:[%s8 + $0x6d8] sm:$0xff]
        %v5950 = vld [vmem:[%s8 + $0x6e0] sm:$0xff]
        %v5951 = vld [vmem:[%s8 + $0x6e8] sm:$0xff]
        %v5952 = vld [vmem:[%s8 + $0x6f0] sm:$0xff]
        %v5953 = vld [vmem:[%s8 + $0x6f8] sm:$0xff]
        %v5954 = vld [vmem:[%s8 + $0x700] sm:$0xff]
        %v5955 = vld [vmem:[%s8 + $0x708] sm:$0xff]
        %v5956 = vld [vmem:[%s8 + $0x710] sm:$0xff]
        %v5957 = vld [vmem:[%s8 + $0x718] sm:$0xff]
        %v5958 = vld [vmem:[%s8 + $0x720] sm:$0xff]
        %v5959 = vld [vmem:[%s8 + $0x728] sm:$0xff]
        %v5960 = vld [vmem:[%s8 + $0x730] sm:$0xff]
        %v5961 = vld [vmem:[%s8 + $0x738] sm:$0xff]
        %v5962 = vld [vmem:[%s8 + $0x740] sm:$0xff]
        %v5963 = vld [vmem:[%s8 + $0x748] sm:$0xff]
        %v5964 = vld [vmem:[%s8 + $0x750] sm:$0xff]
        %v5965 = vld [vmem:[%s8 + $0x758] sm:$0xff]
        %v5966 = vld [vmem:[%s8 + $0x760] sm:$0xff]
        %v5967 = vld [vmem:[%s8 + $0x768] sm:$0xff]
        %v5968 = vld [vmem:[%s8 + $0x770] sm:$0xff]
        %v5969 = vld [vmem:[%s8 + $0x778] sm:$0xff]
        %v5970 = vld [vmem:[%s8 + $0x780] sm:$0xff]
        %v5971 = vld [vmem:[%s8 + $0x788] sm:$0xff]
        %v5972 = vld [vmem:[%s8 + $0x790] sm:$0xff]
        %v5973 = vld [vmem:[%s8 + $0x798] sm:$0xff]
        %v5974 = vld [vmem:[%s8 + $0x7a0] sm:$0xff]
        %v5975 = vld [vmem:[%s8 + $0x7a8] sm:$0xff]
        %v5976 = vld [vmem:[%s8 + $0x7b0] sm:$0xff]
        %v5977 = vld [vmem:[%s8 + $0x7b8] sm:$0xff]
        %v5978 = vld [vmem:[%s8 + $0x7c0] sm:$0xff]
        %v5979 = vld [vmem:[%s8 + $0x7c8] sm:$0xff]
        %v5980 = vld [vmem:[%s8 + $0x7d0] sm:$0xff]
        %v5981 = vld [vmem:[%s8 + $0x7d8] sm:$0xff]
        %v5982 = vld [vmem:[%s8 + $0x7e0] sm:$0xff]
        %v5983 = vld [vmem:[%s8 + $0x7e8] sm:$0xff]
        %v5984 = vld [vmem:[%s8 + $0x7f0] sm:$0xff]
        %v5985 = vld [vmem:[%s8 + $0x7f8] sm:$0xff]
        %v5986 = vld [vmem:[%s8 + $0x800] sm:$0xff]
        %v5987 = vld [vmem:[%s8 + $0x808] sm:$0xff]
        %v5988 = vld [vmem:[%s8 + $0x810] sm:$0xff]
        %v5989 = vld [vmem:[%s8 + $0x818] sm:$0xff]
        %v5990 = vld [vmem:[%s8 + $0x820] sm:$0xff]
        %v5991 = vld [vmem:[%s8 + $0x828] sm:$0xff]
        %v5992 = vld [vmem:[%s8 + $0x830] sm:$0xff]
        %v5993 = vld [vmem:[%s8 + $0x838] sm:$0xff]
        %v5994 = vld [vmem:[%s8 + $0x840] sm:$0xff]
        %v5995 = vld [vmem:[%s8 + $0x848] sm:$0xff]
        %v5996 = vld [vmem:[%s8 + $0x850] sm:$0xff]
        %v5997 = vld [vmem:[%s8 + $0x858] sm:$0xff]
        %v5998 = vld [vmem:[%s8 + $0x860] sm:$0xff]
        %v5999 = vld [vmem:[%s8 + $0x868] sm:$0xff]
        %v6000 = vld [vmem:[%s8 + $0x870] sm:$0xff]
        %v6001 = vld [vmem:[%s8 + $0x878] sm:$0xff]
        %v6002 = vld [vmem:[%s8 + $0x880] sm:$0xff]
        %v6003 = vld [vmem:[%s8 + $0x888] sm:$0xff]
        %v6004 = vld [vmem:[%s8 + $0x890] sm:$0xff]
        %v6005 = vld [vmem:[%s8 + $0x898] sm:$0xff]
        %v6006 = vld [vmem:[%s8 + $0x8a0] sm:$0xff]
        %v6007 = vld [vmem:[%s8 + $0x8a8] sm:$0xff]
        %v6008 = vld [vmem:[%s8 + $0x8b0] sm:$0xff]
        %v6009 = vld [vmem:[%s8 + $0x8b8] sm:$0xff]
        %v6010 = vld [vmem:[%s8 + $0x8c0] sm:$0xff]
        %v6011 = vld [vmem:[%s8 + $0x8c8] sm:$0xff]
        %v6012 = vld [vmem:[%s8 + $0x8d0] sm:$0xff]
        %v6013 = vld [vmem:[%s8 + $0x8d8] sm:$0xff]
        %v6014 = vld [vmem:[%s8 + $0x8e0] sm:$0xff]
        %v6015 = vld [vmem:[%s8 + $0x8e8] sm:$0xff]
        %v6016 = vld [vmem:[%s8 + $0x8f0] sm:$0xff]
        %v6017 = vld [vmem:[%s8 + $0x8f8] sm:$0xff]
        %v6018 = vld [vmem:[%s9] sm:$0xff]
        %v6019 = vld [vmem:[%s9 + $0x8] sm:$0xf]
        %v6022 = vlaneseq
        %v6023 = vshrl.u32 %v6022, 7
        %v6024 = vsub.s32 0, %v6023
        %v6025 = vrot.slane %v6018, %v6024
        %v6026 = vlaneseq
        %v6027 = vshrl.u32 %v6026, 7
        %v6028 = vsub.s32 1, %v6027
        %v6029 = vrot.slane %v6018, %v6028
        %v6030 = vlaneseq
        %v6031 = vshrl.u32 %v6030, 7
        %v6032 = vsub.s32 2, %v6031
        %v6033 = vrot.slane %v6018, %v6032
        %v6034 = vlaneseq
        %v6035 = vshrl.u32 %v6034, 7
        %v6036 = vsub.s32 3, %v6035
        %v6037 = vrot.slane %v6018, %v6036
        %v6038 = vlaneseq
        %v6039 = vshrl.u32 %v6038, 7
        %v6040 = vsub.s32 4, %v6039
        %v6041 = vrot.slane %v6018, %v6040
        %v6042 = vlaneseq
        %v6043 = vshrl.u32 %v6042, 7
        %v6044 = vsub.s32 5, %v6043
        %v6045 = vrot.slane %v6018, %v6044
        %v6046 = vlaneseq
        %v6047 = vshrl.u32 %v6046, 7
        %v6048 = vsub.s32 6, %v6047
        %v6049 = vrot.slane %v6018, %v6048
        %v6050 = vlaneseq
        %v6051 = vshrl.u32 %v6050, 7
        %v6052 = vsub.s32 7, %v6051
        %v6053 = vrot.slane %v6018, %v6052
        %v6054 = vlaneseq
        %v6055 = vshrl.u32 %v6054, 7
        %v6056 = vsub.s32 0, %v6055
        %v6057 = vrot.slane %v6019, %v6056
        %v6058 = vlaneseq
        %v6059 = vshrl.u32 %v6058, 7
        %v6060 = vsub.s32 1, %v6059
        %v6061 = vrot.slane %v6019, %v6060
        %v6062 = vlaneseq
        %v6063 = vshrl.u32 %v6062, 7
        %v6064 = vsub.s32 2, %v6063
        %v6065 = vrot.slane %v6019, %v6064
        %v6066 = vlaneseq
        %v6067 = vshrl.u32 %v6066, 7
        %v6068 = vsub.s32 3, %v6067
        %v6069 = vrot.slane %v6019, %v6068
        %v6370 = vunpack.c.l.b16 %v5730
        %v6371 = vunpack.c.h.b16 %v5730
        %v6372 = vunpack.c.l.b16 %v5731
        %v6373 = vunpack.c.h.b16 %v5731
        %v6374 = vunpack.c.l.b16 %v5732
        %v6375 = vunpack.c.h.b16 %v5732
        %v6376 = vunpack.c.l.b16 %v5733
        %v6377 = vunpack.c.h.b16 %v5733
        %v6378 = vunpack.c.l.b16 %v5734
        %v6379 = vunpack.c.h.b16 %v5734
        %v6380 = vunpack.c.l.b16 %v5735
        %v6381 = vunpack.c.h.b16 %v5735
        %v6382 = vunpack.c.l.b16 %v5736
        %v6383 = vunpack.c.h.b16 %v5736
        %v6384 = vunpack.c.l.b16 %v5737
        %v6385 = vunpack.c.h.b16 %v5737
        %v6386 = vunpack.c.l.b16 %v5738
        %v6387 = vunpack.c.h.b16 %v5738
        %v6388 = vunpack.c.l.b16 %v5739
        %v6389 = vunpack.c.h.b16 %v5739
        %v6390 = vunpack.c.l.b16 %v5740
        %v6391 = vunpack.c.h.b16 %v5740
        %v6392 = vunpack.c.l.b16 %v5741
        %v6393 = vunpack.c.h.b16 %v5741
        %v6394 = vunpack.c.l.b16 %v5742
        %v6395 = vunpack.c.h.b16 %v5742
        %v6396 = vunpack.c.l.b16 %v5743
        %v6397 = vunpack.c.h.b16 %v5743
        %v6398 = vunpack.c.l.b16 %v5744
        %v6399 = vunpack.c.h.b16 %v5744
        %v6400 = vunpack.c.l.b16 %v5745
        %v6401 = vunpack.c.h.b16 %v5745
        %v6402 = vunpack.c.l.b16 %v5746
        %v6403 = vunpack.c.h.b16 %v5746
        %v6404 = vunpack.c.l.b16 %v5747
        %v6405 = vunpack.c.h.b16 %v5747
        %v6406 = vunpack.c.l.b16 %v5748
        %v6407 = vunpack.c.h.b16 %v5748
        %v6408 = vunpack.c.l.b16 %v5749
        %v6409 = vunpack.c.h.b16 %v5749
        %v6410 = vunpack.c.l.b16 %v5750
        %v6411 = vunpack.c.h.b16 %v5750
        %v6412 = vunpack.c.l.b16 %v5751
        %v6413 = vunpack.c.h.b16 %v5751
        %v6414 = vunpack.c.l.b16 %v5752
        %v6415 = vunpack.c.h.b16 %v5752
        %v6416 = vunpack.c.l.b16 %v5753
        %v6417 = vunpack.c.h.b16 %v5753
        %v6418 = vunpack.c.l.b16 %v5754
        %v6419 = vunpack.c.h.b16 %v5754
        %v6420 = vunpack.c.l.b16 %v5755
        %v6421 = vunpack.c.h.b16 %v5755
        %v6422 = vunpack.c.l.b16 %v5756
        %v6423 = vunpack.c.h.b16 %v5756
        %v6424 = vunpack.c.l.b16 %v5757
        %v6425 = vunpack.c.h.b16 %v5757
        %v6426 = vunpack.c.l.b16 %v5758
        %v6427 = vunpack.c.h.b16 %v5758
        %v6428 = vunpack.c.l.b16 %v5759
        %v6429 = vunpack.c.h.b16 %v5759
        %v6430 = vunpack.c.l.b16 %v5760
        %v6431 = vunpack.c.h.b16 %v5760
        %v6432 = vunpack.c.l.b16 %v5761
        %v6433 = vunpack.c.h.b16 %v5761
        %v6434 = vunpack.c.l.b16 %v5762
        %v6435 = vunpack.c.h.b16 %v5762
        %v6436 = vunpack.c.l.b16 %v5763
        %v6437 = vunpack.c.h.b16 %v5763
        %v6438 = vunpack.c.l.b16 %v5764
        %v6439 = vunpack.c.h.b16 %v5764
        %v6440 = vunpack.c.l.b16 %v5765
        %v6441 = vunpack.c.h.b16 %v5765
        %v6442 = vunpack.c.l.b16 %v5766
        %v6443 = vunpack.c.h.b16 %v5766
        %v6444 = vunpack.c.l.b16 %v5767
        %v6445 = vunpack.c.h.b16 %v5767
        %v6446 = vunpack.c.l.b16 %v5768
        %v6447 = vunpack.c.h.b16 %v5768
        %v6448 = vunpack.c.l.b16 %v5769
        %v6449 = vunpack.c.h.b16 %v5769
        %v6450 = vunpack.c.l.b16 %v5770
        %v6451 = vunpack.c.h.b16 %v5770
        %v6452 = vunpack.c.l.b16 %v5771
        %v6453 = vunpack.c.h.b16 %v5771
        %v6454 = vunpack.c.l.b16 %v5772
        %v6455 = vunpack.c.h.b16 %v5772
        %v6456 = vunpack.c.l.b16 %v5773
        %v6457 = vunpack.c.h.b16 %v5773
        %v6458 = vunpack.c.l.b16 %v5774
        %v6459 = vunpack.c.h.b16 %v5774
        %v6460 = vunpack.c.l.b16 %v5775
        %v6461 = vunpack.c.h.b16 %v5775
        %v6462 = vunpack.c.l.b16 %v5776
        %v6463 = vunpack.c.h.b16 %v5776
        %v6464 = vunpack.c.l.b16 %v5777
        %v6465 = vunpack.c.h.b16 %v5777
        %v6466 = vunpack.c.l.b16 %v5778
        %v6467 = vunpack.c.h.b16 %v5778
        %v6468 = vunpack.c.l.b16 %v5779
        %v6469 = vunpack.c.h.b16 %v5779
        %v6470 = vunpack.c.l.b16 %v5780
        %v6471 = vunpack.c.h.b16 %v5780
        %v6472 = vunpack.c.l.b16 %v5781
        %v6473 = vunpack.c.h.b16 %v5781
        %v6474 = vunpack.c.l.b16 %v5782
        %v6475 = vunpack.c.h.b16 %v5782
        %v6476 = vunpack.c.l.b16 %v5783
        %v6477 = vunpack.c.h.b16 %v5783
        %v6478 = vunpack.c.l.b16 %v5784
        %v6479 = vunpack.c.h.b16 %v5784
        %v6480 = vunpack.c.l.b16 %v5785
        %v6481 = vunpack.c.h.b16 %v5785
        %v6482 = vunpack.c.l.b16 %v5786
        %v6483 = vunpack.c.h.b16 %v5786
        %v6484 = vunpack.c.l.b16 %v5787
        %v6485 = vunpack.c.h.b16 %v5787
        %v6486 = vunpack.c.l.b16 %v5788
        %v6487 = vunpack.c.h.b16 %v5788
        %v6488 = vunpack.c.l.b16 %v5789
        %v6489 = vunpack.c.h.b16 %v5789
        %v6490 = vunpack.c.l.b16 %v5790
        %v6491 = vunpack.c.h.b16 %v5790
        %v6492 = vunpack.c.l.b16 %v5791
        %v6493 = vunpack.c.h.b16 %v5791
        %v6494 = vunpack.c.l.b16 %v5792
        %v6495 = vunpack.c.h.b16 %v5792
        %v6496 = vunpack.c.l.b16 %v5793
        %v6497 = vunpack.c.h.b16 %v5793
        %v6498 = vunpack.c.l.b16 %v5794
        %v6499 = vunpack.c.h.b16 %v5794
        %v6500 = vunpack.c.l.b16 %v5795
        %v6501 = vunpack.c.h.b16 %v5795
        %v6502 = vunpack.c.l.b16 %v5796
        %v6503 = vunpack.c.h.b16 %v5796
        %v6504 = vunpack.c.l.b16 %v5797
        %v6505 = vunpack.c.h.b16 %v5797
        %v6506 = vunpack.c.l.b16 %v5798
        %v6507 = vunpack.c.h.b16 %v5798
        %v6508 = vunpack.c.l.b16 %v5799
        %v6509 = vunpack.c.h.b16 %v5799
        %v6510 = vunpack.c.l.b16 %v5800
        %v6511 = vunpack.c.h.b16 %v5800
        %v6512 = vunpack.c.l.b16 %v5801
        %v6513 = vunpack.c.h.b16 %v5801
        %v6514 = vunpack.c.l.b16 %v5802
        %v6515 = vunpack.c.h.b16 %v5802
        %v6516 = vunpack.c.l.b16 %v5803
        %v6517 = vunpack.c.h.b16 %v5803
        %v6518 = vunpack.c.l.b16 %v5804
        %v6519 = vunpack.c.h.b16 %v5804
        %v6520 = vunpack.c.l.b16 %v5805
        %v6521 = vunpack.c.h.b16 %v5805
        %v6522 = vunpack.c.l.b16 %v5806
        %v6523 = vunpack.c.h.b16 %v5806
        %v6524 = vunpack.c.l.b16 %v5807
        %v6525 = vunpack.c.h.b16 %v5807
        %v6526 = vunpack.c.l.b16 %v5808
        %v6527 = vunpack.c.h.b16 %v5808
        %v6528 = vunpack.c.l.b16 %v5809
        %v6529 = vunpack.c.h.b16 %v5809
        %v6530 = vunpack.c.l.b16 %v5810
        %v6531 = vunpack.c.h.b16 %v5810
        %v6532 = vunpack.c.l.b16 %v5811
        %v6533 = vunpack.c.h.b16 %v5811
        %v6534 = vunpack.c.l.b16 %v5812
        %v6535 = vunpack.c.h.b16 %v5812
        %v6536 = vunpack.c.l.b16 %v5813
        %v6537 = vunpack.c.h.b16 %v5813
        %v6538 = vunpack.c.l.b16 %v5814
        %v6539 = vunpack.c.h.b16 %v5814
        %v6540 = vunpack.c.l.b16 %v5815
        %v6541 = vunpack.c.h.b16 %v5815
        %v6542 = vunpack.c.l.b16 %v5816
        %v6543 = vunpack.c.h.b16 %v5816
        %v6544 = vunpack.c.l.b16 %v5817
        %v6545 = vunpack.c.h.b16 %v5817
        %v6546 = vunpack.c.l.b16 %v5818
        %v6547 = vunpack.c.h.b16 %v5818
        %v6548 = vunpack.c.l.b16 %v5819
        %v6549 = vunpack.c.h.b16 %v5819
        %v6550 = vunpack.c.l.b16 %v5820
        %v6551 = vunpack.c.h.b16 %v5820
        %v6552 = vunpack.c.l.b16 %v5821
        %v6553 = vunpack.c.h.b16 %v5821
        %v6554 = vunpack.c.l.b16 %v5822
        %v6555 = vunpack.c.h.b16 %v5822
        %v6556 = vunpack.c.l.b16 %v5823
        %v6557 = vunpack.c.h.b16 %v5823
        %v6558 = vunpack.c.l.b16 %v5824
        %v6559 = vunpack.c.h.b16 %v5824
        %v6560 = vunpack.c.l.b16 %v5825
        %v6561 = vunpack.c.h.b16 %v5825
        %v6562 = vunpack.c.l.b16 %v5826
        %v6563 = vunpack.c.h.b16 %v5826
        %v6564 = vunpack.c.l.b16 %v5827
        %v6565 = vunpack.c.h.b16 %v5827
        %v6566 = vunpack.c.l.b16 %v5828
        %v6567 = vunpack.c.h.b16 %v5828
        %v6568 = vunpack.c.l.b16 %v5829
        %v6569 = vunpack.c.h.b16 %v5829
        %v6570 = vunpack.c.l.b16 %v5830
        %v6571 = vunpack.c.h.b16 %v5830
        %v6572 = vunpack.c.l.b16 %v5831
        %v6573 = vunpack.c.h.b16 %v5831
        %v6574 = vunpack.c.l.b16 %v5832
        %v6575 = vunpack.c.h.b16 %v5832
        %v6576 = vunpack.c.l.b16 %v5833
        %v6577 = vunpack.c.h.b16 %v5833
        %v6578 = vunpack.c.l.b16 %v5834
        %v6579 = vunpack.c.h.b16 %v5834
        %v6580 = vunpack.c.l.b16 %v5835
        %v6581 = vunpack.c.h.b16 %v5835
        %v6582 = vunpack.c.l.b16 %v5836
        %v6583 = vunpack.c.h.b16 %v5836
        %v6584 = vunpack.c.l.b16 %v5837
        %v6585 = vunpack.c.h.b16 %v5837
        %v6586 = vunpack.c.l.b16 %v5838
        %v6587 = vunpack.c.h.b16 %v5838
        %v6588 = vunpack.c.l.b16 %v5839
        %v6589 = vunpack.c.h.b16 %v5839
        %v6590 = vunpack.c.l.b16 %v5840
        %v6591 = vunpack.c.h.b16 %v5840
        %v6592 = vunpack.c.l.b16 %v5841
        %v6593 = vunpack.c.h.b16 %v5841
        %v6594 = vunpack.c.l.b16 %v5842
        %v6595 = vunpack.c.h.b16 %v5842
        %v6596 = vunpack.c.l.b16 %v5843
        %v6597 = vunpack.c.h.b16 %v5843
        %v6598 = vunpack.c.l.b16 %v5844
        %v6599 = vunpack.c.h.b16 %v5844
        %v6600 = vunpack.c.l.b16 %v5845
        %v6601 = vunpack.c.h.b16 %v5845
        %v6602 = vunpack.c.l.b16 %v5846
        %v6603 = vunpack.c.h.b16 %v5846
        %v6604 = vunpack.c.l.b16 %v5847
        %v6605 = vunpack.c.h.b16 %v5847
        %v6606 = vunpack.c.l.b16 %v5848
        %v6607 = vunpack.c.h.b16 %v5848
        %v6608 = vunpack.c.l.b16 %v5849
        %v6609 = vunpack.c.h.b16 %v5849
        %v6610 = vunpack.c.l.b16 %v5850
        %v6611 = vunpack.c.h.b16 %v5850
        %v6612 = vunpack.c.l.b16 %v5851
        %v6613 = vunpack.c.h.b16 %v5851
        %v6614 = vunpack.c.l.b16 %v5852
        %v6615 = vunpack.c.h.b16 %v5852
        %v6616 = vunpack.c.l.b16 %v5853
        %v6617 = vunpack.c.h.b16 %v5853
        %v6618 = vunpack.c.l.b16 %v5854
        %v6619 = vunpack.c.h.b16 %v5854
        %v6620 = vunpack.c.l.b16 %v5855
        %v6621 = vunpack.c.h.b16 %v5855
        %v6622 = vunpack.c.l.b16 %v5856
        %v6623 = vunpack.c.h.b16 %v5856
        %v6624 = vunpack.c.l.b16 %v5857
        %v6625 = vunpack.c.h.b16 %v5857
        %v6626 = vunpack.c.l.b16 %v5858
        %v6627 = vunpack.c.h.b16 %v5858
        %v6628 = vunpack.c.l.b16 %v5859
        %v6629 = vunpack.c.h.b16 %v5859
        %v6630 = vunpack.c.l.b16 %v5860
        %v6631 = vunpack.c.h.b16 %v5860
        %v6632 = vunpack.c.l.b16 %v5861
        %v6633 = vunpack.c.h.b16 %v5861
        %v6634 = vunpack.c.l.b16 %v5862
        %v6635 = vunpack.c.h.b16 %v5862
        %v6636 = vunpack.c.l.b16 %v5863
        %v6637 = vunpack.c.h.b16 %v5863
        %v6638 = vunpack.c.l.b16 %v5864
        %v6639 = vunpack.c.h.b16 %v5864
        %v6640 = vunpack.c.l.b16 %v5865
        %v6641 = vunpack.c.h.b16 %v5865
        %v6642 = vunpack.c.l.b16 %v5866
        %v6643 = vunpack.c.h.b16 %v5866
        %v6644 = vunpack.c.l.b16 %v5867
        %v6645 = vunpack.c.h.b16 %v5867
        %v6646 = vunpack.c.l.b16 %v5868
        %v6647 = vunpack.c.h.b16 %v5868
        %v6648 = vunpack.c.l.b16 %v5869
        %v6649 = vunpack.c.h.b16 %v5869
        %v6650 = vunpack.c.l.b16 %v5870
        %v6651 = vunpack.c.h.b16 %v5870
        %v6652 = vunpack.c.l.b16 %v5871
        %v6653 = vunpack.c.h.b16 %v5871
        %v6654 = vunpack.c.l.b16 %v5872
        %v6655 = vunpack.c.h.b16 %v5872
        %v6656 = vunpack.c.l.b16 %v5873
        %v6657 = vunpack.c.h.b16 %v5873
        %v6658 = vunpack.c.l.b16 %v5874
        %v6659 = vunpack.c.h.b16 %v5874
        %v6660 = vunpack.c.l.b16 %v5875
        %v6661 = vunpack.c.h.b16 %v5875
        %v6662 = vunpack.c.l.b16 %v5876
        %v6663 = vunpack.c.h.b16 %v5876
        %v6664 = vunpack.c.l.b16 %v5877
        %v6665 = vunpack.c.h.b16 %v5877
        %v6666 = vunpack.c.l.b16 %v5878
        %v6667 = vunpack.c.h.b16 %v5878
        %v6668 = vunpack.c.l.b16 %v5879
        %v6669 = vunpack.c.h.b16 %v5879
        %v6670 = vunpack.c.l.b16 %v5880
        %v6671 = vunpack.c.h.b16 %v5880
        %v6672 = vunpack.c.l.b16 %v5881
        %v6673 = vunpack.c.h.b16 %v5881
        %v6674 = vunpack.c.l.b16 %v5882
        %v6675 = vunpack.c.h.b16 %v5882
        %v6676 = vunpack.c.l.b16 %v5883
        %v6677 = vunpack.c.h.b16 %v5883
        %v6678 = vunpack.c.l.b16 %v5884
        %v6679 = vunpack.c.h.b16 %v5884
        %v6680 = vunpack.c.l.b16 %v5885
        %v6681 = vunpack.c.h.b16 %v5885
        %v6682 = vunpack.c.l.b16 %v5886
        %v6683 = vunpack.c.h.b16 %v5886
        %v6684 = vunpack.c.l.b16 %v5887
        %v6685 = vunpack.c.h.b16 %v5887
        %v6686 = vunpack.c.l.b16 %v5888
        %v6687 = vunpack.c.h.b16 %v5888
        %v6688 = vunpack.c.l.b16 %v5889
        %v6689 = vunpack.c.h.b16 %v5889
        %v6690 = vunpack.c.l.b16 %v5890
        %v6691 = vunpack.c.h.b16 %v5890
        %v6692 = vunpack.c.l.b16 %v5891
        %v6693 = vunpack.c.h.b16 %v5891
        %v6694 = vunpack.c.l.b16 %v5892
        %v6695 = vunpack.c.h.b16 %v5892
        %v6696 = vunpack.c.l.b16 %v5893
        %v6697 = vunpack.c.h.b16 %v5893
        %v6698 = vunpack.c.l.b16 %v5894
        %v6699 = vunpack.c.h.b16 %v5894
        %v6700 = vunpack.c.l.b16 %v5895
        %v6701 = vunpack.c.h.b16 %v5895
        %v6702 = vunpack.c.l.b16 %v5896
        %v6703 = vunpack.c.h.b16 %v5896
        %v6704 = vunpack.c.l.b16 %v5897
        %v6705 = vunpack.c.h.b16 %v5897
        %v6706 = vunpack.c.l.b16 %v5898
        %v6707 = vunpack.c.h.b16 %v5898
        %v6708 = vunpack.c.l.b16 %v5899
        %v6709 = vunpack.c.h.b16 %v5899
        %v6710 = vunpack.c.l.b16 %v5900
        %v6711 = vunpack.c.h.b16 %v5900
        %v6712 = vunpack.c.l.b16 %v5901
        %v6713 = vunpack.c.h.b16 %v5901
        %v6714 = vunpack.c.l.b16 %v5902
        %v6715 = vunpack.c.h.b16 %v5902
        %v6716 = vunpack.c.l.b16 %v5903
        %v6717 = vunpack.c.h.b16 %v5903
        %v6718 = vunpack.c.l.b16 %v5904
        %v6719 = vunpack.c.h.b16 %v5904
        %v6720 = vunpack.c.l.b16 %v5905
        %v6721 = vunpack.c.h.b16 %v5905
        %v6722 = vunpack.c.l.b16 %v5906
        %v6723 = vunpack.c.h.b16 %v5906
        %v6724 = vunpack.c.l.b16 %v5907
        %v6725 = vunpack.c.h.b16 %v5907
        %v6726 = vunpack.c.l.b16 %v5908
        %v6727 = vunpack.c.h.b16 %v5908
        %v6728 = vunpack.c.l.b16 %v5909
        %v6729 = vunpack.c.h.b16 %v5909
        %v6730 = vunpack.c.l.b16 %v5910
        %v6731 = vunpack.c.h.b16 %v5910
        %v6732 = vunpack.c.l.b16 %v5911
        %v6733 = vunpack.c.h.b16 %v5911
        %v6734 = vunpack.c.l.b16 %v5912
        %v6735 = vunpack.c.h.b16 %v5912
        %v6736 = vunpack.c.l.b16 %v5913
        %v6737 = vunpack.c.h.b16 %v5913
        %v6738 = vunpack.c.l.b16 %v5914
        %v6739 = vunpack.c.h.b16 %v5914
        %v6740 = vunpack.c.l.b16 %v5915
        %v6741 = vunpack.c.h.b16 %v5915
        %v6742 = vunpack.c.l.b16 %v5916
        %v6743 = vunpack.c.h.b16 %v5916
        %v6744 = vunpack.c.l.b16 %v5917
        %v6745 = vunpack.c.h.b16 %v5917
        %v6746 = vunpack.c.l.b16 %v5918
        %v6747 = vunpack.c.h.b16 %v5918
        %v6748 = vunpack.c.l.b16 %v5919
        %v6749 = vunpack.c.h.b16 %v5919
        %v6750 = vunpack.c.l.b16 %v5920
        %v6751 = vunpack.c.h.b16 %v5920
        %v6752 = vunpack.c.l.b16 %v5921
        %v6753 = vunpack.c.h.b16 %v5921
        %v6754 = vunpack.c.l.b16 %v5922
        %v6755 = vunpack.c.h.b16 %v5922
        %v6756 = vunpack.c.l.b16 %v5923
        %v6757 = vunpack.c.h.b16 %v5923
        %v6758 = vunpack.c.l.b16 %v5924
        %v6759 = vunpack.c.h.b16 %v5924
        %v6760 = vunpack.c.l.b16 %v5925
        %v6761 = vunpack.c.h.b16 %v5925
        %v6762 = vunpack.c.l.b16 %v5926
        %v6763 = vunpack.c.h.b16 %v5926
        %v6764 = vunpack.c.l.b16 %v5927
        %v6765 = vunpack.c.h.b16 %v5927
        %v6766 = vunpack.c.l.b16 %v5928
        %v6767 = vunpack.c.h.b16 %v5928
        %v6768 = vunpack.c.l.b16 %v5929
        %v6769 = vunpack.c.h.b16 %v5929
        %v6770 = vunpack.c.l.b16 %v5930
        %v6771 = vunpack.c.h.b16 %v5930
        %v6772 = vunpack.c.l.b16 %v5931
        %v6773 = vunpack.c.h.b16 %v5931
        %v6774 = vunpack.c.l.b16 %v5932
        %v6775 = vunpack.c.h.b16 %v5932
        %v6776 = vunpack.c.l.b16 %v5933
        %v6777 = vunpack.c.h.b16 %v5933
        %v6778 = vunpack.c.l.b16 %v5934
        %v6779 = vunpack.c.h.b16 %v5934
        %v6780 = vunpack.c.l.b16 %v5935
        %v6781 = vunpack.c.h.b16 %v5935
        %v6782 = vunpack.c.l.b16 %v5936
        %v6783 = vunpack.c.h.b16 %v5936
        %v6784 = vunpack.c.l.b16 %v5937
        %v6785 = vunpack.c.h.b16 %v5937
        %v6786 = vunpack.c.l.b16 %v5938
        %v6787 = vunpack.c.h.b16 %v5938
        %v6788 = vunpack.c.l.b16 %v5939
        %v6789 = vunpack.c.h.b16 %v5939
        %v6790 = vunpack.c.l.b16 %v5940
        %v6791 = vunpack.c.h.b16 %v5940
        %v6792 = vunpack.c.l.b16 %v5941
        %v6793 = vunpack.c.h.b16 %v5941
        %v6794 = vunpack.c.l.b16 %v5942
        %v6795 = vunpack.c.h.b16 %v5942
        %v6796 = vunpack.c.l.b16 %v5943
        %v6797 = vunpack.c.h.b16 %v5943
        %v6798 = vunpack.c.l.b16 %v5944
        %v6799 = vunpack.c.h.b16 %v5944
        %v6800 = vunpack.c.l.b16 %v5945
        %v6801 = vunpack.c.h.b16 %v5945
        %v6802 = vunpack.c.l.b16 %v5946
        %v6803 = vunpack.c.h.b16 %v5946
        %v6804 = vunpack.c.l.b16 %v5947
        %v6805 = vunpack.c.h.b16 %v5947
        %v6806 = vunpack.c.l.b16 %v5948
        %v6807 = vunpack.c.h.b16 %v5948
        %v6808 = vunpack.c.l.b16 %v5949
        %v6809 = vunpack.c.h.b16 %v5949
        %v6810 = vunpack.c.l.b16 %v5950
        %v6811 = vunpack.c.h.b16 %v5950
        %v6812 = vunpack.c.l.b16 %v5951
        %v6813 = vunpack.c.h.b16 %v5951
        %v6814 = vunpack.c.l.b16 %v5952
        %v6815 = vunpack.c.h.b16 %v5952
        %v6816 = vunpack.c.l.b16 %v5953
        %v6817 = vunpack.c.h.b16 %v5953
        %v6818 = vunpack.c.l.b16 %v5954
        %v6819 = vunpack.c.h.b16 %v5954
        %v6820 = vunpack.c.l.b16 %v5955
        %v6821 = vunpack.c.h.b16 %v5955
        %v6822 = vunpack.c.l.b16 %v5956
        %v6823 = vunpack.c.h.b16 %v5956
        %v6824 = vunpack.c.l.b16 %v5957
        %v6825 = vunpack.c.h.b16 %v5957
        %v6826 = vunpack.c.l.b16 %v5958
        %v6827 = vunpack.c.h.b16 %v5958
        %v6828 = vunpack.c.l.b16 %v5959
        %v6829 = vunpack.c.h.b16 %v5959
        %v6830 = vunpack.c.l.b16 %v5960
        %v6831 = vunpack.c.h.b16 %v5960
        %v6832 = vunpack.c.l.b16 %v5961
        %v6833 = vunpack.c.h.b16 %v5961
        %v6834 = vunpack.c.l.b16 %v5962
        %v6835 = vunpack.c.h.b16 %v5962
        %v6836 = vunpack.c.l.b16 %v5963
        %v6837 = vunpack.c.h.b16 %v5963
        %v6838 = vunpack.c.l.b16 %v5964
        %v6839 = vunpack.c.h.b16 %v5964
        %v6840 = vunpack.c.l.b16 %v5965
        %v6841 = vunpack.c.h.b16 %v5965
        %v6842 = vunpack.c.l.b16 %v5966
        %v6843 = vunpack.c.h.b16 %v5966
        %v6844 = vunpack.c.l.b16 %v5967
        %v6845 = vunpack.c.h.b16 %v5967
        %v6846 = vunpack.c.l.b16 %v5968
        %v6847 = vunpack.c.h.b16 %v5968
        %v6848 = vunpack.c.l.b16 %v5969
        %v6849 = vunpack.c.h.b16 %v5969
        %v6850 = vunpack.c.l.b16 %v5970
        %v6851 = vunpack.c.h.b16 %v5970
        %v6852 = vunpack.c.l.b16 %v5971
        %v6853 = vunpack.c.h.b16 %v5971
        %v6854 = vunpack.c.l.b16 %v5972
        %v6855 = vunpack.c.h.b16 %v5972
        %v6856 = vunpack.c.l.b16 %v5973
        %v6857 = vunpack.c.h.b16 %v5973
        %v6858 = vunpack.c.l.b16 %v5974
        %v6859 = vunpack.c.h.b16 %v5974
        %v6860 = vunpack.c.l.b16 %v5975
        %v6861 = vunpack.c.h.b16 %v5975
        %v6862 = vunpack.c.l.b16 %v5976
        %v6863 = vunpack.c.h.b16 %v5976
        %v6864 = vunpack.c.l.b16 %v5977
        %v6865 = vunpack.c.h.b16 %v5977
        %v6866 = vunpack.c.l.b16 %v5978
        %v6867 = vunpack.c.h.b16 %v5978
        %v6868 = vunpack.c.l.b16 %v5979
        %v6869 = vunpack.c.h.b16 %v5979
        %v6870 = vunpack.c.l.b16 %v5980
        %v6871 = vunpack.c.h.b16 %v5980
        %v6872 = vunpack.c.l.b16 %v5981
        %v6873 = vunpack.c.h.b16 %v5981
        %v6874 = vunpack.c.l.b16 %v5982
        %v6875 = vunpack.c.h.b16 %v5982
        %v6876 = vunpack.c.l.b16 %v5983
        %v6877 = vunpack.c.h.b16 %v5983
        %v6878 = vunpack.c.l.b16 %v5984
        %v6879 = vunpack.c.h.b16 %v5984
        %v6880 = vunpack.c.l.b16 %v5985
        %v6881 = vunpack.c.h.b16 %v5985
        %v6882 = vunpack.c.l.b16 %v5986
        %v6883 = vunpack.c.h.b16 %v5986
        %v6884 = vunpack.c.l.b16 %v5987
        %v6885 = vunpack.c.h.b16 %v5987
        %v6886 = vunpack.c.l.b16 %v5988
        %v6887 = vunpack.c.h.b16 %v5988
        %v6888 = vunpack.c.l.b16 %v5989
        %v6889 = vunpack.c.h.b16 %v5989
        %v6890 = vunpack.c.l.b16 %v5990
        %v6891 = vunpack.c.h.b16 %v5990
        %v6892 = vunpack.c.l.b16 %v5991
        %v6893 = vunpack.c.h.b16 %v5991
        %v6894 = vunpack.c.l.b16 %v5992
        %v6895 = vunpack.c.h.b16 %v5992
        %v6896 = vunpack.c.l.b16 %v5993
        %v6897 = vunpack.c.h.b16 %v5993
        %v6898 = vunpack.c.l.b16 %v5994
        %v6899 = vunpack.c.h.b16 %v5994
        %v6900 = vunpack.c.l.b16 %v5995
        %v6901 = vunpack.c.h.b16 %v5995
        %v6902 = vunpack.c.l.b16 %v5996
        %v6903 = vunpack.c.h.b16 %v5996
        %v6904 = vunpack.c.l.b16 %v5997
        %v6905 = vunpack.c.h.b16 %v5997
        %v6906 = vunpack.c.l.b16 %v5998
        %v6907 = vunpack.c.h.b16 %v5998
        %v6908 = vunpack.c.l.b16 %v5999
        %v6909 = vunpack.c.h.b16 %v5999
        %v6910 = vunpack.c.l.b16 %v6000
        %v6911 = vunpack.c.h.b16 %v6000
        %v6912 = vunpack.c.l.b16 %v6001
        %v6913 = vunpack.c.h.b16 %v6001
        %v6914 = vunpack.c.l.b16 %v6002
        %v6915 = vunpack.c.h.b16 %v6002
        %v6916 = vunpack.c.l.b16 %v6003
        %v6917 = vunpack.c.h.b16 %v6003
        %v6918 = vunpack.c.l.b16 %v6004
        %v6919 = vunpack.c.h.b16 %v6004
        %v6920 = vunpack.c.l.b16 %v6005
        %v6921 = vunpack.c.h.b16 %v6005
        %v6922 = vunpack.c.l.b16 %v6006
        %v6923 = vunpack.c.h.b16 %v6006
        %v6924 = vunpack.c.l.b16 %v6007
        %v6925 = vunpack.c.h.b16 %v6007
        %v6926 = vunpack.c.l.b16 %v6008
        %v6927 = vunpack.c.h.b16 %v6008
        %v6928 = vunpack.c.l.b16 %v6009
        %v6929 = vunpack.c.h.b16 %v6009
        %v6930 = vunpack.c.l.b16 %v6010
        %v6931 = vunpack.c.h.b16 %v6010
        %v6932 = vunpack.c.l.b16 %v6011
        %v6933 = vunpack.c.h.b16 %v6011
        %v6934 = vunpack.c.l.b16 %v6012
        %v6935 = vunpack.c.h.b16 %v6012
        %v6936 = vunpack.c.l.b16 %v6013
        %v6937 = vunpack.c.h.b16 %v6013
        %v6938 = vunpack.c.l.b16 %v6014
        %v6939 = vunpack.c.h.b16 %v6014
        %v6940 = vunpack.c.l.b16 %v6015
        %v6941 = vunpack.c.h.b16 %v6015
        %v6942 = vunpack.c.l.b16 %v6016
        %v6943 = vunpack.c.h.b16 %v6016
        %v6944 = vunpack.c.l.b16 %v6017
        %v6945 = vunpack.c.h.b16 %v6017
        %v6946 = vpack.c.b16 %v6382, %v6370
        %v6947 = vpack.c.b16 %v6383, %v6371
        %v6948 = vpack.c.b16 %v6384, %v6372
        %v6949 = vpack.c.b16 %v6385, %v6373
        %v6950 = vpack.c.b16 %v6386, %v6374
        %v6951 = vpack.c.b16 %v6387, %v6375
        %v6952 = vpack.c.b16 %v6388, %v6376
        %v6953 = vpack.c.b16 %v6389, %v6377
        %v6954 = vpack.c.b16 %v6390, %v6378
        %v6955 = vpack.c.b16 %v6391, %v6379
        %v6956 = vpack.c.b16 %v6392, %v6380
        %v6957 = vpack.c.b16 %v6393, %v6381
        %v6958 = vpack.c.b16 %v6406, %v6394
        %v6959 = vpack.c.b16 %v6407, %v6395
        %v6960 = vpack.c.b16 %v6408, %v6396
        %v6961 = vpack.c.b16 %v6409, %v6397
        %v6962 = vpack.c.b16 %v6410, %v6398
        %v6963 = vpack.c.b16 %v6411, %v6399
        %v6964 = vpack.c.b16 %v6412, %v6400
        %v6965 = vpack.c.b16 %v6413, %v6401
        %v6966 = vpack.c.b16 %v6414, %v6402
        %v6967 = vpack.c.b16 %v6415, %v6403
        %v6968 = vpack.c.b16 %v6416, %v6404
        %v6969 = vpack.c.b16 %v6417, %v6405
        %v6970 = vpack.c.b16 %v6430, %v6418
        %v6971 = vpack.c.b16 %v6431, %v6419
        %v6972 = vpack.c.b16 %v6432, %v6420
        %v6973 = vpack.c.b16 %v6433, %v6421
        %v6974 = vpack.c.b16 %v6434, %v6422
        %v6975 = vpack.c.b16 %v6435, %v6423
        %v6976 = vpack.c.b16 %v6436, %v6424
        %v6977 = vpack.c.b16 %v6437, %v6425
        %v6978 = vpack.c.b16 %v6438, %v6426
        %v6979 = vpack.c.b16 %v6439, %v6427
        %v6980 = vpack.c.b16 %v6440, %v6428
        %v6981 = vpack.c.b16 %v6441, %v6429
        %v6982 = vpack.c.b16 %v6454, %v6442
        %v6983 = vpack.c.b16 %v6455, %v6443
        %v6984 = vpack.c.b16 %v6456, %v6444
        %v6985 = vpack.c.b16 %v6457, %v6445
        %v6986 = vpack.c.b16 %v6458, %v6446
        %v6987 = vpack.c.b16 %v6459, %v6447
        %v6988 = vpack.c.b16 %v6460, %v6448
        %v6989 = vpack.c.b16 %v6461, %v6449
        %v6990 = vpack.c.b16 %v6462, %v6450
        %v6991 = vpack.c.b16 %v6463, %v6451
        %v6992 = vpack.c.b16 %v6464, %v6452
        %v6993 = vpack.c.b16 %v6465, %v6453
        %v6994 = vpack.c.b16 %v6478, %v6466
        %v6995 = vpack.c.b16 %v6479, %v6467
        %v6996 = vpack.c.b16 %v6480, %v6468
        %v6997 = vpack.c.b16 %v6481, %v6469
        %v6998 = vpack.c.b16 %v6482, %v6470
        %v6999 = vpack.c.b16 %v6483, %v6471
        %v7000 = vpack.c.b16 %v6484, %v6472
        %v7001 = vpack.c.b16 %v6485, %v6473
        %v7002 = vpack.c.b16 %v6486, %v6474
        %v7003 = vpack.c.b16 %v6487, %v6475
        %v7004 = vpack.c.b16 %v6488, %v6476
        %v7005 = vpack.c.b16 %v6489, %v6477
        %v7006 = vpack.c.b16 %v6502, %v6490
        %v7007 = vpack.c.b16 %v6503, %v6491
        %v7008 = vpack.c.b16 %v6504, %v6492
        %v7009 = vpack.c.b16 %v6505, %v6493
        %v7010 = vpack.c.b16 %v6506, %v6494
        %v7011 = vpack.c.b16 %v6507, %v6495
        %v7012 = vpack.c.b16 %v6508, %v6496
        %v7013 = vpack.c.b16 %v6509, %v6497
        %v7014 = vpack.c.b16 %v6510, %v6498
        %v7015 = vpack.c.b16 %v6511, %v6499
        %v7016 = vpack.c.b16 %v6512, %v6500
        %v7017 = vpack.c.b16 %v6513, %v6501
        %v7018 = vpack.c.b16 %v6526, %v6514
        %v7019 = vpack.c.b16 %v6527, %v6515
        %v7020 = vpack.c.b16 %v6528, %v6516
        %v7021 = vpack.c.b16 %v6529, %v6517
        %v7022 = vpack.c.b16 %v6530, %v6518
        %v7023 = vpack.c.b16 %v6531, %v6519
        %v7024 = vpack.c.b16 %v6532, %v6520
        %v7025 = vpack.c.b16 %v6533, %v6521
        %v7026 = vpack.c.b16 %v6534, %v6522
        %v7027 = vpack.c.b16 %v6535, %v6523
        %v7028 = vpack.c.b16 %v6536, %v6524
        %v7029 = vpack.c.b16 %v6537, %v6525
        %v7030 = vpack.c.b16 %v6550, %v6538
        %v7031 = vpack.c.b16 %v6551, %v6539
        %v7032 = vpack.c.b16 %v6552, %v6540
        %v7033 = vpack.c.b16 %v6553, %v6541
        %v7034 = vpack.c.b16 %v6554, %v6542
        %v7035 = vpack.c.b16 %v6555, %v6543
        %v7036 = vpack.c.b16 %v6556, %v6544
        %v7037 = vpack.c.b16 %v6557, %v6545
        %v7038 = vpack.c.b16 %v6558, %v6546
        %v7039 = vpack.c.b16 %v6559, %v6547
        %v7040 = vpack.c.b16 %v6560, %v6548
        %v7041 = vpack.c.b16 %v6561, %v6549
        %v7042 = vpack.c.b16 %v6574, %v6562
        %v7043 = vpack.c.b16 %v6575, %v6563
        %v7044 = vpack.c.b16 %v6576, %v6564
        %v7045 = vpack.c.b16 %v6577, %v6565
        %v7046 = vpack.c.b16 %v6578, %v6566
        %v7047 = vpack.c.b16 %v6579, %v6567
        %v7048 = vpack.c.b16 %v6580, %v6568
        %v7049 = vpack.c.b16 %v6581, %v6569
        %v7050 = vpack.c.b16 %v6582, %v6570
        %v7051 = vpack.c.b16 %v6583, %v6571
        %v7052 = vpack.c.b16 %v6584, %v6572
        %v7053 = vpack.c.b16 %v6585, %v6573
        %v7054 = vpack.c.b16 %v6598, %v6586
        %v7055 = vpack.c.b16 %v6599, %v6587
        %v7056 = vpack.c.b16 %v6600, %v6588
        %v7057 = vpack.c.b16 %v6601, %v6589
        %v7058 = vpack.c.b16 %v6602, %v6590
        %v7059 = vpack.c.b16 %v6603, %v6591
        %v7060 = vpack.c.b16 %v6604, %v6592
        %v7061 = vpack.c.b16 %v6605, %v6593
        %v7062 = vpack.c.b16 %v6606, %v6594
        %v7063 = vpack.c.b16 %v6607, %v6595
        %v7064 = vpack.c.b16 %v6608, %v6596
        %v7065 = vpack.c.b16 %v6609, %v6597
        %v7066 = vpack.c.b16 %v6622, %v6610
        %v7067 = vpack.c.b16 %v6623, %v6611
        %v7068 = vpack.c.b16 %v6624, %v6612
        %v7069 = vpack.c.b16 %v6625, %v6613
        %v7070 = vpack.c.b16 %v6626, %v6614
        %v7071 = vpack.c.b16 %v6627, %v6615
        %v7072 = vpack.c.b16 %v6628, %v6616
        %v7073 = vpack.c.b16 %v6629, %v6617
        %v7074 = vpack.c.b16 %v6630, %v6618
        %v7075 = vpack.c.b16 %v6631, %v6619
        %v7076 = vpack.c.b16 %v6632, %v6620
        %v7077 = vpack.c.b16 %v6633, %v6621
        %v7078 = vpack.c.b16 %v6646, %v6634
        %v7079 = vpack.c.b16 %v6647, %v6635
        %v7080 = vpack.c.b16 %v6648, %v6636
        %v7081 = vpack.c.b16 %v6649, %v6637
        %v7082 = vpack.c.b16 %v6650, %v6638
        %v7083 = vpack.c.b16 %v6651, %v6639
        %v7084 = vpack.c.b16 %v6652, %v6640
        %v7085 = vpack.c.b16 %v6653, %v6641
        %v7086 = vpack.c.b16 %v6654, %v6642
        %v7087 = vpack.c.b16 %v6655, %v6643
        %v7088 = vpack.c.b16 %v6656, %v6644
        %v7089 = vpack.c.b16 %v6657, %v6645
        %v7090 = vpack.c.b16 %v6670, %v6658
        %v7091 = vpack.c.b16 %v6671, %v6659
        %v7092 = vpack.c.b16 %v6672, %v6660
        %v7093 = vpack.c.b16 %v6673, %v6661
        %v7094 = vpack.c.b16 %v6674, %v6662
        %v7095 = vpack.c.b16 %v6675, %v6663
        %v7096 = vpack.c.b16 %v6676, %v6664
        %v7097 = vpack.c.b16 %v6677, %v6665
        %v7098 = vpack.c.b16 %v6678, %v6666
        %v7099 = vpack.c.b16 %v6679, %v6667
        %v7100 = vpack.c.b16 %v6680, %v6668
        %v7101 = vpack.c.b16 %v6681, %v6669
        %v7102 = vpack.c.b16 %v6694, %v6682
        %v7103 = vpack.c.b16 %v6695, %v6683
        %v7104 = vpack.c.b16 %v6696, %v6684
        %v7105 = vpack.c.b16 %v6697, %v6685
        %v7106 = vpack.c.b16 %v6698, %v6686
        %v7107 = vpack.c.b16 %v6699, %v6687
        %v7108 = vpack.c.b16 %v6700, %v6688
        %v7109 = vpack.c.b16 %v6701, %v6689
        %v7110 = vpack.c.b16 %v6702, %v6690
        %v7111 = vpack.c.b16 %v6703, %v6691
        %v7112 = vpack.c.b16 %v6704, %v6692
        %v7113 = vpack.c.b16 %v6705, %v6693
        %v7114 = vpack.c.b16 %v6718, %v6706
        %v7115 = vpack.c.b16 %v6719, %v6707
        %v7116 = vpack.c.b16 %v6720, %v6708
        %v7117 = vpack.c.b16 %v6721, %v6709
        %v7118 = vpack.c.b16 %v6722, %v6710
        %v7119 = vpack.c.b16 %v6723, %v6711
        %v7120 = vpack.c.b16 %v6724, %v6712
        %v7121 = vpack.c.b16 %v6725, %v6713
        %v7122 = vpack.c.b16 %v6726, %v6714
        %v7123 = vpack.c.b16 %v6727, %v6715
        %v7124 = vpack.c.b16 %v6728, %v6716
        %v7125 = vpack.c.b16 %v6729, %v6717
        %v7126 = vpack.c.b16 %v6742, %v6730
        %v7127 = vpack.c.b16 %v6743, %v6731
        %v7128 = vpack.c.b16 %v6744, %v6732
        %v7129 = vpack.c.b16 %v6745, %v6733
        %v7130 = vpack.c.b16 %v6746, %v6734
        %v7131 = vpack.c.b16 %v6747, %v6735
        %v7132 = vpack.c.b16 %v6748, %v6736
        %v7133 = vpack.c.b16 %v6749, %v6737
        %v7134 = vpack.c.b16 %v6750, %v6738
        %v7135 = vpack.c.b16 %v6751, %v6739
        %v7136 = vpack.c.b16 %v6752, %v6740
        %v7137 = vpack.c.b16 %v6753, %v6741
        %v7138 = vpack.c.b16 %v6766, %v6754
        %v7139 = vpack.c.b16 %v6767, %v6755
        %v7140 = vpack.c.b16 %v6768, %v6756
        %v7141 = vpack.c.b16 %v6769, %v6757
        %v7142 = vpack.c.b16 %v6770, %v6758
        %v7143 = vpack.c.b16 %v6771, %v6759
        %v7144 = vpack.c.b16 %v6772, %v6760
        %v7145 = vpack.c.b16 %v6773, %v6761
        %v7146 = vpack.c.b16 %v6774, %v6762
        %v7147 = vpack.c.b16 %v6775, %v6763
        %v7148 = vpack.c.b16 %v6776, %v6764
        %v7149 = vpack.c.b16 %v6777, %v6765
        %v7150 = vpack.c.b16 %v6790, %v6778
        %v7151 = vpack.c.b16 %v6791, %v6779
        %v7152 = vpack.c.b16 %v6792, %v6780
        %v7153 = vpack.c.b16 %v6793, %v6781
        %v7154 = vpack.c.b16 %v6794, %v6782
        %v7155 = vpack.c.b16 %v6795, %v6783
        %v7156 = vpack.c.b16 %v6796, %v6784
        %v7157 = vpack.c.b16 %v6797, %v6785
        %v7158 = vpack.c.b16 %v6798, %v6786
        %v7159 = vpack.c.b16 %v6799, %v6787
        %v7160 = vpack.c.b16 %v6800, %v6788
        %v7161 = vpack.c.b16 %v6801, %v6789
        %v7162 = vpack.c.b16 %v6814, %v6802
        %v7163 = vpack.c.b16 %v6815, %v6803
        %v7164 = vpack.c.b16 %v6816, %v6804
        %v7165 = vpack.c.b16 %v6817, %v6805
        %v7166 = vpack.c.b16 %v6818, %v6806
        %v7167 = vpack.c.b16 %v6819, %v6807
        %v7168 = vpack.c.b16 %v6820, %v6808
        %v7169 = vpack.c.b16 %v6821, %v6809
        %v7170 = vpack.c.b16 %v6822, %v6810
        %v7171 = vpack.c.b16 %v6823, %v6811
        %v7172 = vpack.c.b16 %v6824, %v6812
        %v7173 = vpack.c.b16 %v6825, %v6813
        %v7174 = vpack.c.b16 %v6838, %v6826
        %v7175 = vpack.c.b16 %v6839, %v6827
        %v7176 = vpack.c.b16 %v6840, %v6828
        %v7177 = vpack.c.b16 %v6841, %v6829
        %v7178 = vpack.c.b16 %v6842, %v6830
        %v7179 = vpack.c.b16 %v6843, %v6831
        %v7180 = vpack.c.b16 %v6844, %v6832
        %v7181 = vpack.c.b16 %v6845, %v6833
        %v7182 = vpack.c.b16 %v6846, %v6834
        %v7183 = vpack.c.b16 %v6847, %v6835
        %v7184 = vpack.c.b16 %v6848, %v6836
        %v7185 = vpack.c.b16 %v6849, %v6837
        %v7186 = vpack.c.b16 %v6862, %v6850
        %v7187 = vpack.c.b16 %v6863, %v6851
        %v7188 = vpack.c.b16 %v6864, %v6852
        %v7189 = vpack.c.b16 %v6865, %v6853
        %v7190 = vpack.c.b16 %v6866, %v6854
        %v7191 = vpack.c.b16 %v6867, %v6855
        %v7192 = vpack.c.b16 %v6868, %v6856
        %v7193 = vpack.c.b16 %v6869, %v6857
        %v7194 = vpack.c.b16 %v6870, %v6858
        %v7195 = vpack.c.b16 %v6871, %v6859
        %v7196 = vpack.c.b16 %v6872, %v6860
        %v7197 = vpack.c.b16 %v6873, %v6861
        %v7198 = vpack.c.b16 %v6886, %v6874
        %v7199 = vpack.c.b16 %v6887, %v6875
        %v7200 = vpack.c.b16 %v6888, %v6876
        %v7201 = vpack.c.b16 %v6889, %v6877
        %v7202 = vpack.c.b16 %v6890, %v6878
        %v7203 = vpack.c.b16 %v6891, %v6879
        %v7204 = vpack.c.b16 %v6892, %v6880
        %v7205 = vpack.c.b16 %v6893, %v6881
        %v7206 = vpack.c.b16 %v6894, %v6882
        %v7207 = vpack.c.b16 %v6895, %v6883
        %v7208 = vpack.c.b16 %v6896, %v6884
        %v7209 = vpack.c.b16 %v6897, %v6885
        %v7210 = vpack.c.b16 %v6910, %v6898
        %v7211 = vpack.c.b16 %v6911, %v6899
        %v7212 = vpack.c.b16 %v6912, %v6900
        %v7213 = vpack.c.b16 %v6913, %v6901
        %v7214 = vpack.c.b16 %v6914, %v6902
        %v7215 = vpack.c.b16 %v6915, %v6903
        %v7216 = vpack.c.b16 %v6916, %v6904
        %v7217 = vpack.c.b16 %v6917, %v6905
        %v7218 = vpack.c.b16 %v6918, %v6906
        %v7219 = vpack.c.b16 %v6919, %v6907
        %v7220 = vpack.c.b16 %v6920, %v6908
        %v7221 = vpack.c.b16 %v6921, %v6909
        %v7222 = vpack.c.b16 %v6934, %v6922
        %v7223 = vpack.c.b16 %v6935, %v6923
        %v7224 = vpack.c.b16 %v6936, %v6924
        %v7225 = vpack.c.b16 %v6937, %v6925
        %v7226 = vpack.c.b16 %v6938, %v6926
        %v7227 = vpack.c.b16 %v6939, %v6927
        %v7228 = vpack.c.b16 %v6940, %v6928
        %v7229 = vpack.c.b16 %v6941, %v6929
        %v7230 = vpack.c.b16 %v6942, %v6930
        %v7231 = vpack.c.b16 %v6943, %v6931
        %v7232 = vpack.c.b16 %v6944, %v6932
        %v7233 = vpack.c.b16 %v6945, %v6933
        %7522 = vmatprep.subr.bf16.mxu0 %v7031
        %7523 = vmatpush1.bf16.msra.mxu0 %v7030
        %7524 = vmatprep.subr.bf16.mxu0 %v7019
        %7525 = vmatpush1.bf16.msra.mxu0 %v7018
        %7526 = vmatprep.subr.bf16.mxu0 %v7007
        %7527 = vmatpush1.bf16.msra.mxu0 %v7006
        %7528 = vmatprep.subr.bf16.mxu0 %v6995
        %7529 = vmatpush1.bf16.msra.mxu0 %v6994
        %7530 = vmatprep.subr.bf16.mxu0 %v6983
        %7531 = vmatpush1.bf16.msra.mxu0 %v6982
        %7532 = vmatprep.subr.bf16.mxu0 %v6971
        %7533 = vmatpush1.bf16.msra.mxu0 %v6970
        %7534 = vmatprep.subr.bf16.mxu0 %v6959
        %7535 = vmatpush1.bf16.msra.mxu0 %v6958
        %7536 = vmatprep.subr.bf16.mxu0 %v6947
        %7537 = vmatpush1.bf16.msra.mxu0 %v6946
        %7538 = vmatprep.subr.bf16.mxu0 %v7127
        %7539 = vmatpush2.bf16.msra.mxu0 %v7126
        %7540 = vmatprep.subr.bf16.mxu0 %v7115
        %7541 = vmatpush2.bf16.msra.mxu0 %v7114
        %7542 = vmatprep.subr.bf16.mxu0 %v7103
        %7543 = vmatpush2.bf16.msra.mxu0 %v7102
        %7544 = vmatprep.subr.bf16.mxu0 %v7091
        %7545 = vmatpush2.bf16.msra.mxu0 %v7090
        %7546 = vmatprep.subr.bf16.mxu0 %v7079
        %7547 = vmatpush2.bf16.msra.mxu0 %v7078
        %7548 = vmatprep.subr.bf16.mxu0 %v7067
        %7549 = vmatpush2.bf16.msra.mxu0 %v7066
        %7550 = vmatprep.subr.bf16.mxu0 %v7055
        %7551 = vmatpush2.bf16.msra.mxu0 %v7054
        %7552 = vmatprep.subr.bf16.mxu0 %v7043
        %7553 = vmatpush2.bf16.msra.mxu0 %v7042
        %7554 = vmatprep.mubr.bf16.mxu0 %v5719
        %7555 = vmatmul.mubr.bf16.gmra.mxu0 %v5718
        %v7556 = vpop.f32.mrf.mxu0
        %v7557 = vadd.f32 %v6025, %v7556
        %v7558 = vpop.f32.mrf.mxu0
        %v7559 = vadd.f32 %v6029, %v7558
        %v7560 = vpop.f32.mrf.mxu0
        %v7561 = vadd.f32 %v6025, %v7560
        %v7562 = vpop.f32.mrf.mxu0
        %v7563 = vadd.f32 %v6029, %v7562
        %7564 = vmatprep.mubr.bf16.mxu0 %v5722
        %7565 = vmatmul.mubr.bf16.gmra.mxu0 %v5721
        %v7566 = vpop.f32.mrf.mxu0
        %v7567 = vadd.f32 %v6025, %v7566
        %v7568 = vpop.f32.mrf.mxu0
        %v7569 = vadd.f32 %v6029, %v7568
        %v7570 = vpop.f32.mrf.mxu0
        %v7571 = vadd.f32 %v6025, %v7570
        %v7572 = vpop.f32.mrf.mxu0
        %v7573 = vadd.f32 %v6029, %v7572
        %7574 = vmatprep.mubr.bf16.mxu0 %v5725
        %7575 = vmatmul.mubr.bf16.gmra.mxu0 %v5724
        %v7576 = vpop.f32.mrf.mxu0
        %v7577 = vadd.f32 %v6025, %v7576
        %v7578 = vpop.f32.mrf.mxu0
        %v7579 = vadd.f32 %v6029, %v7578
        %v7580 = vpop.f32.mrf.mxu0
        %v7581 = vadd.f32 %v6025, %v7580
        %v7582 = vpop.f32.mrf.mxu0
        %v7583 = vadd.f32 %v6029, %v7582
        %7584 = vmatprep.mubr.bf16.mxu0 %v5728
        %7585 = vmatmul.mubr.bf16.gmra.mxu0 %v5727
        %v7586 = vpop.f32.mrf.mxu0
        %v7587 = vadd.f32 %v6025, %v7586
        %v7588 = vpop.f32.mrf.mxu0
        %v7589 = vadd.f32 %v6029, %v7588
        %v7590 = vpop.f32.mrf.mxu0
        %v7591 = vadd.f32 %v6025, %v7590
        %v7592 = vpop.f32.mrf.mxu0
        %v7593 = vadd.f32 %v6029, %v7592
        %7594 = vdwg.mxu0
        %7595 = vmatprep.subr.bf16.mxu0 %v7223
        %7596 = vmatpush1.bf16.msra.mxu0 %v7222
        %7597 = vmatprep.subr.bf16.mxu0 %v7211
        %7598 = vmatpush1.bf16.msra.mxu0 %v7210
        %7599 = vmatprep.subr.bf16.mxu0 %v7199
        %7600 = vmatpush1.bf16.msra.mxu0 %v7198
        %7601 = vmatprep.subr.bf16.mxu0 %v7187
        %7602 = vmatpush1.bf16.msra.mxu0 %v7186
        %7603 = vmatprep.subr.bf16.mxu0 %v7175
        %7604 = vmatpush1.bf16.msra.mxu0 %v7174
        %7605 = vmatprep.subr.bf16.mxu0 %v7163
        %7606 = vmatpush1.bf16.msra.mxu0 %v7162
        %7607 = vmatprep.subr.bf16.mxu0 %v7151
        %7608 = vmatpush1.bf16.msra.mxu0 %v7150
        %7609 = vmatprep.subr.bf16.mxu0 %v7139
        %7610 = vmatpush1.bf16.msra.mxu0 %v7138
        %7611 = vmatprep.subr.bf16.mxu0 0
        %7612 = vmatpush2.bf16.msra.mxu0 0
        %7613 = vmatprep.subr.bf16.mxu0 0
        %7614 = vmatpush2.bf16.msra.mxu0 0
        %7615 = vmatprep.subr.bf16.mxu0 0
        %7616 = vmatpush2.bf16.msra.mxu0 0
        %7617 = vmatprep.subr.bf16.mxu0 0
        %7618 = vmatpush2.bf16.msra.mxu0 0
        %7619 = vmatprep.subr.bf16.mxu0 0
        %7620 = vmatpush2.bf16.msra.mxu0 0
        %7621 = vmatprep.subr.bf16.mxu0 0
        %7622 = vmatpush2.bf16.msra.mxu0 0
        %7623 = vmatprep.subr.bf16.mxu0 0
        %7624 = vmatpush2.bf16.msra.mxu0 0
        %7625 = vmatprep.subr.bf16.mxu0 0
        %7626 = vmatpush2.bf16.msra.mxu0 0
        %7627 = vmatprep.mubr.bf16.mxu0 0
        %7628 = vmatmul.mubr.bf16.gmra.mxu0 %v5720
        %v7629 = vpop.f32.mrf.mxu0
        %v7630 = vadd.f32 %v7557, %v7629
        %v7631 = vpop.f32.mrf.mxu0
        %v7632 = vadd.f32 %v7559, %v7631
        %v7633 = vpop.f32.mrf.mxu0
        %v7634 = vadd.f32 %v7561, %v7633
        %v7635 = vpop.f32.mrf.mxu0
        %v7636 = vadd.f32 %v7563, %v7635
        %7637 = vmatprep.mubr.bf16.mxu0 0
        %7638 = vmatmul.mubr.bf16.gmra.mxu0 %v5723
        %v7639 = vpop.f32.mrf.mxu0
        %v7640 = vadd.f32 %v7567, %v7639
        %v7641 = vpop.f32.mrf.mxu0
        %v7642 = vadd.f32 %v7569, %v7641
        %v7643 = vpop.f32.mrf.mxu0
        %v7644 = vadd.f32 %v7571, %v7643
        %v7645 = vpop.f32.mrf.mxu0
        %v7646 = vadd.f32 %v7573, %v7645
        %7647 = vmatprep.mubr.bf16.mxu0 0
        %7648 = vmatmul.mubr.bf16.gmra.mxu0 %v5726
        %v7649 = vpop.f32.mrf.mxu0
        %v7650 = vadd.f32 %v7577, %v7649
        %v7651 = vpop.f32.mrf.mxu0
        %v7652 = vadd.f32 %v7579, %v7651
        %v7653 = vpop.f32.mrf.mxu0
        %v7654 = vadd.f32 %v7581, %v7653
        %v7655 = vpop.f32.mrf.mxu0
        %v7656 = vadd.f32 %v7583, %v7655
        %7657 = vmatprep.mubr.bf16.mxu0 0
        %7658 = vmatmul.mubr.bf16.gmra.mxu0 %v5729
        %v7659 = vpop.f32.mrf.mxu0
        %v7660 = vadd.f32 %v7587, %v7659
        %v7661 = vpop.f32.mrf.mxu0
        %v7662 = vadd.f32 %v7589, %v7661
        %v7663 = vpop.f32.mrf.mxu0
        %v7664 = vadd.f32 %v7591, %v7663
        %v7665 = vpop.f32.mrf.mxu0
        %v7666 = vadd.f32 %v7593, %v7665
        %7667 = vdwg.mxu0
        %7668 = vmatprep.subr.bf16.mxu0 %v7033
        %7669 = vmatpush1.bf16.msra.mxu0 %v7032
        %7670 = vmatprep.subr.bf16.mxu0 %v7021
        %7671 = vmatpush1.bf16.msra.mxu0 %v7020
        %7672 = vmatprep.subr.bf16.mxu0 %v7009
        %7673 = vmatpush1.bf16.msra.mxu0 %v7008
        %7674 = vmatprep.subr.bf16.mxu0 %v6997
        %7675 = vmatpush1.bf16.msra.mxu0 %v6996
        %7676 = vmatprep.subr.bf16.mxu0 %v6985
        %7677 = vmatpush1.bf16.msra.mxu0 %v6984
        %7678 = vmatprep.subr.bf16.mxu0 %v6973
        %7679 = vmatpush1.bf16.msra.mxu0 %v6972
        %7680 = vmatprep.subr.bf16.mxu0 %v6961
        %7681 = vmatpush1.bf16.msra.mxu0 %v6960
        %7682 = vmatprep.subr.bf16.mxu0 %v6949
        %7683 = vmatpush1.bf16.msra.mxu0 %v6948
        %7684 = vmatprep.subr.bf16.mxu0 %v7129
        %7685 = vmatpush2.bf16.msra.mxu0 %v7128
        %7686 = vmatprep.subr.bf16.mxu0 %v7117
        %7687 = vmatpush2.bf16.msra.mxu0 %v7116
        %7688 = vmatprep.subr.bf16.mxu0 %v7105
        %7689 = vmatpush2.bf16.msra.mxu0 %v7104
        %7690 = vmatprep.subr.bf16.mxu0 %v7093
        %7691 = vmatpush2.bf16.msra.mxu0 %v7092
        %7692 = vmatprep.subr.bf16.mxu0 %v7081
        %7693 = vmatpush2.bf16.msra.mxu0 %v7080
        %7694 = vmatprep.subr.bf16.mxu0 %v7069
        %7695 = vmatpush2.bf16.msra.mxu0 %v7068
        %7696 = vmatprep.subr.bf16.mxu0 %v7057
        %7697 = vmatpush2.bf16.msra.mxu0 %v7056
        %7698 = vmatprep.subr.bf16.mxu0 %v7045
        %7699 = vmatpush2.bf16.msra.mxu0 %v7044
        %7700 = vmatprep.mubr.bf16.mxu0 %v5719
        %7701 = vmatmul.mubr.bf16.gmra.mxu0 %v5718
        %v7702 = vpop.f32.mrf.mxu0
        %v7703 = vadd.f32 %v6033, %v7702
        %v7704 = vpop.f32.mrf.mxu0
        %v7705 = vadd.f32 %v6037, %v7704
        %v7706 = vpop.f32.mrf.mxu0
        %v7707 = vadd.f32 %v6033, %v7706
        %v7708 = vpop.f32.mrf.mxu0
        %v7709 = vadd.f32 %v6037, %v7708
        %7710 = vmatprep.mubr.bf16.mxu0 %v5722
        %7711 = vmatmul.mubr.bf16.gmra.mxu0 %v5721
        %v7712 = vpop.f32.mrf.mxu0
        %v7713 = vadd.f32 %v6033, %v7712
        %v7714 = vpop.f32.mrf.mxu0
        %v7715 = vadd.f32 %v6037, %v7714
        %v7716 = vpop.f32.mrf.mxu0
        %v7717 = vadd.f32 %v6033, %v7716
        %v7718 = vpop.f32.mrf.mxu0
        %v7719 = vadd.f32 %v6037, %v7718
        %7720 = vmatprep.mubr.bf16.mxu0 %v5725
        %7721 = vmatmul.mubr.bf16.gmra.mxu0 %v5724
        %v7722 = vpop.f32.mrf.mxu0
        %v7723 = vadd.f32 %v6033, %v7722
        %v7724 = vpop.f32.mrf.mxu0
        %v7725 = vadd.f32 %v6037, %v7724
        %v7726 = vpop.f32.mrf.mxu0
        %v7727 = vadd.f32 %v6033, %v7726
        %v7728 = vpop.f32.mrf.mxu0
        %v7729 = vadd.f32 %v6037, %v7728
        %7730 = vmatprep.mubr.bf16.mxu0 %v5728
        %7731 = vmatmul.mubr.bf16.gmra.mxu0 %v5727
        %v7732 = vpop.f32.mrf.mxu0
        %v7733 = vadd.f32 %v6033, %v7732
        %v7734 = vpop.f32.mrf.mxu0
        %v7735 = vadd.f32 %v6037, %v7734
        %v7736 = vpop.f32.mrf.mxu0
        %v7737 = vadd.f32 %v6033, %v7736
        %v7738 = vpop.f32.mrf.mxu0
        %v7739 = vadd.f32 %v6037, %v7738
        %7740 = vdwg.mxu0
        %7741 = vmatprep.subr.bf16.mxu0 %v7225
        %7742 = vmatpush1.bf16.msra.mxu0 %v7224
        %7743 = vmatprep.subr.bf16.mxu0 %v7213
        %7744 = vmatpush1.bf16.msra.mxu0 %v7212
        %7745 = vmatprep.subr.bf16.mxu0 %v7201
        %7746 = vmatpush1.bf16.msra.mxu0 %v7200
        %7747 = vmatprep.subr.bf16.mxu0 %v7189
        %7748 = vmatpush1.bf16.msra.mxu0 %v7188
        %7749 = vmatprep.subr.bf16.mxu0 %v7177
        %7750 = vmatpush1.bf16.msra.mxu0 %v7176
        %7751 = vmatprep.subr.bf16.mxu0 %v7165
        %7752 = vmatpush1.bf16.msra.mxu0 %v7164
        %7753 = vmatprep.subr.bf16.mxu0 %v7153
        %7754 = vmatpush1.bf16.msra.mxu0 %v7152
        %7755 = vmatprep.subr.bf16.mxu0 %v7141
        %7756 = vmatpush1.bf16.msra.mxu0 %v7140
        %7757 = vmatprep.subr.bf16.mxu0 0
        %7758 = vmatpush2.bf16.msra.mxu0 0
        %7759 = vmatprep.subr.bf16.mxu0 0
        %7760 = vmatpush2.bf16.msra.mxu0 0
        %7761 = vmatprep.subr.bf16.mxu0 0
        %7762 = vmatpush2.bf16.msra.mxu0 0
        %7763 = vmatprep.subr.bf16.mxu0 0
        %7764 = vmatpush2.bf16.msra.mxu0 0
        %7765 = vmatprep.subr.bf16.mxu0 0
        %7766 = vmatpush2.bf16.msra.mxu0 0
        %7767 = vmatprep.subr.bf16.mxu0 0
        %7768 = vmatpush2.bf16.msra.mxu0 0
        %7769 = vmatprep.subr.bf16.mxu0 0
        %7770 = vmatpush2.bf16.msra.mxu0 0
        %7771 = vmatprep.subr.bf16.mxu0 0
        %7772 = vmatpush2.bf16.msra.mxu0 0
        %7773 = vmatprep.mubr.bf16.mxu0 0
        %7774 = vmatmul.mubr.bf16.gmra.mxu0 %v5720
        %v7775 = vpop.f32.mrf.mxu0
        %v7776 = vadd.f32 %v7703, %v7775
        %v7777 = vpop.f32.mrf.mxu0
        %v7778 = vadd.f32 %v7705, %v7777
        %v7779 = vpop.f32.mrf.mxu0
        %v7780 = vadd.f32 %v7707, %v7779
        %v7781 = vpop.f32.mrf.mxu0
        %v7782 = vadd.f32 %v7709, %v7781
        %7783 = vmatprep.mubr.bf16.mxu0 0
        %7784 = vmatmul.mubr.bf16.gmra.mxu0 %v5723
        %v7785 = vpop.f32.mrf.mxu0
        %v7786 = vadd.f32 %v7713, %v7785
        %v7787 = vpop.f32.mrf.mxu0
        %v7788 = vadd.f32 %v7715, %v7787
        %v7789 = vpop.f32.mrf.mxu0
        %v7790 = vadd.f32 %v7717, %v7789
        %v7791 = vpop.f32.mrf.mxu0
        %v7792 = vadd.f32 %v7719, %v7791
        %7793 = vmatprep.mubr.bf16.mxu0 0
        %7794 = vmatmul.mubr.bf16.gmra.mxu0 %v5726
        %v7795 = vpop.f32.mrf.mxu0
        %v7796 = vadd.f32 %v7723, %v7795
        %v7797 = vpop.f32.mrf.mxu0
        %v7798 = vadd.f32 %v7725, %v7797
        %v7799 = vpop.f32.mrf.mxu0
        %v7800 = vadd.f32 %v7727, %v7799
        %v7801 = vpop.f32.mrf.mxu0
        %v7802 = vadd.f32 %v7729, %v7801
        %7803 = vmatprep.mubr.bf16.mxu0 0
        %7804 = vmatmul.mubr.bf16.gmra.mxu0 %v5729
        %v7805 = vpop.f32.mrf.mxu0
        %v7806 = vadd.f32 %v7733, %v7805
        %v7807 = vpop.f32.mrf.mxu0
        %v7808 = vadd.f32 %v7735, %v7807
        %v7809 = vpop.f32.mrf.mxu0
        %v7810 = vadd.f32 %v7737, %v7809
        %v7811 = vpop.f32.mrf.mxu0
        %v7812 = vadd.f32 %v7739, %v7811
        %7813 = vdwg.mxu0
        %7814 = vmatprep.subr.bf16.mxu0 %v7035
        %7815 = vmatpush1.bf16.msra.mxu0 %v7034
        %7816 = vmatprep.subr.bf16.mxu0 %v7023
        %7817 = vmatpush1.bf16.msra.mxu0 %v7022
        %7818 = vmatprep.subr.bf16.mxu0 %v7011
        %7819 = vmatpush1.bf16.msra.mxu0 %v7010
        %7820 = vmatprep.subr.bf16.mxu0 %v6999
        %7821 = vmatpush1.bf16.msra.mxu0 %v6998
        %7822 = vmatprep.subr.bf16.mxu0 %v6987
        %7823 = vmatpush1.bf16.msra.mxu0 %v6986
        %7824 = vmatprep.subr.bf16.mxu0 %v6975
        %7825 = vmatpush1.bf16.msra.mxu0 %v6974
        %7826 = vmatprep.subr.bf16.mxu0 %v6963
        %7827 = vmatpush1.bf16.msra.mxu0 %v6962
        %7828 = vmatprep.subr.bf16.mxu0 %v6951
        %7829 = vmatpush1.bf16.msra.mxu0 %v6950
        %7830 = vmatprep.subr.bf16.mxu0 %v7131
        %7831 = vmatpush2.bf16.msra.mxu0 %v7130
        %7832 = vmatprep.subr.bf16.mxu0 %v7119
        %7833 = vmatpush2.bf16.msra.mxu0 %v7118
        %7834 = vmatprep.subr.bf16.mxu0 %v7107
        %7835 = vmatpush2.bf16.msra.mxu0 %v7106
        %7836 = vmatprep.subr.bf16.mxu0 %v7095
        %7837 = vmatpush2.bf16.msra.mxu0 %v7094
        %7838 = vmatprep.subr.bf16.mxu0 %v7083
        %7839 = vmatpush2.bf16.msra.mxu0 %v7082
        %7840 = vmatprep.subr.bf16.mxu0 %v7071
        %7841 = vmatpush2.bf16.msra.mxu0 %v7070
        %7842 = vmatprep.subr.bf16.mxu0 %v7059
        %7843 = vmatpush2.bf16.msra.mxu0 %v7058
        %7844 = vmatprep.subr.bf16.mxu0 %v7047
        %7845 = vmatpush2.bf16.msra.mxu0 %v7046
        %7846 = vmatprep.mubr.bf16.mxu0 %v5719
        %7847 = vmatmul.mubr.bf16.gmra.mxu0 %v5718
        %v7848 = vpop.f32.mrf.mxu0
        %v7849 = vadd.f32 %v6041, %v7848
        %v7850 = vpop.f32.mrf.mxu0
        %v7851 = vadd.f32 %v6045, %v7850
        %v7852 = vpop.f32.mrf.mxu0
        %v7853 = vadd.f32 %v6041, %v7852
        %v7854 = vpop.f32.mrf.mxu0
        %v7855 = vadd.f32 %v6045, %v7854
        %7856 = vmatprep.mubr.bf16.mxu0 %v5722
        %7857 = vmatmul.mubr.bf16.gmra.mxu0 %v5721
        %v7858 = vpop.f32.mrf.mxu0
        %v7859 = vadd.f32 %v6041, %v7858
        %v7860 = vpop.f32.mrf.mxu0
        %v7861 = vadd.f32 %v6045, %v7860
        %v7862 = vpop.f32.mrf.mxu0
        %v7863 = vadd.f32 %v6041, %v7862
        %v7864 = vpop.f32.mrf.mxu0
        %v7865 = vadd.f32 %v6045, %v7864
        %7866 = vmatprep.mubr.bf16.mxu0 %v5725
        %7867 = vmatmul.mubr.bf16.gmra.mxu0 %v5724
        %v7868 = vpop.f32.mrf.mxu0
        %v7869 = vadd.f32 %v6041, %v7868
        %v7870 = vpop.f32.mrf.mxu0
        %v7871 = vadd.f32 %v6045, %v7870
        %v7872 = vpop.f32.mrf.mxu0
        %v7873 = vadd.f32 %v6041, %v7872
        %v7874 = vpop.f32.mrf.mxu0
        %v7875 = vadd.f32 %v6045, %v7874
        %7876 = vmatprep.mubr.bf16.mxu0 %v5728
        %7877 = vmatmul.mubr.bf16.gmra.mxu0 %v5727
        %v7878 = vpop.f32.mrf.mxu0
        %v7879 = vadd.f32 %v6041, %v7878
        %v7880 = vpop.f32.mrf.mxu0
        %v7881 = vadd.f32 %v6045, %v7880
        %v7882 = vpop.f32.mrf.mxu0
        %v7883 = vadd.f32 %v6041, %v7882
        %v7884 = vpop.f32.mrf.mxu0
        %v7885 = vadd.f32 %v6045, %v7884
        %7886 = vdwg.mxu0
        %7887 = vmatprep.subr.bf16.mxu0 %v7227
        %7888 = vmatpush1.bf16.msra.mxu0 %v7226
        %7889 = vmatprep.subr.bf16.mxu0 %v7215
        %7890 = vmatpush1.bf16.msra.mxu0 %v7214
        %7891 = vmatprep.subr.bf16.mxu0 %v7203
        %7892 = vmatpush1.bf16.msra.mxu0 %v7202
        %7893 = vmatprep.subr.bf16.mxu0 %v7191
        %7894 = vmatpush1.bf16.msra.mxu0 %v7190
        %7895 = vmatprep.subr.bf16.mxu0 %v7179
        %7896 = vmatpush1.bf16.msra.mxu0 %v7178
        %7897 = vmatprep.subr.bf16.mxu0 %v7167
        %7898 = vmatpush1.bf16.msra.mxu0 %v7166
        %7899 = vmatprep.subr.bf16.mxu0 %v7155
        %7900 = vmatpush1.bf16.msra.mxu0 %v7154
        %7901 = vmatprep.subr.bf16.mxu0 %v7143
        %7902 = vmatpush1.bf16.msra.mxu0 %v7142
        %7903 = vmatprep.subr.bf16.mxu0 0
        %7904 = vmatpush2.bf16.msra.mxu0 0
        %7905 = vmatprep.subr.bf16.mxu0 0
        %7906 = vmatpush2.bf16.msra.mxu0 0
        %7907 = vmatprep.subr.bf16.mxu0 0
        %7908 = vmatpush2.bf16.msra.mxu0 0
        %7909 = vmatprep.subr.bf16.mxu0 0
        %7910 = vmatpush2.bf16.msra.mxu0 0
        %7911 = vmatprep.subr.bf16.mxu0 0
        %7912 = vmatpush2.bf16.msra.mxu0 0
        %7913 = vmatprep.subr.bf16.mxu0 0
        %7914 = vmatpush2.bf16.msra.mxu0 0
        %7915 = vmatprep.subr.bf16.mxu0 0
        %7916 = vmatpush2.bf16.msra.mxu0 0
        %7917 = vmatprep.subr.bf16.mxu0 0
        %7918 = vmatpush2.bf16.msra.mxu0 0
        %7919 = vmatprep.mubr.bf16.mxu0 0
        %7920 = vmatmul.mubr.bf16.gmra.mxu0 %v5720
        %v7921 = vpop.f32.mrf.mxu0
        %v7922 = vadd.f32 %v7849, %v7921
        %v7923 = vpop.f32.mrf.mxu0
        %v7924 = vadd.f32 %v7851, %v7923
        %v7925 = vpop.f32.mrf.mxu0
        %v7926 = vadd.f32 %v7853, %v7925
        %v7927 = vpop.f32.mrf.mxu0
        %v7928 = vadd.f32 %v7855, %v7927
        %7929 = vmatprep.mubr.bf16.mxu0 0
        %7930 = vmatmul.mubr.bf16.gmra.mxu0 %v5723
        %v7931 = vpop.f32.mrf.mxu0
        %v7932 = vadd.f32 %v7859, %v7931
        %v7933 = vpop.f32.mrf.mxu0
        %v7934 = vadd.f32 %v7861, %v7933
        %v7935 = vpop.f32.mrf.mxu0
        %v7936 = vadd.f32 %v7863, %v7935
        %v7937 = vpop.f32.mrf.mxu0
        %v7938 = vadd.f32 %v7865, %v7937
        %7939 = vmatprep.mubr.bf16.mxu0 0
        %7940 = vmatmul.mubr.bf16.gmra.mxu0 %v5726
        %v7941 = vpop.f32.mrf.mxu0
        %v7942 = vadd.f32 %v7869, %v7941
        %v7943 = vpop.f32.mrf.mxu0
        %v7944 = vadd.f32 %v7871, %v7943
        %v7945 = vpop.f32.mrf.mxu0
        %v7946 = vadd.f32 %v7873, %v7945
        %v7947 = vpop.f32.mrf.mxu0
        %v7948 = vadd.f32 %v7875, %v7947
        %7949 = vmatprep.mubr.bf16.mxu0 0
        %7950 = vmatmul.mubr.bf16.gmra.mxu0 %v5729
        %v7951 = vpop.f32.mrf.mxu0
        %v7952 = vadd.f32 %v7879, %v7951
        %v7953 = vpop.f32.mrf.mxu0
        %v7954 = vadd.f32 %v7881, %v7953
        %v7955 = vpop.f32.mrf.mxu0
        %v7956 = vadd.f32 %v7883, %v7955
        %v7957 = vpop.f32.mrf.mxu0
        %v7958 = vadd.f32 %v7885, %v7957
        %7959 = vdwg.mxu0
        %7960 = vmatprep.subr.bf16.mxu0 %v7037
        %7961 = vmatpush1.bf16.msra.mxu0 %v7036
        %7962 = vmatprep.subr.bf16.mxu0 %v7025
        %7963 = vmatpush1.bf16.msra.mxu0 %v7024
        %7964 = vmatprep.subr.bf16.mxu0 %v7013
        %7965 = vmatpush1.bf16.msra.mxu0 %v7012
        %7966 = vmatprep.subr.bf16.mxu0 %v7001
        %7967 = vmatpush1.bf16.msra.mxu0 %v7000
        %7968 = vmatprep.subr.bf16.mxu0 %v6989
        %7969 = vmatpush1.bf16.msra.mxu0 %v6988
        %7970 = vmatprep.subr.bf16.mxu0 %v6977
        %7971 = vmatpush1.bf16.msra.mxu0 %v6976
        %7972 = vmatprep.subr.bf16.mxu0 %v6965
        %7973 = vmatpush1.bf16.msra.mxu0 %v6964
        %7974 = vmatprep.subr.bf16.mxu0 %v6953
        %7975 = vmatpush1.bf16.msra.mxu0 %v6952
        %7976 = vmatprep.subr.bf16.mxu0 %v7133
        %7977 = vmatpush2.bf16.msra.mxu0 %v7132
        %7978 = vmatprep.subr.bf16.mxu0 %v7121
        %7979 = vmatpush2.bf16.msra.mxu0 %v7120
        %7980 = vmatprep.subr.bf16.mxu0 %v7109
        %7981 = vmatpush2.bf16.msra.mxu0 %v7108
        %7982 = vmatprep.subr.bf16.mxu0 %v7097
        %7983 = vmatpush2.bf16.msra.mxu0 %v7096
        %7984 = vmatprep.subr.bf16.mxu0 %v7085
        %7985 = vmatpush2.bf16.msra.mxu0 %v7084
        %7986 = vmatprep.subr.bf16.mxu0 %v7073
        %7987 = vmatpush2.bf16.msra.mxu0 %v7072
        %7988 = vmatprep.subr.bf16.mxu0 %v7061
        %7989 = vmatpush2.bf16.msra.mxu0 %v7060
        %7990 = vmatprep.subr.bf16.mxu0 %v7049
        %7991 = vmatpush2.bf16.msra.mxu0 %v7048
        %7992 = vmatprep.mubr.bf16.mxu0 %v5719
        %7993 = vmatmul.mubr.bf16.gmra.mxu0 %v5718
        %v7994 = vpop.f32.mrf.mxu0
        %v7995 = vadd.f32 %v6049, %v7994
        %v7996 = vpop.f32.mrf.mxu0
        %v7997 = vadd.f32 %v6053, %v7996
        %v7998 = vpop.f32.mrf.mxu0
        %v7999 = vadd.f32 %v6049, %v7998
        %v8000 = vpop.f32.mrf.mxu0
        %v8001 = vadd.f32 %v6053, %v8000
        %8002 = vmatprep.mubr.bf16.mxu0 %v5722
        %8003 = vmatmul.mubr.bf16.gmra.mxu0 %v5721
        %v8004 = vpop.f32.mrf.mxu0
        %v8005 = vadd.f32 %v6049, %v8004
        %v8006 = vpop.f32.mrf.mxu0
        %v8007 = vadd.f32 %v6053, %v8006
        %v8008 = vpop.f32.mrf.mxu0
        %v8009 = vadd.f32 %v6049, %v8008
        %v8010 = vpop.f32.mrf.mxu0
        %v8011 = vadd.f32 %v6053, %v8010
        %8012 = vmatprep.mubr.bf16.mxu0 %v5725
        %8013 = vmatmul.mubr.bf16.gmra.mxu0 %v5724
        %v8014 = vpop.f32.mrf.mxu0
        %v8015 = vadd.f32 %v6049, %v8014
        %v8016 = vpop.f32.mrf.mxu0
        %v8017 = vadd.f32 %v6053, %v8016
        %v8018 = vpop.f32.mrf.mxu0
        %v8019 = vadd.f32 %v6049, %v8018
        %v8020 = vpop.f32.mrf.mxu0
        %v8021 = vadd.f32 %v6053, %v8020
        %8022 = vmatprep.mubr.bf16.mxu0 %v5728
        %8023 = vmatmul.mubr.bf16.gmra.mxu0 %v5727
        %v8024 = vpop.f32.mrf.mxu0
        %v8025 = vadd.f32 %v6049, %v8024
        %v8026 = vpop.f32.mrf.mxu0
        %v8027 = vadd.f32 %v6053, %v8026
        %v8028 = vpop.f32.mrf.mxu0
        %v8029 = vadd.f32 %v6049, %v8028
        %v8030 = vpop.f32.mrf.mxu0
        %v8031 = vadd.f32 %v6053, %v8030
        %8032 = vdwg.mxu0
        %8033 = vmatprep.subr.bf16.mxu0 %v7229
        %8034 = vmatpush1.bf16.msra.mxu0 %v7228
        %8035 = vmatprep.subr.bf16.mxu0 %v7217
        %8036 = vmatpush1.bf16.msra.mxu0 %v7216
        %8037 = vmatprep.subr.bf16.mxu0 %v7205
        %8038 = vmatpush1.bf16.msra.mxu0 %v7204
        %8039 = vmatprep.subr.bf16.mxu0 %v7193
        %8040 = vmatpush1.bf16.msra.mxu0 %v7192
        %8041 = vmatprep.subr.bf16.mxu0 %v7181
        %8042 = vmatpush1.bf16.msra.mxu0 %v7180
        %8043 = vmatprep.subr.bf16.mxu0 %v7169
        %8044 = vmatpush1.bf16.msra.mxu0 %v7168
        %8045 = vmatprep.subr.bf16.mxu0 %v7157
        %8046 = vmatpush1.bf16.msra.mxu0 %v7156
        %8047 = vmatprep.subr.bf16.mxu0 %v7145
        %8048 = vmatpush1.bf16.msra.mxu0 %v7144
        %8049 = vmatprep.subr.bf16.mxu0 0
        %8050 = vmatpush2.bf16.msra.mxu0 0
        %8051 = vmatprep.subr.bf16.mxu0 0
        %8052 = vmatpush2.bf16.msra.mxu0 0
        %8053 = vmatprep.subr.bf16.mxu0 0
        %8054 = vmatpush2.bf16.msra.mxu0 0
        %8055 = vmatprep.subr.bf16.mxu0 0
        %8056 = vmatpush2.bf16.msra.mxu0 0
        %8057 = vmatprep.subr.bf16.mxu0 0
        %8058 = vmatpush2.bf16.msra.mxu0 0
        %8059 = vmatprep.subr.bf16.mxu0 0
        %8060 = vmatpush2.bf16.msra.mxu0 0
        %8061 = vmatprep.subr.bf16.mxu0 0
        %8062 = vmatpush2.bf16.msra.mxu0 0
        %8063 = vmatprep.subr.bf16.mxu0 0
        %8064 = vmatpush2.bf16.msra.mxu0 0
        %8065 = vmatprep.mubr.bf16.mxu0 0
        %8066 = vmatmul.mubr.bf16.gmra.mxu0 %v5720
        %v8067 = vpop.f32.mrf.mxu0
        %v8068 = vadd.f32 %v7995, %v8067
        %v8069 = vpop.f32.mrf.mxu0
        %v8070 = vadd.f32 %v7997, %v8069
        %v8071 = vpop.f32.mrf.mxu0
        %v8072 = vadd.f32 %v7999, %v8071
        %v8073 = vpop.f32.mrf.mxu0
        %v8074 = vadd.f32 %v8001, %v8073
        %8075 = vmatprep.mubr.bf16.mxu0 0
        %8076 = vmatmul.mubr.bf16.gmra.mxu0 %v5723
        %v8077 = vpop.f32.mrf.mxu0
        %v8078 = vadd.f32 %v8005, %v8077
        %v8079 = vpop.f32.mrf.mxu0
        %v8080 = vadd.f32 %v8007, %v8079
        %v8081 = vpop.f32.mrf.mxu0
        %v8082 = vadd.f32 %v8009, %v8081
        %v8083 = vpop.f32.mrf.mxu0
        %v8084 = vadd.f32 %v8011, %v8083
        %8085 = vmatprep.mubr.bf16.mxu0 0
        %8086 = vmatmul.mubr.bf16.gmra.mxu0 %v5726
        %v8087 = vpop.f32.mrf.mxu0
        %v8088 = vadd.f32 %v8015, %v8087
        %v8089 = vpop.f32.mrf.mxu0
        %v8090 = vadd.f32 %v8017, %v8089
        %v8091 = vpop.f32.mrf.mxu0
        %v8092 = vadd.f32 %v8019, %v8091
        %v8093 = vpop.f32.mrf.mxu0
        %v8094 = vadd.f32 %v8021, %v8093
        %8095 = vmatprep.mubr.bf16.mxu0 0
        %8096 = vmatmul.mubr.bf16.gmra.mxu0 %v5729
        %v8097 = vpop.f32.mrf.mxu0
        %v8098 = vadd.f32 %v8025, %v8097
        %v8099 = vpop.f32.mrf.mxu0
        %v8100 = vadd.f32 %v8027, %v8099
        %v8101 = vpop.f32.mrf.mxu0
        %v8102 = vadd.f32 %v8029, %v8101
        %v8103 = vpop.f32.mrf.mxu0
        %v8104 = vadd.f32 %v8031, %v8103
        %8105 = vdwg.mxu0
        %8106 = vmatprep.subr.bf16.mxu0 %v7039
        %8107 = vmatpush1.bf16.msra.mxu0 %v7038
        %8108 = vmatprep.subr.bf16.mxu0 %v7027
        %8109 = vmatpush1.bf16.msra.mxu0 %v7026
        %8110 = vmatprep.subr.bf16.mxu0 %v7015
        %8111 = vmatpush1.bf16.msra.mxu0 %v7014
        %8112 = vmatprep.subr.bf16.mxu0 %v7003
        %8113 = vmatpush1.bf16.msra.mxu0 %v7002
        %8114 = vmatprep.subr.bf16.mxu0 %v6991
        %8115 = vmatpush1.bf16.msra.mxu0 %v6990
        %8116 = vmatprep.subr.bf16.mxu0 %v6979
        %8117 = vmatpush1.bf16.msra.mxu0 %v6978
        %8118 = vmatprep.subr.bf16.mxu0 %v6967
        %8119 = vmatpush1.bf16.msra.mxu0 %v6966
        %8120 = vmatprep.subr.bf16.mxu0 %v6955
        %8121 = vmatpush1.bf16.msra.mxu0 %v6954
        %8122 = vmatprep.subr.bf16.mxu0 %v7135
        %8123 = vmatpush2.bf16.msra.mxu0 %v7134
        %8124 = vmatprep.subr.bf16.mxu0 %v7123
        %8125 = vmatpush2.bf16.msra.mxu0 %v7122
        %8126 = vmatprep.subr.bf16.mxu0 %v7111
        %8127 = vmatpush2.bf16.msra.mxu0 %v7110
        %8128 = vmatprep.subr.bf16.mxu0 %v7099
        %8129 = vmatpush2.bf16.msra.mxu0 %v7098
        %8130 = vmatprep.subr.bf16.mxu0 %v7087
        %8131 = vmatpush2.bf16.msra.mxu0 %v7086
        %8132 = vmatprep.subr.bf16.mxu0 %v7075
        %8133 = vmatpush2.bf16.msra.mxu0 %v7074
        %8134 = vmatprep.subr.bf16.mxu0 %v7063
        %8135 = vmatpush2.bf16.msra.mxu0 %v7062
        %8136 = vmatprep.subr.bf16.mxu0 %v7051
        %8137 = vmatpush2.bf16.msra.mxu0 %v7050
        %8138 = vmatprep.mubr.bf16.mxu0 %v5719
        %8139 = vmatmul.mubr.bf16.gmra.mxu0 %v5718
        %v8140 = vpop.f32.mrf.mxu0
        %v8141 = vadd.f32 %v6057, %v8140
        %v8142 = vpop.f32.mrf.mxu0
        %v8143 = vadd.f32 %v6061, %v8142
        %v8144 = vpop.f32.mrf.mxu0
        %v8145 = vadd.f32 %v6057, %v8144
        %v8146 = vpop.f32.mrf.mxu0
        %v8147 = vadd.f32 %v6061, %v8146
        %8148 = vmatprep.mubr.bf16.mxu0 %v5722
        %8149 = vmatmul.mubr.bf16.gmra.mxu0 %v5721
        %v8150 = vpop.f32.mrf.mxu0
        %v8151 = vadd.f32 %v6057, %v8150
        %v8152 = vpop.f32.mrf.mxu0
        %v8153 = vadd.f32 %v6061, %v8152
        %v8154 = vpop.f32.mrf.mxu0
        %v8155 = vadd.f32 %v6057, %v8154
        %v8156 = vpop.f32.mrf.mxu0
        %v8157 = vadd.f32 %v6061, %v8156
        %8158 = vmatprep.mubr.bf16.mxu0 %v5725
        %8159 = vmatmul.mubr.bf16.gmra.mxu0 %v5724
        %v8160 = vpop.f32.mrf.mxu0
        %v8161 = vadd.f32 %v6057, %v8160
        %v8162 = vpop.f32.mrf.mxu0
        %v8163 = vadd.f32 %v6061, %v8162
        %v8164 = vpop.f32.mrf.mxu0
        %v8165 = vadd.f32 %v6057, %v8164
        %v8166 = vpop.f32.mrf.mxu0
        %v8167 = vadd.f32 %v6061, %v8166
        %8168 = vmatprep.mubr.bf16.mxu0 %v5728
        %8169 = vmatmul.mubr.bf16.gmra.mxu0 %v5727
        %v8170 = vpop.f32.mrf.mxu0
        %v8171 = vadd.f32 %v6057, %v8170
        %v8172 = vpop.f32.mrf.mxu0
        %v8173 = vadd.f32 %v6061, %v8172
        %v8174 = vpop.f32.mrf.mxu0
        %v8175 = vadd.f32 %v6057, %v8174
        %v8176 = vpop.f32.mrf.mxu0
        %v8177 = vadd.f32 %v6061, %v8176
        %8178 = vdwg.mxu0
        %8179 = vmatprep.subr.bf16.mxu0 %v7231
        %8180 = vmatpush1.bf16.msra.mxu0 %v7230
        %8181 = vmatprep.subr.bf16.mxu0 %v7219
        %8182 = vmatpush1.bf16.msra.mxu0 %v7218
        %8183 = vmatprep.subr.bf16.mxu0 %v7207
        %8184 = vmatpush1.bf16.msra.mxu0 %v7206
        %8185 = vmatprep.subr.bf16.mxu0 %v7195
        %8186 = vmatpush1.bf16.msra.mxu0 %v7194
        %8187 = vmatprep.subr.bf16.mxu0 %v7183
        %8188 = vmatpush1.bf16.msra.mxu0 %v7182
        %8189 = vmatprep.subr.bf16.mxu0 %v7171
        %8190 = vmatpush1.bf16.msra.mxu0 %v7170
        %8191 = vmatprep.subr.bf16.mxu0 %v7159
        %8192 = vmatpush1.bf16.msra.mxu0 %v7158
        %8193 = vmatprep.subr.bf16.mxu0 %v7147
        %8194 = vmatpush1.bf16.msra.mxu0 %v7146
        %8195 = vmatprep.subr.bf16.mxu0 0
        %8196 = vmatpush2.bf16.msra.mxu0 0
        %8197 = vmatprep.subr.bf16.mxu0 0
        %8198 = vmatpush2.bf16.msra.mxu0 0
        %8199 = vmatprep.subr.bf16.mxu0 0
        %8200 = vmatpush2.bf16.msra.mxu0 0
        %8201 = vmatprep.subr.bf16.mxu0 0
        %8202 = vmatpush2.bf16.msra.mxu0 0
        %8203 = vmatprep.subr.bf16.mxu0 0
        %8204 = vmatpush2.bf16.msra.mxu0 0
        %8205 = vmatprep.subr.bf16.mxu0 0
        %8206 = vmatpush2.bf16.msra.mxu0 0
        %8207 = vmatprep.subr.bf16.mxu0 0
        %8208 = vmatpush2.bf16.msra.mxu0 0
        %8209 = vmatprep.subr.bf16.mxu0 0
        %8210 = vmatpush2.bf16.msra.mxu0 0
        %8211 = vmatprep.mubr.bf16.mxu0 0
        %8212 = vmatmul.mubr.bf16.gmra.mxu0 %v5720
        %v8213 = vpop.f32.mrf.mxu0
        %v8214 = vadd.f32 %v8141, %v8213
        %v8215 = vpop.f32.mrf.mxu0
        %v8216 = vadd.f32 %v8143, %v8215
        %v8217 = vpop.f32.mrf.mxu0
        %v8218 = vadd.f32 %v8145, %v8217
        %v8219 = vpop.f32.mrf.mxu0
        %v8220 = vadd.f32 %v8147, %v8219
        %8221 = vmatprep.mubr.bf16.mxu0 0
        %8222 = vmatmul.mubr.bf16.gmra.mxu0 %v5723
        %v8223 = vpop.f32.mrf.mxu0
        %v8224 = vadd.f32 %v8151, %v8223
        %v8225 = vpop.f32.mrf.mxu0
        %v8226 = vadd.f32 %v8153, %v8225
        %v8227 = vpop.f32.mrf.mxu0
        %v8228 = vadd.f32 %v8155, %v8227
        %v8229 = vpop.f32.mrf.mxu0
        %v8230 = vadd.f32 %v8157, %v8229
        %8231 = vmatprep.mubr.bf16.mxu0 0
        %8232 = vmatmul.mubr.bf16.gmra.mxu0 %v5726
        %v8233 = vpop.f32.mrf.mxu0
        %v8234 = vadd.f32 %v8161, %v8233
        %v8235 = vpop.f32.mrf.mxu0
        %v8236 = vadd.f32 %v8163, %v8235
        %v8237 = vpop.f32.mrf.mxu0
        %v8238 = vadd.f32 %v8165, %v8237
        %v8239 = vpop.f32.mrf.mxu0
        %v8240 = vadd.f32 %v8167, %v8239
        %8241 = vmatprep.mubr.bf16.mxu0 0
        %8242 = vmatmul.mubr.bf16.gmra.mxu0 %v5729
        %v8243 = vpop.f32.mrf.mxu0
        %v8244 = vadd.f32 %v8171, %v8243
        %v8245 = vpop.f32.mrf.mxu0
        %v8246 = vadd.f32 %v8173, %v8245
        %v8247 = vpop.f32.mrf.mxu0
        %v8248 = vadd.f32 %v8175, %v8247
        %v8249 = vpop.f32.mrf.mxu0
        %v8250 = vadd.f32 %v8177, %v8249
        %8251 = vdwg.mxu0
        %8252 = vmatprep.subr.bf16.mxu0 %v7041
        %8253 = vmatpush1.bf16.msra.mxu0 %v7040
        %8254 = vmatprep.subr.bf16.mxu0 %v7029
        %8255 = vmatpush1.bf16.msra.mxu0 %v7028
        %8256 = vmatprep.subr.bf16.mxu0 %v7017
        %8257 = vmatpush1.bf16.msra.mxu0 %v7016
        %8258 = vmatprep.subr.bf16.mxu0 %v7005
        %8259 = vmatpush1.bf16.msra.mxu0 %v7004
        %8260 = vmatprep.subr.bf16.mxu0 %v6993
        %8261 = vmatpush1.bf16.msra.mxu0 %v6992
        %8262 = vmatprep.subr.bf16.mxu0 %v6981
        %8263 = vmatpush1.bf16.msra.mxu0 %v6980
        %8264 = vmatprep.subr.bf16.mxu0 %v6969
        %8265 = vmatpush1.bf16.msra.mxu0 %v6968
        %8266 = vmatprep.subr.bf16.mxu0 %v6957
        %8267 = vmatpush1.bf16.msra.mxu0 %v6956
        %8268 = vmatprep.subr.bf16.mxu0 %v7137
        %8269 = vmatpush2.bf16.msra.mxu0 %v7136
        %8270 = vmatprep.subr.bf16.mxu0 %v7125
        %8271 = vmatpush2.bf16.msra.mxu0 %v7124
        %8272 = vmatprep.subr.bf16.mxu0 %v7113
        %8273 = vmatpush2.bf16.msra.mxu0 %v7112
        %8274 = vmatprep.subr.bf16.mxu0 %v7101
        %8275 = vmatpush2.bf16.msra.mxu0 %v7100
        %8276 = vmatprep.subr.bf16.mxu0 %v7089
        %8277 = vmatpush2.bf16.msra.mxu0 %v7088
        %8278 = vmatprep.subr.bf16.mxu0 %v7077
        %8279 = vmatpush2.bf16.msra.mxu0 %v7076
        %8280 = vmatprep.subr.bf16.mxu0 %v7065
        %8281 = vmatpush2.bf16.msra.mxu0 %v7064
        %8282 = vmatprep.subr.bf16.mxu0 %v7053
        %8283 = vmatpush2.bf16.msra.mxu0 %v7052
        %8284 = vmatprep.mubr.bf16.mxu0 %v5719
        %8285 = vmatmul.mubr.bf16.gmra.mxu0 %v5718
        %v8286 = vpop.f32.mrf.mxu0
        %v8287 = vadd.f32 %v6065, %v8286
        %v8288 = vpop.f32.mrf.mxu0
        %v8289 = vadd.f32 %v6069, %v8288
        %v8290 = vpop.f32.mrf.mxu0
        %v8291 = vadd.f32 %v6065, %v8290
        %v8292 = vpop.f32.mrf.mxu0
        %v8293 = vadd.f32 %v6069, %v8292
        %8294 = vmatprep.mubr.bf16.mxu0 %v5722
        %8295 = vmatmul.mubr.bf16.gmra.mxu0 %v5721
        %v8296 = vpop.f32.mrf.mxu0
        %v8297 = vadd.f32 %v6065, %v8296
        %v8298 = vpop.f32.mrf.mxu0
        %v8299 = vadd.f32 %v6069, %v8298
        %v8300 = vpop.f32.mrf.mxu0
        %v8301 = vadd.f32 %v6065, %v8300
        %v8302 = vpop.f32.mrf.mxu0
        %v8303 = vadd.f32 %v6069, %v8302
        %8304 = vmatprep.mubr.bf16.mxu0 %v5725
        %8305 = vmatmul.mubr.bf16.gmra.mxu0 %v5724
        %v8306 = vpop.f32.mrf.mxu0
        %v8307 = vadd.f32 %v6065, %v8306
        %v8308 = vpop.f32.mrf.mxu0
        %v8309 = vadd.f32 %v6069, %v8308
        %v8310 = vpop.f32.mrf.mxu0
        %v8311 = vadd.f32 %v6065, %v8310
        %v8312 = vpop.f32.mrf.mxu0
        %v8313 = vadd.f32 %v6069, %v8312
        %8314 = vmatprep.mubr.bf16.mxu0 %v5728
        %8315 = vmatmul.mubr.bf16.gmra.mxu0 %v5727
        %v8316 = vpop.f32.mrf.mxu0
        %v8317 = vadd.f32 %v6065, %v8316
        %v8318 = vpop.f32.mrf.mxu0
        %v8319 = vadd.f32 %v6069, %v8318
        %v8320 = vpop.f32.mrf.mxu0
        %v8321 = vadd.f32 %v6065, %v8320
        %v8322 = vpop.f32.mrf.mxu0
        %v8323 = vadd.f32 %v6069, %v8322
        %8324 = vdwg.mxu0
        %8325 = vmatprep.subr.bf16.mxu0 %v7233
        %8326 = vmatpush1.bf16.msra.mxu0 %v7232
        %8327 = vmatprep.subr.bf16.mxu0 %v7221
        %8328 = vmatpush1.bf16.msra.mxu0 %v7220
        %8329 = vmatprep.subr.bf16.mxu0 %v7209
        %8330 = vmatpush1.bf16.msra.mxu0 %v7208
        %8331 = vmatprep.subr.bf16.mxu0 %v7197
        %8332 = vmatpush1.bf16.msra.mxu0 %v7196
        %8333 = vmatprep.subr.bf16.mxu0 %v7185
        %8334 = vmatpush1.bf16.msra.mxu0 %v7184
        %8335 = vmatprep.subr.bf16.mxu0 %v7173
        %8336 = vmatpush1.bf16.msra.mxu0 %v7172
        %8337 = vmatprep.subr.bf16.mxu0 %v7161
        %8338 = vmatpush1.bf16.msra.mxu0 %v7160
        %8339 = vmatprep.subr.bf16.mxu0 %v7149
        %8340 = vmatpush1.bf16.msra.mxu0 %v7148
        %8341 = vmatprep.subr.bf16.mxu0 0
        %8342 = vmatpush2.bf16.msra.mxu0 0
        %8343 = vmatprep.subr.bf16.mxu0 0
        %8344 = vmatpush2.bf16.msra.mxu0 0
        %8345 = vmatprep.subr.bf16.mxu0 0
        %8346 = vmatpush2.bf16.msra.mxu0 0
        %8347 = vmatprep.subr.bf16.mxu0 0
        %8348 = vmatpush2.bf16.msra.mxu0 0
        %8349 = vmatprep.subr.bf16.mxu0 0
        %8350 = vmatpush2.bf16.msra.mxu0 0
        %8351 = vmatprep.subr.bf16.mxu0 0
        %8352 = vmatpush2.bf16.msra.mxu0 0
        %8353 = vmatprep.subr.bf16.mxu0 0
        %8354 = vmatpush2.bf16.msra.mxu0 0
        %8355 = vmatprep.subr.bf16.mxu0 0
        %8356 = vmatpush2.bf16.msra.mxu0 0
        %8357 = vmatprep.mubr.bf16.mxu0 0
        %8358 = vmatmul.mubr.bf16.gmra.mxu0 %v5720
        %v8359 = vpop.f32.mrf.mxu0
        %v8360 = vadd.f32 %v8287, %v8359
        %v8361 = vpop.f32.mrf.mxu0
        %v8362 = vadd.f32 %v8289, %v8361
        %v8363 = vpop.f32.mrf.mxu0
        %v8364 = vadd.f32 %v8291, %v8363
        %v8365 = vpop.f32.mrf.mxu0
        %v8366 = vadd.f32 %v8293, %v8365
        %8367 = vmatprep.mubr.bf16.mxu0 0
        %8368 = vmatmul.mubr.bf16.gmra.mxu0 %v5723
        %v8369 = vpop.f32.mrf.mxu0
        %v8370 = vadd.f32 %v8297, %v8369
        %v8371 = vpop.f32.mrf.mxu0
        %v8372 = vadd.f32 %v8299, %v8371
        %v8373 = vpop.f32.mrf.mxu0
        %v8374 = vadd.f32 %v8301, %v8373
        %v8375 = vpop.f32.mrf.mxu0
        %v8376 = vadd.f32 %v8303, %v8375
        %8377 = vmatprep.mubr.bf16.mxu0 0
        %8378 = vmatmul.mubr.bf16.gmra.mxu0 %v5726
        %v8379 = vpop.f32.mrf.mxu0
        %v8380 = vadd.f32 %v8307, %v8379
        %v8381 = vpop.f32.mrf.mxu0
        %v8382 = vadd.f32 %v8309, %v8381
        %v8383 = vpop.f32.mrf.mxu0
        %v8384 = vadd.f32 %v8311, %v8383
        %v8385 = vpop.f32.mrf.mxu0
        %v8386 = vadd.f32 %v8313, %v8385
        %8387 = vmatprep.mubr.bf16.mxu0 0
        %8388 = vmatmul.mubr.bf16.gmra.mxu0 %v5729
        %v8389 = vpop.f32.mrf.mxu0
        %v8390 = vadd.f32 %v8317, %v8389
        %v8391 = vpop.f32.mrf.mxu0
        %v8392 = vadd.f32 %v8319, %v8391
        %v8393 = vpop.f32.mrf.mxu0
        %v8394 = vadd.f32 %v8321, %v8393
        %v8395 = vpop.f32.mrf.mxu0
        %v8396 = vadd.f32 %v8323, %v8395
        %8397 = vdwg.mxu0
        %v8398 = vmax.f32 %v7630, 0.0
        %v8399 = vmax.f32 %v7632, 0.0
        %v8400 = vmax.f32 %v7776, 0.0
        %v8401 = vmax.f32 %v7778, 0.0
        %v8402 = vmax.f32 %v7922, 0.0
        %v8403 = vmax.f32 %v7924, 0.0
        %v8404 = vmax.f32 %v8068, 0.0
        %v8405 = vmax.f32 %v8070, 0.0
        %v8406 = vmax.f32 %v8214, 0.0
        %v8407 = vmax.f32 %v8216, 0.0
        %v8408 = vmax.f32 %v8360, 0.0
        %v8409 = vmax.f32 %v8362, 0.0
        %v8410 = vmax.f32 %v7634, 0.0
        %v8411 = vmax.f32 %v7636, 0.0
        %v8412 = vmax.f32 %v7780, 0.0
        %v8413 = vmax.f32 %v7782, 0.0
        %v8414 = vmax.f32 %v7926, 0.0
        %v8415 = vmax.f32 %v7928, 0.0
        %v8416 = vmax.f32 %v8072, 0.0
        %v8417 = vmax.f32 %v8074, 0.0
        %v8418 = vmax.f32 %v8218, 0.0
        %v8419 = vmax.f32 %v8220, 0.0
        %v8420 = vmax.f32 %v8364, 0.0
        %v8421 = vmax.f32 %v8366, 0.0
        %v8422 = vmax.f32 %v7640, 0.0
        %v8423 = vmax.f32 %v7642, 0.0
        %v8424 = vmax.f32 %v7786, 0.0
        %v8425 = vmax.f32 %v7788, 0.0
        %v8426 = vmax.f32 %v7932, 0.0
        %v8427 = vmax.f32 %v7934, 0.0
        %v8428 = vmax.f32 %v8078, 0.0
        %v8429 = vmax.f32 %v8080, 0.0
        %v8430 = vmax.f32 %v8224, 0.0
        %v8431 = vmax.f32 %v8226, 0.0
        %v8432 = vmax.f32 %v8370, 0.0
        %v8433 = vmax.f32 %v8372, 0.0
        %v8434 = vmax.f32 %v7644, 0.0
        %v8435 = vmax.f32 %v7646, 0.0
        %v8436 = vmax.f32 %v7790, 0.0
        %v8437 = vmax.f32 %v7792, 0.0
        %v8438 = vmax.f32 %v7936, 0.0
        %v8439 = vmax.f32 %v7938, 0.0
        %v8440 = vmax.f32 %v8082, 0.0
        %v8441 = vmax.f32 %v8084, 0.0
        %v8442 = vmax.f32 %v8228, 0.0
        %v8443 = vmax.f32 %v8230, 0.0
        %v8444 = vmax.f32 %v8374, 0.0
        %v8445 = vmax.f32 %v8376, 0.0
        %v8446 = vmax.f32 %v7650, 0.0
        %v8447 = vmax.f32 %v7652, 0.0
        %v8448 = vmax.f32 %v7796, 0.0
        %v8449 = vmax.f32 %v7798, 0.0
        %v8450 = vmax.f32 %v7942, 0.0
        %v8451 = vmax.f32 %v7944, 0.0
        %v8452 = vmax.f32 %v8088, 0.0
        %v8453 = vmax.f32 %v8090, 0.0
        %v8454 = vmax.f32 %v8234, 0.0
        %v8455 = vmax.f32 %v8236, 0.0
        %v8456 = vmax.f32 %v8380, 0.0
        %v8457 = vmax.f32 %v8382, 0.0
        %v8458 = vmax.f32 %v7654, 0.0
        %v8459 = vmax.f32 %v7656, 0.0
        %v8460 = vmax.f32 %v7800, 0.0
        %v8461 = vmax.f32 %v7802, 0.0
        %v8462 = vmax.f32 %v7946, 0.0
        %v8463 = vmax.f32 %v7948, 0.0
        %v8464 = vmax.f32 %v8092, 0.0
        %v8465 = vmax.f32 %v8094, 0.0
        %v8466 = vmax.f32 %v8238, 0.0
        %v8467 = vmax.f32 %v8240, 0.0
        %v8468 = vmax.f32 %v8384, 0.0
        %v8469 = vmax.f32 %v8386, 0.0
        %v8470 = vmax.f32 %v7660, 0.0
        %v8471 = vmax.f32 %v7662, 0.0
        %v8472 = vmax.f32 %v7806, 0.0
        %v8473 = vmax.f32 %v7808, 0.0
        %v8474 = vmax.f32 %v7952, 0.0
        %v8475 = vmax.f32 %v7954, 0.0
        %v8476 = vmax.f32 %v8098, 0.0
        %v8477 = vmax.f32 %v8100, 0.0
        %v8478 = vmax.f32 %v8244, 0.0
        %v8479 = vmax.f32 %v8246, 0.0
        %v8480 = vmax.f32 %v8390, 0.0
        %v8481 = vmax.f32 %v8392, 0.0
        %v8482 = vmax.f32 %v7664, 0.0
        %v8483 = vmax.f32 %v7666, 0.0
        %v8484 = vmax.f32 %v7810, 0.0
        %v8485 = vmax.f32 %v7812, 0.0
        %v8486 = vmax.f32 %v7956, 0.0
        %v8487 = vmax.f32 %v7958, 0.0
        %v8488 = vmax.f32 %v8102, 0.0
        %v8489 = vmax.f32 %v8104, 0.0
        %v8490 = vmax.f32 %v8248, 0.0
        %v8491 = vmax.f32 %v8250, 0.0
        %v8492 = vmax.f32 %v8394, 0.0
        %v8493 = vmax.f32 %v8396, 0.0
        %v8494 = vpack.c.bf16 %v8410, %v8398
        %v8495 = vpack.c.bf16 %v8411, %v8399
        %v8496 = vpack.c.bf16 %v8412, %v8400
        %v8497 = vpack.c.bf16 %v8413, %v8401
        %v8498 = vpack.c.bf16 %v8414, %v8402
        %v8499 = vpack.c.bf16 %v8415, %v8403
        %v8500 = vpack.c.bf16 %v8416, %v8404
        %v8501 = vpack.c.bf16 %v8417, %v8405
        %v8502 = vpack.c.bf16 %v8418, %v8406
        %v8503 = vpack.c.bf16 %v8419, %v8407
        %v8504 = vpack.c.bf16 %v8420, %v8408
        %v8505 = vpack.c.bf16 %v8421, %v8409
        %v8506 = vpack.c.bf16 %v8434, %v8422
        %v8507 = vpack.c.bf16 %v8435, %v8423
        %v8508 = vpack.c.bf16 %v8436, %v8424
        %v8509 = vpack.c.bf16 %v8437, %v8425
        %v8510 = vpack.c.bf16 %v8438, %v8426
        %v8511 = vpack.c.bf16 %v8439, %v8427
        %v8512 = vpack.c.bf16 %v8440, %v8428
        %v8513 = vpack.c.bf16 %v8441, %v8429
        %v8514 = vpack.c.bf16 %v8442, %v8430
        %v8515 = vpack.c.bf16 %v8443, %v8431
        %v8516 = vpack.c.bf16 %v8444, %v8432
        %v8517 = vpack.c.bf16 %v8445, %v8433
        %v8518 = vpack.c.bf16 %v8458, %v8446
        %v8519 = vpack.c.bf16 %v8459, %v8447
        %v8520 = vpack.c.bf16 %v8460, %v8448
        %v8521 = vpack.c.bf16 %v8461, %v8449
        %v8522 = vpack.c.bf16 %v8462, %v8450
        %v8523 = vpack.c.bf16 %v8463, %v8451
        %v8524 = vpack.c.bf16 %v8464, %v8452
        %v8525 = vpack.c.bf16 %v8465, %v8453
        %v8526 = vpack.c.bf16 %v8466, %v8454
        %v8527 = vpack.c.bf16 %v8467, %v8455
        %v8528 = vpack.c.bf16 %v8468, %v8456
        %v8529 = vpack.c.bf16 %v8469, %v8457
        %v8530 = vpack.c.bf16 %v8482, %v8470
        %v8531 = vpack.c.bf16 %v8483, %v8471
        %v8532 = vpack.c.bf16 %v8484, %v8472
        %v8533 = vpack.c.bf16 %v8485, %v8473
        %v8534 = vpack.c.bf16 %v8486, %v8474
        %v8535 = vpack.c.bf16 %v8487, %v8475
        %v8536 = vpack.c.bf16 %v8488, %v8476
        %v8537 = vpack.c.bf16 %v8489, %v8477
        %v8538 = vpack.c.bf16 %v8490, %v8478
        %v8539 = vpack.c.bf16 %v8491, %v8479
        %v8540 = vpack.c.bf16 %v8492, %v8480
        %v8541 = vpack.c.bf16 %v8493, %v8481
        %v8542 = vld [vmem:[%s10] sm:$0xff]
        %v8543 = vld [vmem:[%s10 + $0x8] sm:$0xf]
        %v8544 = vld [vmem:[%s10 + $0xc] sm:$0xff]
        %v8545 = vld [vmem:[%s10 + $0x14] sm:$0xf]
        %v8546 = vld [vmem:[%s10 + $0x18] sm:$0xff]
        %v8547 = vld [vmem:[%s10 + $0x20] sm:$0xf]
        %v8548 = vld [vmem:[%s10 + $0x24] sm:$0xff]
        %v8549 = vld [vmem:[%s10 + $0x2c] sm:$0xf]
        %v8550 = vld [vmem:[%s10 + $0x30] sm:$0xff]
        %v8551 = vld [vmem:[%s10 + $0x38] sm:$0xf]
        %v8552 = vld [vmem:[%s10 + $0x3c] sm:$0xff]
        %v8553 = vld [vmem:[%s10 + $0x44] sm:$0xf]
        %v8554 = vld [vmem:[%s10 + $0x48] sm:$0xff]
        %v8555 = vld [vmem:[%s10 + $0x50] sm:$0xf]
        %v8556 = vld [vmem:[%s10 + $0x54] sm:$0xff]
        %v8557 = vld [vmem:[%s10 + $0x5c] sm:$0xf]
        %v8558 = vld [vmem:[%s10 + $0x60] sm:$0xff]
        %v8559 = vld [vmem:[%s10 + $0x68] sm:$0xf]
        %v8560 = vld [vmem:[%s10 + $0x6c] sm:$0xff]
        %v8561 = vld [vmem:[%s10 + $0x74] sm:$0xf]
        %v8562 = vld [vmem:[%s10 + $0x78] sm:$0xff]
        %v8563 = vld [vmem:[%s10 + $0x80] sm:$0xf]
        %v8564 = vld [vmem:[%s10 + $0x84] sm:$0xff]
        %v8565 = vld [vmem:[%s10 + $0x8c] sm:$0xf]
        %v8566 = vld [vmem:[%s10 + $0x90] sm:$0xff]
        %v8567 = vld [vmem:[%s10 + $0x98] sm:$0xf]
        %v8568 = vld [vmem:[%s10 + $0x9c] sm:$0xff]
        %v8569 = vld [vmem:[%s10 + $0xa4] sm:$0xf]
        %v8570 = vld [vmem:[%s10 + $0xa8] sm:$0xff]
        %v8571 = vld [vmem:[%s10 + $0xb0] sm:$0xf]
        %v8572 = vld [vmem:[%s10 + $0xb4] sm:$0xff]
        %v8573 = vld [vmem:[%s10 + $0xbc] sm:$0xf]
        %v8574 = vld [vmem:[%s10 + $0xc0] sm:$0xff]
        %v8575 = vld [vmem:[%s10 + $0xc8] sm:$0xf]
        %v8576 = vld [vmem:[%s10 + $0xcc] sm:$0xff]
        %v8577 = vld [vmem:[%s10 + $0xd4] sm:$0xf]
        %v8578 = vld [vmem:[%s10 + $0xd8] sm:$0xff]
        %v8579 = vld [vmem:[%s10 + $0xe0] sm:$0xf]
        %v8580 = vld [vmem:[%s10 + $0xe4] sm:$0xff]
        %v8581 = vld [vmem:[%s10 + $0xec] sm:$0xf]
        %v8582 = vld [vmem:[%s10 + $0xf0] sm:$0xff]
        %v8583 = vld [vmem:[%s10 + $0xf8] sm:$0xf]
        %v8584 = vld [vmem:[%s10 + $0xfc] sm:$0xff]
        %v8585 = vld [vmem:[%s10 + $0x104] sm:$0xf]
        %v8586 = vld [vmem:[%s10 + $0x108] sm:$0xff]
        %v8587 = vld [vmem:[%s10 + $0x110] sm:$0xf]
        %v8588 = vld [vmem:[%s10 + $0x114] sm:$0xff]
        %v8589 = vld [vmem:[%s10 + $0x11c] sm:$0xf]
        %v8590 = vld [vmem:[%s10 + $0x120] sm:$0xff]
        %v8591 = vld [vmem:[%s10 + $0x128] sm:$0xf]
        %v8592 = vld [vmem:[%s10 + $0x12c] sm:$0xff]
        %v8593 = vld [vmem:[%s10 + $0x134] sm:$0xf]
        %v8594 = vld [vmem:[%s10 + $0x138] sm:$0xff]
        %v8595 = vld [vmem:[%s10 + $0x140] sm:$0xf]
        %v8596 = vld [vmem:[%s10 + $0x144] sm:$0xff]
        %v8597 = vld [vmem:[%s10 + $0x14c] sm:$0xf]
        %v8598 = vld [vmem:[%s10 + $0x150] sm:$0xff]
        %v8599 = vld [vmem:[%s10 + $0x158] sm:$0xf]
        %v8600 = vld [vmem:[%s10 + $0x15c] sm:$0xff]
        %v8601 = vld [vmem:[%s10 + $0x164] sm:$0xf]
        %v8602 = vld [vmem:[%s10 + $0x168] sm:$0xff]
        %v8603 = vld [vmem:[%s10 + $0x170] sm:$0xf]
        %v8604 = vld [vmem:[%s10 + $0x174] sm:$0xff]
        %v8605 = vld [vmem:[%s10 + $0x17c] sm:$0xf]
        %v8606 = vld [vmem:[%s10 + $0x180] sm:$0xff]
        %v8607 = vld [vmem:[%s10 + $0x188] sm:$0xf]
        %v8608 = vld [vmem:[%s10 + $0x18c] sm:$0xff]
        %v8609 = vld [vmem:[%s10 + $0x194] sm:$0xf]
        %v8610 = vld [vmem:[%s10 + $0x198] sm:$0xff]
        %v8611 = vld [vmem:[%s10 + $0x1a0] sm:$0xf]
        %v8612 = vld [vmem:[%s10 + $0x1a4] sm:$0xff]
        %v8613 = vld [vmem:[%s10 + $0x1ac] sm:$0xf]
        %v8614 = vld [vmem:[%s10 + $0x1b0] sm:$0xff]
        %v8615 = vld [vmem:[%s10 + $0x1b8] sm:$0xf]
        %v8616 = vld [vmem:[%s10 + $0x1bc] sm:$0xff]
        %v8617 = vld [vmem:[%s10 + $0x1c4] sm:$0xf]
        %v8618 = vld [vmem:[%s10 + $0x1c8] sm:$0xff]
        %v8619 = vld [vmem:[%s10 + $0x1d0] sm:$0xf]
        %v8620 = vld [vmem:[%s10 + $0x1d4] sm:$0xff]
        %v8621 = vld [vmem:[%s10 + $0x1dc] sm:$0xf]
        %v8622 = vld [vmem:[%s10 + $0x1e0] sm:$0xff]
        %v8623 = vld [vmem:[%s10 + $0x1e8] sm:$0xf]
        %v8624 = vld [vmem:[%s10 + $0x1ec] sm:$0xff]
        %v8625 = vld [vmem:[%s10 + $0x1f4] sm:$0xf]
        %v8626 = vld [vmem:[%s10 + $0x1f8] sm:$0xff]
        %v8627 = vld [vmem:[%s10 + $0x200] sm:$0xf]
        %v8628 = vld [vmem:[%s10 + $0x204] sm:$0xff]
        %v8629 = vld [vmem:[%s10 + $0x20c] sm:$0xf]
        %v8630 = vld [vmem:[%s10 + $0x210] sm:$0xff]
        %v8631 = vld [vmem:[%s10 + $0x218] sm:$0xf]
        %v8632 = vld [vmem:[%s10 + $0x21c] sm:$0xff]
        %v8633 = vld [vmem:[%s10 + $0x224] sm:$0xf]
        %v8634 = vld [vmem:[%s10 + $0x228] sm:$0xff]
        %v8635 = vld [vmem:[%s10 + $0x230] sm:$0xf]
        %v8636 = vld [vmem:[%s10 + $0x234] sm:$0xff]
        %v8637 = vld [vmem:[%s10 + $0x23c] sm:$0xf]
        %v8638 = vld [vmem:[%s10 + $0x240] sm:$0xff]
        %v8639 = vld [vmem:[%s10 + $0x248] sm:$0xf]
        %v8640 = vld [vmem:[%s10 + $0x24c] sm:$0xff]
        %v8641 = vld [vmem:[%s10 + $0x254] sm:$0xf]
        %v8642 = vld [vmem:[%s10 + $0x258] sm:$0xff]
        %v8643 = vld [vmem:[%s10 + $0x260] sm:$0xf]
        %v8644 = vld [vmem:[%s10 + $0x264] sm:$0xff]
        %v8645 = vld [vmem:[%s10 + $0x26c] sm:$0xf]
        %v8646 = vld [vmem:[%s10 + $0x270] sm:$0xff]
        %v8647 = vld [vmem:[%s10 + $0x278] sm:$0xf]
        %v8648 = vld [vmem:[%s10 + $0x27c] sm:$0xff]
        %v8649 = vld [vmem:[%s10 + $0x284] sm:$0xf]
        %v8650 = vld [vmem:[%s10 + $0x288] sm:$0xff]
        %v8651 = vld [vmem:[%s10 + $0x290] sm:$0xf]
        %v8652 = vld [vmem:[%s10 + $0x294] sm:$0xff]
        %v8653 = vld [vmem:[%s10 + $0x29c] sm:$0xf]
        %v8654 = vld [vmem:[%s10 + $0x2a0] sm:$0xff]
        %v8655 = vld [vmem:[%s10 + $0x2a8] sm:$0xf]
        %v8656 = vld [vmem:[%s10 + $0x2ac] sm:$0xff]
        %v8657 = vld [vmem:[%s10 + $0x2b4] sm:$0xf]
        %v8658 = vld [vmem:[%s10 + $0x2b8] sm:$0xff]
        %v8659 = vld [vmem:[%s10 + $0x2c0] sm:$0xf]
        %v8660 = vld [vmem:[%s10 + $0x2c4] sm:$0xff]
        %v8661 = vld [vmem:[%s10 + $0x2cc] sm:$0xf]
        %v8662 = vld [vmem:[%s10 + $0x2d0] sm:$0xff]
        %v8663 = vld [vmem:[%s10 + $0x2d8] sm:$0xf]
        %v8664 = vld [vmem:[%s10 + $0x2dc] sm:$0xff]
        %v8665 = vld [vmem:[%s10 + $0x2e4] sm:$0xf]
        %v8666 = vld [vmem:[%s10 + $0x2e8] sm:$0xff]
        %v8667 = vld [vmem:[%s10 + $0x2f0] sm:$0xf]
        %v8668 = vld [vmem:[%s10 + $0x2f4] sm:$0xff]
        %v8669 = vld [vmem:[%s10 + $0x2fc] sm:$0xf]
        %v8670 = vld [vmem:[%s10 + $0x300] sm:$0xff]
        %v8671 = vld [vmem:[%s10 + $0x308] sm:$0xf]
        %v8672 = vld [vmem:[%s10 + $0x30c] sm:$0xff]
        %v8673 = vld [vmem:[%s10 + $0x314] sm:$0xf]
        %v8674 = vld [vmem:[%s10 + $0x318] sm:$0xff]
        %v8675 = vld [vmem:[%s10 + $0x320] sm:$0xf]
        %v8676 = vld [vmem:[%s10 + $0x324] sm:$0xff]
        %v8677 = vld [vmem:[%s10 + $0x32c] sm:$0xf]
        %v8678 = vld [vmem:[%s10 + $0x330] sm:$0xff]
        %v8679 = vld [vmem:[%s10 + $0x338] sm:$0xf]
        %v8680 = vld [vmem:[%s10 + $0x33c] sm:$0xff]
        %v8681 = vld [vmem:[%s10 + $0x344] sm:$0xf]
        %v8682 = vld [vmem:[%s10 + $0x348] sm:$0xff]
        %v8683 = vld [vmem:[%s10 + $0x350] sm:$0xf]
        %v8684 = vld [vmem:[%s10 + $0x354] sm:$0xff]
        %v8685 = vld [vmem:[%s10 + $0x35c] sm:$0xf]
        %v8686 = vld [vmem:[%s10 + $0x360] sm:$0xff]
        %v8687 = vld [vmem:[%s10 + $0x368] sm:$0xf]
        %v8688 = vld [vmem:[%s10 + $0x36c] sm:$0xff]
        %v8689 = vld [vmem:[%s10 + $0x374] sm:$0xf]
        %v8690 = vld [vmem:[%s10 + $0x378] sm:$0xff]
        %v8691 = vld [vmem:[%s10 + $0x380] sm:$0xf]
        %v8692 = vld [vmem:[%s10 + $0x384] sm:$0xff]
        %v8693 = vld [vmem:[%s10 + $0x38c] sm:$0xf]
        %v8694 = vld [vmem:[%s10 + $0x390] sm:$0xff]
        %v8695 = vld [vmem:[%s10 + $0x398] sm:$0xf]
        %v8696 = vld [vmem:[%s10 + $0x39c] sm:$0xff]
        %v8697 = vld [vmem:[%s10 + $0x3a4] sm:$0xf]
        %v8698 = vld [vmem:[%s10 + $0x3a8] sm:$0xff]
        %v8699 = vld [vmem:[%s10 + $0x3b0] sm:$0xf]
        %v8700 = vld [vmem:[%s10 + $0x3b4] sm:$0xff]
        %v8701 = vld [vmem:[%s10 + $0x3bc] sm:$0xf]
        %v8702 = vld [vmem:[%s10 + $0x3c0] sm:$0xff]
        %v8703 = vld [vmem:[%s10 + $0x3c8] sm:$0xf]
        %v8704 = vld [vmem:[%s10 + $0x3cc] sm:$0xff]
        %v8705 = vld [vmem:[%s10 + $0x3d4] sm:$0xf]
        %v8706 = vld [vmem:[%s10 + $0x3d8] sm:$0xff]
        %v8707 = vld [vmem:[%s10 + $0x3e0] sm:$0xf]
        %v8708 = vld [vmem:[%s10 + $0x3e4] sm:$0xff]
        %v8709 = vld [vmem:[%s10 + $0x3ec] sm:$0xf]
        %v8710 = vld [vmem:[%s10 + $0x3f0] sm:$0xff]
        %v8711 = vld [vmem:[%s10 + $0x3f8] sm:$0xf]
        %v8712 = vld [vmem:[%s10 + $0x3fc] sm:$0xff]
        %v8713 = vld [vmem:[%s10 + $0x404] sm:$0xf]
        %v8714 = vld [vmem:[%s10 + $0x408] sm:$0xff]
        %v8715 = vld [vmem:[%s10 + $0x410] sm:$0xf]
        %v8716 = vld [vmem:[%s10 + $0x414] sm:$0xff]
        %v8717 = vld [vmem:[%s10 + $0x41c] sm:$0xf]
        %v8718 = vld [vmem:[%s10 + $0x420] sm:$0xff]
        %v8719 = vld [vmem:[%s10 + $0x428] sm:$0xf]
        %v8720 = vld [vmem:[%s10 + $0x42c] sm:$0xff]
        %v8721 = vld [vmem:[%s10 + $0x434] sm:$0xf]
        %v8722 = vld [vmem:[%s10 + $0x438] sm:$0xff]
        %v8723 = vld [vmem:[%s10 + $0x440] sm:$0xf]
        %v8724 = vld [vmem:[%s10 + $0x444] sm:$0xff]
        %v8725 = vld [vmem:[%s10 + $0x44c] sm:$0xf]
        %v8726 = vld [vmem:[%s10 + $0x450] sm:$0xff]
        %v8727 = vld [vmem:[%s10 + $0x458] sm:$0xf]
        %v8728 = vld [vmem:[%s10 + $0x45c] sm:$0xff]
        %v8729 = vld [vmem:[%s10 + $0x464] sm:$0xf]
        %v8730 = vld [vmem:[%s10 + $0x468] sm:$0xff]
        %v8731 = vld [vmem:[%s10 + $0x470] sm:$0xf]
        %v8732 = vld [vmem:[%s10 + $0x474] sm:$0xff]
        %v8733 = vld [vmem:[%s10 + $0x47c] sm:$0xf]
        %v8734 = vld [vmem:[%s10 + $0x480] sm:$0xff]
        %v8735 = vld [vmem:[%s10 + $0x488] sm:$0xf]
        %v8736 = vld [vmem:[%s10 + $0x48c] sm:$0xff]
        %v8737 = vld [vmem:[%s10 + $0x494] sm:$0xf]
        %v8738 = vld [vmem:[%s10 + $0x498] sm:$0xff]
        %v8739 = vld [vmem:[%s10 + $0x4a0] sm:$0xf]
        %v8740 = vld [vmem:[%s10 + $0x4a4] sm:$0xff]
        %v8741 = vld [vmem:[%s10 + $0x4ac] sm:$0xf]
        %v8742 = vld [vmem:[%s10 + $0x4b0] sm:$0xff]
        %v8743 = vld [vmem:[%s10 + $0x4b8] sm:$0xf]
        %v8744 = vld [vmem:[%s10 + $0x4bc] sm:$0xff]
        %v8745 = vld [vmem:[%s10 + $0x4c4] sm:$0xf]
        %v8746 = vld [vmem:[%s10 + $0x4c8] sm:$0xff]
        %v8747 = vld [vmem:[%s10 + $0x4d0] sm:$0xf]
        %v8748 = vld [vmem:[%s10 + $0x4d4] sm:$0xff]
        %v8749 = vld [vmem:[%s10 + $0x4dc] sm:$0xf]
        %v8750 = vld [vmem:[%s10 + $0x4e0] sm:$0xff]
        %v8751 = vld [vmem:[%s10 + $0x4e8] sm:$0xf]
        %v8752 = vld [vmem:[%s10 + $0x4ec] sm:$0xff]
        %v8753 = vld [vmem:[%s10 + $0x4f4] sm:$0xf]
        %v8754 = vld [vmem:[%s10 + $0x4f8] sm:$0xff]
        %v8755 = vld [vmem:[%s10 + $0x500] sm:$0xf]
        %v8756 = vld [vmem:[%s10 + $0x504] sm:$0xff]
        %v8757 = vld [vmem:[%s10 + $0x50c] sm:$0xf]
        %v8758 = vld [vmem:[%s10 + $0x510] sm:$0xff]
        %v8759 = vld [vmem:[%s10 + $0x518] sm:$0xf]
        %v8760 = vld [vmem:[%s10 + $0x51c] sm:$0xff]
        %v8761 = vld [vmem:[%s10 + $0x524] sm:$0xf]
        %v8762 = vld [vmem:[%s10 + $0x528] sm:$0xff]
        %v8763 = vld [vmem:[%s10 + $0x530] sm:$0xf]
        %v8764 = vld [vmem:[%s10 + $0x534] sm:$0xff]
        %v8765 = vld [vmem:[%s10 + $0x53c] sm:$0xf]
        %v8766 = vld [vmem:[%s10 + $0x540] sm:$0xff]
        %v8767 = vld [vmem:[%s10 + $0x548] sm:$0xf]
        %v8768 = vld [vmem:[%s10 + $0x54c] sm:$0xff]
        %v8769 = vld [vmem:[%s10 + $0x554] sm:$0xf]
        %v8770 = vld [vmem:[%s10 + $0x558] sm:$0xff]
        %v8771 = vld [vmem:[%s10 + $0x560] sm:$0xf]
        %v8772 = vld [vmem:[%s10 + $0x564] sm:$0xff]
        %v8773 = vld [vmem:[%s10 + $0x56c] sm:$0xf]
        %v8774 = vld [vmem:[%s10 + $0x570] sm:$0xff]
        %v8775 = vld [vmem:[%s10 + $0x578] sm:$0xf]
        %v8776 = vld [vmem:[%s10 + $0x57c] sm:$0xff]
        %v8777 = vld [vmem:[%s10 + $0x584] sm:$0xf]
        %v8778 = vld [vmem:[%s10 + $0x588] sm:$0xff]
        %v8779 = vld [vmem:[%s10 + $0x590] sm:$0xf]
        %v8780 = vld [vmem:[%s10 + $0x594] sm:$0xff]
        %v8781 = vld [vmem:[%s10 + $0x59c] sm:$0xf]
        %v8782 = vld [vmem:[%s10 + $0x5a0] sm:$0xff]
        %v8783 = vld [vmem:[%s10 + $0x5a8] sm:$0xf]
        %v8784 = vld [vmem:[%s10 + $0x5ac] sm:$0xff]
        %v8785 = vld [vmem:[%s10 + $0x5b4] sm:$0xf]
        %v8786 = vld [vmem:[%s10 + $0x5b8] sm:$0xff]
        %v8787 = vld [vmem:[%s10 + $0x5c0] sm:$0xf]
        %v8788 = vld [vmem:[%s10 + $0x5c4] sm:$0xff]
        %v8789 = vld [vmem:[%s10 + $0x5cc] sm:$0xf]
        %v8790 = vld [vmem:[%s10 + $0x5d0] sm:$0xff]
        %v8791 = vld [vmem:[%s10 + $0x5d8] sm:$0xf]
        %v8792 = vld [vmem:[%s10 + $0x5dc] sm:$0xff]
        %v8793 = vld [vmem:[%s10 + $0x5e4] sm:$0xf]
        %v8794 = vld [vmem:[%s10 + $0x5e8] sm:$0xff]
        %v8795 = vld [vmem:[%s10 + $0x5f0] sm:$0xf]
        %v8796 = vld [vmem:[%s10 + $0x5f4] sm:$0xff]
        %v8797 = vld [vmem:[%s10 + $0x5fc] sm:$0xf]
        %v8798 = vld [vmem:[%s10 + $0x600] sm:$0xff]
        %v8799 = vld [vmem:[%s10 + $0x608] sm:$0xf]
        %v8800 = vld [vmem:[%s10 + $0x60c] sm:$0xff]
        %v8801 = vld [vmem:[%s10 + $0x614] sm:$0xf]
        %v8802 = vld [vmem:[%s10 + $0x618] sm:$0xff]
        %v8803 = vld [vmem:[%s10 + $0x620] sm:$0xf]
        %v8804 = vld [vmem:[%s10 + $0x624] sm:$0xff]
        %v8805 = vld [vmem:[%s10 + $0x62c] sm:$0xf]
        %v8806 = vld [vmem:[%s10 + $0x630] sm:$0xff]
        %v8807 = vld [vmem:[%s10 + $0x638] sm:$0xf]
        %v8808 = vld [vmem:[%s10 + $0x63c] sm:$0xff]
        %v8809 = vld [vmem:[%s10 + $0x644] sm:$0xf]
        %v8810 = vld [vmem:[%s10 + $0x648] sm:$0xff]
        %v8811 = vld [vmem:[%s10 + $0x650] sm:$0xf]
        %v8812 = vld [vmem:[%s10 + $0x654] sm:$0xff]
        %v8813 = vld [vmem:[%s10 + $0x65c] sm:$0xf]
        %v8814 = vld [vmem:[%s10 + $0x660] sm:$0xff]
        %v8815 = vld [vmem:[%s10 + $0x668] sm:$0xf]
        %v8816 = vld [vmem:[%s10 + $0x66c] sm:$0xff]
        %v8817 = vld [vmem:[%s10 + $0x674] sm:$0xf]
        %v8818 = vld [vmem:[%s10 + $0x678] sm:$0xff]
        %v8819 = vld [vmem:[%s10 + $0x680] sm:$0xf]
        %v8820 = vld [vmem:[%s10 + $0x684] sm:$0xff]
        %v8821 = vld [vmem:[%s10 + $0x68c] sm:$0xf]
        %v8822 = vld [vmem:[%s10 + $0x690] sm:$0xff]
        %v8823 = vld [vmem:[%s10 + $0x698] sm:$0xf]
        %v8824 = vld [vmem:[%s10 + $0x69c] sm:$0xff]
        %v8825 = vld [vmem:[%s10 + $0x6a4] sm:$0xf]
        %v8826 = vld [vmem:[%s10 + $0x6a8] sm:$0xff]
        %v8827 = vld [vmem:[%s10 + $0x6b0] sm:$0xf]
        %v8828 = vld [vmem:[%s10 + $0x6b4] sm:$0xff]
        %v8829 = vld [vmem:[%s10 + $0x6bc] sm:$0xf]
        %v8830 = vld [vmem:[%s10 + $0x6c0] sm:$0xff]
        %v8831 = vld [vmem:[%s10 + $0x6c8] sm:$0xf]
        %v8832 = vld [vmem:[%s10 + $0x6cc] sm:$0xff]
        %v8833 = vld [vmem:[%s10 + $0x6d4] sm:$0xf]
        %v8834 = vld [vmem:[%s10 + $0x6d8] sm:$0xff]
        %v8835 = vld [vmem:[%s10 + $0x6e0] sm:$0xf]
        %v8836 = vld [vmem:[%s10 + $0x6e4] sm:$0xff]
        %v8837 = vld [vmem:[%s10 + $0x6ec] sm:$0xf]
        %v8838 = vld [vmem:[%s10 + $0x6f0] sm:$0xff]
        %v8839 = vld [vmem:[%s10 + $0x6f8] sm:$0xf]
        %v8840 = vld [vmem:[%s10 + $0x6fc] sm:$0xff]
        %v8841 = vld [vmem:[%s10 + $0x704] sm:$0xf]
        %v8842 = vld [vmem:[%s10 + $0x708] sm:$0xff]
        %v8843 = vld [vmem:[%s10 + $0x710] sm:$0xf]
        %v8844 = vld [vmem:[%s10 + $0x714] sm:$0xff]
        %v8845 = vld [vmem:[%s10 + $0x71c] sm:$0xf]
        %v8846 = vld [vmem:[%s10 + $0x720] sm:$0xff]
        %v8847 = vld [vmem:[%s10 + $0x728] sm:$0xf]
        %v8848 = vld [vmem:[%s10 + $0x72c] sm:$0xff]
        %v8849 = vld [vmem:[%s10 + $0x734] sm:$0xf]
        %v8850 = vld [vmem:[%s10 + $0x738] sm:$0xff]
        %v8851 = vld [vmem:[%s10 + $0x740] sm:$0xf]
        %v8852 = vld [vmem:[%s10 + $0x744] sm:$0xff]
        %v8853 = vld [vmem:[%s10 + $0x74c] sm:$0xf]
        %v8854 = vld [vmem:[%s10 + $0x750] sm:$0xff]
        %v8855 = vld [vmem:[%s10 + $0x758] sm:$0xf]
        %v8856 = vld [vmem:[%s10 + $0x75c] sm:$0xff]
        %v8857 = vld [vmem:[%s10 + $0x764] sm:$0xf]
        %v8858 = vld [vmem:[%s10 + $0x768] sm:$0xff]
        %v8859 = vld [vmem:[%s10 + $0x770] sm:$0xf]
        %v8860 = vld [vmem:[%s10 + $0x774] sm:$0xff]
        %v8861 = vld [vmem:[%s10 + $0x77c] sm:$0xf]
        %v8862 = vld [vmem:[%s10 + $0x780] sm:$0xff]
        %v8863 = vld [vmem:[%s10 + $0x788] sm:$0xf]
        %v8864 = vld [vmem:[%s10 + $0x78c] sm:$0xff]
        %v8865 = vld [vmem:[%s10 + $0x794] sm:$0xf]
        %v8866 = vld [vmem:[%s10 + $0x798] sm:$0xff]
        %v8867 = vld [vmem:[%s10 + $0x7a0] sm:$0xf]
        %v8868 = vld [vmem:[%s10 + $0x7a4] sm:$0xff]
        %v8869 = vld [vmem:[%s10 + $0x7ac] sm:$0xf]
        %v8870 = vld [vmem:[%s10 + $0x7b0] sm:$0xff]
        %v8871 = vld [vmem:[%s10 + $0x7b8] sm:$0xf]
        %v8872 = vld [vmem:[%s10 + $0x7bc] sm:$0xff]
        %v8873 = vld [vmem:[%s10 + $0x7c4] sm:$0xf]
        %v8874 = vld [vmem:[%s10 + $0x7c8] sm:$0xff]
        %v8875 = vld [vmem:[%s10 + $0x7d0] sm:$0xf]
        %v8876 = vld [vmem:[%s10 + $0x7d4] sm:$0xff]
        %v8877 = vld [vmem:[%s10 + $0x7dc] sm:$0xf]
        %v8878 = vld [vmem:[%s10 + $0x7e0] sm:$0xff]
        %v8879 = vld [vmem:[%s10 + $0x7e8] sm:$0xf]
        %v8880 = vld [vmem:[%s10 + $0x7ec] sm:$0xff]
        %v8881 = vld [vmem:[%s10 + $0x7f4] sm:$0xf]
        %v8882 = vld [vmem:[%s10 + $0x7f8] sm:$0xff]
        %v8883 = vld [vmem:[%s10 + $0x800] sm:$0xf]
        %v8884 = vld [vmem:[%s10 + $0x804] sm:$0xff]
        %v8885 = vld [vmem:[%s10 + $0x80c] sm:$0xf]
        %v8886 = vld [vmem:[%s10 + $0x810] sm:$0xff]
        %v8887 = vld [vmem:[%s10 + $0x818] sm:$0xf]
        %v8888 = vld [vmem:[%s10 + $0x81c] sm:$0xff]
        %v8889 = vld [vmem:[%s10 + $0x824] sm:$0xf]
        %v8890 = vld [vmem:[%s10 + $0x828] sm:$0xff]
        %v8891 = vld [vmem:[%s10 + $0x830] sm:$0xf]
        %v8892 = vld [vmem:[%s10 + $0x834] sm:$0xff]
        %v8893 = vld [vmem:[%s10 + $0x83c] sm:$0xf]
        %v8894 = vld [vmem:[%s10 + $0x840] sm:$0xff]
        %v8895 = vld [vmem:[%s10 + $0x848] sm:$0xf]
        %v8896 = vld [vmem:[%s10 + $0x84c] sm:$0xff]
        %v8897 = vld [vmem:[%s10 + $0x854] sm:$0xf]
        %v8898 = vld [vmem:[%s10 + $0x858] sm:$0xff]
        %v8899 = vld [vmem:[%s10 + $0x860] sm:$0xf]
        %v8900 = vld [vmem:[%s10 + $0x864] sm:$0xff]
        %v8901 = vld [vmem:[%s10 + $0x86c] sm:$0xf]
        %v8902 = vld [vmem:[%s10 + $0x870] sm:$0xff]
        %v8903 = vld [vmem:[%s10 + $0x878] sm:$0xf]
        %v8904 = vld [vmem:[%s10 + $0x87c] sm:$0xff]
        %v8905 = vld [vmem:[%s10 + $0x884] sm:$0xf]
        %v8906 = vld [vmem:[%s10 + $0x888] sm:$0xff]
        %v8907 = vld [vmem:[%s10 + $0x890] sm:$0xf]
        %v8908 = vld [vmem:[%s10 + $0x894] sm:$0xff]
        %v8909 = vld [vmem:[%s10 + $0x89c] sm:$0xf]
        %v8910 = vld [vmem:[%s10 + $0x8a0] sm:$0xff]
        %v8911 = vld [vmem:[%s10 + $0x8a8] sm:$0xf]
        %v8912 = vld [vmem:[%s10 + $0x8ac] sm:$0xff]
        %v8913 = vld [vmem:[%s10 + $0x8b4] sm:$0xf]
        %v8914 = vld [vmem:[%s10 + $0x8b8] sm:$0xff]
        %v8915 = vld [vmem:[%s10 + $0x8c0] sm:$0xf]
        %v8916 = vld [vmem:[%s10 + $0x8c4] sm:$0xff]
        %v8917 = vld [vmem:[%s10 + $0x8cc] sm:$0xf]
        %v8918 = vld [vmem:[%s10 + $0x8d0] sm:$0xff]
        %v8919 = vld [vmem:[%s10 + $0x8d8] sm:$0xf]
        %v8920 = vld [vmem:[%s10 + $0x8dc] sm:$0xff]
        %v8921 = vld [vmem:[%s10 + $0x8e4] sm:$0xf]
        %v8922 = vld [vmem:[%s10 + $0x8e8] sm:$0xff]
        %v8923 = vld [vmem:[%s10 + $0x8f0] sm:$0xf]
        %v8924 = vld [vmem:[%s10 + $0x8f4] sm:$0xff]
        %v8925 = vld [vmem:[%s10 + $0x8fc] sm:$0xf]
        %v8926 = vld [vmem:[%s11] sm:$0x7]
        %v8928 = vlaneseq
        %v8929 = vshrl.u32 %v8928, 7
        %v8930 = vsub.s32 0, %v8929
        %v8931 = vrot.slane %v8926, %v8930
        %v8932 = vlaneseq
        %v8933 = vshrl.u32 %v8932, 7
        %v8934 = vsub.s32 1, %v8933
        %v8935 = vrot.slane %v8926, %v8934
        %v8936 = vlaneseq
        %v8937 = vshrl.u32 %v8936, 7
        %v8938 = vsub.s32 2, %v8937
        %v8939 = vrot.slane %v8926, %v8938
        %v9327 = vunpack.c.l.b16 %v8542
        %v9328 = vunpack.c.h.b16 %v8542
        %v9329 = vunpack.c.l.b16 %v8543
        %v9330 = vunpack.c.l.b16 %v8544
        %v9331 = vunpack.c.h.b16 %v8544
        %v9332 = vunpack.c.l.b16 %v8545
        %v9333 = vunpack.c.l.b16 %v8546
        %v9334 = vunpack.c.h.b16 %v8546
        %v9335 = vunpack.c.l.b16 %v8547
        %v9336 = vunpack.c.l.b16 %v8548
        %v9337 = vunpack.c.h.b16 %v8548
        %v9338 = vunpack.c.l.b16 %v8549
        %v9339 = vunpack.c.l.b16 %v8550
        %v9340 = vunpack.c.h.b16 %v8550
        %v9341 = vunpack.c.l.b16 %v8551
        %v9342 = vunpack.c.l.b16 %v8552
        %v9343 = vunpack.c.h.b16 %v8552
        %v9344 = vunpack.c.l.b16 %v8553
        %v9345 = vunpack.c.l.b16 %v8554
        %v9346 = vunpack.c.h.b16 %v8554
        %v9347 = vunpack.c.l.b16 %v8555
        %v9348 = vunpack.c.l.b16 %v8556
        %v9349 = vunpack.c.h.b16 %v8556
        %v9350 = vunpack.c.l.b16 %v8557
        %v9351 = vunpack.c.l.b16 %v8558
        %v9352 = vunpack.c.h.b16 %v8558
        %v9353 = vunpack.c.l.b16 %v8559
        %v9354 = vunpack.c.l.b16 %v8560
        %v9355 = vunpack.c.h.b16 %v8560
        %v9356 = vunpack.c.l.b16 %v8561
        %v9357 = vunpack.c.l.b16 %v8562
        %v9358 = vunpack.c.h.b16 %v8562
        %v9359 = vunpack.c.l.b16 %v8563
        %v9360 = vunpack.c.l.b16 %v8564
        %v9361 = vunpack.c.h.b16 %v8564
        %v9362 = vunpack.c.l.b16 %v8565
        %v9363 = vunpack.c.l.b16 %v8566
        %v9364 = vunpack.c.h.b16 %v8566
        %v9365 = vunpack.c.l.b16 %v8567
        %v9366 = vunpack.c.l.b16 %v8568
        %v9367 = vunpack.c.h.b16 %v8568
        %v9368 = vunpack.c.l.b16 %v8569
        %v9369 = vunpack.c.l.b16 %v8570
        %v9370 = vunpack.c.h.b16 %v8570
        %v9371 = vunpack.c.l.b16 %v8571
        %v9372 = vunpack.c.l.b16 %v8572
        %v9373 = vunpack.c.h.b16 %v8572
        %v9374 = vunpack.c.l.b16 %v8573
        %v9375 = vunpack.c.l.b16 %v8574
        %v9376 = vunpack.c.h.b16 %v8574
        %v9377 = vunpack.c.l.b16 %v8575
        %v9378 = vunpack.c.l.b16 %v8576
        %v9379 = vunpack.c.h.b16 %v8576
        %v9380 = vunpack.c.l.b16 %v8577
        %v9381 = vunpack.c.l.b16 %v8578
        %v9382 = vunpack.c.h.b16 %v8578
        %v9383 = vunpack.c.l.b16 %v8579
        %v9384 = vunpack.c.l.b16 %v8580
        %v9385 = vunpack.c.h.b16 %v8580
        %v9386 = vunpack.c.l.b16 %v8581
        %v9387 = vunpack.c.l.b16 %v8582
        %v9388 = vunpack.c.h.b16 %v8582
        %v9389 = vunpack.c.l.b16 %v8583
        %v9390 = vunpack.c.l.b16 %v8584
        %v9391 = vunpack.c.h.b16 %v8584
        %v9392 = vunpack.c.l.b16 %v8585
        %v9393 = vunpack.c.l.b16 %v8586
        %v9394 = vunpack.c.h.b16 %v8586
        %v9395 = vunpack.c.l.b16 %v8587
        %v9396 = vunpack.c.l.b16 %v8588
        %v9397 = vunpack.c.h.b16 %v8588
        %v9398 = vunpack.c.l.b16 %v8589
        %v9399 = vunpack.c.l.b16 %v8590
        %v9400 = vunpack.c.h.b16 %v8590
        %v9401 = vunpack.c.l.b16 %v8591
        %v9402 = vunpack.c.l.b16 %v8592
        %v9403 = vunpack.c.h.b16 %v8592
        %v9404 = vunpack.c.l.b16 %v8593
        %v9405 = vunpack.c.l.b16 %v8594
        %v9406 = vunpack.c.h.b16 %v8594
        %v9407 = vunpack.c.l.b16 %v8595
        %v9408 = vunpack.c.l.b16 %v8596
        %v9409 = vunpack.c.h.b16 %v8596
        %v9410 = vunpack.c.l.b16 %v8597
        %v9411 = vunpack.c.l.b16 %v8598
        %v9412 = vunpack.c.h.b16 %v8598
        %v9413 = vunpack.c.l.b16 %v8599
        %v9414 = vunpack.c.l.b16 %v8600
        %v9415 = vunpack.c.h.b16 %v8600
        %v9416 = vunpack.c.l.b16 %v8601
        %v9417 = vunpack.c.l.b16 %v8602
        %v9418 = vunpack.c.h.b16 %v8602
        %v9419 = vunpack.c.l.b16 %v8603
        %v9420 = vunpack.c.l.b16 %v8604
        %v9421 = vunpack.c.h.b16 %v8604
        %v9422 = vunpack.c.l.b16 %v8605
        %v9423 = vunpack.c.l.b16 %v8606
        %v9424 = vunpack.c.h.b16 %v8606
        %v9425 = vunpack.c.l.b16 %v8607
        %v9426 = vunpack.c.l.b16 %v8608
        %v9427 = vunpack.c.h.b16 %v8608
        %v9428 = vunpack.c.l.b16 %v8609
        %v9429 = vunpack.c.l.b16 %v8610
        %v9430 = vunpack.c.h.b16 %v8610
        %v9431 = vunpack.c.l.b16 %v8611
        %v9432 = vunpack.c.l.b16 %v8612
        %v9433 = vunpack.c.h.b16 %v8612
        %v9434 = vunpack.c.l.b16 %v8613
        %v9435 = vunpack.c.l.b16 %v8614
        %v9436 = vunpack.c.h.b16 %v8614
        %v9437 = vunpack.c.l.b16 %v8615
        %v9438 = vunpack.c.l.b16 %v8616
        %v9439 = vunpack.c.h.b16 %v8616
        %v9440 = vunpack.c.l.b16 %v8617
        %v9441 = vunpack.c.l.b16 %v8618
        %v9442 = vunpack.c.h.b16 %v8618
        %v9443 = vunpack.c.l.b16 %v8619
        %v9444 = vunpack.c.l.b16 %v8620
        %v9445 = vunpack.c.h.b16 %v8620
        %v9446 = vunpack.c.l.b16 %v8621
        %v9447 = vunpack.c.l.b16 %v8622
        %v9448 = vunpack.c.h.b16 %v8622
        %v9449 = vunpack.c.l.b16 %v8623
        %v9450 = vunpack.c.l.b16 %v8624
        %v9451 = vunpack.c.h.b16 %v8624
        %v9452 = vunpack.c.l.b16 %v8625
        %v9453 = vunpack.c.l.b16 %v8626
        %v9454 = vunpack.c.h.b16 %v8626
        %v9455 = vunpack.c.l.b16 %v8627
        %v9456 = vunpack.c.l.b16 %v8628
        %v9457 = vunpack.c.h.b16 %v8628
        %v9458 = vunpack.c.l.b16 %v8629
        %v9459 = vunpack.c.l.b16 %v8630
        %v9460 = vunpack.c.h.b16 %v8630
        %v9461 = vunpack.c.l.b16 %v8631
        %v9462 = vunpack.c.l.b16 %v8632
        %v9463 = vunpack.c.h.b16 %v8632
        %v9464 = vunpack.c.l.b16 %v8633
        %v9465 = vunpack.c.l.b16 %v8634
        %v9466 = vunpack.c.h.b16 %v8634
        %v9467 = vunpack.c.l.b16 %v8635
        %v9468 = vunpack.c.l.b16 %v8636
        %v9469 = vunpack.c.h.b16 %v8636
        %v9470 = vunpack.c.l.b16 %v8637
        %v9471 = vunpack.c.l.b16 %v8638
        %v9472 = vunpack.c.h.b16 %v8638
        %v9473 = vunpack.c.l.b16 %v8639
        %v9474 = vunpack.c.l.b16 %v8640
        %v9475 = vunpack.c.h.b16 %v8640
        %v9476 = vunpack.c.l.b16 %v8641
        %v9477 = vunpack.c.l.b16 %v8642
        %v9478 = vunpack.c.h.b16 %v8642
        %v9479 = vunpack.c.l.b16 %v8643
        %v9480 = vunpack.c.l.b16 %v8644
        %v9481 = vunpack.c.h.b16 %v8644
        %v9482 = vunpack.c.l.b16 %v8645
        %v9483 = vunpack.c.l.b16 %v8646
        %v9484 = vunpack.c.h.b16 %v8646
        %v9485 = vunpack.c.l.b16 %v8647
        %v9486 = vunpack.c.l.b16 %v8648
        %v9487 = vunpack.c.h.b16 %v8648
        %v9488 = vunpack.c.l.b16 %v8649
        %v9489 = vunpack.c.l.b16 %v8650
        %v9490 = vunpack.c.h.b16 %v8650
        %v9491 = vunpack.c.l.b16 %v8651
        %v9492 = vunpack.c.l.b16 %v8652
        %v9493 = vunpack.c.h.b16 %v8652
        %v9494 = vunpack.c.l.b16 %v8653
        %v9495 = vunpack.c.l.b16 %v8654
        %v9496 = vunpack.c.h.b16 %v8654
        %v9497 = vunpack.c.l.b16 %v8655
        %v9498 = vunpack.c.l.b16 %v8656
        %v9499 = vunpack.c.h.b16 %v8656
        %v9500 = vunpack.c.l.b16 %v8657
        %v9501 = vunpack.c.l.b16 %v8658
        %v9502 = vunpack.c.h.b16 %v8658
        %v9503 = vunpack.c.l.b16 %v8659
        %v9504 = vunpack.c.l.b16 %v8660
        %v9505 = vunpack.c.h.b16 %v8660
        %v9506 = vunpack.c.l.b16 %v8661
        %v9507 = vunpack.c.l.b16 %v8662
        %v9508 = vunpack.c.h.b16 %v8662
        %v9509 = vunpack.c.l.b16 %v8663
        %v9510 = vunpack.c.l.b16 %v8664
        %v9511 = vunpack.c.h.b16 %v8664
        %v9512 = vunpack.c.l.b16 %v8665
        %v9513 = vunpack.c.l.b16 %v8666
        %v9514 = vunpack.c.h.b16 %v8666
        %v9515 = vunpack.c.l.b16 %v8667
        %v9516 = vunpack.c.l.b16 %v8668
        %v9517 = vunpack.c.h.b16 %v8668
        %v9518 = vunpack.c.l.b16 %v8669
        %v9519 = vunpack.c.l.b16 %v8670
        %v9520 = vunpack.c.h.b16 %v8670
        %v9521 = vunpack.c.l.b16 %v8671
        %v9522 = vunpack.c.l.b16 %v8672
        %v9523 = vunpack.c.h.b16 %v8672
        %v9524 = vunpack.c.l.b16 %v8673
        %v9525 = vunpack.c.l.b16 %v8674
        %v9526 = vunpack.c.h.b16 %v8674
        %v9527 = vunpack.c.l.b16 %v8675
        %v9528 = vunpack.c.l.b16 %v8676
        %v9529 = vunpack.c.h.b16 %v8676
        %v9530 = vunpack.c.l.b16 %v8677
        %v9531 = vunpack.c.l.b16 %v8678
        %v9532 = vunpack.c.h.b16 %v8678
        %v9533 = vunpack.c.l.b16 %v8679
        %v9534 = vunpack.c.l.b16 %v8680
        %v9535 = vunpack.c.h.b16 %v8680
        %v9536 = vunpack.c.l.b16 %v8681
        %v9537 = vunpack.c.l.b16 %v8682
        %v9538 = vunpack.c.h.b16 %v8682
        %v9539 = vunpack.c.l.b16 %v8683
        %v9540 = vunpack.c.l.b16 %v8684
        %v9541 = vunpack.c.h.b16 %v8684
        %v9542 = vunpack.c.l.b16 %v8685
        %v9543 = vunpack.c.l.b16 %v8686
        %v9544 = vunpack.c.h.b16 %v8686
        %v9545 = vunpack.c.l.b16 %v8687
        %v9546 = vunpack.c.l.b16 %v8688
        %v9547 = vunpack.c.h.b16 %v8688
        %v9548 = vunpack.c.l.b16 %v8689
        %v9549 = vunpack.c.l.b16 %v8690
        %v9550 = vunpack.c.h.b16 %v8690
        %v9551 = vunpack.c.l.b16 %v8691
        %v9552 = vunpack.c.l.b16 %v8692
        %v9553 = vunpack.c.h.b16 %v8692
        %v9554 = vunpack.c.l.b16 %v8693
        %v9555 = vunpack.c.l.b16 %v8694
        %v9556 = vunpack.c.h.b16 %v8694
        %v9557 = vunpack.c.l.b16 %v8695
        %v9558 = vunpack.c.l.b16 %v8696
        %v9559 = vunpack.c.h.b16 %v8696
        %v9560 = vunpack.c.l.b16 %v8697
        %v9561 = vunpack.c.l.b16 %v8698
        %v9562 = vunpack.c.h.b16 %v8698
        %v9563 = vunpack.c.l.b16 %v8699
        %v9564 = vunpack.c.l.b16 %v8700
        %v9565 = vunpack.c.h.b16 %v8700
        %v9566 = vunpack.c.l.b16 %v8701
        %v9567 = vunpack.c.l.b16 %v8702
        %v9568 = vunpack.c.h.b16 %v8702
        %v9569 = vunpack.c.l.b16 %v8703
        %v9570 = vunpack.c.l.b16 %v8704
        %v9571 = vunpack.c.h.b16 %v8704
        %v9572 = vunpack.c.l.b16 %v8705
        %v9573 = vunpack.c.l.b16 %v8706
        %v9574 = vunpack.c.h.b16 %v8706
        %v9575 = vunpack.c.l.b16 %v8707
        %v9576 = vunpack.c.l.b16 %v8708
        %v9577 = vunpack.c.h.b16 %v8708
        %v9578 = vunpack.c.l.b16 %v8709
        %v9579 = vunpack.c.l.b16 %v8710
        %v9580 = vunpack.c.h.b16 %v8710
        %v9581 = vunpack.c.l.b16 %v8711
        %v9582 = vunpack.c.l.b16 %v8712
        %v9583 = vunpack.c.h.b16 %v8712
        %v9584 = vunpack.c.l.b16 %v8713
        %v9585 = vunpack.c.l.b16 %v8714
        %v9586 = vunpack.c.h.b16 %v8714
        %v9587 = vunpack.c.l.b16 %v8715
        %v9588 = vunpack.c.l.b16 %v8716
        %v9589 = vunpack.c.h.b16 %v8716
        %v9590 = vunpack.c.l.b16 %v8717
        %v9591 = vunpack.c.l.b16 %v8718
        %v9592 = vunpack.c.h.b16 %v8718
        %v9593 = vunpack.c.l.b16 %v8719
        %v9594 = vunpack.c.l.b16 %v8720
        %v9595 = vunpack.c.h.b16 %v8720
        %v9596 = vunpack.c.l.b16 %v8721
        %v9597 = vunpack.c.l.b16 %v8722
        %v9598 = vunpack.c.h.b16 %v8722
        %v9599 = vunpack.c.l.b16 %v8723
        %v9600 = vunpack.c.l.b16 %v8724
        %v9601 = vunpack.c.h.b16 %v8724
        %v9602 = vunpack.c.l.b16 %v8725
        %v9603 = vunpack.c.l.b16 %v8726
        %v9604 = vunpack.c.h.b16 %v8726
        %v9605 = vunpack.c.l.b16 %v8727
        %v9606 = vunpack.c.l.b16 %v8728
        %v9607 = vunpack.c.h.b16 %v8728
        %v9608 = vunpack.c.l.b16 %v8729
        %v9609 = vunpack.c.l.b16 %v8730
        %v9610 = vunpack.c.h.b16 %v8730
        %v9611 = vunpack.c.l.b16 %v8731
        %v9612 = vunpack.c.l.b16 %v8732
        %v9613 = vunpack.c.h.b16 %v8732
        %v9614 = vunpack.c.l.b16 %v8733
        %v9615 = vunpack.c.l.b16 %v8734
        %v9616 = vunpack.c.h.b16 %v8734
        %v9617 = vunpack.c.l.b16 %v8735
        %v9618 = vunpack.c.l.b16 %v8736
        %v9619 = vunpack.c.h.b16 %v8736
        %v9620 = vunpack.c.l.b16 %v8737
        %v9621 = vunpack.c.l.b16 %v8738
        %v9622 = vunpack.c.h.b16 %v8738
        %v9623 = vunpack.c.l.b16 %v8739
        %v9624 = vunpack.c.l.b16 %v8740
        %v9625 = vunpack.c.h.b16 %v8740
        %v9626 = vunpack.c.l.b16 %v8741
        %v9627 = vunpack.c.l.b16 %v8742
        %v9628 = vunpack.c.h.b16 %v8742
        %v9629 = vunpack.c.l.b16 %v8743
        %v9630 = vunpack.c.l.b16 %v8744
        %v9631 = vunpack.c.h.b16 %v8744
        %v9632 = vunpack.c.l.b16 %v8745
        %v9633 = vunpack.c.l.b16 %v8746
        %v9634 = vunpack.c.h.b16 %v8746
        %v9635 = vunpack.c.l.b16 %v8747
        %v9636 = vunpack.c.l.b16 %v8748
        %v9637 = vunpack.c.h.b16 %v8748
        %v9638 = vunpack.c.l.b16 %v8749
        %v9639 = vunpack.c.l.b16 %v8750
        %v9640 = vunpack.c.h.b16 %v8750
        %v9641 = vunpack.c.l.b16 %v8751
        %v9642 = vunpack.c.l.b16 %v8752
        %v9643 = vunpack.c.h.b16 %v8752
        %v9644 = vunpack.c.l.b16 %v8753
        %v9645 = vunpack.c.l.b16 %v8754
        %v9646 = vunpack.c.h.b16 %v8754
        %v9647 = vunpack.c.l.b16 %v8755
        %v9648 = vunpack.c.l.b16 %v8756
        %v9649 = vunpack.c.h.b16 %v8756
        %v9650 = vunpack.c.l.b16 %v8757
        %v9651 = vunpack.c.l.b16 %v8758
        %v9652 = vunpack.c.h.b16 %v8758
        %v9653 = vunpack.c.l.b16 %v8759
        %v9654 = vunpack.c.l.b16 %v8760
        %v9655 = vunpack.c.h.b16 %v8760
        %v9656 = vunpack.c.l.b16 %v8761
        %v9657 = vunpack.c.l.b16 %v8762
        %v9658 = vunpack.c.h.b16 %v8762
        %v9659 = vunpack.c.l.b16 %v8763
        %v9660 = vunpack.c.l.b16 %v8764
        %v9661 = vunpack.c.h.b16 %v8764
        %v9662 = vunpack.c.l.b16 %v8765
        %v9663 = vunpack.c.l.b16 %v8766
        %v9664 = vunpack.c.h.b16 %v8766
        %v9665 = vunpack.c.l.b16 %v8767
        %v9666 = vunpack.c.l.b16 %v8768
        %v9667 = vunpack.c.h.b16 %v8768
        %v9668 = vunpack.c.l.b16 %v8769
        %v9669 = vunpack.c.l.b16 %v8770
        %v9670 = vunpack.c.h.b16 %v8770
        %v9671 = vunpack.c.l.b16 %v8771
        %v9672 = vunpack.c.l.b16 %v8772
        %v9673 = vunpack.c.h.b16 %v8772
        %v9674 = vunpack.c.l.b16 %v8773
        %v9675 = vunpack.c.l.b16 %v8774
        %v9676 = vunpack.c.h.b16 %v8774
        %v9677 = vunpack.c.l.b16 %v8775
        %v9678 = vunpack.c.l.b16 %v8776
        %v9679 = vunpack.c.h.b16 %v8776
        %v9680 = vunpack.c.l.b16 %v8777
        %v9681 = vunpack.c.l.b16 %v8778
        %v9682 = vunpack.c.h.b16 %v8778
        %v9683 = vunpack.c.l.b16 %v8779
        %v9684 = vunpack.c.l.b16 %v8780
        %v9685 = vunpack.c.h.b16 %v8780
        %v9686 = vunpack.c.l.b16 %v8781
        %v9687 = vunpack.c.l.b16 %v8782
        %v9688 = vunpack.c.h.b16 %v8782
        %v9689 = vunpack.c.l.b16 %v8783
        %v9690 = vunpack.c.l.b16 %v8784
        %v9691 = vunpack.c.h.b16 %v8784
        %v9692 = vunpack.c.l.b16 %v8785
        %v9693 = vunpack.c.l.b16 %v8786
        %v9694 = vunpack.c.h.b16 %v8786
        %v9695 = vunpack.c.l.b16 %v8787
        %v9696 = vunpack.c.l.b16 %v8788
        %v9697 = vunpack.c.h.b16 %v8788
        %v9698 = vunpack.c.l.b16 %v8789
        %v9699 = vunpack.c.l.b16 %v8790
        %v9700 = vunpack.c.h.b16 %v8790
        %v9701 = vunpack.c.l.b16 %v8791
        %v9702 = vunpack.c.l.b16 %v8792
        %v9703 = vunpack.c.h.b16 %v8792
        %v9704 = vunpack.c.l.b16 %v8793
        %v9705 = vunpack.c.l.b16 %v8794
        %v9706 = vunpack.c.h.b16 %v8794
        %v9707 = vunpack.c.l.b16 %v8795
        %v9708 = vunpack.c.l.b16 %v8796
        %v9709 = vunpack.c.h.b16 %v8796
        %v9710 = vunpack.c.l.b16 %v8797
        %v9711 = vunpack.c.l.b16 %v8798
        %v9712 = vunpack.c.h.b16 %v8798
        %v9713 = vunpack.c.l.b16 %v8799
        %v9714 = vunpack.c.l.b16 %v8800
        %v9715 = vunpack.c.h.b16 %v8800
        %v9716 = vunpack.c.l.b16 %v8801
        %v9717 = vunpack.c.l.b16 %v8802
        %v9718 = vunpack.c.h.b16 %v8802
        %v9719 = vunpack.c.l.b16 %v8803
        %v9720 = vunpack.c.l.b16 %v8804
        %v9721 = vunpack.c.h.b16 %v8804
        %v9722 = vunpack.c.l.b16 %v8805
        %v9723 = vunpack.c.l.b16 %v8806
        %v9724 = vunpack.c.h.b16 %v8806
        %v9725 = vunpack.c.l.b16 %v8807
        %v9726 = vunpack.c.l.b16 %v8808
        %v9727 = vunpack.c.h.b16 %v8808
        %v9728 = vunpack.c.l.b16 %v8809
        %v9729 = vunpack.c.l.b16 %v8810
        %v9730 = vunpack.c.h.b16 %v8810
        %v9731 = vunpack.c.l.b16 %v8811
        %v9732 = vunpack.c.l.b16 %v8812
        %v9733 = vunpack.c.h.b16 %v8812
        %v9734 = vunpack.c.l.b16 %v8813
        %v9735 = vunpack.c.l.b16 %v8814
        %v9736 = vunpack.c.h.b16 %v8814
        %v9737 = vunpack.c.l.b16 %v8815
        %v9738 = vunpack.c.l.b16 %v8816
        %v9739 = vunpack.c.h.b16 %v8816
        %v9740 = vunpack.c.l.b16 %v8817
        %v9741 = vunpack.c.l.b16 %v8818
        %v9742 = vunpack.c.h.b16 %v8818
        %v9743 = vunpack.c.l.b16 %v8819
        %v9744 = vunpack.c.l.b16 %v8820
        %v9745 = vunpack.c.h.b16 %v8820
        %v9746 = vunpack.c.l.b16 %v8821
        %v9747 = vunpack.c.l.b16 %v8822
        %v9748 = vunpack.c.h.b16 %v8822
        %v9749 = vunpack.c.l.b16 %v8823
        %v9750 = vunpack.c.l.b16 %v8824
        %v9751 = vunpack.c.h.b16 %v8824
        %v9752 = vunpack.c.l.b16 %v8825
        %v9753 = vunpack.c.l.b16 %v8826
        %v9754 = vunpack.c.h.b16 %v8826
        %v9755 = vunpack.c.l.b16 %v8827
        %v9756 = vunpack.c.l.b16 %v8828
        %v9757 = vunpack.c.h.b16 %v8828
        %v9758 = vunpack.c.l.b16 %v8829
        %v9759 = vunpack.c.l.b16 %v8830
        %v9760 = vunpack.c.h.b16 %v8830
        %v9761 = vunpack.c.l.b16 %v8831
        %v9762 = vunpack.c.l.b16 %v8832
        %v9763 = vunpack.c.h.b16 %v8832
        %v9764 = vunpack.c.l.b16 %v8833
        %v9765 = vunpack.c.l.b16 %v8834
        %v9766 = vunpack.c.h.b16 %v8834
        %v9767 = vunpack.c.l.b16 %v8835
        %v9768 = vunpack.c.l.b16 %v8836
        %v9769 = vunpack.c.h.b16 %v8836
        %v9770 = vunpack.c.l.b16 %v8837
        %v9771 = vunpack.c.l.b16 %v8838
        %v9772 = vunpack.c.h.b16 %v8838
        %v9773 = vunpack.c.l.b16 %v8839
        %v9774 = vunpack.c.l.b16 %v8840
        %v9775 = vunpack.c.h.b16 %v8840
        %v9776 = vunpack.c.l.b16 %v8841
        %v9777 = vunpack.c.l.b16 %v8842
        %v9778 = vunpack.c.h.b16 %v8842
        %v9779 = vunpack.c.l.b16 %v8843
        %v9780 = vunpack.c.l.b16 %v8844
        %v9781 = vunpack.c.h.b16 %v8844
        %v9782 = vunpack.c.l.b16 %v8845
        %v9783 = vunpack.c.l.b16 %v8846
        %v9784 = vunpack.c.h.b16 %v8846
        %v9785 = vunpack.c.l.b16 %v8847
        %v9786 = vunpack.c.l.b16 %v8848
        %v9787 = vunpack.c.h.b16 %v8848
        %v9788 = vunpack.c.l.b16 %v8849
        %v9789 = vunpack.c.l.b16 %v8850
        %v9790 = vunpack.c.h.b16 %v8850
        %v9791 = vunpack.c.l.b16 %v8851
        %v9792 = vunpack.c.l.b16 %v8852
        %v9793 = vunpack.c.h.b16 %v8852
        %v9794 = vunpack.c.l.b16 %v8853
        %v9795 = vunpack.c.l.b16 %v8854
        %v9796 = vunpack.c.h.b16 %v8854
        %v9797 = vunpack.c.l.b16 %v8855
        %v9798 = vunpack.c.l.b16 %v8856
        %v9799 = vunpack.c.h.b16 %v8856
        %v9800 = vunpack.c.l.b16 %v8857
        %v9801 = vunpack.c.l.b16 %v8858
        %v9802 = vunpack.c.h.b16 %v8858
        %v9803 = vunpack.c.l.b16 %v8859
        %v9804 = vunpack.c.l.b16 %v8860
        %v9805 = vunpack.c.h.b16 %v8860
        %v9806 = vunpack.c.l.b16 %v8861
        %v9807 = vunpack.c.l.b16 %v8862
        %v9808 = vunpack.c.h.b16 %v8862
        %v9809 = vunpack.c.l.b16 %v8863
        %v9810 = vunpack.c.l.b16 %v8864
        %v9811 = vunpack.c.h.b16 %v8864
        %v9812 = vunpack.c.l.b16 %v8865
        %v9813 = vunpack.c.l.b16 %v8866
        %v9814 = vunpack.c.h.b16 %v8866
        %v9815 = vunpack.c.l.b16 %v8867
        %v9816 = vunpack.c.l.b16 %v8868
        %v9817 = vunpack.c.h.b16 %v8868
        %v9818 = vunpack.c.l.b16 %v8869
        %v9819 = vunpack.c.l.b16 %v8870
        %v9820 = vunpack.c.h.b16 %v8870
        %v9821 = vunpack.c.l.b16 %v8871
        %v9822 = vunpack.c.l.b16 %v8872
        %v9823 = vunpack.c.h.b16 %v8872
        %v9824 = vunpack.c.l.b16 %v8873
        %v9825 = vunpack.c.l.b16 %v8874
        %v9826 = vunpack.c.h.b16 %v8874
        %v9827 = vunpack.c.l.b16 %v8875
        %v9828 = vunpack.c.l.b16 %v8876
        %v9829 = vunpack.c.h.b16 %v8876
        %v9830 = vunpack.c.l.b16 %v8877
        %v9831 = vunpack.c.l.b16 %v8878
        %v9832 = vunpack.c.h.b16 %v8878
        %v9833 = vunpack.c.l.b16 %v8879
        %v9834 = vunpack.c.l.b16 %v8880
        %v9835 = vunpack.c.h.b16 %v8880
        %v9836 = vunpack.c.l.b16 %v8881
        %v9837 = vunpack.c.l.b16 %v8882
        %v9838 = vunpack.c.h.b16 %v8882
        %v9839 = vunpack.c.l.b16 %v8883
        %v9840 = vunpack.c.l.b16 %v8884
        %v9841 = vunpack.c.h.b16 %v8884
        %v9842 = vunpack.c.l.b16 %v8885
        %v9843 = vunpack.c.l.b16 %v8886
        %v9844 = vunpack.c.h.b16 %v8886
        %v9845 = vunpack.c.l.b16 %v8887
        %v9846 = vunpack.c.l.b16 %v8888
        %v9847 = vunpack.c.h.b16 %v8888
        %v9848 = vunpack.c.l.b16 %v8889
        %v9849 = vunpack.c.l.b16 %v8890
        %v9850 = vunpack.c.h.b16 %v8890
        %v9851 = vunpack.c.l.b16 %v8891
        %v9852 = vunpack.c.l.b16 %v8892
        %v9853 = vunpack.c.h.b16 %v8892
        %v9854 = vunpack.c.l.b16 %v8893
        %v9855 = vunpack.c.l.b16 %v8894
        %v9856 = vunpack.c.h.b16 %v8894
        %v9857 = vunpack.c.l.b16 %v8895
        %v9858 = vunpack.c.l.b16 %v8896
        %v9859 = vunpack.c.h.b16 %v8896
        %v9860 = vunpack.c.l.b16 %v8897
        %v9861 = vunpack.c.l.b16 %v8898
        %v9862 = vunpack.c.h.b16 %v8898
        %v9863 = vunpack.c.l.b16 %v8899
        %v9864 = vunpack.c.l.b16 %v8900
        %v9865 = vunpack.c.h.b16 %v8900
        %v9866 = vunpack.c.l.b16 %v8901
        %v9867 = vunpack.c.l.b16 %v8902
        %v9868 = vunpack.c.h.b16 %v8902
        %v9869 = vunpack.c.l.b16 %v8903
        %v9870 = vunpack.c.l.b16 %v8904
        %v9871 = vunpack.c.h.b16 %v8904
        %v9872 = vunpack.c.l.b16 %v8905
        %v9873 = vunpack.c.l.b16 %v8906
        %v9874 = vunpack.c.h.b16 %v8906
        %v9875 = vunpack.c.l.b16 %v8907
        %v9876 = vunpack.c.l.b16 %v8908
        %v9877 = vunpack.c.h.b16 %v8908
        %v9878 = vunpack.c.l.b16 %v8909
        %v9879 = vunpack.c.l.b16 %v8910
        %v9880 = vunpack.c.h.b16 %v8910
        %v9881 = vunpack.c.l.b16 %v8911
        %v9882 = vunpack.c.l.b16 %v8912
        %v9883 = vunpack.c.h.b16 %v8912
        %v9884 = vunpack.c.l.b16 %v8913
        %v9885 = vunpack.c.l.b16 %v8914
        %v9886 = vunpack.c.h.b16 %v8914
        %v9887 = vunpack.c.l.b16 %v8915
        %v9888 = vunpack.c.l.b16 %v8916
        %v9889 = vunpack.c.h.b16 %v8916
        %v9890 = vunpack.c.l.b16 %v8917
        %v9891 = vunpack.c.l.b16 %v8918
        %v9892 = vunpack.c.h.b16 %v8918
        %v9893 = vunpack.c.l.b16 %v8919
        %v9894 = vunpack.c.l.b16 %v8920
        %v9895 = vunpack.c.h.b16 %v8920
        %v9896 = vunpack.c.l.b16 %v8921
        %v9897 = vunpack.c.l.b16 %v8922
        %v9898 = vunpack.c.h.b16 %v8922
        %v9899 = vunpack.c.l.b16 %v8923
        %v9900 = vunpack.c.l.b16 %v8924
        %v9901 = vunpack.c.h.b16 %v8924
        %v9902 = vunpack.c.l.b16 %v8925
        %v9903 = vpack.c.b16 %v9330, %v9327
        %v9904 = vpack.c.b16 %v9331, %v9328
        %v9905 = vpack.c.b16 %v9332, %v9329
        %v9906 = vpack.c.b16 %v9336, %v9333
        %v9907 = vpack.c.b16 %v9337, %v9334
        %v9908 = vpack.c.b16 %v9338, %v9335
        %v9909 = vpack.c.b16 %v9342, %v9339
        %v9910 = vpack.c.b16 %v9343, %v9340
        %v9911 = vpack.c.b16 %v9344, %v9341
        %v9912 = vpack.c.b16 %v9348, %v9345
        %v9913 = vpack.c.b16 %v9349, %v9346
        %v9914 = vpack.c.b16 %v9350, %v9347
        %v9915 = vpack.c.b16 %v9354, %v9351
        %v9916 = vpack.c.b16 %v9355, %v9352
        %v9917 = vpack.c.b16 %v9356, %v9353
        %v9918 = vpack.c.b16 %v9360, %v9357
        %v9919 = vpack.c.b16 %v9361, %v9358
        %v9920 = vpack.c.b16 %v9362, %v9359
        %v9921 = vpack.c.b16 %v9366, %v9363
        %v9922 = vpack.c.b16 %v9367, %v9364
        %v9923 = vpack.c.b16 %v9368, %v9365
        %v9924 = vpack.c.b16 %v9372, %v9369
        %v9925 = vpack.c.b16 %v9373, %v9370
        %v9926 = vpack.c.b16 %v9374, %v9371
        %v9927 = vpack.c.b16 %v9378, %v9375
        %v9928 = vpack.c.b16 %v9379, %v9376
        %v9929 = vpack.c.b16 %v9380, %v9377
        %v9930 = vpack.c.b16 %v9384, %v9381
        %v9931 = vpack.c.b16 %v9385, %v9382
        %v9932 = vpack.c.b16 %v9386, %v9383
        %v9933 = vpack.c.b16 %v9390, %v9387
        %v9934 = vpack.c.b16 %v9391, %v9388
        %v9935 = vpack.c.b16 %v9392, %v9389
        %v9936 = vpack.c.b16 %v9396, %v9393
        %v9937 = vpack.c.b16 %v9397, %v9394
        %v9938 = vpack.c.b16 %v9398, %v9395
        %v9939 = vpack.c.b16 %v9402, %v9399
        %v9940 = vpack.c.b16 %v9403, %v9400
        %v9941 = vpack.c.b16 %v9404, %v9401
        %v9942 = vpack.c.b16 %v9408, %v9405
        %v9943 = vpack.c.b16 %v9409, %v9406
        %v9944 = vpack.c.b16 %v9410, %v9407
        %v9945 = vpack.c.b16 %v9414, %v9411
        %v9946 = vpack.c.b16 %v9415, %v9412
        %v9947 = vpack.c.b16 %v9416, %v9413
        %v9948 = vpack.c.b16 %v9420, %v9417
        %v9949 = vpack.c.b16 %v9421, %v9418
        %v9950 = vpack.c.b16 %v9422, %v9419
        %v9951 = vpack.c.b16 %v9426, %v9423
        %v9952 = vpack.c.b16 %v9427, %v9424
        %v9953 = vpack.c.b16 %v9428, %v9425
        %v9954 = vpack.c.b16 %v9432, %v9429
        %v9955 = vpack.c.b16 %v9433, %v9430
        %v9956 = vpack.c.b16 %v9434, %v9431
        %v9957 = vpack.c.b16 %v9438, %v9435
        %v9958 = vpack.c.b16 %v9439, %v9436
        %v9959 = vpack.c.b16 %v9440, %v9437
        %v9960 = vpack.c.b16 %v9444, %v9441
        %v9961 = vpack.c.b16 %v9445, %v9442
        %v9962 = vpack.c.b16 %v9446, %v9443
        %v9963 = vpack.c.b16 %v9450, %v9447
        %v9964 = vpack.c.b16 %v9451, %v9448
        %v9965 = vpack.c.b16 %v9452, %v9449
        %v9966 = vpack.c.b16 %v9456, %v9453
        %v9967 = vpack.c.b16 %v9457, %v9454
        %v9968 = vpack.c.b16 %v9458, %v9455
        %v9969 = vpack.c.b16 %v9462, %v9459
        %v9970 = vpack.c.b16 %v9463, %v9460
        %v9971 = vpack.c.b16 %v9464, %v9461
        %v9972 = vpack.c.b16 %v9468, %v9465
        %v9973 = vpack.c.b16 %v9469, %v9466
        %v9974 = vpack.c.b16 %v9470, %v9467
        %v9975 = vpack.c.b16 %v9474, %v9471
        %v9976 = vpack.c.b16 %v9475, %v9472
        %v9977 = vpack.c.b16 %v9476, %v9473
        %v9978 = vpack.c.b16 %v9480, %v9477
        %v9979 = vpack.c.b16 %v9481, %v9478
        %v9980 = vpack.c.b16 %v9482, %v9479
        %v9981 = vpack.c.b16 %v9486, %v9483
        %v9982 = vpack.c.b16 %v9487, %v9484
        %v9983 = vpack.c.b16 %v9488, %v9485
        %v9984 = vpack.c.b16 %v9492, %v9489
        %v9985 = vpack.c.b16 %v9493, %v9490
        %v9986 = vpack.c.b16 %v9494, %v9491
        %v9987 = vpack.c.b16 %v9498, %v9495
        %v9988 = vpack.c.b16 %v9499, %v9496
        %v9989 = vpack.c.b16 %v9500, %v9497
        %v9990 = vpack.c.b16 %v9504, %v9501
        %v9991 = vpack.c.b16 %v9505, %v9502
        %v9992 = vpack.c.b16 %v9506, %v9503
        %v9993 = vpack.c.b16 %v9510, %v9507
        %v9994 = vpack.c.b16 %v9511, %v9508
        %v9995 = vpack.c.b16 %v9512, %v9509
        %v9996 = vpack.c.b16 %v9516, %v9513
        %v9997 = vpack.c.b16 %v9517, %v9514
        %v9998 = vpack.c.b16 %v9518, %v9515
        %v9999 = vpack.c.b16 %v9522, %v9519
        %v10000 = vpack.c.b16 %v9523, %v9520
        %v10001 = vpack.c.b16 %v9524, %v9521
        %v10002 = vpack.c.b16 %v9528, %v9525
        %v10003 = vpack.c.b16 %v9529, %v9526
        %v10004 = vpack.c.b16 %v9530, %v9527
        %v10005 = vpack.c.b16 %v9534, %v9531
        %v10006 = vpack.c.b16 %v9535, %v9532
        %v10007 = vpack.c.b16 %v9536, %v9533
        %v10008 = vpack.c.b16 %v9540, %v9537
        %v10009 = vpack.c.b16 %v9541, %v9538
        %v10010 = vpack.c.b16 %v9542, %v9539
        %v10011 = vpack.c.b16 %v9546, %v9543
        %v10012 = vpack.c.b16 %v9547, %v9544
        %v10013 = vpack.c.b16 %v9548, %v9545
        %v10014 = vpack.c.b16 %v9552, %v9549
        %v10015 = vpack.c.b16 %v9553, %v9550
        %v10016 = vpack.c.b16 %v9554, %v9551
        %v10017 = vpack.c.b16 %v9558, %v9555
        %v10018 = vpack.c.b16 %v9559, %v9556
        %v10019 = vpack.c.b16 %v9560, %v9557
        %v10020 = vpack.c.b16 %v9564, %v9561
        %v10021 = vpack.c.b16 %v9565, %v9562
        %v10022 = vpack.c.b16 %v9566, %v9563
        %v10023 = vpack.c.b16 %v9570, %v9567
        %v10024 = vpack.c.b16 %v9571, %v9568
        %v10025 = vpack.c.b16 %v9572, %v9569
        %v10026 = vpack.c.b16 %v9576, %v9573
        %v10027 = vpack.c.b16 %v9577, %v9574
        %v10028 = vpack.c.b16 %v9578, %v9575
        %v10029 = vpack.c.b16 %v9582, %v9579
        %v10030 = vpack.c.b16 %v9583, %v9580
        %v10031 = vpack.c.b16 %v9584, %v9581
        %v10032 = vpack.c.b16 %v9588, %v9585
        %v10033 = vpack.c.b16 %v9589, %v9586
        %v10034 = vpack.c.b16 %v9590, %v9587
        %v10035 = vpack.c.b16 %v9594, %v9591
        %v10036 = vpack.c.b16 %v9595, %v9592
        %v10037 = vpack.c.b16 %v9596, %v9593
        %v10038 = vpack.c.b16 %v9600, %v9597
        %v10039 = vpack.c.b16 %v9601, %v9598
        %v10040 = vpack.c.b16 %v9602, %v9599
        %v10041 = vpack.c.b16 %v9606, %v9603
        %v10042 = vpack.c.b16 %v9607, %v9604
        %v10043 = vpack.c.b16 %v9608, %v9605
        %v10044 = vpack.c.b16 %v9612, %v9609
        %v10045 = vpack.c.b16 %v9613, %v9610
        %v10046 = vpack.c.b16 %v9614, %v9611
        %v10047 = vpack.c.b16 %v9618, %v9615
        %v10048 = vpack.c.b16 %v9619, %v9616
        %v10049 = vpack.c.b16 %v9620, %v9617
        %v10050 = vpack.c.b16 %v9624, %v9621
        %v10051 = vpack.c.b16 %v9625, %v9622
        %v10052 = vpack.c.b16 %v9626, %v9623
        %v10053 = vpack.c.b16 %v9630, %v9627
        %v10054 = vpack.c.b16 %v9631, %v9628
        %v10055 = vpack.c.b16 %v9632, %v9629
        %v10056 = vpack.c.b16 %v9636, %v9633
        %v10057 = vpack.c.b16 %v9637, %v9634
        %v10058 = vpack.c.b16 %v9638, %v9635
        %v10059 = vpack.c.b16 %v9642, %v9639
        %v10060 = vpack.c.b16 %v9643, %v9640
        %v10061 = vpack.c.b16 %v9644, %v9641
        %v10062 = vpack.c.b16 %v9648, %v9645
        %v10063 = vpack.c.b16 %v9649, %v9646
        %v10064 = vpack.c.b16 %v9650, %v9647
        %v10065 = vpack.c.b16 %v9654, %v9651
        %v10066 = vpack.c.b16 %v9655, %v9652
        %v10067 = vpack.c.b16 %v9656, %v9653
        %v10068 = vpack.c.b16 %v9660, %v9657
        %v10069 = vpack.c.b16 %v9661, %v9658
        %v10070 = vpack.c.b16 %v9662, %v9659
        %v10071 = vpack.c.b16 %v9666, %v9663
        %v10072 = vpack.c.b16 %v9667, %v9664
        %v10073 = vpack.c.b16 %v9668, %v9665
        %v10074 = vpack.c.b16 %v9672, %v9669
        %v10075 = vpack.c.b16 %v9673, %v9670
        %v10076 = vpack.c.b16 %v9674, %v9671
        %v10077 = vpack.c.b16 %v9678, %v9675
        %v10078 = vpack.c.b16 %v9679, %v9676
        %v10079 = vpack.c.b16 %v9680, %v9677
        %v10080 = vpack.c.b16 %v9684, %v9681
        %v10081 = vpack.c.b16 %v9685, %v9682
        %v10082 = vpack.c.b16 %v9686, %v9683
        %v10083 = vpack.c.b16 %v9690, %v9687
        %v10084 = vpack.c.b16 %v9691, %v9688
        %v10085 = vpack.c.b16 %v9692, %v9689
        %v10086 = vpack.c.b16 %v9696, %v9693
        %v10087 = vpack.c.b16 %v9697, %v9694
        %v10088 = vpack.c.b16 %v9698, %v9695
        %v10089 = vpack.c.b16 %v9702, %v9699
        %v10090 = vpack.c.b16 %v9703, %v9700
        %v10091 = vpack.c.b16 %v9704, %v9701
        %v10092 = vpack.c.b16 %v9708, %v9705
        %v10093 = vpack.c.b16 %v9709, %v9706
        %v10094 = vpack.c.b16 %v9710, %v9707
        %v10095 = vpack.c.b16 %v9714, %v9711
        %v10096 = vpack.c.b16 %v9715, %v9712
        %v10097 = vpack.c.b16 %v9716, %v9713
        %v10098 = vpack.c.b16 %v9720, %v9717
        %v10099 = vpack.c.b16 %v9721, %v9718
        %v10100 = vpack.c.b16 %v9722, %v9719
        %v10101 = vpack.c.b16 %v9726, %v9723
        %v10102 = vpack.c.b16 %v9727, %v9724
        %v10103 = vpack.c.b16 %v9728, %v9725
        %v10104 = vpack.c.b16 %v9732, %v9729
        %v10105 = vpack.c.b16 %v9733, %v9730
        %v10106 = vpack.c.b16 %v9734, %v9731
        %v10107 = vpack.c.b16 %v9738, %v9735
        %v10108 = vpack.c.b16 %v9739, %v9736
        %v10109 = vpack.c.b16 %v9740, %v9737
        %v10110 = vpack.c.b16 %v9744, %v9741
        %v10111 = vpack.c.b16 %v9745, %v9742
        %v10112 = vpack.c.b16 %v9746, %v9743
        %v10113 = vpack.c.b16 %v9750, %v9747
        %v10114 = vpack.c.b16 %v9751, %v9748
        %v10115 = vpack.c.b16 %v9752, %v9749
        %v10116 = vpack.c.b16 %v9756, %v9753
        %v10117 = vpack.c.b16 %v9757, %v9754
        %v10118 = vpack.c.b16 %v9758, %v9755
        %v10119 = vpack.c.b16 %v9762, %v9759
        %v10120 = vpack.c.b16 %v9763, %v9760
        %v10121 = vpack.c.b16 %v9764, %v9761
        %v10122 = vpack.c.b16 %v9768, %v9765
        %v10123 = vpack.c.b16 %v9769, %v9766
        %v10124 = vpack.c.b16 %v9770, %v9767
        %v10125 = vpack.c.b16 %v9774, %v9771
        %v10126 = vpack.c.b16 %v9775, %v9772
        %v10127 = vpack.c.b16 %v9776, %v9773
        %v10128 = vpack.c.b16 %v9780, %v9777
        %v10129 = vpack.c.b16 %v9781, %v9778
        %v10130 = vpack.c.b16 %v9782, %v9779
        %v10131 = vpack.c.b16 %v9786, %v9783
        %v10132 = vpack.c.b16 %v9787, %v9784
        %v10133 = vpack.c.b16 %v9788, %v9785
        %v10134 = vpack.c.b16 %v9792, %v9789
        %v10135 = vpack.c.b16 %v9793, %v9790
        %v10136 = vpack.c.b16 %v9794, %v9791
        %v10137 = vpack.c.b16 %v9798, %v9795
        %v10138 = vpack.c.b16 %v9799, %v9796
        %v10139 = vpack.c.b16 %v9800, %v9797
        %v10140 = vpack.c.b16 %v9804, %v9801
        %v10141 = vpack.c.b16 %v9805, %v9802
        %v10142 = vpack.c.b16 %v9806, %v9803
        %v10143 = vpack.c.b16 %v9810, %v9807
        %v10144 = vpack.c.b16 %v9811, %v9808
        %v10145 = vpack.c.b16 %v9812, %v9809
        %v10146 = vpack.c.b16 %v9816, %v9813
        %v10147 = vpack.c.b16 %v9817, %v9814
        %v10148 = vpack.c.b16 %v9818, %v9815
        %v10149 = vpack.c.b16 %v9822, %v9819
        %v10150 = vpack.c.b16 %v9823, %v9820
        %v10151 = vpack.c.b16 %v9824, %v9821
        %v10152 = vpack.c.b16 %v9828, %v9825
        %v10153 = vpack.c.b16 %v9829, %v9826
        %v10154 = vpack.c.b16 %v9830, %v9827
        %v10155 = vpack.c.b16 %v9834, %v9831
        %v10156 = vpack.c.b16 %v9835, %v9832
        %v10157 = vpack.c.b16 %v9836, %v9833
        %v10158 = vpack.c.b16 %v9840, %v9837
        %v10159 = vpack.c.b16 %v9841, %v9838
        %v10160 = vpack.c.b16 %v9842, %v9839
        %v10161 = vpack.c.b16 %v9846, %v9843
        %v10162 = vpack.c.b16 %v9847, %v9844
        %v10163 = vpack.c.b16 %v9848, %v9845
        %v10164 = vpack.c.b16 %v9852, %v9849
        %v10165 = vpack.c.b16 %v9853, %v9850
        %v10166 = vpack.c.b16 %v9854, %v9851
        %v10167 = vpack.c.b16 %v9858, %v9855
        %v10168 = vpack.c.b16 %v9859, %v9856
        %v10169 = vpack.c.b16 %v9860, %v9857
        %v10170 = vpack.c.b16 %v9864, %v9861
        %v10171 = vpack.c.b16 %v9865, %v9862
        %v10172 = vpack.c.b16 %v9866, %v9863
        %v10173 = vpack.c.b16 %v9870, %v9867
        %v10174 = vpack.c.b16 %v9871, %v9868
        %v10175 = vpack.c.b16 %v9872, %v9869
        %v10176 = vpack.c.b16 %v9876, %v9873
        %v10177 = vpack.c.b16 %v9877, %v9874
        %v10178 = vpack.c.b16 %v9878, %v9875
        %v10179 = vpack.c.b16 %v9882, %v9879
        %v10180 = vpack.c.b16 %v9883, %v9880
        %v10181 = vpack.c.b16 %v9884, %v9881
        %v10182 = vpack.c.b16 %v9888, %v9885
        %v10183 = vpack.c.b16 %v9889, %v9886
        %v10184 = vpack.c.b16 %v9890, %v9887
        %v10185 = vpack.c.b16 %v9894, %v9891
        %v10186 = vpack.c.b16 %v9895, %v9892
        %v10187 = vpack.c.b16 %v9896, %v9893
        %v10188 = vpack.c.b16 %v9900, %v9897
        %v10189 = vpack.c.b16 %v9901, %v9898
        %v10190 = vpack.c.b16 %v9902, %v9899
        %10479 = vmatprep.subr.bf16.mxu0 %v9925
        %10480 = vmatpush1.bf16.msra.mxu0 %v9924
        %10481 = vmatprep.subr.bf16.mxu0 %v9922
        %10482 = vmatpush1.bf16.msra.mxu0 %v9921
        %10483 = vmatprep.subr.bf16.mxu0 %v9919
        %10484 = vmatpush1.bf16.msra.mxu0 %v9918
        %10485 = vmatprep.subr.bf16.mxu0 %v9916
        %10486 = vmatpush1.bf16.msra.mxu0 %v9915
        %10487 = vmatprep.subr.bf16.mxu0 %v9913
        %10488 = vmatpush1.bf16.msra.mxu0 %v9912
        %10489 = vmatprep.subr.bf16.mxu0 %v9910
        %10490 = vmatpush1.bf16.msra.mxu0 %v9909
        %10491 = vmatprep.subr.bf16.mxu0 %v9907
        %10492 = vmatpush1.bf16.msra.mxu0 %v9906
        %10493 = vmatprep.subr.bf16.mxu0 %v9904
        %10494 = vmatpush1.bf16.msra.mxu0 %v9903
        %10495 = vmatprep.subr.bf16.mxu0 %v9949
        %10496 = vmatpush2.bf16.msra.mxu0 %v9948
        %10497 = vmatprep.subr.bf16.mxu0 %v9946
        %10498 = vmatpush2.bf16.msra.mxu0 %v9945
        %10499 = vmatprep.subr.bf16.mxu0 %v9943
        %10500 = vmatpush2.bf16.msra.mxu0 %v9942
        %10501 = vmatprep.subr.bf16.mxu0 %v9940
        %10502 = vmatpush2.bf16.msra.mxu0 %v9939
        %10503 = vmatprep.subr.bf16.mxu0 %v9937
        %10504 = vmatpush2.bf16.msra.mxu0 %v9936
        %10505 = vmatprep.subr.bf16.mxu0 %v9934
        %10506 = vmatpush2.bf16.msra.mxu0 %v9933
        %10507 = vmatprep.subr.bf16.mxu0 %v9931
        %10508 = vmatpush2.bf16.msra.mxu0 %v9930
        %10509 = vmatprep.subr.bf16.mxu0 %v9928
        %10510 = vmatpush2.bf16.msra.mxu0 %v9927
        %10511 = vmatprep.mubr.bf16.mxu0 %v8495
        %10512 = vmatmul.mubr.bf16.gmra.mxu0 %v8494
        %v10513 = vpop.f32.mrf.mxu0
        %v10514 = vadd.f32 %v8931, %v10513
        %v10515 = vpop.f32.mrf.mxu0
        %v10516 = vadd.f32 %v8935, %v10515
        %v10517 = vpop.f32.mrf.mxu0
        %v10518 = vadd.f32 %v8931, %v10517
        %v10519 = vpop.f32.mrf.mxu0
        %v10520 = vadd.f32 %v8935, %v10519
        %10521 = vmatprep.mubr.bf16.mxu0 %v8507
        %10522 = vmatmul.mubr.bf16.gmra.mxu0 %v8506
        %v10523 = vpop.f32.mrf.mxu0
        %v10524 = vadd.f32 %v8931, %v10523
        %v10525 = vpop.f32.mrf.mxu0
        %v10526 = vadd.f32 %v8935, %v10525
        %v10527 = vpop.f32.mrf.mxu0
        %v10528 = vadd.f32 %v8931, %v10527
        %v10529 = vpop.f32.mrf.mxu0
        %v10530 = vadd.f32 %v8935, %v10529
        %10531 = vmatprep.mubr.bf16.mxu0 %v8519
        %10532 = vmatmul.mubr.bf16.gmra.mxu0 %v8518
        %v10533 = vpop.f32.mrf.mxu0
        %v10534 = vadd.f32 %v8931, %v10533
        %v10535 = vpop.f32.mrf.mxu0
        %v10536 = vadd.f32 %v8935, %v10535
        %v10537 = vpop.f32.mrf.mxu0
        %v10538 = vadd.f32 %v8931, %v10537
        %v10539 = vpop.f32.mrf.mxu0
        %v10540 = vadd.f32 %v8935, %v10539
        %10541 = vmatprep.mubr.bf16.mxu0 %v8531
        %10542 = vmatmul.mubr.bf16.gmra.mxu0 %v8530
        %v10543 = vpop.f32.mrf.mxu0
        %v10544 = vadd.f32 %v8931, %v10543
        %v10545 = vpop.f32.mrf.mxu0
        %v10546 = vadd.f32 %v8935, %v10545
        %v10547 = vpop.f32.mrf.mxu0
        %v10548 = vadd.f32 %v8931, %v10547
        %v10549 = vpop.f32.mrf.mxu0
        %v10550 = vadd.f32 %v8935, %v10549
        %10551 = vdwg.mxu0
        %10552 = vmatprep.subr.bf16.mxu0 %v9973
        %10553 = vmatpush1.bf16.msra.mxu0 %v9972
        %10554 = vmatprep.subr.bf16.mxu0 %v9970
        %10555 = vmatpush1.bf16.msra.mxu0 %v9969
        %10556 = vmatprep.subr.bf16.mxu0 %v9967
        %10557 = vmatpush1.bf16.msra.mxu0 %v9966
        %10558 = vmatprep.subr.bf16.mxu0 %v9964
        %10559 = vmatpush1.bf16.msra.mxu0 %v9963
        %10560 = vmatprep.subr.bf16.mxu0 %v9961
        %10561 = vmatpush1.bf16.msra.mxu0 %v9960
        %10562 = vmatprep.subr.bf16.mxu0 %v9958
        %10563 = vmatpush1.bf16.msra.mxu0 %v9957
        %10564 = vmatprep.subr.bf16.mxu0 %v9955
        %10565 = vmatpush1.bf16.msra.mxu0 %v9954
        %10566 = vmatprep.subr.bf16.mxu0 %v9952
        %10567 = vmatpush1.bf16.msra.mxu0 %v9951
        %10568 = vmatprep.subr.bf16.mxu0 %v9997
        %10569 = vmatpush2.bf16.msra.mxu0 %v9996
        %10570 = vmatprep.subr.bf16.mxu0 %v9994
        %10571 = vmatpush2.bf16.msra.mxu0 %v9993
        %10572 = vmatprep.subr.bf16.mxu0 %v9991
        %10573 = vmatpush2.bf16.msra.mxu0 %v9990
        %10574 = vmatprep.subr.bf16.mxu0 %v9988
        %10575 = vmatpush2.bf16.msra.mxu0 %v9987
        %10576 = vmatprep.subr.bf16.mxu0 %v9985
        %10577 = vmatpush2.bf16.msra.mxu0 %v9984
        %10578 = vmatprep.subr.bf16.mxu0 %v9982
        %10579 = vmatpush2.bf16.msra.mxu0 %v9981
        %10580 = vmatprep.subr.bf16.mxu0 %v9979
        %10581 = vmatpush2.bf16.msra.mxu0 %v9978
        %10582 = vmatprep.subr.bf16.mxu0 %v9976
        %10583 = vmatpush2.bf16.msra.mxu0 %v9975
        %10584 = vmatprep.mubr.bf16.mxu0 %v8497
        %10585 = vmatmul.mubr.bf16.gmra.mxu0 %v8496
        %v10586 = vpop.f32.mrf.mxu0
        %v10587 = vadd.f32 %v10514, %v10586
        %v10588 = vpop.f32.mrf.mxu0
        %v10589 = vadd.f32 %v10516, %v10588
        %v10590 = vpop.f32.mrf.mxu0
        %v10591 = vadd.f32 %v10518, %v10590
        %v10592 = vpop.f32.mrf.mxu0
        %v10593 = vadd.f32 %v10520, %v10592
        %10594 = vmatprep.mubr.bf16.mxu0 %v8509
        %10595 = vmatmul.mubr.bf16.gmra.mxu0 %v8508
        %v10596 = vpop.f32.mrf.mxu0
        %v10597 = vadd.f32 %v10524, %v10596
        %v10598 = vpop.f32.mrf.mxu0
        %v10599 = vadd.f32 %v10526, %v10598
        %v10600 = vpop.f32.mrf.mxu0
        %v10601 = vadd.f32 %v10528, %v10600
        %v10602 = vpop.f32.mrf.mxu0
        %v10603 = vadd.f32 %v10530, %v10602
        %10604 = vmatprep.mubr.bf16.mxu0 %v8521
        %10605 = vmatmul.mubr.bf16.gmra.mxu0 %v8520
        %v10606 = vpop.f32.mrf.mxu0
        %v10607 = vadd.f32 %v10534, %v10606
        %v10608 = vpop.f32.mrf.mxu0
        %v10609 = vadd.f32 %v10536, %v10608
        %v10610 = vpop.f32.mrf.mxu0
        %v10611 = vadd.f32 %v10538, %v10610
        %v10612 = vpop.f32.mrf.mxu0
        %v10613 = vadd.f32 %v10540, %v10612
        %10614 = vmatprep.mubr.bf16.mxu0 %v8533
        %10615 = vmatmul.mubr.bf16.gmra.mxu0 %v8532
        %v10616 = vpop.f32.mrf.mxu0
        %v10617 = vadd.f32 %v10544, %v10616
        %v10618 = vpop.f32.mrf.mxu0
        %v10619 = vadd.f32 %v10546, %v10618
        %v10620 = vpop.f32.mrf.mxu0
        %v10621 = vadd.f32 %v10548, %v10620
        %v10622 = vpop.f32.mrf.mxu0
        %v10623 = vadd.f32 %v10550, %v10622
        %10624 = vdwg.mxu0
        %10625 = vmatprep.subr.bf16.mxu0 %v10021
        %10626 = vmatpush1.bf16.msra.mxu0 %v10020
        %10627 = vmatprep.subr.bf16.mxu0 %v10018
        %10628 = vmatpush1.bf16.msra.mxu0 %v10017
        %10629 = vmatprep.subr.bf16.mxu0 %v10015
        %10630 = vmatpush1.bf16.msra.mxu0 %v10014
        %10631 = vmatprep.subr.bf16.mxu0 %v10012
        %10632 = vmatpush1.bf16.msra.mxu0 %v10011
        %10633 = vmatprep.subr.bf16.mxu0 %v10009
        %10634 = vmatpush1.bf16.msra.mxu0 %v10008
        %10635 = vmatprep.subr.bf16.mxu0 %v10006
        %10636 = vmatpush1.bf16.msra.mxu0 %v10005
        %10637 = vmatprep.subr.bf16.mxu0 %v10003
        %10638 = vmatpush1.bf16.msra.mxu0 %v10002
        %10639 = vmatprep.subr.bf16.mxu0 %v10000
        %10640 = vmatpush1.bf16.msra.mxu0 %v9999
        %10641 = vmatprep.subr.bf16.mxu0 %v10045
        %10642 = vmatpush2.bf16.msra.mxu0 %v10044
        %10643 = vmatprep.subr.bf16.mxu0 %v10042
        %10644 = vmatpush2.bf16.msra.mxu0 %v10041
        %10645 = vmatprep.subr.bf16.mxu0 %v10039
        %10646 = vmatpush2.bf16.msra.mxu0 %v10038
        %10647 = vmatprep.subr.bf16.mxu0 %v10036
        %10648 = vmatpush2.bf16.msra.mxu0 %v10035
        %10649 = vmatprep.subr.bf16.mxu0 %v10033
        %10650 = vmatpush2.bf16.msra.mxu0 %v10032
        %10651 = vmatprep.subr.bf16.mxu0 %v10030
        %10652 = vmatpush2.bf16.msra.mxu0 %v10029
        %10653 = vmatprep.subr.bf16.mxu0 %v10027
        %10654 = vmatpush2.bf16.msra.mxu0 %v10026
        %10655 = vmatprep.subr.bf16.mxu0 %v10024
        %10656 = vmatpush2.bf16.msra.mxu0 %v10023
        %10657 = vmatprep.mubr.bf16.mxu0 %v8499
        %10658 = vmatmul.mubr.bf16.gmra.mxu0 %v8498
        %v10659 = vpop.f32.mrf.mxu0
        %v10660 = vadd.f32 %v10587, %v10659
        %v10661 = vpop.f32.mrf.mxu0
        %v10662 = vadd.f32 %v10589, %v10661
        %v10663 = vpop.f32.mrf.mxu0
        %v10664 = vadd.f32 %v10591, %v10663
        %v10665 = vpop.f32.mrf.mxu0
        %v10666 = vadd.f32 %v10593, %v10665
        %10667 = vmatprep.mubr.bf16.mxu0 %v8511
        %10668 = vmatmul.mubr.bf16.gmra.mxu0 %v8510
        %v10669 = vpop.f32.mrf.mxu0
        %v10670 = vadd.f32 %v10597, %v10669
        %v10671 = vpop.f32.mrf.mxu0
        %v10672 = vadd.f32 %v10599, %v10671
        %v10673 = vpop.f32.mrf.mxu0
        %v10674 = vadd.f32 %v10601, %v10673
        %v10675 = vpop.f32.mrf.mxu0
        %v10676 = vadd.f32 %v10603, %v10675
        %10677 = vmatprep.mubr.bf16.mxu0 %v8523
        %10678 = vmatmul.mubr.bf16.gmra.mxu0 %v8522
        %v10679 = vpop.f32.mrf.mxu0
        %v10680 = vadd.f32 %v10607, %v10679
        %v10681 = vpop.f32.mrf.mxu0
        %v10682 = vadd.f32 %v10609, %v10681
        %v10683 = vpop.f32.mrf.mxu0
        %v10684 = vadd.f32 %v10611, %v10683
        %v10685 = vpop.f32.mrf.mxu0
        %v10686 = vadd.f32 %v10613, %v10685
        %10687 = vmatprep.mubr.bf16.mxu0 %v8535
        %10688 = vmatmul.mubr.bf16.gmra.mxu0 %v8534
        %v10689 = vpop.f32.mrf.mxu0
        %v10690 = vadd.f32 %v10617, %v10689
        %v10691 = vpop.f32.mrf.mxu0
        %v10692 = vadd.f32 %v10619, %v10691
        %v10693 = vpop.f32.mrf.mxu0
        %v10694 = vadd.f32 %v10621, %v10693
        %v10695 = vpop.f32.mrf.mxu0
        %v10696 = vadd.f32 %v10623, %v10695
        %10697 = vdwg.mxu0
        %10698 = vmatprep.subr.bf16.mxu0 %v10069
        %10699 = vmatpush1.bf16.msra.mxu0 %v10068
        %10700 = vmatprep.subr.bf16.mxu0 %v10066
        %10701 = vmatpush1.bf16.msra.mxu0 %v10065
        %10702 = vmatprep.subr.bf16.mxu0 %v10063
        %10703 = vmatpush1.bf16.msra.mxu0 %v10062
        %10704 = vmatprep.subr.bf16.mxu0 %v10060
        %10705 = vmatpush1.bf16.msra.mxu0 %v10059
        %10706 = vmatprep.subr.bf16.mxu0 %v10057
        %10707 = vmatpush1.bf16.msra.mxu0 %v10056
        %10708 = vmatprep.subr.bf16.mxu0 %v10054
        %10709 = vmatpush1.bf16.msra.mxu0 %v10053
        %10710 = vmatprep.subr.bf16.mxu0 %v10051
        %10711 = vmatpush1.bf16.msra.mxu0 %v10050
        %10712 = vmatprep.subr.bf16.mxu0 %v10048
        %10713 = vmatpush1.bf16.msra.mxu0 %v10047
        %10714 = vmatprep.subr.bf16.mxu0 %v10093
        %10715 = vmatpush2.bf16.msra.mxu0 %v10092
        %10716 = vmatprep.subr.bf16.mxu0 %v10090
        %10717 = vmatpush2.bf16.msra.mxu0 %v10089
        %10718 = vmatprep.subr.bf16.mxu0 %v10087
        %10719 = vmatpush2.bf16.msra.mxu0 %v10086
        %10720 = vmatprep.subr.bf16.mxu0 %v10084
        %10721 = vmatpush2.bf16.msra.mxu0 %v10083
        %10722 = vmatprep.subr.bf16.mxu0 %v10081
        %10723 = vmatpush2.bf16.msra.mxu0 %v10080
        %10724 = vmatprep.subr.bf16.mxu0 %v10078
        %10725 = vmatpush2.bf16.msra.mxu0 %v10077
        %10726 = vmatprep.subr.bf16.mxu0 %v10075
        %10727 = vmatpush2.bf16.msra.mxu0 %v10074
        %10728 = vmatprep.subr.bf16.mxu0 %v10072
        %10729 = vmatpush2.bf16.msra.mxu0 %v10071
        %10730 = vmatprep.mubr.bf16.mxu0 %v8501
        %10731 = vmatmul.mubr.bf16.gmra.mxu0 %v8500
        %v10732 = vpop.f32.mrf.mxu0
        %v10733 = vadd.f32 %v10660, %v10732
        %v10734 = vpop.f32.mrf.mxu0
        %v10735 = vadd.f32 %v10662, %v10734
        %v10736 = vpop.f32.mrf.mxu0
        %v10737 = vadd.f32 %v10664, %v10736
        %v10738 = vpop.f32.mrf.mxu0
        %v10739 = vadd.f32 %v10666, %v10738
        %10740 = vmatprep.mubr.bf16.mxu0 %v8513
        %10741 = vmatmul.mubr.bf16.gmra.mxu0 %v8512
        %v10742 = vpop.f32.mrf.mxu0
        %v10743 = vadd.f32 %v10670, %v10742
        %v10744 = vpop.f32.mrf.mxu0
        %v10745 = vadd.f32 %v10672, %v10744
        %v10746 = vpop.f32.mrf.mxu0
        %v10747 = vadd.f32 %v10674, %v10746
        %v10748 = vpop.f32.mrf.mxu0
        %v10749 = vadd.f32 %v10676, %v10748
        %10750 = vmatprep.mubr.bf16.mxu0 %v8525
        %10751 = vmatmul.mubr.bf16.gmra.mxu0 %v8524
        %v10752 = vpop.f32.mrf.mxu0
        %v10753 = vadd.f32 %v10680, %v10752
        %v10754 = vpop.f32.mrf.mxu0
        %v10755 = vadd.f32 %v10682, %v10754
        %v10756 = vpop.f32.mrf.mxu0
        %v10757 = vadd.f32 %v10684, %v10756
        %v10758 = vpop.f32.mrf.mxu0
        %v10759 = vadd.f32 %v10686, %v10758
        %10760 = vmatprep.mubr.bf16.mxu0 %v8537
        %10761 = vmatmul.mubr.bf16.gmra.mxu0 %v8536
        %v10762 = vpop.f32.mrf.mxu0
        %v10763 = vadd.f32 %v10690, %v10762
        %v10764 = vpop.f32.mrf.mxu0
        %v10765 = vadd.f32 %v10692, %v10764
        %v10766 = vpop.f32.mrf.mxu0
        %v10767 = vadd.f32 %v10694, %v10766
        %v10768 = vpop.f32.mrf.mxu0
        %v10769 = vadd.f32 %v10696, %v10768
        %10770 = vdwg.mxu0
        %10771 = vmatprep.subr.bf16.mxu0 %v10117
        %10772 = vmatpush1.bf16.msra.mxu0 %v10116
        %10773 = vmatprep.subr.bf16.mxu0 %v10114
        %10774 = vmatpush1.bf16.msra.mxu0 %v10113
        %10775 = vmatprep.subr.bf16.mxu0 %v10111
        %10776 = vmatpush1.bf16.msra.mxu0 %v10110
        %10777 = vmatprep.subr.bf16.mxu0 %v10108
        %10778 = vmatpush1.bf16.msra.mxu0 %v10107
        %10779 = vmatprep.subr.bf16.mxu0 %v10105
        %10780 = vmatpush1.bf16.msra.mxu0 %v10104
        %10781 = vmatprep.subr.bf16.mxu0 %v10102
        %10782 = vmatpush1.bf16.msra.mxu0 %v10101
        %10783 = vmatprep.subr.bf16.mxu0 %v10099
        %10784 = vmatpush1.bf16.msra.mxu0 %v10098
        %10785 = vmatprep.subr.bf16.mxu0 %v10096
        %10786 = vmatpush1.bf16.msra.mxu0 %v10095
        %10787 = vmatprep.subr.bf16.mxu0 %v10141
        %10788 = vmatpush2.bf16.msra.mxu0 %v10140
        %10789 = vmatprep.subr.bf16.mxu0 %v10138
        %10790 = vmatpush2.bf16.msra.mxu0 %v10137
        %10791 = vmatprep.subr.bf16.mxu0 %v10135
        %10792 = vmatpush2.bf16.msra.mxu0 %v10134
        %10793 = vmatprep.subr.bf16.mxu0 %v10132
        %10794 = vmatpush2.bf16.msra.mxu0 %v10131
        %10795 = vmatprep.subr.bf16.mxu0 %v10129
        %10796 = vmatpush2.bf16.msra.mxu0 %v10128
        %10797 = vmatprep.subr.bf16.mxu0 %v10126
        %10798 = vmatpush2.bf16.msra.mxu0 %v10125
        %10799 = vmatprep.subr.bf16.mxu0 %v10123
        %10800 = vmatpush2.bf16.msra.mxu0 %v10122
        %10801 = vmatprep.subr.bf16.mxu0 %v10120
        %10802 = vmatpush2.bf16.msra.mxu0 %v10119
        %10803 = vmatprep.mubr.bf16.mxu0 %v8503
        %10804 = vmatmul.mubr.bf16.gmra.mxu0 %v8502
        %v10805 = vpop.f32.mrf.mxu0
        %v10806 = vadd.f32 %v10733, %v10805
        %v10807 = vpop.f32.mrf.mxu0
        %v10808 = vadd.f32 %v10735, %v10807
        %v10809 = vpop.f32.mrf.mxu0
        %v10810 = vadd.f32 %v10737, %v10809
        %v10811 = vpop.f32.mrf.mxu0
        %v10812 = vadd.f32 %v10739, %v10811
        %10813 = vmatprep.mubr.bf16.mxu0 %v8515
        %10814 = vmatmul.mubr.bf16.gmra.mxu0 %v8514
        %v10815 = vpop.f32.mrf.mxu0
        %v10816 = vadd.f32 %v10743, %v10815
        %v10817 = vpop.f32.mrf.mxu0
        %v10818 = vadd.f32 %v10745, %v10817
        %v10819 = vpop.f32.mrf.mxu0
        %v10820 = vadd.f32 %v10747, %v10819
        %v10821 = vpop.f32.mrf.mxu0
        %v10822 = vadd.f32 %v10749, %v10821
        %10823 = vmatprep.mubr.bf16.mxu0 %v8527
        %10824 = vmatmul.mubr.bf16.gmra.mxu0 %v8526
        %v10825 = vpop.f32.mrf.mxu0
        %v10826 = vadd.f32 %v10753, %v10825
        %v10827 = vpop.f32.mrf.mxu0
        %v10828 = vadd.f32 %v10755, %v10827
        %v10829 = vpop.f32.mrf.mxu0
        %v10830 = vadd.f32 %v10757, %v10829
        %v10831 = vpop.f32.mrf.mxu0
        %v10832 = vadd.f32 %v10759, %v10831
        %10833 = vmatprep.mubr.bf16.mxu0 %v8539
        %10834 = vmatmul.mubr.bf16.gmra.mxu0 %v8538
        %v10835 = vpop.f32.mrf.mxu0
        %v10836 = vadd.f32 %v10763, %v10835
        %v10837 = vpop.f32.mrf.mxu0
        %v10838 = vadd.f32 %v10765, %v10837
        %v10839 = vpop.f32.mrf.mxu0
        %v10840 = vadd.f32 %v10767, %v10839
        %v10841 = vpop.f32.mrf.mxu0
        %v10842 = vadd.f32 %v10769, %v10841
        %10843 = vdwg.mxu0
        %10844 = vmatprep.subr.bf16.mxu0 %v10165
        %10845 = vmatpush1.bf16.msra.mxu0 %v10164
        %10846 = vmatprep.subr.bf16.mxu0 %v10162
        %10847 = vmatpush1.bf16.msra.mxu0 %v10161
        %10848 = vmatprep.subr.bf16.mxu0 %v10159
        %10849 = vmatpush1.bf16.msra.mxu0 %v10158
        %10850 = vmatprep.subr.bf16.mxu0 %v10156
        %10851 = vmatpush1.bf16.msra.mxu0 %v10155
        %10852 = vmatprep.subr.bf16.mxu0 %v10153
        %10853 = vmatpush1.bf16.msra.mxu0 %v10152
        %10854 = vmatprep.subr.bf16.mxu0 %v10150
        %10855 = vmatpush1.bf16.msra.mxu0 %v10149
        %10856 = vmatprep.subr.bf16.mxu0 %v10147
        %10857 = vmatpush1.bf16.msra.mxu0 %v10146
        %10858 = vmatprep.subr.bf16.mxu0 %v10144
        %10859 = vmatpush1.bf16.msra.mxu0 %v10143
        %10860 = vmatprep.subr.bf16.mxu0 %v10189
        %10861 = vmatpush2.bf16.msra.mxu0 %v10188
        %10862 = vmatprep.subr.bf16.mxu0 %v10186
        %10863 = vmatpush2.bf16.msra.mxu0 %v10185
        %10864 = vmatprep.subr.bf16.mxu0 %v10183
        %10865 = vmatpush2.bf16.msra.mxu0 %v10182
        %10866 = vmatprep.subr.bf16.mxu0 %v10180
        %10867 = vmatpush2.bf16.msra.mxu0 %v10179
        %10868 = vmatprep.subr.bf16.mxu0 %v10177
        %10869 = vmatpush2.bf16.msra.mxu0 %v10176
        %10870 = vmatprep.subr.bf16.mxu0 %v10174
        %10871 = vmatpush2.bf16.msra.mxu0 %v10173
        %10872 = vmatprep.subr.bf16.mxu0 %v10171
        %10873 = vmatpush2.bf16.msra.mxu0 %v10170
        %10874 = vmatprep.subr.bf16.mxu0 %v10168
        %10875 = vmatpush2.bf16.msra.mxu0 %v10167
        %10876 = vmatprep.mubr.bf16.mxu0 %v8505
        %10877 = vmatmul.mubr.bf16.gmra.mxu0 %v8504
        %v10878 = vpop.f32.mrf.mxu0
        %v10879 = vadd.f32 %v10806, %v10878
        %v10880 = vpop.f32.mrf.mxu0
        %v10881 = vadd.f32 %v10808, %v10880
        %v10882 = vpop.f32.mrf.mxu0
        %v10883 = vadd.f32 %v10810, %v10882
        %v10884 = vpop.f32.mrf.mxu0
        %v10885 = vadd.f32 %v10812, %v10884
        %10886 = vmatprep.mubr.bf16.mxu0 %v8517
        %10887 = vmatmul.mubr.bf16.gmra.mxu0 %v8516
        %v10888 = vpop.f32.mrf.mxu0
        %v10889 = vadd.f32 %v10816, %v10888
        %v10890 = vpop.f32.mrf.mxu0
        %v10891 = vadd.f32 %v10818, %v10890
        %v10892 = vpop.f32.mrf.mxu0
        %v10893 = vadd.f32 %v10820, %v10892
        %v10894 = vpop.f32.mrf.mxu0
        %v10895 = vadd.f32 %v10822, %v10894
        %10896 = vmatprep.mubr.bf16.mxu0 %v8529
        %10897 = vmatmul.mubr.bf16.gmra.mxu0 %v8528
        %v10898 = vpop.f32.mrf.mxu0
        %v10899 = vadd.f32 %v10826, %v10898
        %v10900 = vpop.f32.mrf.mxu0
        %v10901 = vadd.f32 %v10828, %v10900
        %v10902 = vpop.f32.mrf.mxu0
        %v10903 = vadd.f32 %v10830, %v10902
        %v10904 = vpop.f32.mrf.mxu0
        %v10905 = vadd.f32 %v10832, %v10904
        %10906 = vmatprep.mubr.bf16.mxu0 %v8541
        %10907 = vmatmul.mubr.bf16.gmra.mxu0 %v8540
        %v10908 = vpop.f32.mrf.mxu0
        %v10909 = vadd.f32 %v10836, %v10908
        %v10910 = vpop.f32.mrf.mxu0
        %v10911 = vadd.f32 %v10838, %v10910
        %v10912 = vpop.f32.mrf.mxu0
        %v10913 = vadd.f32 %v10840, %v10912
        %v10914 = vpop.f32.mrf.mxu0
        %v10915 = vadd.f32 %v10842, %v10914
        %10916 = vdwg.mxu0
        %10917 = vmatprep.subr.bf16.mxu0 0
        %10918 = vmatpush1.bf16.msra.mxu0 %v9926
        %10919 = vmatprep.subr.bf16.mxu0 0
        %10920 = vmatpush1.bf16.msra.mxu0 %v9923
        %10921 = vmatprep.subr.bf16.mxu0 0
        %10922 = vmatpush1.bf16.msra.mxu0 %v9920
        %10923 = vmatprep.subr.bf16.mxu0 0
        %10924 = vmatpush1.bf16.msra.mxu0 %v9917
        %10925 = vmatprep.subr.bf16.mxu0 0
        %10926 = vmatpush1.bf16.msra.mxu0 %v9914
        %10927 = vmatprep.subr.bf16.mxu0 0
        %10928 = vmatpush1.bf16.msra.mxu0 %v9911
        %10929 = vmatprep.subr.bf16.mxu0 0
        %10930 = vmatpush1.bf16.msra.mxu0 %v9908
        %10931 = vmatprep.subr.bf16.mxu0 0
        %10932 = vmatpush1.bf16.msra.mxu0 %v9905
        %10933 = vmatprep.subr.bf16.mxu0 0
        %10934 = vmatpush2.bf16.msra.mxu0 %v9950
        %10935 = vmatprep.subr.bf16.mxu0 0
        %10936 = vmatpush2.bf16.msra.mxu0 %v9947
        %10937 = vmatprep.subr.bf16.mxu0 0
        %10938 = vmatpush2.bf16.msra.mxu0 %v9944
        %10939 = vmatprep.subr.bf16.mxu0 0
        %10940 = vmatpush2.bf16.msra.mxu0 %v9941
        %10941 = vmatprep.subr.bf16.mxu0 0
        %10942 = vmatpush2.bf16.msra.mxu0 %v9938
        %10943 = vmatprep.subr.bf16.mxu0 0
        %10944 = vmatpush2.bf16.msra.mxu0 %v9935
        %10945 = vmatprep.subr.bf16.mxu0 0
        %10946 = vmatpush2.bf16.msra.mxu0 %v9932
        %10947 = vmatprep.subr.bf16.mxu0 0
        %10948 = vmatpush2.bf16.msra.mxu0 %v9929
        %10949 = vmatprep.mubr.bf16.mxu0 %v8495
        %10950 = vmatmul.mubr.bf16.gmra.mxu0 %v8494
        %v10951 = vpop.f32.mrf.mxu0
        %v10952 = vadd.f32 %v8939, %v10951
        %v10953 = vpop.f32.mrf.mxu0
        %v10954 = vpop.f32.mrf.mxu0
        %v10955 = vadd.f32 %v8939, %v10954
        %v10956 = vpop.f32.mrf.mxu0
        %10957 = vmatprep.mubr.bf16.mxu0 %v8507
        %10958 = vmatmul.mubr.bf16.gmra.mxu0 %v8506
        %v10959 = vpop.f32.mrf.mxu0
        %v10960 = vadd.f32 %v8939, %v10959
        %v10961 = vpop.f32.mrf.mxu0
        %v10962 = vpop.f32.mrf.mxu0
        %v10963 = vadd.f32 %v8939, %v10962
        %v10964 = vpop.f32.mrf.mxu0
        %10965 = vmatprep.mubr.bf16.mxu0 %v8519
        %10966 = vmatmul.mubr.bf16.gmra.mxu0 %v8518
        %v10967 = vpop.f32.mrf.mxu0
        %v10968 = vadd.f32 %v8939, %v10967
        %v10969 = vpop.f32.mrf.mxu0
        %v10970 = vpop.f32.mrf.mxu0
        %v10971 = vadd.f32 %v8939, %v10970
        %v10972 = vpop.f32.mrf.mxu0
        %10973 = vmatprep.mubr.bf16.mxu0 %v8531
        %10974 = vmatmul.mubr.bf16.gmra.mxu0 %v8530
        %v10975 = vpop.f32.mrf.mxu0
        %v10976 = vadd.f32 %v8939, %v10975
        %v10977 = vpop.f32.mrf.mxu0
        %v10978 = vpop.f32.mrf.mxu0
        %v10979 = vadd.f32 %v8939, %v10978
        %v10980 = vpop.f32.mrf.mxu0
        %10981 = vdwg.mxu0
        %10982 = vmatprep.subr.bf16.mxu0 0
        %10983 = vmatpush1.bf16.msra.mxu0 %v9974
        %10984 = vmatprep.subr.bf16.mxu0 0
        %10985 = vmatpush1.bf16.msra.mxu0 %v9971
        %10986 = vmatprep.subr.bf16.mxu0 0
        %10987 = vmatpush1.bf16.msra.mxu0 %v9968
        %10988 = vmatprep.subr.bf16.mxu0 0
        %10989 = vmatpush1.bf16.msra.mxu0 %v9965
        %10990 = vmatprep.subr.bf16.mxu0 0
        %10991 = vmatpush1.bf16.msra.mxu0 %v9962
        %10992 = vmatprep.subr.bf16.mxu0 0
        %10993 = vmatpush1.bf16.msra.mxu0 %v9959
        %10994 = vmatprep.subr.bf16.mxu0 0
        %10995 = vmatpush1.bf16.msra.mxu0 %v9956
        %10996 = vmatprep.subr.bf16.mxu0 0
        %10997 = vmatpush1.bf16.msra.mxu0 %v9953
        %10998 = vmatprep.subr.bf16.mxu0 0
        %10999 = vmatpush2.bf16.msra.mxu0 %v9998
        %11000 = vmatprep.subr.bf16.mxu0 0
        %11001 = vmatpush2.bf16.msra.mxu0 %v9995
        %11002 = vmatprep.subr.bf16.mxu0 0
        %11003 = vmatpush2.bf16.msra.mxu0 %v9992
        %11004 = vmatprep.subr.bf16.mxu0 0
        %11005 = vmatpush2.bf16.msra.mxu0 %v9989
        %11006 = vmatprep.subr.bf16.mxu0 0
        %11007 = vmatpush2.bf16.msra.mxu0 %v9986
        %11008 = vmatprep.subr.bf16.mxu0 0
        %11009 = vmatpush2.bf16.msra.mxu0 %v9983
        %11010 = vmatprep.subr.bf16.mxu0 0
        %11011 = vmatpush2.bf16.msra.mxu0 %v9980
        %11012 = vmatprep.subr.bf16.mxu0 0
        %11013 = vmatpush2.bf16.msra.mxu0 %v9977
        %11014 = vmatprep.mubr.bf16.mxu0 %v8497
        %11015 = vmatmul.mubr.bf16.gmra.mxu0 %v8496
        %v11016 = vpop.f32.mrf.mxu0
        %v11017 = vadd.f32 %v10952, %v11016
        %v11018 = vpop.f32.mrf.mxu0
        %v11019 = vpop.f32.mrf.mxu0
        %v11020 = vadd.f32 %v10955, %v11019
        %v11021 = vpop.f32.mrf.mxu0
        %11022 = vmatprep.mubr.bf16.mxu0 %v8509
        %11023 = vmatmul.mubr.bf16.gmra.mxu0 %v8508
        %v11024 = vpop.f32.mrf.mxu0
        %v11025 = vadd.f32 %v10960, %v11024
        %v11026 = vpop.f32.mrf.mxu0
        %v11027 = vpop.f32.mrf.mxu0
        %v11028 = vadd.f32 %v10963, %v11027
        %v11029 = vpop.f32.mrf.mxu0
        %11030 = vmatprep.mubr.bf16.mxu0 %v8521
        %11031 = vmatmul.mubr.bf16.gmra.mxu0 %v8520
        %v11032 = vpop.f32.mrf.mxu0
        %v11033 = vadd.f32 %v10968, %v11032
        %v11034 = vpop.f32.mrf.mxu0
        %v11035 = vpop.f32.mrf.mxu0
        %v11036 = vadd.f32 %v10971, %v11035
        %v11037 = vpop.f32.mrf.mxu0
        %11038 = vmatprep.mubr.bf16.mxu0 %v8533
        %11039 = vmatmul.mubr.bf16.gmra.mxu0 %v8532
        %v11040 = vpop.f32.mrf.mxu0
        %v11041 = vadd.f32 %v10976, %v11040
        %v11042 = vpop.f32.mrf.mxu0
        %v11043 = vpop.f32.mrf.mxu0
        %v11044 = vadd.f32 %v10979, %v11043
        %v11045 = vpop.f32.mrf.mxu0
        %11046 = vdwg.mxu0
        %11047 = vmatprep.subr.bf16.mxu0 0
        %11048 = vmatpush1.bf16.msra.mxu0 %v10022
        %11049 = vmatprep.subr.bf16.mxu0 0
        %11050 = vmatpush1.bf16.msra.mxu0 %v10019
        %11051 = vmatprep.subr.bf16.mxu0 0
        %11052 = vmatpush1.bf16.msra.mxu0 %v10016
        %11053 = vmatprep.subr.bf16.mxu0 0
        %11054 = vmatpush1.bf16.msra.mxu0 %v10013
        %11055 = vmatprep.subr.bf16.mxu0 0
        %11056 = vmatpush1.bf16.msra.mxu0 %v10010
        %11057 = vmatprep.subr.bf16.mxu0 0
        %11058 = vmatpush1.bf16.msra.mxu0 %v10007
        %11059 = vmatprep.subr.bf16.mxu0 0
        %11060 = vmatpush1.bf16.msra.mxu0 %v10004
        %11061 = vmatprep.subr.bf16.mxu0 0
        %11062 = vmatpush1.bf16.msra.mxu0 %v10001
        %11063 = vmatprep.subr.bf16.mxu0 0
        %11064 = vmatpush2.bf16.msra.mxu0 %v10046
        %11065 = vmatprep.subr.bf16.mxu0 0
        %11066 = vmatpush2.bf16.msra.mxu0 %v10043
        %11067 = vmatprep.subr.bf16.mxu0 0
        %11068 = vmatpush2.bf16.msra.mxu0 %v10040
        %11069 = vmatprep.subr.bf16.mxu0 0
        %11070 = vmatpush2.bf16.msra.mxu0 %v10037
        %11071 = vmatprep.subr.bf16.mxu0 0
        %11072 = vmatpush2.bf16.msra.mxu0 %v10034
        %11073 = vmatprep.subr.bf16.mxu0 0
        %11074 = vmatpush2.bf16.msra.mxu0 %v10031
        %11075 = vmatprep.subr.bf16.mxu0 0
        %11076 = vmatpush2.bf16.msra.mxu0 %v10028
        %11077 = vmatprep.subr.bf16.mxu0 0
        %11078 = vmatpush2.bf16.msra.mxu0 %v10025
        %11079 = vmatprep.mubr.bf16.mxu0 %v8499
        %11080 = vmatmul.mubr.bf16.gmra.mxu0 %v8498
        %v11081 = vpop.f32.mrf.mxu0
        %v11082 = vadd.f32 %v11017, %v11081
        %v11083 = vpop.f32.mrf.mxu0
        %v11084 = vpop.f32.mrf.mxu0
        %v11085 = vadd.f32 %v11020, %v11084
        %v11086 = vpop.f32.mrf.mxu0
        %11087 = vmatprep.mubr.bf16.mxu0 %v8511
        %11088 = vmatmul.mubr.bf16.gmra.mxu0 %v8510
        %v11089 = vpop.f32.mrf.mxu0
        %v11090 = vadd.f32 %v11025, %v11089
        %v11091 = vpop.f32.mrf.mxu0
        %v11092 = vpop.f32.mrf.mxu0
        %v11093 = vadd.f32 %v11028, %v11092
        %v11094 = vpop.f32.mrf.mxu0
        %11095 = vmatprep.mubr.bf16.mxu0 %v8523
        %11096 = vmatmul.mubr.bf16.gmra.mxu0 %v8522
        %v11097 = vpop.f32.mrf.mxu0
        %v11098 = vadd.f32 %v11033, %v11097
        %v11099 = vpop.f32.mrf.mxu0
        %v11100 = vpop.f32.mrf.mxu0
        %v11101 = vadd.f32 %v11036, %v11100
        %v11102 = vpop.f32.mrf.mxu0
        %11103 = vmatprep.mubr.bf16.mxu0 %v8535
        %11104 = vmatmul.mubr.bf16.gmra.mxu0 %v8534
        %v11105 = vpop.f32.mrf.mxu0
        %v11106 = vadd.f32 %v11041, %v11105
        %v11107 = vpop.f32.mrf.mxu0
        %v11108 = vpop.f32.mrf.mxu0
        %v11109 = vadd.f32 %v11044, %v11108
        %v11110 = vpop.f32.mrf.mxu0
        %11111 = vdwg.mxu0
        %11112 = vmatprep.subr.bf16.mxu0 0
        %11113 = vmatpush1.bf16.msra.mxu0 %v10070
        %11114 = vmatprep.subr.bf16.mxu0 0
        %11115 = vmatpush1.bf16.msra.mxu0 %v10067
        %11116 = vmatprep.subr.bf16.mxu0 0
        %11117 = vmatpush1.bf16.msra.mxu0 %v10064
        %11118 = vmatprep.subr.bf16.mxu0 0
        %11119 = vmatpush1.bf16.msra.mxu0 %v10061
        %11120 = vmatprep.subr.bf16.mxu0 0
        %11121 = vmatpush1.bf16.msra.mxu0 %v10058
        %11122 = vmatprep.subr.bf16.mxu0 0
        %11123 = vmatpush1.bf16.msra.mxu0 %v10055
        %11124 = vmatprep.subr.bf16.mxu0 0
        %11125 = vmatpush1.bf16.msra.mxu0 %v10052
        %11126 = vmatprep.subr.bf16.mxu0 0
        %11127 = vmatpush1.bf16.msra.mxu0 %v10049
        %11128 = vmatprep.subr.bf16.mxu0 0
        %11129 = vmatpush2.bf16.msra.mxu0 %v10094
        %11130 = vmatprep.subr.bf16.mxu0 0
        %11131 = vmatpush2.bf16.msra.mxu0 %v10091
        %11132 = vmatprep.subr.bf16.mxu0 0
        %11133 = vmatpush2.bf16.msra.mxu0 %v10088
        %11134 = vmatprep.subr.bf16.mxu0 0
        %11135 = vmatpush2.bf16.msra.mxu0 %v10085
        %11136 = vmatprep.subr.bf16.mxu0 0
        %11137 = vmatpush2.bf16.msra.mxu0 %v10082
        %11138 = vmatprep.subr.bf16.mxu0 0
        %11139 = vmatpush2.bf16.msra.mxu0 %v10079
        %11140 = vmatprep.subr.bf16.mxu0 0
        %11141 = vmatpush2.bf16.msra.mxu0 %v10076
        %11142 = vmatprep.subr.bf16.mxu0 0
        %11143 = vmatpush2.bf16.msra.mxu0 %v10073
        %11144 = vmatprep.mubr.bf16.mxu0 %v8501
        %11145 = vmatmul.mubr.bf16.gmra.mxu0 %v8500
        %v11146 = vpop.f32.mrf.mxu0
        %v11147 = vadd.f32 %v11082, %v11146
        %v11148 = vpop.f32.mrf.mxu0
        %v11149 = vpop.f32.mrf.mxu0
        %v11150 = vadd.f32 %v11085, %v11149
        %v11151 = vpop.f32.mrf.mxu0
        %11152 = vmatprep.mubr.bf16.mxu0 %v8513
        %11153 = vmatmul.mubr.bf16.gmra.mxu0 %v8512
        %v11154 = vpop.f32.mrf.mxu0
        %v11155 = vadd.f32 %v11090, %v11154
        %v11156 = vpop.f32.mrf.mxu0
        %v11157 = vpop.f32.mrf.mxu0
        %v11158 = vadd.f32 %v11093, %v11157
        %v11159 = vpop.f32.mrf.mxu0
        %11160 = vmatprep.mubr.bf16.mxu0 %v8525
        %11161 = vmatmul.mubr.bf16.gmra.mxu0 %v8524
        %v11162 = vpop.f32.mrf.mxu0
        %v11163 = vadd.f32 %v11098, %v11162
        %v11164 = vpop.f32.mrf.mxu0
        %v11165 = vpop.f32.mrf.mxu0
        %v11166 = vadd.f32 %v11101, %v11165
        %v11167 = vpop.f32.mrf.mxu0
        %11168 = vmatprep.mubr.bf16.mxu0 %v8537
        %11169 = vmatmul.mubr.bf16.gmra.mxu0 %v8536
        %v11170 = vpop.f32.mrf.mxu0
        %v11171 = vadd.f32 %v11106, %v11170
        %v11172 = vpop.f32.mrf.mxu0
        %v11173 = vpop.f32.mrf.mxu0
        %v11174 = vadd.f32 %v11109, %v11173
        %v11175 = vpop.f32.mrf.mxu0
        %11176 = vdwg.mxu0
        %11177 = vmatprep.subr.bf16.mxu0 0
        %11178 = vmatpush1.bf16.msra.mxu0 %v10118
        %11179 = vmatprep.subr.bf16.mxu0 0
        %11180 = vmatpush1.bf16.msra.mxu0 %v10115
        %11181 = vmatprep.subr.bf16.mxu0 0
        %11182 = vmatpush1.bf16.msra.mxu0 %v10112
        %11183 = vmatprep.subr.bf16.mxu0 0
        %11184 = vmatpush1.bf16.msra.mxu0 %v10109
        %11185 = vmatprep.subr.bf16.mxu0 0
        %11186 = vmatpush1.bf16.msra.mxu0 %v10106
        %11187 = vmatprep.subr.bf16.mxu0 0
        %11188 = vmatpush1.bf16.msra.mxu0 %v10103
        %11189 = vmatprep.subr.bf16.mxu0 0
        %11190 = vmatpush1.bf16.msra.mxu0 %v10100
        %11191 = vmatprep.subr.bf16.mxu0 0
        %11192 = vmatpush1.bf16.msra.mxu0 %v10097
        %11193 = vmatprep.subr.bf16.mxu0 0
        %11194 = vmatpush2.bf16.msra.mxu0 %v10142
        %11195 = vmatprep.subr.bf16.mxu0 0
        %11196 = vmatpush2.bf16.msra.mxu0 %v10139
        %11197 = vmatprep.subr.bf16.mxu0 0
        %11198 = vmatpush2.bf16.msra.mxu0 %v10136
        %11199 = vmatprep.subr.bf16.mxu0 0
        %11200 = vmatpush2.bf16.msra.mxu0 %v10133
        %11201 = vmatprep.subr.bf16.mxu0 0
        %11202 = vmatpush2.bf16.msra.mxu0 %v10130
        %11203 = vmatprep.subr.bf16.mxu0 0
        %11204 = vmatpush2.bf16.msra.mxu0 %v10127
        %11205 = vmatprep.subr.bf16.mxu0 0
        %11206 = vmatpush2.bf16.msra.mxu0 %v10124
        %11207 = vmatprep.subr.bf16.mxu0 0
        %11208 = vmatpush2.bf16.msra.mxu0 %v10121
        %11209 = vmatprep.mubr.bf16.mxu0 %v8503
        %11210 = vmatmul.mubr.bf16.gmra.mxu0 %v8502
        %v11211 = vpop.f32.mrf.mxu0
        %v11212 = vadd.f32 %v11147, %v11211
        %v11213 = vpop.f32.mrf.mxu0
        %v11214 = vpop.f32.mrf.mxu0
        %v11215 = vadd.f32 %v11150, %v11214
        %v11216 = vpop.f32.mrf.mxu0
        %11217 = vmatprep.mubr.bf16.mxu0 %v8515
        %11218 = vmatmul.mubr.bf16.gmra.mxu0 %v8514
        %v11219 = vpop.f32.mrf.mxu0
        %v11220 = vadd.f32 %v11155, %v11219
        %v11221 = vpop.f32.mrf.mxu0
        %v11222 = vpop.f32.mrf.mxu0
        %v11223 = vadd.f32 %v11158, %v11222
        %v11224 = vpop.f32.mrf.mxu0
        %11225 = vmatprep.mubr.bf16.mxu0 %v8527
        %11226 = vmatmul.mubr.bf16.gmra.mxu0 %v8526
        %v11227 = vpop.f32.mrf.mxu0
        %v11228 = vadd.f32 %v11163, %v11227
        %v11229 = vpop.f32.mrf.mxu0
        %v11230 = vpop.f32.mrf.mxu0
        %v11231 = vadd.f32 %v11166, %v11230
        %v11232 = vpop.f32.mrf.mxu0
        %11233 = vmatprep.mubr.bf16.mxu0 %v8539
        %11234 = vmatmul.mubr.bf16.gmra.mxu0 %v8538
        %v11235 = vpop.f32.mrf.mxu0
        %v11236 = vadd.f32 %v11171, %v11235
        %v11237 = vpop.f32.mrf.mxu0
        %v11238 = vpop.f32.mrf.mxu0
        %v11239 = vadd.f32 %v11174, %v11238
        %v11240 = vpop.f32.mrf.mxu0
        %11241 = vdwg.mxu0
        %11242 = vmatprep.subr.bf16.mxu0 0
        %11243 = vmatpush1.bf16.msra.mxu0 %v10166
        %11244 = vmatprep.subr.bf16.mxu0 0
        %11245 = vmatpush1.bf16.msra.mxu0 %v10163
        %11246 = vmatprep.subr.bf16.mxu0 0
        %11247 = vmatpush1.bf16.msra.mxu0 %v10160
        %11248 = vmatprep.subr.bf16.mxu0 0
        %11249 = vmatpush1.bf16.msra.mxu0 %v10157
        %11250 = vmatprep.subr.bf16.mxu0 0
        %11251 = vmatpush1.bf16.msra.mxu0 %v10154
        %11252 = vmatprep.subr.bf16.mxu0 0
        %11253 = vmatpush1.bf16.msra.mxu0 %v10151
        %11254 = vmatprep.subr.bf16.mxu0 0
        %11255 = vmatpush1.bf16.msra.mxu0 %v10148
        %11256 = vmatprep.subr.bf16.mxu0 0
        %11257 = vmatpush1.bf16.msra.mxu0 %v10145
        %11258 = vmatprep.subr.bf16.mxu0 0
        %11259 = vmatpush2.bf16.msra.mxu0 %v10190
        %11260 = vmatprep.subr.bf16.mxu0 0
        %11261 = vmatpush2.bf16.msra.mxu0 %v10187
        %11262 = vmatprep.subr.bf16.mxu0 0
        %11263 = vmatpush2.bf16.msra.mxu0 %v10184
        %11264 = vmatprep.subr.bf16.mxu0 0
        %11265 = vmatpush2.bf16.msra.mxu0 %v10181
        %11266 = vmatprep.subr.bf16.mxu0 0
        %11267 = vmatpush2.bf16.msra.mxu0 %v10178
        %11268 = vmatprep.subr.bf16.mxu0 0
        %11269 = vmatpush2.bf16.msra.mxu0 %v10175
        %11270 = vmatprep.subr.bf16.mxu0 0
        %11271 = vmatpush2.bf16.msra.mxu0 %v10172
        %11272 = vmatprep.subr.bf16.mxu0 0
        %11273 = vmatpush2.bf16.msra.mxu0 %v10169
        %11274 = vmatprep.mubr.bf16.mxu0 %v8505
        %11275 = vmatmul.mubr.bf16.gmra.mxu0 %v8504
        %v11276 = vpop.f32.mrf.mxu0
        %v11277 = vadd.f32 %v11212, %v11276
        %v11278 = vpop.f32.mrf.mxu0
        %v11279 = vpop.f32.mrf.mxu0
        %v11280 = vadd.f32 %v11215, %v11279
        %v11281 = vpop.f32.mrf.mxu0
        %11282 = vmatprep.mubr.bf16.mxu0 %v8517
        %11283 = vmatmul.mubr.bf16.gmra.mxu0 %v8516
        %v11284 = vpop.f32.mrf.mxu0
        %v11285 = vadd.f32 %v11220, %v11284
        %v11286 = vpop.f32.mrf.mxu0
        %v11287 = vpop.f32.mrf.mxu0
        %v11288 = vadd.f32 %v11223, %v11287
        %v11289 = vpop.f32.mrf.mxu0
        %11290 = vmatprep.mubr.bf16.mxu0 %v8529
        %11291 = vmatmul.mubr.bf16.gmra.mxu0 %v8528
        %v11292 = vpop.f32.mrf.mxu0
        %v11293 = vadd.f32 %v11228, %v11292
        %v11294 = vpop.f32.mrf.mxu0
        %v11295 = vpop.f32.mrf.mxu0
        %v11296 = vadd.f32 %v11231, %v11295
        %v11297 = vpop.f32.mrf.mxu0
        %11298 = vmatprep.mubr.bf16.mxu0 %v8541
        %11299 = vmatmul.mubr.bf16.gmra.mxu0 %v8540
        %v11300 = vpop.f32.mrf.mxu0
        %v11301 = vadd.f32 %v11236, %v11300
        %v11302 = vpop.f32.mrf.mxu0
        %v11303 = vpop.f32.mrf.mxu0
        %v11304 = vadd.f32 %v11239, %v11303
        %v11305 = vpop.f32.mrf.mxu0
        %11306 = vdwg.mxu0
        %v11307 = vmax.f32 %v10879, 0.0
        %v11308 = vmax.f32 %v10881, 0.0
        %v11309 = vmax.f32 %v11277, 0.0
        %v11310 = vmax.f32 %v10883, 0.0
        %v11311 = vmax.f32 %v10885, 0.0
        %v11312 = vmax.f32 %v11280, 0.0
        %v11313 = vmax.f32 %v10889, 0.0
        %v11314 = vmax.f32 %v10891, 0.0
        %v11315 = vmax.f32 %v11285, 0.0
        %v11316 = vmax.f32 %v10893, 0.0
        %v11317 = vmax.f32 %v10895, 0.0
        %v11318 = vmax.f32 %v11288, 0.0
        %v11319 = vmax.f32 %v10899, 0.0
        %v11320 = vmax.f32 %v10901, 0.0
        %v11321 = vmax.f32 %v11293, 0.0
        %v11322 = vmax.f32 %v10903, 0.0
        %v11323 = vmax.f32 %v10905, 0.0
        %v11324 = vmax.f32 %v11296, 0.0
        %v11325 = vmax.f32 %v10909, 0.0
        %v11326 = vmax.f32 %v10911, 0.0
        %v11327 = vmax.f32 %v11301, 0.0
        %v11328 = vmax.f32 %v10913, 0.0
        %v11329 = vmax.f32 %v10915, 0.0
        %v11330 = vmax.f32 %v11304, 0.0
        %v11331 = vadd.f32 %v5444, %v11307
        %v11332 = vadd.f32 %v5445, %v11308
        %v11333 = vadd.f32 %v5446, %v11309
        %v11334 = vadd.f32 %v5447, %v11310
        %v11335 = vadd.f32 %v5448, %v11311
        %v11336 = vadd.f32 %v5449, %v11312
        %v11337 = vadd.f32 %v5450, %v11313
        %v11338 = vadd.f32 %v5451, %v11314
        %v11339 = vadd.f32 %v5452, %v11315
        %v11340 = vadd.f32 %v5453, %v11316
        %v11341 = vadd.f32 %v5454, %v11317
        %v11342 = vadd.f32 %v5455, %v11318
        %v11343 = vadd.f32 %v5456, %v11319
        %v11344 = vadd.f32 %v5457, %v11320
        %v11345 = vadd.f32 %v5458, %v11321
        %v11346 = vadd.f32 %v5459, %v11322
        %v11347 = vadd.f32 %v5460, %v11323
        %v11348 = vadd.f32 %v5461, %v11324
        %v11349 = vadd.f32 %v5462, %v11325
        %v11350 = vadd.f32 %v5463, %v11326
        %v11351 = vadd.f32 %v5464, %v11327
        %v11352 = vadd.f32 %v5465, %v11328
        %v11353 = vadd.f32 %v5466, %v11329
        %v11354 = vadd.f32 %v5467, %v11330
        %11355 = vst [vmem:[%s406] sm:$0xff] %v11331
        %11356 = vst [vmem:[%s406 + $0x8] sm:$0xff] %v11332
        %11357 = vst [vmem:[%s406 + $0x10] sm:$0xff] %v11333
        %11358 = vst [vmem:[%s406 + $0x18] sm:$0xff] %v11334
        %11359 = vst [vmem:[%s406 + $0x20] sm:$0xff] %v11335
        %11360 = vst [vmem:[%s406 + $0x28] sm:$0xff] %v11336
        %11361 = vst [vmem:[%s406 + $0x30] sm:$0xff] %v11337
        %11362 = vst [vmem:[%s406 + $0x38] sm:$0xff] %v11338
        %11363 = vst [vmem:[%s406 + $0x40] sm:$0xff] %v11339
        %11364 = vst [vmem:[%s406 + $0x48] sm:$0xff] %v11340
        %11365 = vst [vmem:[%s406 + $0x50] sm:$0xff] %v11341
        %11366 = vst [vmem:[%s406 + $0x58] sm:$0xff] %v11342
        %11367 = vst [vmem:[%s406 + $0x60] sm:$0xff] %v11343
        %11368 = vst [vmem:[%s406 + $0x68] sm:$0xff] %v11344
        %11369 = vst [vmem:[%s406 + $0x70] sm:$0xff] %v11345
        %11370 = vst [vmem:[%s406 + $0x78] sm:$0xff] %v11346
        %11371 = vst [vmem:[%s406 + $0x80] sm:$0xff] %v11347
        %11372 = vst [vmem:[%s406 + $0x88] sm:$0xff] %v11348
        %11373 = vst [vmem:[%s406 + $0x90] sm:$0xff] %v11349
        %11374 = vst [vmem:[%s406 + $0x98] sm:$0xff] %v11350
        %11375 = vst [vmem:[%s406 + $0xa0] sm:$0xff] %v11351
        %11376 = vst [vmem:[%s406 + $0xa8] sm:$0xff] %v11352
        %11377 = vst [vmem:[%s406 + $0xb0] sm:$0xff] %v11353
        %11378 = vst [vmem:[%s406 + $0xb8] sm:$0xff] %v11354
        %s11379 = sand.u32 %s291, 1
        %s11380 = scalar_lea.sflag [#allocation4], %s11379
        %s11381 = sand.u32 %s291, 1
        %s11382 = smul.addr %s11381, 192
        %s11383 = scalar_lea.vmem [#allocation3], %s11382
        // Predicated region
        $region69: #{block_forward.1} parent=67 // pred_check
          %p11384 = pneg %p301
        $region70: #{block_forward.1} parent=67 // pred_check_branch
          %11386 = sbr.rel (%p11384) target = $region72
        $region71: #{block_forward.1} parent=67 // pred_region
          %s11388 = ssub.s32 3072, 3072
          %11389 = vsyncadd %s11380, %s11388
          %s11390 = smul.addr %s26, 24
          %s11391 = smul.addr %s11390, 128
          %s11392 = scalar_lea.hbm %s12, %s11391
          %s11393 = sshll.u32 %s11383, 4
          %s11394 = int_to_ptr.vmem [resolvable:$true] %s11393
          %11399 = dma.vmem_to_hbm [thread:$0]  %s11394, 3072, %s11392, %s11380, 384, 384, 24
        $region72: #{block_forward.1} parent=67 // pred_fallthru
          _
      $region68: #{block_forward.1} parent=5 // pred_fallthru
        _
      %p11400 = scmp.le.s32.totalorder 2, %s21
      // Predicated region
      $region73: #{block_forward.1} parent=5 // pred_check
        %p11401 = pneg %p11400
      $region74: #{block_forward.1} parent=5 // pred_check_branch
        %11403 = sbr.rel (%p11401) target = $region76
      $region75: #{block_forward.1} parent=5 // pred_region
        %s11404 = ssub.s32 %s21, 2
        // Predicated region
        $region77: #{block_forward.1} parent=75 // pred_check
          %p11405 = pneg %p307
        $region78: #{block_forward.1} parent=75 // pred_check_branch
          %11407 = sbr.rel (%p11405) target = $region80
        $region79: #{block_forward.1} parent=75 // pred_region
          %s11408 = sand.u32 %s292, 1
          %s11409 = scalar_lea.sflag [#allocation4], %s11408
          %s11410 = sand.u32 %s292, 1
          %s11411 = smul.addr %s11410, 192
          %s11412 = scalar_lea.vmem [#allocation3], %s11411
          %11413 = dma.done %s11409, 3072
        $region80: #{block_forward.1} parent=75 // pred_fallthru
          _
      $region76: #{block_forward.1} parent=5 // pred_fallthru
        _
    $region6: #{block_forward.1} parent=1 // loop_footer
      %s25 = sadd.s32 1, %s21
    $region7: #{block_forward.1} parent=1 // loop_footer_branch
      %20 = sbr.rel target = $region3
    $region8: #{block_forward.1} parent=1 // loop_exit
      _
    %11414 = vsyncpa [#allocation4], 1
    %s11415 = scalar_lea.sflag [#allocation4], 1
    %11416 = vsyncpa %s11415, 1

</llo_original>
